<compile_context>
chip_gen: v6e
topology: v6e:2x2x1
jax: 0.10.0
libtpu: 0.0.40
codegen_flags: <defaults>
</compile_context>

<pallas_src>
import functools
import math

import jax
import jax.numpy as jnp
from jax.experimental import pallas as pl
from jax.experimental.pallas import tpu as pltpu

SCALES_LEVELS = 64
SCALES_MAX = 256
SCALES_MIN = 0.11
LIKELIHOOD_BOUND = 1e-9
LANE = 128
GEMM_TM = 512          # row tile for the fused GEMM (well under VMEM budget)
EW_TR = 256            # row tile for elementwise entropy kernels


def get_scale_table(min_=SCALES_MIN, max_=SCALES_MAX, levels=SCALES_LEVELS):
    return jnp.exp(jnp.linspace(math.log(min_), math.log(max_), levels))


def _rup(x, m):
    return ((x + m - 1) // m) * m


# --------------------------------------------------------------------------
# Fused GEMM (+ bias + optional ReLU) Pallas kernel
# --------------------------------------------------------------------------

def _gemm_bias_kernel(a_ref, b_ref, bias_ref, o_ref, *, relu):
    acc = jnp.dot(a_ref[...], b_ref[...], preferred_element_type=jnp.float32)
    acc = acc + bias_ref[...]                       # (1, N) broadcasts over rows
    if relu:
        acc = jnp.maximum(acc, 0.0)
    o_ref[...] = acc


def fused_matmul(a, b, bias, *, relu):
    """(M,K) @ (K,N) + bias [-> relu].  A/B fed to the MXU in bf16, f32 accum.

    K and N must be multiples of 128 (callers guarantee lane-dense layouts).
    """
    M, K = a.shape
    K2, N = b.shape
    assert K == K2 and K % LANE == 0 and N % LANE == 0

    # Pad rows so the tile evenly divides (and is bf16 sublane friendly).
    if M <= GEMM_TM:
        Mp = _rup(M, 16)
    else:
        Mp = _rup(M, GEMM_TM)
    tm = min(Mp, GEMM_TM)
    if Mp != M:
        a = jnp.pad(a, ((0, Mp - M), (0, 0)))

    a16 = a.astype(jnp.bfloat16)
    b16 = b.astype(jnp.bfloat16)
    bias2 = bias.reshape(1, N).astype(jnp.float32)

    cost = pl.CostEstimate(
        flops=2 * Mp * K * N,
        transcendentals=0,
        bytes_accessed=2 * (Mp * K + K * N) + 4 * (Mp * N + N),
    )

    out = pl.pallas_call(
        functools.partial(_gemm_bias_kernel, relu=relu),
        out_shape=jax.ShapeDtypeStruct((Mp, N), jnp.float32),
        grid=(Mp // tm,),
        in_specs=[
            pl.BlockSpec((tm, K), lambda i: (i, 0)),
            pl.BlockSpec((K, N), lambda i: (0, 0)),
            pl.BlockSpec((1, N), lambda i: (0, 0)),
        ],
        out_specs=pl.BlockSpec((tm, N), lambda i: (i, 0)),
        compiler_params=pltpu.CompilerParams(
            dimension_semantics=("parallel",)),
        cost_estimate=cost,
    )(a16, b16, bias2)

    return out[:M] if Mp != M else out


# --------------------------------------------------------------------------
# Convolutions (NHWC, padded channels) -> fused GEMM
# --------------------------------------------------------------------------

def conv2d_nhwc(x, w, b, *, stride, padding, relu):
    """x: (B,H,W,Cin_pad) f32 (padded channels are zero).
    w: (Cout, Cin, kh, kw)  [PyTorch Conv2d layout], b: (Cout,).
    Returns (B,Ho,Wo,Cout_pad) with zero padded channels."""
    B, H, W, Cin_pad = x.shape
    Cout, Cin, kh, kw = w.shape
    Cout_pad = _rup(Cout, LANE)

    xp = jnp.pad(x, ((0, 0), (padding, padding), (padding, padding), (0, 0)))
    Ho = (H + 2 * padding - kh) // stride + 1
    Wo = (W + 2 * padding - kw) // stride + 1
    patches = [xp[:, i:i + stride * Ho:stride, j:j + stride * Wo:stride, :]
               for i in range(kh) for j in range(kw)]
    A = jnp.concatenate(patches, axis=-1).reshape(B * Ho * Wo, kh * kw * Cin_pad)

    wt = jnp.transpose(w, (2, 3, 1, 0))                          # (kh,kw,Cin,Cout)
    wt = jnp.pad(wt, ((0, 0), (0, 0),
                      (0, Cin_pad - Cin), (0, Cout_pad - Cout)))
    Wmat = wt.reshape(kh * kw * Cin_pad, Cout_pad)
    bias = jnp.pad(b, (0, Cout_pad - Cout))

    out = fused_matmul(A, Wmat, bias, relu=relu)
    return out.reshape(B, Ho, Wo, Cout_pad)


def deconv2d_nhwc(x, w_t, b, *, relu):
    """ConvTranspose2d(stride=2, kernel=3, padding=1, output_padding=1) via
    sub-pixel decomposition; all 4 output phases computed in one GEMM.
    x: (B,H,W,Cin_pad); w_t: (Cin, Cout, 3, 3) [PyTorch layout]; b: (Cout,)."""
    B, H, W, Cin_pad = x.shape
    Cin, Cout, kh, kw = w_t.shape
    assert (kh, kw) == (3, 3)
    Cout_pad = _rup(Cout, LANE)

    # Taps x[m+dy, n+dx] (zero beyond the high edge).
    xp = jnp.pad(x, ((0, 0), (0, 1), (0, 1), (0, 0)))
    taps = [(0, 0), (0, 1), (1, 0), (1, 1)]
    A = jnp.concatenate([xp[:, dy:dy + H, dx:dx + W, :] for dy, dx in taps],
                        axis=-1).reshape(B * H * W, 4 * Cin_pad)

    # Output phase (ry, rx) at (2m+ry, 2n+rx) uses kernel tap
    # (ky, kx) = (ry + 1 - 2*dy, rx + 1 - 2*dx) for input tap (m+dy, n+dx).
    wt = jnp.pad(w_t, ((0, Cin_pad - Cin), (0, Cout_pad - Cout), (0, 0), (0, 0)))
    phases = [(0, 0), (0, 1), (1, 0), (1, 1)]
    zero_blk = jnp.zeros((Cin_pad, Cout_pad), jnp.float32)
    row_blocks = []
    for dy, dx in taps:
        cols = []
        for ry, rx in phases:
            ky, kx = ry + 1 - 2 * dy, rx + 1 - 2 * dx
            if 0 <= ky < 3 and 0 <= kx < 3:
                cols.append(wt[:, :, ky, kx])
            else:
                cols.append(zero_blk)
        row_blocks.append(jnp.concatenate(cols, axis=1))
    Wmat = jnp.concatenate(row_blocks, axis=0)          # (4*Cin_pad, 4*Cout_pad)
    bias = jnp.tile(jnp.pad(b, (0, Cout_pad - Cout)), 4)

    out = fused_matmul(A, Wmat, bias, relu=relu)        # (B*H*W, 4*Cout_pad)
    out = out.reshape(B, H, W, 2, 2, Cout_pad)          # (..., ry, rx, C)
    out = jnp.transpose(out, (0, 1, 3, 2, 4, 5)).reshape(B, 2 * H, 2 * W, Cout_pad)
    return out


# --------------------------------------------------------------------------
# Entropy-model elementwise kernels (lane-dense (rows, Cpad) tiles)
# --------------------------------------------------------------------------

_SQRT2_INV = 1.0 / math.sqrt(2.0)


def _erf(x):
    # Abramowitz & Stegun 7.1.26 polynomial approximation (|err| < 1.5e-7).
    p = 0.3275911
    a1, a2, a3, a4, a5 = (0.254829592, -0.284496736, 1.421413741,
                          -1.453152027, 1.061405429)
    s = jnp.where(x >= 0, 1.0, -1.0)
    ax = jnp.abs(x)
    t = pl.reciprocal(1.0 + p * ax, approx=True)
    poly = ((((a5 * t + a4) * t + a3) * t + a2) * t + a1) * t
    return s * (1.0 - poly * jnp.exp(-ax * ax))


def _std_normal_cdf(x):
    return 0.5 * (1.0 + _erf(x * _SQRT2_INV))


def _sigmoid(x):
    return pl.reciprocal(1.0 + jnp.exp(-x), approx=True)


def _gaussian_conditional_kernel(y_ref, sc_ref, mu_ref, yhat_ref, lik_ref):
    """GaussianConditional forward (eval): quantize("dequantize", means) + likelihood."""
    y = y_ref[...]
    mu = mu_ref[...]
    sc = jnp.maximum(sc_ref[...], SCALES_MIN)          # scale lower bound
    inv_sc = pl.reciprocal(sc, approx=True)
    y_hat = jnp.round(y - mu) + mu
    v = jnp.abs(y_hat - mu)
    lik = (_std_normal_cdf((0.5 - v) * inv_sc)
           - _std_normal_cdf((-0.5 - v) * inv_sc))
    yhat_ref[...] = y_hat
    lik_ref[...] = jnp.maximum(lik, LIKELIHOOD_BOUND)  # likelihood lower bound


def _factorized_kernel(z_ref, sc_ref, mu_ref, zhat_ref, lik_ref):
    """EntropyBottleneck forward (eval), per-channel logistic CDF.
    sc_ref/mu_ref are (1, Cpad) rows that broadcast across the row tile."""
    z = z_ref[...]
    mu = mu_ref[...]
    inv_sc = pl.reciprocal(jnp.maximum(sc_ref[...], 1e-6), approx=True)
    z_hat = jnp.round(z)
    d = (z_hat - mu) * inv_sc
    h = 0.5 * inv_sc
    lik = _sigmoid(d + h) - _sigmoid(d - h)
    zhat_ref[...] = z_hat
    lik_ref[...] = jnp.maximum(lik, LIKELIHOOD_BOUND)


def _tile_rows(arr2d, tr):
    R = arr2d.shape[0]
    Rp = _rup(R, tr)
    if Rp != R:
        arr2d = jnp.pad(arr2d, ((0, Rp - R), (0, 0)))
    return arr2d, Rp


def gaussian_conditional(y, scales, means):
    """All inputs NHWC with Cpad (multiple of 128) channels; one fused call
    over every pack (elementwise => identical to per-pack calls)."""
    B, H, W, Cp = y.shape
    R = B * H * W
    tr = min(_rup(R, 8), EW_TR)
    y2, Rp = _tile_rows(y.reshape(R, Cp), tr)
    sc2, _ = _tile_rows(scales.reshape(R, Cp), tr)
    mu2, _ = _tile_rows(means.reshape(R, Cp), tr)

    y_hat, lik = pl.pallas_call(
        _gaussian_conditional_kernel,
        out_shape=(jax.ShapeDtypeStruct((Rp, Cp), jnp.float32),
                   jax.ShapeDtypeStruct((Rp, Cp), jnp.float32)),
        grid=(Rp // tr,),
        in_specs=[pl.BlockSpec((tr, Cp), lambda i: (i, 0)),
                  pl.BlockSpec((tr, Cp), lambda i: (i, 0)),
                  pl.BlockSpec((tr, Cp), lambda i: (i, 0))],
        out_specs=(pl.BlockSpec((tr, Cp), lambda i: (i, 0)),
                   pl.BlockSpec((tr, Cp), lambda i: (i, 0))),
        compiler_params=pltpu.CompilerParams(
            dimension_semantics=("parallel",)),
    )(y2, sc2, mu2)
    return (y_hat[:R].reshape(B, H, W, Cp),
            lik[:R].reshape(B, H, W, Cp))


def entropy_bottleneck(z, scale_c, mean_c):
    """z: (B,H,W,Cpad); scale_c/mean_c: (Cpad,) per-channel parameters passed
    as (1, Cpad) rows (no full-size broadcast arrays)."""
    B, H, W, Cp = z.shape
    R = B * H * W
    tr = min(_rup(R, 8), EW_TR)
    z2, Rp = _tile_rows(z.reshape(R, Cp), tr)
    sc = scale_c.reshape(1, Cp)
    mu = mean_c.reshape(1, Cp)

    z_hat, lik = pl.pallas_call(
        _factorized_kernel,
        out_shape=(jax.ShapeDtypeStruct((Rp, Cp), jnp.float32),
                   jax.ShapeDtypeStruct((Rp, Cp), jnp.float32)),
        grid=(Rp // tr,),
        in_specs=[pl.BlockSpec((tr, Cp), lambda i: (i, 0)),
                  pl.BlockSpec((1, Cp), lambda i: (0, 0)),
                  pl.BlockSpec((1, Cp), lambda i: (0, 0))],
        out_specs=(pl.BlockSpec((tr, Cp), lambda i: (i, 0)),
                   pl.BlockSpec((tr, Cp), lambda i: (i, 0))),
        compiler_params=pltpu.CompilerParams(
            dimension_semantics=("parallel",)),
    )(z2, sc, mu)
    return (z_hat[:R].reshape(B, H, W, Cp),
            lik[:R].reshape(B, H, W, Cp))


# --------------------------------------------------------------------------
# Parameters + forward pass
# --------------------------------------------------------------------------

def _init_conv(key, cout, cin, k, scale=0.1):
    kw_, kb_ = jax.random.split(key)
    w = jax.random.normal(kw_, (cout, cin, k, k), jnp.float32) * scale
    b = jax.random.normal(kb_, (cout,), jnp.float32) * scale
    return w, b


def _init_deconv(key, cin, cout, k, scale=0.1):
    kw_, kb_ = jax.random.split(key)
    w = jax.random.normal(kw_, (cin, cout, k, k), jnp.float32) * scale
    b = jax.random.normal(kb_, (cout,), jnp.float32) * scale
    return w, b


def init_params(key, N=32):
    keys = jax.random.split(key, 8)
    p = {}
    p['g_a1'] = _init_conv(keys[0], N, 3, 3)
    p['g_a2'] = _init_conv(keys[1], N, N, 3)
    p['h_a1'] = _init_conv(keys[2], N, N, 3)
    p['h_a2'] = _init_conv(keys[3], N, N, 3)
    p['h_s1'] = _init_deconv(keys[4], N, N, 3)
    p['h_s2'] = _init_conv(keys[5], 2 * N, N, 3)
    p['g_s1'] = _init_deconv(keys[6], N, N, 3)
    p['g_s2'] = _init_deconv(keys[7], N, 3, 3)
    p['em_z_scale'] = jnp.linspace(0.5, 2.0, N).astype(jnp.float32)
    p['em_z_mean'] = jnp.zeros((N,), jnp.float32)
    return p


def compressor_forward(params, x_nchw):
    N = params['em_z_scale'].shape[0]
    Cx = x_nchw.shape[1]

    # NHWC + lane-dense channel padding at the boundary only.
    x = jnp.transpose(x_nchw, (0, 2, 3, 1))
    x = jnp.pad(x, ((0, 0), (0, 0), (0, 0), (0, _rup(Cx, LANE) - Cx)))

    # g_a: general analysis (x -> y), /4 spatial
    y = conv2d_nhwc(x, *params['g_a1'], stride=2, padding=1, relu=True)
    y = conv2d_nhwc(y, *params['g_a2'], stride=2, padding=1, relu=False)

    # h_a: hyper analysis (y -> z), /2 spatial
    z = conv2d_nhwc(y, *params['h_a1'], stride=1, padding=1, relu=True)
    z = conv2d_nhwc(z, *params['h_a2'], stride=2, padding=1, relu=False)

    Cp = y.shape[-1]

    # p_a(y): pack analysis is a channel split; the Gaussian conditional is
    # elementwise, so a single fused call below is identical to the per-pack
    # loop + pack synthesis of the reference.

    # em_z: entropy bottleneck (per-channel params, padded channels get scale=1)
    sc_z = jnp.pad(params['em_z_scale'], (0, Cp - N), constant_values=1.0)
    mu_z = jnp.pad(params['em_z_mean'], (0, Cp - N))
    z_hat, z_lik = entropy_bottleneck(z, sc_z, mu_z)

    # h_s: hyper synthesis (z_hat -> gaussian params), x2 spatial, 2N channels
    g = deconv2d_nhwc(z_hat, *params['h_s1'], relu=True)
    gp = conv2d_nhwc(g, *params['h_s2'], stride=1, padding=1, relu=False)

    # chunk(2, dim=channel) then re-pad to lane-dense Cp for the fused em_y call
    scales_hat = gp[..., :N]
    means_hat = gp[..., N:2 * N]
    pad_c = ((0, 0), (0, 0), (0, 0), (0, Cp - N))
    scales_p = jnp.pad(scales_hat, pad_c)          # padded scales clamp to SCALES_MIN
    means_p = jnp.pad(means_hat, pad_c)

    y_hat, y_lik = gaussian_conditional(y, scales_p, means_p)

    # g_s: general synthesis (y_hat -> x_hat), x4 spatial
    xh = deconv2d_nhwc(y_hat, *params['g_s1'], relu=True)
    x_hat_p = deconv2d_nhwc(xh, *params['g_s2'], relu=False)

    cout_final = params['g_s2'][0].shape[1]
    x_hat = jnp.transpose(x_hat_p[..., :cout_final], (0, 3, 1, 2))
    y_likelihoods = jnp.transpose(y_lik[..., :N], (0, 3, 1, 2))
    z_likelihoods = jnp.transpose(z_lik[..., :N], (0, 3, 1, 2))

    return {'x_hat': x_hat,
            'likelihoods': {'y': y_likelihoods, 'z': z_likelihoods}}


if __name__ == "__main__":
    N = 32
    B, H, W = 2, 16, 16
    key = jax.random.PRNGKey(0)
    kx, kp = jax.random.split(key)
    x = jax.random.uniform(kx, (B, 3, H, W), jnp.float32)
    params = init_params(kp, N=N)

    out = jax.jit(compressor_forward)(params, x)
    out = jax.tree_util.tree_map(jax.block_until_ready, out)

    assert out['x_hat'].shape == (B, 3, H, W)
    assert out['likelihoods']['y'].shape == (B, N, H // 4, W // 4)
    assert out['likelihoods']['z'].shape == (B, N, H // 8, W // 8)
    assert bool(jnp.all(jnp.isfinite(out['x_hat'])))
    assert bool(jnp.all(out['likelihoods']['y'] > 0))
    assert bool(jnp.all(out['likelihoods']['z'] > 0))
    print("KERNEL_OK")
</pallas_src>

<mosaic_0001>
module attributes {stable_mosaic.version = 11 : i64} {
  func.func @_gemm_bias_kernel(%arg0: i32, %arg1: memref<128x1152xbf16, #tpu.memory_space<vmem>>, %arg2: memref<1152x128xbf16, #tpu.memory_space<vmem>>, %arg3: memref<1x128xf32, #tpu.memory_space<vmem>>, %arg4: memref<128x128xf32, #tpu.memory_space<vmem>>) attributes {dimension_semantics = [#tpu.dimension_semantics<parallel>], iteration_bounds = array<i64: 1>, scalar_prefetch = 0 : i64, scratch_operands = 0 : i64, tpu.core_type = #tpu.core_type<tc>, window_params = [{transform_indices = @transform_0, window_bounds = array<i64: 128, 1152>}, {pipeline_mode = #tpu.pipeline_mode<synchronous>, transform_indices = @transform_1, window_bounds = array<i64: 1152, 128>}, {pipeline_mode = #tpu.pipeline_mode<synchronous>, transform_indices = @transform_2, window_bounds = array<i64: 1, 128>}, {transform_indices = @transform_3, window_bounds = array<i64: 128, 128>}]} {
    %c0 = arith.constant 0 : index
    %c0_0 = arith.constant 0 : index
    %0 = vector.load %arg1[%c0, %c0_0] : memref<128x1152xbf16, #tpu.memory_space<vmem>>, vector<128x1152xbf16>
    %c0_1 = arith.constant 0 : index
    %c0_2 = arith.constant 0 : index
    %1 = vector.load %arg2[%c0_1, %c0_2] : memref<1152x128xbf16, #tpu.memory_space<vmem>>, vector<1152x128xbf16>
    %cst = arith.constant dense<0.000000e+00> : vector<128x128xf32>
    %2 = tpu.matmul %0, %1, %cst {dimension_numbers = #tpu.dot_dimension_numbers<[1], [0], [0], [1], [0, 0, 1, 1], [], []>} : vector<128x1152xbf16>, vector<1152x128xbf16>, vector<128x128xf32> -> vector<128x128xf32>
    %c0_3 = arith.constant 0 : index
    %c0_4 = arith.constant 0 : index
    %3 = vector.load %arg3[%c0_3, %c0_4] : memref<1x128xf32, #tpu.memory_space<vmem>>, vector<1x128xf32>
    %4 = vector.broadcast %3 : vector<1x128xf32> to vector<128x128xf32>
    %5 = arith.addf %2, %4 : vector<128x128xf32>
    %cst_5 = arith.constant 0.000000e+00 : f32
    %6 = vector.broadcast %cst_5 : f32 to vector<128x128xf32>
    %7 = arith.maximumf %5, %6 : vector<128x128xf32>
    %c0_6 = arith.constant 0 : index
    %c0_7 = arith.constant 0 : index
    %8 = vector.load %arg4[%c0_6, %c0_7] : memref<128x128xf32, #tpu.memory_space<vmem>>, vector<128x128xf32>
    tpu.vector_store %arg4[%c0_6, %c0_7], %7 {strides = array<i32>} : memref<128x128xf32, #tpu.memory_space<vmem>>, vector<128x128xf32>,
    return
  }
  func.func @transform_0(%arg0: i32) -> (i32, i32) {
    %c0_i32 = arith.constant 0 : i32
    %c0_i32_0 = arith.constant 0 : i32
    return %arg0, %c0_i32 : i32, i32
  }
  func.func @transform_1(%arg0: i32) -> (i32, i32) {
    %c0_i32 = arith.constant 0 : i32
    %c0_i32_0 = arith.constant 0 : i32
    %c0_i32_1 = arith.constant 0 : i32
    return %c0_i32, %c0_i32_0 : i32, i32
  }
  func.func @transform_2(%arg0: i32) -> (i32, i32) {
    %c0_i32 = arith.constant 0 : i32
    %c0_i32_0 = arith.constant 0 : i32
    %c0_i32_1 = arith.constant 0 : i32
    return %c0_i32, %c0_i32_0 : i32, i32
  }
  func.func @transform_3(%arg0: i32) -> (i32, i32) {
    %c0_i32 = arith.constant 0 : i32
    %c0_i32_0 = arith.constant 0 : i32
    return %arg0, %c0_i32 : i32, i32
  }
}

module attributes {stable_mosaic.version = 11 : i64} {
  func.func @_gemm_bias_kernel(%arg0: i32, %arg1: memref<32x1152xbf16, #tpu.memory_space<vmem>>, %arg2: memref<1152x128xbf16, #tpu.memory_space<vmem>>, %arg3: memref<1x128xf32, #tpu.memory_space<vmem>>, %arg4: memref<32x128xf32, #tpu.memory_space<vmem>>) attributes {dimension_semantics = [#tpu.dimension_semantics<parallel>], iteration_bounds = array<i64: 1>, scalar_prefetch = 0 : i64, scratch_operands = 0 : i64, tpu.core_type = #tpu.core_type<tc>, window_params = [{transform_indices = @transform_0, window_bounds = array<i64: 32, 1152>}, {pipeline_mode = #tpu.pipeline_mode<synchronous>, transform_indices = @transform_1, window_bounds = array<i64: 1152, 128>}, {pipeline_mode = #tpu.pipeline_mode<synchronous>, transform_indices = @transform_2, window_bounds = array<i64: 1, 128>}, {transform_indices = @transform_3, window_bounds = array<i64: 32, 128>}]} {
    %c0 = arith.constant 0 : index
    %c0_0 = arith.constant 0 : index
    %0 = vector.load %arg1[%c0, %c0_0] : memref<32x1152xbf16, #tpu.memory_space<vmem>>, vector<32x1152xbf16>
    %c0_1 = arith.constant 0 : index
    %c0_2 = arith.constant 0 : index
    %1 = vector.load %arg2[%c0_1, %c0_2] : memref<1152x128xbf16, #tpu.memory_space<vmem>>, vector<1152x128xbf16>
    %cst = arith.constant dense<0.000000e+00> : vector<32x128xf32>
    %2 = tpu.matmul %0, %1, %cst {dimension_numbers = #tpu.dot_dimension_numbers<[1], [0], [0], [1], [0, 0, 1, 1], [], []>} : vector<32x1152xbf16>, vector<1152x128xbf16>, vector<32x128xf32> -> vector<32x128xf32>
    %c0_3 = arith.constant 0 : index
    %c0_4 = arith.constant 0 : index
    %3 = vector.load %arg3[%c0_3, %c0_4] : memref<1x128xf32, #tpu.memory_space<vmem>>, vector<1x128xf32>
    %4 = vector.broadcast %3 : vector<1x128xf32> to vector<32x128xf32>
    %5 = arith.addf %2, %4 : vector<32x128xf32>
    %c0_5 = arith.constant 0 : index
    %c0_6 = arith.constant 0 : index
    %6 = vector.load %arg4[%c0_5, %c0_6] : memref<32x128xf32, #tpu.memory_space<vmem>>, vector<32x128xf32>
    tpu.vector_store %arg4[%c0_5, %c0_6], %5 {strides = array<i32>} : memref<32x128xf32, #tpu.memory_space<vmem>>, vector<32x128xf32>,
    return
  }
  func.func @transform_0(%arg0: i32) -> (i32, i32) {
    %c0_i32 = arith.constant 0 : i32
    %c0_i32_0 = arith.constant 0 : i32
    return %arg0, %c0_i32 : i32, i32
  }
  func.func @transform_1(%arg0: i32) -> (i32, i32) {
    %c0_i32 = arith.constant 0 : i32
    %c0_i32_0 = arith.constant 0 : i32
    %c0_i32_1 = arith.constant 0 : i32
    return %c0_i32, %c0_i32_0 : i32, i32
  }
  func.func @transform_2(%arg0: i32) -> (i32, i32) {
    %c0_i32 = arith.constant 0 : i32
    %c0_i32_0 = arith.constant 0 : i32
    %c0_i32_1 = arith.constant 0 : i32
    return %c0_i32, %c0_i32_0 : i32, i32
  }
  func.func @transform_3(%arg0: i32) -> (i32, i32) {
    %c0_i32 = arith.constant 0 : i32
    %c0_i32_0 = arith.constant 0 : i32
    return %arg0, %c0_i32 : i32, i32
  }
}

module attributes {stable_mosaic.version = 11 : i64} {
  func.func @_gemm_bias_kernel(%arg0: i32, %arg1: memref<32x1152xbf16, #tpu.memory_space<vmem>>, %arg2: memref<1152x128xbf16, #tpu.memory_space<vmem>>, %arg3: memref<1x128xf32, #tpu.memory_space<vmem>>, %arg4: memref<32x128xf32, #tpu.memory_space<vmem>>) attributes {dimension_semantics = [#tpu.dimension_semantics<parallel>], iteration_bounds = array<i64: 1>, scalar_prefetch = 0 : i64, scratch_operands = 0 : i64, tpu.core_type = #tpu.core_type<tc>, window_params = [{transform_indices = @transform_0, window_bounds = array<i64: 32, 1152>}, {pipeline_mode = #tpu.pipeline_mode<synchronous>, transform_indices = @transform_1, window_bounds = array<i64: 1152, 128>}, {pipeline_mode = #tpu.pipeline_mode<synchronous>, transform_indices = @transform_2, window_bounds = array<i64: 1, 128>}, {transform_indices = @transform_3, window_bounds = array<i64: 32, 128>}]} {
    %c0 = arith.constant 0 : index
    %c0_0 = arith.constant 0 : index
    %0 = vector.load %arg1[%c0, %c0_0] : memref<32x1152xbf16, #tpu.memory_space<vmem>>, vector<32x1152xbf16>
    %c0_1 = arith.constant 0 : index
    %c0_2 = arith.constant 0 : index
    %1 = vector.load %arg2[%c0_1, %c0_2] : memref<1152x128xbf16, #tpu.memory_space<vmem>>, vector<1152x128xbf16>
    %cst = arith.constant dense<0.000000e+00> : vector<32x128xf32>
    %2 = tpu.matmul %0, %1, %cst {dimension_numbers = #tpu.dot_dimension_numbers<[1], [0], [0], [1], [0, 0, 1, 1], [], []>} : vector<32x1152xbf16>, vector<1152x128xbf16>, vector<32x128xf32> -> vector<32x128xf32>
    %c0_3 = arith.constant 0 : index
    %c0_4 = arith.constant 0 : index
    %3 = vector.load %arg3[%c0_3, %c0_4] : memref<1x128xf32, #tpu.memory_space<vmem>>, vector<1x128xf32>
    %4 = vector.broadcast %3 : vector<1x128xf32> to vector<32x128xf32>
    %5 = arith.addf %2, %4 : vector<32x128xf32>
    %cst_5 = arith.constant 0.000000e+00 : f32
    %6 = vector.broadcast %cst_5 : f32 to vector<32x128xf32>
    %7 = arith.maximumf %5, %6 : vector<32x128xf32>
    %c0_6 = arith.constant 0 : index
    %c0_7 = arith.constant 0 : index
    %8 = vector.load %arg4[%c0_6, %c0_7] : memref<32x128xf32, #tpu.memory_space<vmem>>, vector<32x128xf32>
    tpu.vector_store %arg4[%c0_6, %c0_7], %7 {strides = array<i32>} : memref<32x128xf32, #tpu.memory_space<vmem>>, vector<32x128xf32>,
    return
  }
  func.func @transform_0(%arg0: i32) -> (i32, i32) {
    %c0_i32 = arith.constant 0 : i32
    %c0_i32_0 = arith.constant 0 : i32
    return %arg0, %c0_i32 : i32, i32
  }
  func.func @transform_1(%arg0: i32) -> (i32, i32) {
    %c0_i32 = arith.constant 0 : i32
    %c0_i32_0 = arith.constant 0 : i32
    %c0_i32_1 = arith.constant 0 : i32
    return %c0_i32, %c0_i32_0 : i32, i32
  }
  func.func @transform_2(%arg0: i32) -> (i32, i32) {
    %c0_i32 = arith.constant 0 : i32
    %c0_i32_0 = arith.constant 0 : i32
    %c0_i32_1 = arith.constant 0 : i32
    return %c0_i32, %c0_i32_0 : i32, i32
  }
  func.func @transform_3(%arg0: i32) -> (i32, i32) {
    %c0_i32 = arith.constant 0 : i32
    %c0_i32_0 = arith.constant 0 : i32
    return %arg0, %c0_i32 : i32, i32
  }
}

module attributes {stable_mosaic.version = 11 : i64} {
  func.func @_factorized_kernel(%arg0: i32, %arg1: memref<8x128xf32, #tpu.memory_space<vmem>>, %arg2: memref<1x128xf32, #tpu.memory_space<vmem>>, %arg3: memref<1x128xf32, #tpu.memory_space<vmem>>, %arg4: memref<8x128xf32, #tpu.memory_space<vmem>>, %arg5: memref<8x128xf32, #tpu.memory_space<vmem>>) attributes {dimension_semantics = [#tpu.dimension_semantics<parallel>], iteration_bounds = array<i64: 1>, scalar_prefetch = 0 : i64, scratch_operands = 0 : i64, tpu.core_type = #tpu.core_type<tc>, window_params = [{transform_indices = @transform_0, window_bounds = array<i64: 8, 128>}, {pipeline_mode = #tpu.pipeline_mode<synchronous>, transform_indices = @transform_1, window_bounds = array<i64: 1, 128>}, {pipeline_mode = #tpu.pipeline_mode<synchronous>, transform_indices = @transform_2, window_bounds = array<i64: 1, 128>}, {transform_indices = @transform_3, window_bounds = array<i64: 8, 128>}, {transform_indices = @transform_4, window_bounds = array<i64: 8, 128>}]} {
    %c0 = arith.constant 0 : index
    %c0_0 = arith.constant 0 : index
    %0 = vector.load %arg1[%c0, %c0_0] : memref<8x128xf32, #tpu.memory_space<vmem>>, vector<8x128xf32>
    %c0_1 = arith.constant 0 : index
    %c0_2 = arith.constant 0 : index
    %1 = vector.load %arg3[%c0_1, %c0_2] : memref<1x128xf32, #tpu.memory_space<vmem>>, vector<1x128xf32>
    %c0_3 = arith.constant 0 : index
    %c0_4 = arith.constant 0 : index
    %2 = vector.load %arg2[%c0_3, %c0_4] : memref<1x128xf32, #tpu.memory_space<vmem>>, vector<1x128xf32>
    %cst = arith.constant 9.99999997E-7 : f32
    %3 = vector.broadcast %cst : f32 to vector<1x128xf32>
    %4 = arith.maximumf %2, %3 : vector<1x128xf32>
    %5 = tpu.reciprocal %4 {approx = true} : vector<1x128xf32> -> vector<1x128xf32>
    %6 = math.roundeven %0 : vector<8x128xf32>
    %7 = vector.broadcast %1 : vector<1x128xf32> to vector<8x128xf32>
    %8 = arith.subf %6, %7 : vector<8x128xf32>
    %9 = vector.broadcast %5 : vector<1x128xf32> to vector<8x128xf32>
    %10 = arith.mulf %8, %9 : vector<8x128xf32>
    %cst_5 = arith.constant 5.000000e-01 : f32
    %11 = vector.broadcast %cst_5 : f32 to vector<1x128xf32>
    %12 = arith.mulf %11, %5 : vector<1x128xf32>
    %13 = vector.broadcast %12 : vector<1x128xf32> to vector<8x128xf32>
    %14 = arith.addf %10, %13 : vector<8x128xf32>
    %cst_6 = arith.constant 0.000000e+00 : f32
    %15 = vector.broadcast %cst_6 : f32 to vector<8x128xf32>
    %16 = arith.subf %15, %14 : vector<8x128xf32>
    %17 = math.exp %16 : vector<8x128xf32>
    %cst_7 = arith.constant 1.000000e+00 : f32
    %18 = vector.broadcast %cst_7 : f32 to vector<8x128xf32>
    %19 = arith.addf %18, %17 : vector<8x128xf32>
    %20 = tpu.reciprocal %19 {approx = true} : vector<8x128xf32> -> vector<8x128xf32>
    %21 = vector.broadcast %12 : vector<1x128xf32> to vector<8x128xf32>
    %22 = arith.subf %10, %21 : vector<8x128xf32>
    %cst_8 = arith.constant 0.000000e+00 : f32
    %23 = vector.broadcast %cst_8 : f32 to vector<8x128xf32>
    %24 = arith.subf %23, %22 : vector<8x128xf32>
    %25 = math.exp %24 : vector<8x128xf32>
    %cst_9 = arith.constant 1.000000e+00 : f32
    %26 = vector.broadcast %cst_9 : f32 to vector<8x128xf32>
    %27 = arith.addf %26, %25 : vector<8x128xf32>
    %28 = tpu.reciprocal %27 {approx = true} : vector<8x128xf32> -> vector<8x128xf32>
    %29 = arith.subf %20, %28 : vector<8x128xf32>
    %c0_10 = arith.constant 0 : index
    %c0_11 = arith.constant 0 : index
    %30 = vector.load %arg4[%c0_10, %c0_11] : memref<8x128xf32, #tpu.memory_space<vmem>>, vector<8x128xf32>
    tpu.vector_store %arg4[%c0_10, %c0_11], %6 {strides = array<i32>} : memref<8x128xf32, #tpu.memory_space<vmem>>, vector<8x128xf32>,
    %cst_12 = arith.constant 9.99999971E-10 : f32
    %31 = vector.broadcast %cst_12 : f32 to vector<8x128xf32>
    %32 = arith.maximumf %29, %31 : vector<8x128xf32>
    %c0_13 = arith.constant 0 : index
    %c0_14 = arith.constant 0 : index
    %33 = vector.load %arg5[%c0_13, %c0_14] : memref<8x128xf32, #tpu.memory_space<vmem>>, vector<8x128xf32>
    tpu.vector_store %arg5[%c0_13, %c0_14], %32 {strides = array<i32>} : memref<8x128xf32, #tpu.memory_space<vmem>>, vector<8x128xf32>,
    return
  }
  func.func @transform_0(%arg0: i32) -> (i32, i32) {
    %c0_i32 = arith.constant 0 : i32
    %c0_i32_0 = arith.constant 0 : i32
    return %arg0, %c0_i32 : i32, i32
  }
  func.func @transform_1(%arg0: i32) -> (i32, i32) {
    %c0_i32 = arith.constant 0 : i32
    %c0_i32_0 = arith.constant 0 : i32
    %c0_i32_1 = arith.constant 0 : i32
    return %c0_i32, %c0_i32_0 : i32, i32
  }
  func.func @transform_2(%arg0: i32) -> (i32, i32) {
    %c0_i32 = arith.constant 0 : i32
    %c0_i32_0 = arith.constant 0 : i32
    %c0_i32_1 = arith.constant 0 : i32
    return %c0_i32, %c0_i32_0 : i32, i32
  }
  func.func @transform_3(%arg0: i32) -> (i32, i32) {
    %c0_i32 = arith.constant 0 : i32
    %c0_i32_0 = arith.constant 0 : i32
    return %arg0, %c0_i32 : i32, i32
  }
  func.func @transform_4(%arg0: i32) -> (i32, i32) {
    %c0_i32 = arith.constant 0 : i32
    %c0_i32_0 = arith.constant 0 : i32
    return %arg0, %c0_i32 : i32, i32
  }
}

module attributes {stable_mosaic.version = 11 : i64} {
  func.func @_gemm_bias_kernel(%arg0: i32, %arg1: memref<16x1152xbf16, #tpu.memory_space<vmem>>, %arg2: memref<1152x128xbf16, #tpu.memory_space<vmem>>, %arg3: memref<1x128xf32, #tpu.memory_space<vmem>>, %arg4: memref<16x128xf32, #tpu.memory_space<vmem>>) attributes {dimension_semantics = [#tpu.dimension_semantics<parallel>], iteration_bounds = array<i64: 1>, scalar_prefetch = 0 : i64, scratch_operands = 0 : i64, tpu.core_type = #tpu.core_type<tc>, window_params = [{transform_indices = @transform_0, window_bounds = array<i64: 16, 1152>}, {pipeline_mode = #tpu.pipeline_mode<synchronous>, transform_indices = @transform_1, window_bounds = array<i64: 1152, 128>}, {pipeline_mode = #tpu.pipeline_mode<synchronous>, transform_indices = @transform_2, window_bounds = array<i64: 1, 128>}, {transform_indices = @transform_3, window_bounds = array<i64: 16, 128>}]} {
    %c0 = arith.constant 0 : index
    %c0_0 = arith.constant 0 : index
    %0 = vector.load %arg1[%c0, %c0_0] : memref<16x1152xbf16, #tpu.memory_space<vmem>>, vector<16x1152xbf16>
    %c0_1 = arith.constant 0 : index
    %c0_2 = arith.constant 0 : index
    %1 = vector.load %arg2[%c0_1, %c0_2] : memref<1152x128xbf16, #tpu.memory_space<vmem>>, vector<1152x128xbf16>
    %cst = arith.constant dense<0.000000e+00> : vector<16x128xf32>
    %2 = tpu.matmul %0, %1, %cst {dimension_numbers = #tpu.dot_dimension_numbers<[1], [0], [0], [1], [0, 0, 1, 1], [], []>} : vector<16x1152xbf16>, vector<1152x128xbf16>, vector<16x128xf32> -> vector<16x128xf32>
    %c0_3 = arith.constant 0 : index
    %c0_4 = arith.constant 0 : index
    %3 = vector.load %arg3[%c0_3, %c0_4] : memref<1x128xf32, #tpu.memory_space<vmem>>, vector<1x128xf32>
    %4 = vector.broadcast %3 : vector<1x128xf32> to vector<16x128xf32>
    %5 = arith.addf %2, %4 : vector<16x128xf32>
    %c0_5 = arith.constant 0 : index
    %c0_6 = arith.constant 0 : index
    %6 = vector.load %arg4[%c0_5, %c0_6] : memref<16x128xf32, #tpu.memory_space<vmem>>, vector<16x128xf32>
    tpu.vector_store %arg4[%c0_5, %c0_6], %5 {strides = array<i32>} : memref<16x128xf32, #tpu.memory_space<vmem>>, vector<16x128xf32>,
    return
  }
  func.func @transform_0(%arg0: i32) -> (i32, i32) {
    %c0_i32 = arith.constant 0 : i32
    %c0_i32_0 = arith.constant 0 : i32
    return %arg0, %c0_i32 : i32, i32
  }
  func.func @transform_1(%arg0: i32) -> (i32, i32) {
    %c0_i32 = arith.constant 0 : i32
    %c0_i32_0 = arith.constant 0 : i32
    %c0_i32_1 = arith.constant 0 : i32
    return %c0_i32, %c0_i32_0 : i32, i32
  }
  func.func @transform_2(%arg0: i32) -> (i32, i32) {
    %c0_i32 = arith.constant 0 : i32
    %c0_i32_0 = arith.constant 0 : i32
    %c0_i32_1 = arith.constant 0 : i32
    return %c0_i32, %c0_i32_0 : i32, i32
  }
  func.func @transform_3(%arg0: i32) -> (i32, i32) {
    %c0_i32 = arith.constant 0 : i32
    %c0_i32_0 = arith.constant 0 : i32
    return %arg0, %c0_i32 : i32, i32
  }
}

module attributes {stable_mosaic.version = 11 : i64} {
  func.func @_gemm_bias_kernel(%arg0: i32, %arg1: memref<16x512xbf16, #tpu.memory_space<vmem>>, %arg2: memref<512x512xbf16, #tpu.memory_space<vmem>>, %arg3: memref<1x512xf32, #tpu.memory_space<vmem>>, %arg4: memref<16x512xf32, #tpu.memory_space<vmem>>) attributes {dimension_semantics = [#tpu.dimension_semantics<parallel>], iteration_bounds = array<i64: 1>, scalar_prefetch = 0 : i64, scratch_operands = 0 : i64, tpu.core_type = #tpu.core_type<tc>, window_params = [{transform_indices = @transform_0, window_bounds = array<i64: 16, 512>}, {pipeline_mode = #tpu.pipeline_mode<synchronous>, transform_indices = @transform_1, window_bounds = array<i64: 512, 512>}, {pipeline_mode = #tpu.pipeline_mode<synchronous>, transform_indices = @transform_2, window_bounds = array<i64: 1, 512>}, {transform_indices = @transform_3, window_bounds = array<i64: 16, 512>}]} {
    %c0 = arith.constant 0 : index
    %c0_0 = arith.constant 0 : index
    %0 = vector.load %arg1[%c0, %c0_0] : memref<16x512xbf16, #tpu.memory_space<vmem>>, vector<16x512xbf16>
    %c0_1 = arith.constant 0 : index
    %c0_2 = arith.constant 0 : index
    %1 = vector.load %arg2[%c0_1, %c0_2] : memref<512x512xbf16, #tpu.memory_space<vmem>>, vector<512x512xbf16>
    %cst = arith.constant dense<0.000000e+00> : vector<16x512xf32>
    %2 = tpu.matmul %0, %1, %cst {dimension_numbers = #tpu.dot_dimension_numbers<[1], [0], [0], [1], [0, 0, 1, 1], [], []>} : vector<16x512xbf16>, vector<512x512xbf16>, vector<16x512xf32> -> vector<16x512xf32>
    %c0_3 = arith.constant 0 : index
    %c0_4 = arith.constant 0 : index
    %3 = vector.load %arg3[%c0_3, %c0_4] : memref<1x512xf32, #tpu.memory_space<vmem>>, vector<1x512xf32>
    %4 = vector.broadcast %3 : vector<1x512xf32> to vector<16x512xf32>
    %5 = arith.addf %2, %4 : vector<16x512xf32>
    %cst_5 = arith.constant 0.000000e+00 : f32
    %6 = vector.broadcast %cst_5 : f32 to vector<16x512xf32>
    %7 = arith.maximumf %5, %6 : vector<16x512xf32>
    %c0_6 = arith.constant 0 : index
    %c0_7 = arith.constant 0 : index
    %8 = vector.load %arg4[%c0_6, %c0_7] : memref<16x512xf32, #tpu.memory_space<vmem>>, vector<16x512xf32>
    tpu.vector_store %arg4[%c0_6, %c0_7], %7 {strides = array<i32>} : memref<16x512xf32, #tpu.memory_space<vmem>>, vector<16x512xf32>,
    return
  }
  func.func @transform_0(%arg0: i32) -> (i32, i32) {
    %c0_i32 = arith.constant 0 : i32
    %c0_i32_0 = arith.constant 0 : i32
    return %arg0, %c0_i32 : i32, i32
  }
  func.func @transform_1(%arg0: i32) -> (i32, i32) {
    %c0_i32 = arith.constant 0 : i32
    %c0_i32_0 = arith.constant 0 : i32
    %c0_i32_1 = arith.constant 0 : i32
    return %c0_i32, %c0_i32_0 : i32, i32
  }
  func.func @transform_2(%arg0: i32) -> (i32, i32) {
    %c0_i32 = arith.constant 0 : i32
    %c0_i32_0 = arith.constant 0 : i32
    %c0_i32_1 = arith.constant 0 : i32
    return %c0_i32, %c0_i32_0 : i32, i32
  }
  func.func @transform_3(%arg0: i32) -> (i32, i32) {
    %c0_i32 = arith.constant 0 : i32
    %c0_i32_0 = arith.constant 0 : i32
    return %arg0, %c0_i32 : i32, i32
  }
}

module attributes {stable_mosaic.version = 11 : i64} {
  func.func @_gaussian_conditional_kernel(%arg0: i32, %arg1: memref<32x128xf32, #tpu.memory_space<vmem>>, %arg2: memref<32x128xf32, #tpu.memory_space<vmem>>, %arg3: memref<32x128xf32, #tpu.memory_space<vmem>>, %arg4: memref<32x128xf32, #tpu.memory_space<vmem>>, %arg5: memref<32x128xf32, #tpu.memory_space<vmem>>) attributes {dimension_semantics = [#tpu.dimension_semantics<parallel>], iteration_bounds = array<i64: 1>, scalar_prefetch = 0 : i64, scratch_operands = 0 : i64, tpu.core_type = #tpu.core_type<tc>, window_params = [{transform_indices = @transform_0, window_bounds = array<i64: 32, 128>}, {transform_indices = @transform_1, window_bounds = array<i64: 32, 128>}, {transform_indices = @transform_2, window_bounds = array<i64: 32, 128>}, {transform_indices = @transform_3, window_bounds = array<i64: 32, 128>}, {transform_indices = @transform_4, window_bounds = array<i64: 32, 128>}]} {
    %c0 = arith.constant 0 : index
    %c0_0 = arith.constant 0 : index
    %0 = vector.load %arg1[%c0, %c0_0] : memref<32x128xf32, #tpu.memory_space<vmem>>, vector<32x128xf32>
    %c0_1 = arith.constant 0 : index
    %c0_2 = arith.constant 0 : index
    %1 = vector.load %arg3[%c0_1, %c0_2] : memref<32x128xf32, #tpu.memory_space<vmem>>, vector<32x128xf32>
    %c0_3 = arith.constant 0 : index
    %c0_4 = arith.constant 0 : index
    %2 = vector.load %arg2[%c0_3, %c0_4] : memref<32x128xf32, #tpu.memory_space<vmem>>, vector<32x128xf32>
    %cst = arith.constant 1.100000e-01 : f32
    %3 = vector.broadcast %cst : f32 to vector<32x128xf32>
    %4 = arith.maximumf %2, %3 : vector<32x128xf32>
    %5 = tpu.reciprocal %4 {approx = true} : vector<32x128xf32> -> vector<32x128xf32>
    %6 = arith.subf %0, %1 : vector<32x128xf32>
    %7 = math.roundeven %6 : vector<32x128xf32>
    %8 = arith.addf %7, %1 : vector<32x128xf32>
    %9 = arith.subf %8, %1 : vector<32x128xf32>
    %10 = math.absf %9 : vector<32x128xf32>
    %cst_5 = arith.constant 5.000000e-01 : f32
    %11 = vector.broadcast %cst_5 : f32 to vector<32x128xf32>
    %12 = arith.subf %11, %10 : vector<32x128xf32>
    %13 = arith.mulf %12, %5 : vector<32x128xf32>
    %cst_6 = arith.constant 0.707106769 : f32
    %14 = vector.broadcast %cst_6 : f32 to vector<32x128xf32>
    %15 = arith.mulf %13, %14 : vector<32x128xf32>
    %cst_7 = arith.constant 0.000000e+00 : f32
    %16 = vector.broadcast %cst_7 : f32 to vector<32x128xf32>
    %17 = arith.cmpf oge, %15, %16 : vector<32x128xf32>
    %cst_8 = arith.constant 1.000000e+00 : f32
    %cst_9 = arith.constant -1.000000e+00 : f32
    %18 = vector.broadcast %cst_8 : f32 to vector<32x128xf32>
    %19 = vector.broadcast %cst_9 : f32 to vector<32x128xf32>
    %20 = arith.select %17, %18, %19 : vector<32x128xi1>, vector<32x128xf32>
    %21 = math.absf %15 : vector<32x128xf32>
    %cst_10 = arith.constant 0.327591091 : f32
    %22 = vector.broadcast %cst_10 : f32 to vector<32x128xf32>
    %23 = arith.mulf %22, %21 : vector<32x128xf32>
    %cst_11 = arith.constant 1.000000e+00 : f32
    %24 = vector.broadcast %cst_11 : f32 to vector<32x128xf32>
    %25 = arith.addf %24, %23 : vector<32x128xf32>
    %26 = tpu.reciprocal %25 {approx = true} : vector<32x128xf32> -> vector<32x128xf32>
    %cst_12 = arith.constant 1.06140542 : f32
    %27 = vector.broadcast %cst_12 : f32 to vector<32x128xf32>
    %28 = arith.mulf %27, %26 : vector<32x128xf32>
    %cst_13 = arith.constant -1.45315206 : f32
    %29 = vector.broadcast %cst_13 : f32 to vector<32x128xf32>
    %30 = arith.addf %28, %29 : vector<32x128xf32>
    %31 = arith.mulf %30, %26 : vector<32x128xf32>
    %cst_14 = arith.constant 1.42141378 : f32
    %32 = vector.broadcast %cst_14 : f32 to vector<32x128xf32>
    %33 = arith.addf %31, %32 : vector<32x128xf32>
    %34 = arith.mulf %33, %26 : vector<32x128xf32>
    %cst_15 = arith.constant -0.284496725 : f32
    %35 = vector.broadcast %cst_15 : f32 to vector<32x128xf32>
    %36 = arith.addf %34, %35 : vector<32x128xf32>
    %37 = arith.mulf %36, %26 : vector<32x128xf32>
    %cst_16 = arith.constant 0.254829586 : f32
    %38 = vector.broadcast %cst_16 : f32 to vector<32x128xf32>
    %39 = arith.addf %37, %38 : vector<32x128xf32>
    %40 = arith.mulf %39, %26 : vector<32x128xf32>
    %cst_17 = arith.constant 0.000000e+00 : f32
    %41 = vector.broadcast %cst_17 : f32 to vector<32x128xf32>
    %42 = arith.subf %41, %21 : vector<32x128xf32>
    %43 = arith.mulf %42, %21 : vector<32x128xf32>
    %44 = math.exp %43 : vector<32x128xf32>
    %45 = arith.mulf %40, %44 : vector<32x128xf32>
    %cst_18 = arith.constant 1.000000e+00 : f32
    %46 = vector.broadcast %cst_18 : f32 to vector<32x128xf32>
    %47 = arith.subf %46, %45 : vector<32x128xf32>
    %48 = arith.mulf %20, %47 : vector<32x128xf32>
    %cst_19 = arith.constant 1.000000e+00 : f32
    %49 = vector.broadcast %cst_19 : f32 to vector<32x128xf32>
    %50 = arith.addf %49, %48 : vector<32x128xf32>
    %cst_20 = arith.constant 5.000000e-01 : f32
    %51 = vector.broadcast %cst_20 : f32 to vector<32x128xf32>
    %52 = arith.mulf %51, %50 : vector<32x128xf32>
    %cst_21 = arith.constant -5.000000e-01 : f32
    %53 = vector.broadcast %cst_21 : f32 to vector<32x128xf32>
    %54 = arith.subf %53, %10 : vector<32x128xf32>
    %55 = arith.mulf %54, %5 : vector<32x128xf32>
    %cst_22 = arith.constant 0.707106769 : f32
    %56 = vector.broadcast %cst_22 : f32 to vector<32x128xf32>
    %57 = arith.mulf %55, %56 : vector<32x128xf32>
    %cst_23 = arith.constant 0.000000e+00 : f32
    %58 = vector.broadcast %cst_23 : f32 to vector<32x128xf32>
    %59 = arith.cmpf oge, %57, %58 : vector<32x128xf32>
    %cst_24 = arith.constant 1.000000e+00 : f32
    %cst_25 = arith.constant -1.000000e+00 : f32
    %60 = vector.broadcast %cst_24 : f32 to vector<32x128xf32>
    %61 = vector.broadcast %cst_25 : f32 to vector<32x128xf32>
    %62 = arith.select %59, %60, %61 : vector<32x128xi1>, vector<32x128xf32>
    %63 = math.absf %57 : vector<32x128xf32>
    %cst_26 = arith.constant 0.327591091 : f32
    %64 = vector.broadcast %cst_26 : f32 to vector<32x128xf32>
    %65 = arith.mulf %64, %63 : vector<32x128xf32>
    %cst_27 = arith.constant 1.000000e+00 : f32
    %66 = vector.broadcast %cst_27 : f32 to vector<32x128xf32>
    %67 = arith.addf %66, %65 : vector<32x128xf32>
    %68 = tpu.reciprocal %67 {approx = true} : vector<32x128xf32> -> vector<32x128xf32>
    %cst_28 = arith.constant 1.06140542 : f32
    %69 = vector.broadcast %cst_28 : f32 to vector<32x128xf32>
    %70 = arith.mulf %69, %68 : vector<32x128xf32>
    %cst_29 = arith.constant -1.45315206 : f32
    %71 = vector.broadcast %cst_29 : f32 to vector<32x128xf32>
    %72 = arith.addf %70, %71 : vector<32x128xf32>
    %73 = arith.mulf %72, %68 : vector<32x128xf32>
    %cst_30 = arith.constant 1.42141378 : f32
    %74 = vector.broadcast %cst_30 : f32 to vector<32x128xf32>
    %75 = arith.addf %73, %74 : vector<32x128xf32>
    %76 = arith.mulf %75, %68 : vector<32x128xf32>
    %cst_31 = arith.constant -0.284496725 : f32
    %77 = vector.broadcast %cst_31 : f32 to vector<32x128xf32>
    %78 = arith.addf %76, %77 : vector<32x128xf32>
    %79 = arith.mulf %78, %68 : vector<32x128xf32>
    %cst_32 = arith.constant 0.254829586 : f32
    %80 = vector.broadcast %cst_32 : f32 to vector<32x128xf32>
    %81 = arith.addf %79, %80 : vector<32x128xf32>
    %82 = arith.mulf %81, %68 : vector<32x128xf32>
    %cst_33 = arith.constant 0.000000e+00 : f32
    %83 = vector.broadcast %cst_33 : f32 to vector<32x128xf32>
    %84 = arith.subf %83, %63 : vector<32x128xf32>
    %85 = arith.mulf %84, %63 : vector<32x128xf32>
    %86 = math.exp %85 : vector<32x128xf32>
    %87 = arith.mulf %82, %86 : vector<32x128xf32>
    %cst_34 = arith.constant 1.000000e+00 : f32
    %88 = vector.broadcast %cst_34 : f32 to vector<32x128xf32>
    %89 = arith.subf %88, %87 : vector<32x128xf32>
    %90 = arith.mulf %62, %89 : vector<32x128xf32>
    %cst_35 = arith.constant 1.000000e+00 : f32
    %91 = vector.broadcast %cst_35 : f32 to vector<32x128xf32>
    %92 = arith.addf %91, %90 : vector<32x128xf32>
    %cst_36 = arith.constant 5.000000e-01 : f32
    %93 = vector.broadcast %cst_36 : f32 to vector<32x128xf32>
    %94 = arith.mulf %93, %92 : vector<32x128xf32>
    %95 = arith.subf %52, %94 : vector<32x128xf32>
    %c0_37 = arith.constant 0 : index
    %c0_38 = arith.constant 0 : index
    %96 = vector.load %arg4[%c0_37, %c0_38] : memref<32x128xf32, #tpu.memory_space<vmem>>, vector<32x128xf32>
    tpu.vector_store %arg4[%c0_37, %c0_38], %8 {strides = array<i32>} : memref<32x128xf32, #tpu.memory_space<vmem>>, vector<32x128xf32>,
    %cst_39 = arith.constant 9.99999971E-10 : f32
    %97 = vector.broadcast %cst_39 : f32 to vector<32x128xf32>
    %98 = arith.maximumf %95, %97 : vector<32x128xf32>
    %c0_40 = arith.constant 0 : index
    %c0_41 = arith.constant 0 : index
    %99 = vector.load %arg5[%c0_40, %c0_41] : memref<32x128xf32, #tpu.memory_space<vmem>>, vector<32x128xf32>
    tpu.vector_store %arg5[%c0_40, %c0_41], %98 {strides = array<i32>} : memref<32x128xf32, #tpu.memory_space<vmem>>, vector<32x128xf32>,
    return
  }
  func.func @transform_0(%arg0: i32) -> (i32, i32) {
    %c0_i32 = arith.constant 0 : i32
    %c0_i32_0 = arith.constant 0 : i32
    return %arg0, %c0_i32 : i32, i32
  }
  func.func @transform_1(%arg0: i32) -> (i32, i32) {
    %c0_i32 = arith.constant 0 : i32
    %c0_i32_0 = arith.constant 0 : i32
    return %arg0, %c0_i32 : i32, i32
  }
  func.func @transform_2(%arg0: i32) -> (i32, i32) {
    %c0_i32 = arith.constant 0 : i32
    %c0_i32_0 = arith.constant 0 : i32
    return %arg0, %c0_i32 : i32, i32
  }
  func.func @transform_3(%arg0: i32) -> (i32, i32) {
    %c0_i32 = arith.constant 0 : i32
    %c0_i32_0 = arith.constant 0 : i32
    return %arg0, %c0_i32 : i32, i32
  }
  func.func @transform_4(%arg0: i32) -> (i32, i32) {
    %c0_i32 = arith.constant 0 : i32
    %c0_i32_0 = arith.constant 0 : i32
    return %arg0, %c0_i32 : i32, i32
  }
}

module attributes {stable_mosaic.version = 11 : i64} {
  func.func @_gemm_bias_kernel(%arg0: i32, %arg1: memref<32x512xbf16, #tpu.memory_space<vmem>>, %arg2: memref<512x512xbf16, #tpu.memory_space<vmem>>, %arg3: memref<1x512xf32, #tpu.memory_space<vmem>>, %arg4: memref<32x512xf32, #tpu.memory_space<vmem>>) attributes {dimension_semantics = [#tpu.dimension_semantics<parallel>], iteration_bounds = array<i64: 1>, scalar_prefetch = 0 : i64, scratch_operands = 0 : i64, tpu.core_type = #tpu.core_type<tc>, window_params = [{transform_indices = @transform_0, window_bounds = array<i64: 32, 512>}, {pipeline_mode = #tpu.pipeline_mode<synchronous>, transform_indices = @transform_1, window_bounds = array<i64: 512, 512>}, {pipeline_mode = #tpu.pipeline_mode<synchronous>, transform_indices = @transform_2, window_bounds = array<i64: 1, 512>}, {transform_indices = @transform_3, window_bounds = array<i64: 32, 512>}]} {
    %c0 = arith.constant 0 : index
    %c0_0 = arith.constant 0 : index
    %0 = vector.load %arg1[%c0, %c0_0] : memref<32x512xbf16, #tpu.memory_space<vmem>>, vector<32x512xbf16>
    %c0_1 = arith.constant 0 : index
    %c0_2 = arith.constant 0 : index
    %1 = vector.load %arg2[%c0_1, %c0_2] : memref<512x512xbf16, #tpu.memory_space<vmem>>, vector<512x512xbf16>
    %cst = arith.constant dense<0.000000e+00> : vector<32x512xf32>
    %2 = tpu.matmul %0, %1, %cst {dimension_numbers = #tpu.dot_dimension_numbers<[1], [0], [0], [1], [0, 0, 1, 1], [], []>} : vector<32x512xbf16>, vector<512x512xbf16>, vector<32x512xf32> -> vector<32x512xf32>
    %c0_3 = arith.constant 0 : index
    %c0_4 = arith.constant 0 : index
    %3 = vector.load %arg3[%c0_3, %c0_4] : memref<1x512xf32, #tpu.memory_space<vmem>>, vector<1x512xf32>
    %4 = vector.broadcast %3 : vector<1x512xf32> to vector<32x512xf32>
    %5 = arith.addf %2, %4 : vector<32x512xf32>
    %cst_5 = arith.constant 0.000000e+00 : f32
    %6 = vector.broadcast %cst_5 : f32 to vector<32x512xf32>
    %7 = arith.maximumf %5, %6 : vector<32x512xf32>
    %c0_6 = arith.constant 0 : index
    %c0_7 = arith.constant 0 : index
    %8 = vector.load %arg4[%c0_6, %c0_7] : memref<32x512xf32, #tpu.memory_space<vmem>>, vector<32x512xf32>
    tpu.vector_store %arg4[%c0_6, %c0_7], %7 {strides = array<i32>} : memref<32x512xf32, #tpu.memory_space<vmem>>, vector<32x512xf32>,
    return
  }
  func.func @transform_0(%arg0: i32) -> (i32, i32) {
    %c0_i32 = arith.constant 0 : i32
    %c0_i32_0 = arith.constant 0 : i32
    return %arg0, %c0_i32 : i32, i32
  }
  func.func @transform_1(%arg0: i32) -> (i32, i32) {
    %c0_i32 = arith.constant 0 : i32
    %c0_i32_0 = arith.constant 0 : i32
    %c0_i32_1 = arith.constant 0 : i32
    return %c0_i32, %c0_i32_0 : i32, i32
  }
  func.func @transform_2(%arg0: i32) -> (i32, i32) {
    %c0_i32 = arith.constant 0 : i32
    %c0_i32_0 = arith.constant 0 : i32
    %c0_i32_1 = arith.constant 0 : i32
    return %c0_i32, %c0_i32_0 : i32, i32
  }
  func.func @transform_3(%arg0: i32) -> (i32, i32) {
    %c0_i32 = arith.constant 0 : i32
    %c0_i32_0 = arith.constant 0 : i32
    return %arg0, %c0_i32 : i32, i32
  }
}

module attributes {stable_mosaic.version = 11 : i64} {
  func.func @_gemm_bias_kernel(%arg0: i32, %arg1: memref<128x512xbf16, #tpu.memory_space<vmem>>, %arg2: memref<512x512xbf16, #tpu.memory_space<vmem>>, %arg3: memref<1x512xf32, #tpu.memory_space<vmem>>, %arg4: memref<128x512xf32, #tpu.memory_space<vmem>>) attributes {dimension_semantics = [#tpu.dimension_semantics<parallel>], iteration_bounds = array<i64: 1>, scalar_prefetch = 0 : i64, scratch_operands = 0 : i64, tpu.core_type = #tpu.core_type<tc>, window_params = [{transform_indices = @transform_0, window_bounds = array<i64: 128, 512>}, {pipeline_mode = #tpu.pipeline_mode<synchronous>, transform_indices = @transform_1, window_bounds = array<i64: 512, 512>}, {pipeline_mode = #tpu.pipeline_mode<synchronous>, transform_indices = @transform_2, window_bounds = array<i64: 1, 512>}, {transform_indices = @transform_3, window_bounds = array<i64: 128, 512>}]} {
    %c0 = arith.constant 0 : index
    %c0_0 = arith.constant 0 : index
    %0 = vector.load %arg1[%c0, %c0_0] : memref<128x512xbf16, #tpu.memory_space<vmem>>, vector<128x512xbf16>
    %c0_1 = arith.constant 0 : index
    %c0_2 = arith.constant 0 : index
    %1 = vector.load %arg2[%c0_1, %c0_2] : memref<512x512xbf16, #tpu.memory_space<vmem>>, vector<512x512xbf16>
    %cst = arith.constant dense<0.000000e+00> : vector<128x512xf32>
    %2 = tpu.matmul %0, %1, %cst {dimension_numbers = #tpu.dot_dimension_numbers<[1], [0], [0], [1], [0, 0, 1, 1], [], []>} : vector<128x512xbf16>, vector<512x512xbf16>, vector<128x512xf32> -> vector<128x512xf32>
    %c0_3 = arith.constant 0 : index
    %c0_4 = arith.constant 0 : index
    %3 = vector.load %arg3[%c0_3, %c0_4] : memref<1x512xf32, #tpu.memory_space<vmem>>, vector<1x512xf32>
    %4 = vector.broadcast %3 : vector<1x512xf32> to vector<128x512xf32>
    %5 = arith.addf %2, %4 : vector<128x512xf32>
    %c0_5 = arith.constant 0 : index
    %c0_6 = arith.constant 0 : index
    %6 = vector.load %arg4[%c0_5, %c0_6] : memref<128x512xf32, #tpu.memory_space<vmem>>, vector<128x512xf32>
    tpu.vector_store %arg4[%c0_5, %c0_6], %5 {strides = array<i32>} : memref<128x512xf32, #tpu.memory_space<vmem>>, vector<128x512xf32>,
    return
  }
  func.func @transform_0(%arg0: i32) -> (i32, i32) {
    %c0_i32 = arith.constant 0 : i32
    %c0_i32_0 = arith.constant 0 : i32
    return %arg0, %c0_i32 : i32, i32
  }
  func.func @transform_1(%arg0: i32) -> (i32, i32) {
    %c0_i32 = arith.constant 0 : i32
    %c0_i32_0 = arith.constant 0 : i32
    %c0_i32_1 = arith.constant 0 : i32
    return %c0_i32, %c0_i32_0 : i32, i32
  }
  func.func @transform_2(%arg0: i32) -> (i32, i32) {
    %c0_i32 = arith.constant 0 : i32
    %c0_i32_0 = arith.constant 0 : i32
    %c0_i32_1 = arith.constant 0 : i32
    return %c0_i32, %c0_i32_0 : i32, i32
  }
  func.func @transform_3(%arg0: i32) -> (i32, i32) {
    %c0_i32 = arith.constant 0 : i32
    %c0_i32_0 = arith.constant 0 : i32
    return %arg0, %c0_i32 : i32, i32
  }
}

</mosaic_0001>

<llo_original>
// kernel: compressor_forward.10
$region0: #{compressor_forward.10}
  #allocation0 [shape = 'u32[]', space=smem, size = 0x4, offset = 0x4, fixed_abs, tag = 'smem constant byte address 0x4 - core index']
  #allocation1 [shape = 'u32[144,128]{1,0:T(1,128)}', space=vmem, size = 0x12000, scoped, tag = 'internal scratch']
  %s0 = inlined_call_operand.vmem [shape: bf16[128,1152], index: 0, kind: input, shape index: {}]
  %s1 = inlined_call_operand.vmem [shape: bf16[1152,128], index: 1, kind: input, shape index: {}]
  %s2 = inlined_call_operand.vmem [shape: f32[1,128], index: 2, kind: input, shape index: {}]
  %s3 = inlined_call_operand.vmem [shape: f32[128,128], index: 3, kind: output, shape index: {}]
  %s4 = sld [smem:[#allocation0]]
  $region22: #{compressor_forward.10} parent=0
    _
  %s6 = ssub.s32 1, %s4
  %s7 = scalar_select 0, %s6, %s4
  // Predicated region
  $region2: #{compressor_forward.10} parent=0 // pred_check
    _
  $region3: #{compressor_forward.10} parent=0 // pred_check_branch
    %9 = sbr.rel (0) target = $region5
  $region4: #{compressor_forward.10} parent=0 // pred_region
    _
  $region5: #{compressor_forward.10} parent=0 // pred_fallthru
    _
  // Predicated region
  $region6: #{compressor_forward.10} parent=0 // pred_check
    _
  $region7: #{compressor_forward.10} parent=0 // pred_check_branch
    %11 = sbr.rel (0) target = $region9
  $region8: #{compressor_forward.10} parent=0 // pred_region
    _
  $region9: #{compressor_forward.10} parent=0 // pred_fallthru
    _
  // Predicated region
  $region10: #{compressor_forward.10} parent=0 // pred_check
    _
  $region11: #{compressor_forward.10} parent=0 // pred_check_branch
    %13 = sbr.rel (0) target = $region13
  $region12: #{compressor_forward.10} parent=0 // pred_region
    _
  $region13: #{compressor_forward.10} parent=0 // pred_fallthru
    _
  %v15 = vld [vmem:[%s0] sm:$0xff]
  %v16 = vld [vmem:[%s0 + $0x8] sm:$0xff]
  %v17 = vld [vmem:[%s0 + $0x10] sm:$0xff]
  %v18 = vld [vmem:[%s0 + $0x18] sm:$0xff]
  %v19 = vld [vmem:[%s0 + $0x20] sm:$0xf]
  %v20 = vld [vmem:[%s0 + $0x24] sm:$0xff]
  %v21 = vld [vmem:[%s0 + $0x2c] sm:$0xff]
  %v22 = vld [vmem:[%s0 + $0x34] sm:$0xff]
  %v23 = vld [vmem:[%s0 + $0x3c] sm:$0xff]
  %v24 = vld [vmem:[%s0 + $0x44] sm:$0xf]
  %v25 = vld [vmem:[%s0 + $0x48] sm:$0xff]
  %v26 = vld [vmem:[%s0 + $0x50] sm:$0xff]
  %v27 = vld [vmem:[%s0 + $0x58] sm:$0xff]
  %v28 = vld [vmem:[%s0 + $0x60] sm:$0xff]
  %v29 = vld [vmem:[%s0 + $0x68] sm:$0xf]
  %v30 = vld [vmem:[%s0 + $0x6c] sm:$0xff]
  %v31 = vld [vmem:[%s0 + $0x74] sm:$0xff]
  %v32 = vld [vmem:[%s0 + $0x7c] sm:$0xff]
  %v33 = vld [vmem:[%s0 + $0x84] sm:$0xff]
  %v34 = vld [vmem:[%s0 + $0x8c] sm:$0xf]
  %v35 = vld [vmem:[%s0 + $0x90] sm:$0xff]
  %v36 = vld [vmem:[%s0 + $0x98] sm:$0xff]
  %v37 = vld [vmem:[%s0 + $0xa0] sm:$0xff]
  %v38 = vld [vmem:[%s0 + $0xa8] sm:$0xff]
  %v39 = vld [vmem:[%s0 + $0xb0] sm:$0xf]
  %v40 = vld [vmem:[%s0 + $0xb4] sm:$0xff]
  %v41 = vld [vmem:[%s0 + $0xbc] sm:$0xff]
  %v42 = vld [vmem:[%s0 + $0xc4] sm:$0xff]
  %v43 = vld [vmem:[%s0 + $0xcc] sm:$0xff]
  %v44 = vld [vmem:[%s0 + $0xd4] sm:$0xf]
  %v45 = vld [vmem:[%s0 + $0xd8] sm:$0xff]
  %v46 = vld [vmem:[%s0 + $0xe0] sm:$0xff]
  %v47 = vld [vmem:[%s0 + $0xe8] sm:$0xff]
  %v48 = vld [vmem:[%s0 + $0xf0] sm:$0xff]
  %v49 = vld [vmem:[%s0 + $0xf8] sm:$0xf]
  %v50 = vld [vmem:[%s0 + $0xfc] sm:$0xff]
  %v51 = vld [vmem:[%s0 + $0x104] sm:$0xff]
  %v52 = vld [vmem:[%s0 + $0x10c] sm:$0xff]
  %v53 = vld [vmem:[%s0 + $0x114] sm:$0xff]
  %v54 = vld [vmem:[%s0 + $0x11c] sm:$0xf]
  %v55 = vld [vmem:[%s0 + $0x120] sm:$0xff]
  %v56 = vld [vmem:[%s0 + $0x128] sm:$0xff]
  %v57 = vld [vmem:[%s0 + $0x130] sm:$0xff]
  %v58 = vld [vmem:[%s0 + $0x138] sm:$0xff]
  %v59 = vld [vmem:[%s0 + $0x140] sm:$0xf]
  %v60 = vld [vmem:[%s0 + $0x144] sm:$0xff]
  %v61 = vld [vmem:[%s0 + $0x14c] sm:$0xff]
  %v62 = vld [vmem:[%s0 + $0x154] sm:$0xff]
  %v63 = vld [vmem:[%s0 + $0x15c] sm:$0xff]
  %v64 = vld [vmem:[%s0 + $0x164] sm:$0xf]
  %v65 = vld [vmem:[%s0 + $0x168] sm:$0xff]
  %v66 = vld [vmem:[%s0 + $0x170] sm:$0xff]
  %v67 = vld [vmem:[%s0 + $0x178] sm:$0xff]
  %v68 = vld [vmem:[%s0 + $0x180] sm:$0xff]
  %v69 = vld [vmem:[%s0 + $0x188] sm:$0xf]
  %v70 = vld [vmem:[%s0 + $0x18c] sm:$0xff]
  %v71 = vld [vmem:[%s0 + $0x194] sm:$0xff]
  %v72 = vld [vmem:[%s0 + $0x19c] sm:$0xff]
  %v73 = vld [vmem:[%s0 + $0x1a4] sm:$0xff]
  %v74 = vld [vmem:[%s0 + $0x1ac] sm:$0xf]
  %v75 = vld [vmem:[%s0 + $0x1b0] sm:$0xff]
  %v76 = vld [vmem:[%s0 + $0x1b8] sm:$0xff]
  %v77 = vld [vmem:[%s0 + $0x1c0] sm:$0xff]
  %v78 = vld [vmem:[%s0 + $0x1c8] sm:$0xff]
  %v79 = vld [vmem:[%s0 + $0x1d0] sm:$0xf]
  %v80 = vld [vmem:[%s0 + $0x1d4] sm:$0xff]
  %v81 = vld [vmem:[%s0 + $0x1dc] sm:$0xff]
  %v82 = vld [vmem:[%s0 + $0x1e4] sm:$0xff]
  %v83 = vld [vmem:[%s0 + $0x1ec] sm:$0xff]
  %v84 = vld [vmem:[%s0 + $0x1f4] sm:$0xf]
  %v85 = vld [vmem:[%s0 + $0x1f8] sm:$0xff]
  %v86 = vld [vmem:[%s0 + $0x200] sm:$0xff]
  %v87 = vld [vmem:[%s0 + $0x208] sm:$0xff]
  %v88 = vld [vmem:[%s0 + $0x210] sm:$0xff]
  %v89 = vld [vmem:[%s0 + $0x218] sm:$0xf]
  %v90 = vld [vmem:[%s0 + $0x21c] sm:$0xff]
  %v91 = vld [vmem:[%s0 + $0x224] sm:$0xff]
  %v92 = vld [vmem:[%s0 + $0x22c] sm:$0xff]
  %v93 = vld [vmem:[%s0 + $0x234] sm:$0xff]
  %v94 = vld [vmem:[%s0 + $0x23c] sm:$0xf]
  %v95 = vld [vmem:[%s1] sm:$0xf]
  %v96 = vld [vmem:[%s1 + $0x4] sm:$0xf]
  %v97 = vld [vmem:[%s1 + $0x8] sm:$0xf]
  %v98 = vld [vmem:[%s1 + $0xc] sm:$0xf]
  %v99 = vld [vmem:[%s1 + $0x10] sm:$0xf]
  %v100 = vld [vmem:[%s1 + $0x14] sm:$0xf]
  %v101 = vld [vmem:[%s1 + $0x18] sm:$0xf]
  %v102 = vld [vmem:[%s1 + $0x1c] sm:$0xf]
  %v103 = vld [vmem:[%s1 + $0x20] sm:$0xf]
  %v104 = vld [vmem:[%s1 + $0x24] sm:$0xf]
  %v105 = vld [vmem:[%s1 + $0x28] sm:$0xf]
  %v106 = vld [vmem:[%s1 + $0x2c] sm:$0xf]
  %v107 = vld [vmem:[%s1 + $0x30] sm:$0xf]
  %v108 = vld [vmem:[%s1 + $0x34] sm:$0xf]
  %v109 = vld [vmem:[%s1 + $0x38] sm:$0xf]
  %v110 = vld [vmem:[%s1 + $0x3c] sm:$0xf]
  %v111 = vld [vmem:[%s1 + $0x40] sm:$0xf]
  %v112 = vld [vmem:[%s1 + $0x44] sm:$0xf]
  %v113 = vld [vmem:[%s1 + $0x48] sm:$0xf]
  %v114 = vld [vmem:[%s1 + $0x4c] sm:$0xf]
  %v115 = vld [vmem:[%s1 + $0x50] sm:$0xf]
  %v116 = vld [vmem:[%s1 + $0x54] sm:$0xf]
  %v117 = vld [vmem:[%s1 + $0x58] sm:$0xf]
  %v118 = vld [vmem:[%s1 + $0x5c] sm:$0xf]
  %v119 = vld [vmem:[%s1 + $0x60] sm:$0xf]
  %v120 = vld [vmem:[%s1 + $0x64] sm:$0xf]
  %v121 = vld [vmem:[%s1 + $0x68] sm:$0xf]
  %v122 = vld [vmem:[%s1 + $0x6c] sm:$0xf]
  %v123 = vld [vmem:[%s1 + $0x70] sm:$0xf]
  %v124 = vld [vmem:[%s1 + $0x74] sm:$0xf]
  %v125 = vld [vmem:[%s1 + $0x78] sm:$0xf]
  %v126 = vld [vmem:[%s1 + $0x7c] sm:$0xf]
  %v127 = vld [vmem:[%s1 + $0x80] sm:$0xf]
  %v128 = vld [vmem:[%s1 + $0x84] sm:$0xf]
  %v129 = vld [vmem:[%s1 + $0x88] sm:$0xf]
  %v130 = vld [vmem:[%s1 + $0x8c] sm:$0xf]
  %v131 = vld [vmem:[%s1 + $0x90] sm:$0xf]
  %v132 = vld [vmem:[%s1 + $0x94] sm:$0xf]
  %v133 = vld [vmem:[%s1 + $0x98] sm:$0xf]
  %v134 = vld [vmem:[%s1 + $0x9c] sm:$0xf]
  %v135 = vld [vmem:[%s1 + $0xa0] sm:$0xf]
  %v136 = vld [vmem:[%s1 + $0xa4] sm:$0xf]
  %v137 = vld [vmem:[%s1 + $0xa8] sm:$0xf]
  %v138 = vld [vmem:[%s1 + $0xac] sm:$0xf]
  %v139 = vld [vmem:[%s1 + $0xb0] sm:$0xf]
  %v140 = vld [vmem:[%s1 + $0xb4] sm:$0xf]
  %v141 = vld [vmem:[%s1 + $0xb8] sm:$0xf]
  %v142 = vld [vmem:[%s1 + $0xbc] sm:$0xf]
  %v143 = vld [vmem:[%s1 + $0xc0] sm:$0xf]
  %v144 = vld [vmem:[%s1 + $0xc4] sm:$0xf]
  %v145 = vld [vmem:[%s1 + $0xc8] sm:$0xf]
  %v146 = vld [vmem:[%s1 + $0xcc] sm:$0xf]
  %v147 = vld [vmem:[%s1 + $0xd0] sm:$0xf]
  %v148 = vld [vmem:[%s1 + $0xd4] sm:$0xf]
  %v149 = vld [vmem:[%s1 + $0xd8] sm:$0xf]
  %v150 = vld [vmem:[%s1 + $0xdc] sm:$0xf]
  %v151 = vld [vmem:[%s1 + $0xe0] sm:$0xf]
  %v152 = vld [vmem:[%s1 + $0xe4] sm:$0xf]
  %v153 = vld [vmem:[%s1 + $0xe8] sm:$0xf]
  %v154 = vld [vmem:[%s1 + $0xec] sm:$0xf]
  %v155 = vld [vmem:[%s1 + $0xf0] sm:$0xf]
  %v156 = vld [vmem:[%s1 + $0xf4] sm:$0xf]
  %v157 = vld [vmem:[%s1 + $0xf8] sm:$0xf]
  %v158 = vld [vmem:[%s1 + $0xfc] sm:$0xf]
  %v159 = vld [vmem:[%s1 + $0x100] sm:$0xf]
  %v160 = vld [vmem:[%s1 + $0x104] sm:$0xf]
  %v161 = vld [vmem:[%s1 + $0x108] sm:$0xf]
  %v162 = vld [vmem:[%s1 + $0x10c] sm:$0xf]
  %v163 = vld [vmem:[%s1 + $0x110] sm:$0xf]
  %v164 = vld [vmem:[%s1 + $0x114] sm:$0xf]
  %v165 = vld [vmem:[%s1 + $0x118] sm:$0xf]
  %v166 = vld [vmem:[%s1 + $0x11c] sm:$0xf]
  %v167 = vld [vmem:[%s1 + $0x120] sm:$0xf]
  %v168 = vld [vmem:[%s1 + $0x124] sm:$0xf]
  %v169 = vld [vmem:[%s1 + $0x128] sm:$0xf]
  %v170 = vld [vmem:[%s1 + $0x12c] sm:$0xf]
  %v171 = vld [vmem:[%s1 + $0x130] sm:$0xf]
  %v172 = vld [vmem:[%s1 + $0x134] sm:$0xf]
  %v173 = vld [vmem:[%s1 + $0x138] sm:$0xf]
  %v174 = vld [vmem:[%s1 + $0x13c] sm:$0xf]
  %v175 = vld [vmem:[%s1 + $0x140] sm:$0xf]
  %v176 = vld [vmem:[%s1 + $0x144] sm:$0xf]
  %v177 = vld [vmem:[%s1 + $0x148] sm:$0xf]
  %v178 = vld [vmem:[%s1 + $0x14c] sm:$0xf]
  %v179 = vld [vmem:[%s1 + $0x150] sm:$0xf]
  %v180 = vld [vmem:[%s1 + $0x154] sm:$0xf]
  %v181 = vld [vmem:[%s1 + $0x158] sm:$0xf]
  %v182 = vld [vmem:[%s1 + $0x15c] sm:$0xf]
  %v183 = vld [vmem:[%s1 + $0x160] sm:$0xf]
  %v184 = vld [vmem:[%s1 + $0x164] sm:$0xf]
  %v185 = vld [vmem:[%s1 + $0x168] sm:$0xf]
  %v186 = vld [vmem:[%s1 + $0x16c] sm:$0xf]
  %v187 = vld [vmem:[%s1 + $0x170] sm:$0xf]
  %v188 = vld [vmem:[%s1 + $0x174] sm:$0xf]
  %v189 = vld [vmem:[%s1 + $0x178] sm:$0xf]
  %v190 = vld [vmem:[%s1 + $0x17c] sm:$0xf]
  %v191 = vld [vmem:[%s1 + $0x180] sm:$0xf]
  %v192 = vld [vmem:[%s1 + $0x184] sm:$0xf]
  %v193 = vld [vmem:[%s1 + $0x188] sm:$0xf]
  %v194 = vld [vmem:[%s1 + $0x18c] sm:$0xf]
  %v195 = vld [vmem:[%s1 + $0x190] sm:$0xf]
  %v196 = vld [vmem:[%s1 + $0x194] sm:$0xf]
  %v197 = vld [vmem:[%s1 + $0x198] sm:$0xf]
  %v198 = vld [vmem:[%s1 + $0x19c] sm:$0xf]
  %v199 = vld [vmem:[%s1 + $0x1a0] sm:$0xf]
  %v200 = vld [vmem:[%s1 + $0x1a4] sm:$0xf]
  %v201 = vld [vmem:[%s1 + $0x1a8] sm:$0xf]
  %v202 = vld [vmem:[%s1 + $0x1ac] sm:$0xf]
  %v203 = vld [vmem:[%s1 + $0x1b0] sm:$0xf]
  %v204 = vld [vmem:[%s1 + $0x1b4] sm:$0xf]
  %v205 = vld [vmem:[%s1 + $0x1b8] sm:$0xf]
  %v206 = vld [vmem:[%s1 + $0x1bc] sm:$0xf]
  %v207 = vld [vmem:[%s1 + $0x1c0] sm:$0xf]
  %v208 = vld [vmem:[%s1 + $0x1c4] sm:$0xf]
  %v209 = vld [vmem:[%s1 + $0x1c8] sm:$0xf]
  %v210 = vld [vmem:[%s1 + $0x1cc] sm:$0xf]
  %v211 = vld [vmem:[%s1 + $0x1d0] sm:$0xf]
  %v212 = vld [vmem:[%s1 + $0x1d4] sm:$0xf]
  %v213 = vld [vmem:[%s1 + $0x1d8] sm:$0xf]
  %v214 = vld [vmem:[%s1 + $0x1dc] sm:$0xf]
  %v215 = vld [vmem:[%s1 + $0x1e0] sm:$0xf]
  %v216 = vld [vmem:[%s1 + $0x1e4] sm:$0xf]
  %v217 = vld [vmem:[%s1 + $0x1e8] sm:$0xf]
  %v218 = vld [vmem:[%s1 + $0x1ec] sm:$0xf]
  %v219 = vld [vmem:[%s1 + $0x1f0] sm:$0xf]
  %v220 = vld [vmem:[%s1 + $0x1f4] sm:$0xf]
  %v221 = vld [vmem:[%s1 + $0x1f8] sm:$0xf]
  %v222 = vld [vmem:[%s1 + $0x1fc] sm:$0xf]
  %v223 = vld [vmem:[%s1 + $0x200] sm:$0xf]
  %v224 = vld [vmem:[%s1 + $0x204] sm:$0xf]
  %v225 = vld [vmem:[%s1 + $0x208] sm:$0xf]
  %v226 = vld [vmem:[%s1 + $0x20c] sm:$0xf]
  %v227 = vld [vmem:[%s1 + $0x210] sm:$0xf]
  %v228 = vld [vmem:[%s1 + $0x214] sm:$0xf]
  %v229 = vld [vmem:[%s1 + $0x218] sm:$0xf]
  %v230 = vld [vmem:[%s1 + $0x21c] sm:$0xf]
  %v231 = vld [vmem:[%s1 + $0x220] sm:$0xf]
  %v232 = vld [vmem:[%s1 + $0x224] sm:$0xf]
  %v233 = vld [vmem:[%s1 + $0x228] sm:$0xf]
  %v234 = vld [vmem:[%s1 + $0x22c] sm:$0xf]
  %v235 = vld [vmem:[%s1 + $0x230] sm:$0xf]
  %v236 = vld [vmem:[%s1 + $0x234] sm:$0xf]
  %v237 = vld [vmem:[%s1 + $0x238] sm:$0xf]
  %v238 = vld [vmem:[%s1 + $0x23c] sm:$0xf]
  %v239 = vld [vmem:[%s2] sm:$0x1]
  %v241 = vlaneseq
  %v242 = vshrl.u32 %v241, 7
  %v243 = vsub.s32 0, %v242
  %v244 = vrot.slane %v239, %v243
  %v326 = vunpack.c.l.b16 %v15
  %v327 = vunpack.c.h.b16 %v15
  %v328 = vunpack.c.l.b16 %v16
  %v329 = vunpack.c.h.b16 %v16
  %v330 = vunpack.c.l.b16 %v17
  %v331 = vunpack.c.h.b16 %v17
  %v332 = vunpack.c.l.b16 %v18
  %v333 = vunpack.c.h.b16 %v18
  %v334 = vunpack.c.l.b16 %v19
  %v335 = vunpack.c.l.b16 %v20
  %v336 = vunpack.c.h.b16 %v20
  %v337 = vunpack.c.l.b16 %v21
  %v338 = vunpack.c.h.b16 %v21
  %v339 = vunpack.c.l.b16 %v22
  %v340 = vunpack.c.h.b16 %v22
  %v341 = vunpack.c.l.b16 %v23
  %v342 = vunpack.c.h.b16 %v23
  %v343 = vunpack.c.l.b16 %v24
  %v344 = vunpack.c.l.b16 %v25
  %v345 = vunpack.c.h.b16 %v25
  %v346 = vunpack.c.l.b16 %v26
  %v347 = vunpack.c.h.b16 %v26
  %v348 = vunpack.c.l.b16 %v27
  %v349 = vunpack.c.h.b16 %v27
  %v350 = vunpack.c.l.b16 %v28
  %v351 = vunpack.c.h.b16 %v28
  %v352 = vunpack.c.l.b16 %v29
  %v353 = vunpack.c.l.b16 %v30
  %v354 = vunpack.c.h.b16 %v30
  %v355 = vunpack.c.l.b16 %v31
  %v356 = vunpack.c.h.b16 %v31
  %v357 = vunpack.c.l.b16 %v32
  %v358 = vunpack.c.h.b16 %v32
  %v359 = vunpack.c.l.b16 %v33
  %v360 = vunpack.c.h.b16 %v33
  %v361 = vunpack.c.l.b16 %v34
  %v362 = vunpack.c.l.b16 %v35
  %v363 = vunpack.c.h.b16 %v35
  %v364 = vunpack.c.l.b16 %v36
  %v365 = vunpack.c.h.b16 %v36
  %v366 = vunpack.c.l.b16 %v37
  %v367 = vunpack.c.h.b16 %v37
  %v368 = vunpack.c.l.b16 %v38
  %v369 = vunpack.c.h.b16 %v38
  %v370 = vunpack.c.l.b16 %v39
  %v371 = vunpack.c.l.b16 %v40
  %v372 = vunpack.c.h.b16 %v40
  %v373 = vunpack.c.l.b16 %v41
  %v374 = vunpack.c.h.b16 %v41
  %v375 = vunpack.c.l.b16 %v42
  %v376 = vunpack.c.h.b16 %v42
  %v377 = vunpack.c.l.b16 %v43
  %v378 = vunpack.c.h.b16 %v43
  %v379 = vunpack.c.l.b16 %v44
  %v380 = vunpack.c.l.b16 %v45
  %v381 = vunpack.c.h.b16 %v45
  %v382 = vunpack.c.l.b16 %v46
  %v383 = vunpack.c.h.b16 %v46
  %v384 = vunpack.c.l.b16 %v47
  %v385 = vunpack.c.h.b16 %v47
  %v386 = vunpack.c.l.b16 %v48
  %v387 = vunpack.c.h.b16 %v48
  %v388 = vunpack.c.l.b16 %v49
  %v389 = vunpack.c.l.b16 %v50
  %v390 = vunpack.c.h.b16 %v50
  %v391 = vunpack.c.l.b16 %v51
  %v392 = vunpack.c.h.b16 %v51
  %v393 = vunpack.c.l.b16 %v52
  %v394 = vunpack.c.h.b16 %v52
  %v395 = vunpack.c.l.b16 %v53
  %v396 = vunpack.c.h.b16 %v53
  %v397 = vunpack.c.l.b16 %v54
  %v398 = vunpack.c.l.b16 %v55
  %v399 = vunpack.c.h.b16 %v55
  %v400 = vunpack.c.l.b16 %v56
  %v401 = vunpack.c.h.b16 %v56
  %v402 = vunpack.c.l.b16 %v57
  %v403 = vunpack.c.h.b16 %v57
  %v404 = vunpack.c.l.b16 %v58
  %v405 = vunpack.c.h.b16 %v58
  %v406 = vunpack.c.l.b16 %v59
  %v407 = vunpack.c.l.b16 %v60
  %v408 = vunpack.c.h.b16 %v60
  %v409 = vunpack.c.l.b16 %v61
  %v410 = vunpack.c.h.b16 %v61
  %v411 = vunpack.c.l.b16 %v62
  %v412 = vunpack.c.h.b16 %v62
  %v413 = vunpack.c.l.b16 %v63
  %v414 = vunpack.c.h.b16 %v63
  %v415 = vunpack.c.l.b16 %v64
  %v416 = vunpack.c.l.b16 %v65
  %v417 = vunpack.c.h.b16 %v65
  %v418 = vunpack.c.l.b16 %v66
  %v419 = vunpack.c.h.b16 %v66
  %v420 = vunpack.c.l.b16 %v67
  %v421 = vunpack.c.h.b16 %v67
  %v422 = vunpack.c.l.b16 %v68
  %v423 = vunpack.c.h.b16 %v68
  %v424 = vunpack.c.l.b16 %v69
  %v425 = vunpack.c.l.b16 %v70
  %v426 = vunpack.c.h.b16 %v70
  %v427 = vunpack.c.l.b16 %v71
  %v428 = vunpack.c.h.b16 %v71
  %v429 = vunpack.c.l.b16 %v72
  %v430 = vunpack.c.h.b16 %v72
  %v431 = vunpack.c.l.b16 %v73
  %v432 = vunpack.c.h.b16 %v73
  %v433 = vunpack.c.l.b16 %v74
  %v434 = vunpack.c.l.b16 %v75
  %v435 = vunpack.c.h.b16 %v75
  %v436 = vunpack.c.l.b16 %v76
  %v437 = vunpack.c.h.b16 %v76
  %v438 = vunpack.c.l.b16 %v77
  %v439 = vunpack.c.h.b16 %v77
  %v440 = vunpack.c.l.b16 %v78
  %v441 = vunpack.c.h.b16 %v78
  %v442 = vunpack.c.l.b16 %v79
  %v443 = vunpack.c.l.b16 %v80
  %v444 = vunpack.c.h.b16 %v80
  %v445 = vunpack.c.l.b16 %v81
  %v446 = vunpack.c.h.b16 %v81
  %v447 = vunpack.c.l.b16 %v82
  %v448 = vunpack.c.h.b16 %v82
  %v449 = vunpack.c.l.b16 %v83
  %v450 = vunpack.c.h.b16 %v83
  %v451 = vunpack.c.l.b16 %v84
  %v452 = vunpack.c.l.b16 %v85
  %v453 = vunpack.c.h.b16 %v85
  %v454 = vunpack.c.l.b16 %v86
  %v455 = vunpack.c.h.b16 %v86
  %v456 = vunpack.c.l.b16 %v87
  %v457 = vunpack.c.h.b16 %v87
  %v458 = vunpack.c.l.b16 %v88
  %v459 = vunpack.c.h.b16 %v88
  %v460 = vunpack.c.l.b16 %v89
  %v461 = vunpack.c.l.b16 %v90
  %v462 = vunpack.c.h.b16 %v90
  %v463 = vunpack.c.l.b16 %v91
  %v464 = vunpack.c.h.b16 %v91
  %v465 = vunpack.c.l.b16 %v92
  %v466 = vunpack.c.h.b16 %v92
  %v467 = vunpack.c.l.b16 %v93
  %v468 = vunpack.c.h.b16 %v93
  %v469 = vunpack.c.l.b16 %v94
  %v470 = vpack.c.b16 %v335, %v326
  %v471 = vpack.c.b16 %v336, %v327
  %v472 = vpack.c.b16 %v337, %v328
  %v473 = vpack.c.b16 %v338, %v329
  %v474 = vpack.c.b16 %v339, %v330
  %v475 = vpack.c.b16 %v340, %v331
  %v476 = vpack.c.b16 %v341, %v332
  %v477 = vpack.c.b16 %v342, %v333
  %v478 = vpack.c.b16 %v343, %v334
  %v479 = vpack.c.b16 %v353, %v344
  %v480 = vpack.c.b16 %v354, %v345
  %v481 = vpack.c.b16 %v355, %v346
  %v482 = vpack.c.b16 %v356, %v347
  %v483 = vpack.c.b16 %v357, %v348
  %v484 = vpack.c.b16 %v358, %v349
  %v485 = vpack.c.b16 %v359, %v350
  %v486 = vpack.c.b16 %v360, %v351
  %v487 = vpack.c.b16 %v361, %v352
  %v488 = vpack.c.b16 %v371, %v362
  %v489 = vpack.c.b16 %v372, %v363
  %v490 = vpack.c.b16 %v373, %v364
  %v491 = vpack.c.b16 %v374, %v365
  %v492 = vpack.c.b16 %v375, %v366
  %v493 = vpack.c.b16 %v376, %v367
  %v494 = vpack.c.b16 %v377, %v368
  %v495 = vpack.c.b16 %v378, %v369
  %v496 = vpack.c.b16 %v379, %v370
  %v497 = vpack.c.b16 %v389, %v380
  %v498 = vpack.c.b16 %v390, %v381
  %v499 = vpack.c.b16 %v391, %v382
  %v500 = vpack.c.b16 %v392, %v383
  %v501 = vpack.c.b16 %v393, %v384
  %v502 = vpack.c.b16 %v394, %v385
  %v503 = vpack.c.b16 %v395, %v386
  %v504 = vpack.c.b16 %v396, %v387
  %v505 = vpack.c.b16 %v397, %v388
  %v506 = vpack.c.b16 %v407, %v398
  %v507 = vpack.c.b16 %v408, %v399
  %v508 = vpack.c.b16 %v409, %v400
  %v509 = vpack.c.b16 %v410, %v401
  %v510 = vpack.c.b16 %v411, %v402
  %v511 = vpack.c.b16 %v412, %v403
  %v512 = vpack.c.b16 %v413, %v404
  %v513 = vpack.c.b16 %v414, %v405
  %v514 = vpack.c.b16 %v415, %v406
  %v515 = vpack.c.b16 %v425, %v416
  %v516 = vpack.c.b16 %v426, %v417
  %v517 = vpack.c.b16 %v427, %v418
  %v518 = vpack.c.b16 %v428, %v419
  %v519 = vpack.c.b16 %v429, %v420
  %v520 = vpack.c.b16 %v430, %v421
  %v521 = vpack.c.b16 %v431, %v422
  %v522 = vpack.c.b16 %v432, %v423
  %v523 = vpack.c.b16 %v433, %v424
  %v524 = vpack.c.b16 %v443, %v434
  %v525 = vpack.c.b16 %v444, %v435
  %v526 = vpack.c.b16 %v445, %v436
  %v527 = vpack.c.b16 %v446, %v437
  %v528 = vpack.c.b16 %v447, %v438
  %v529 = vpack.c.b16 %v448, %v439
  %v530 = vpack.c.b16 %v449, %v440
  %v531 = vpack.c.b16 %v450, %v441
  %v532 = vpack.c.b16 %v451, %v442
  %v533 = vpack.c.b16 %v461, %v452
  %v534 = vpack.c.b16 %v462, %v453
  %v535 = vpack.c.b16 %v463, %v454
  %v536 = vpack.c.b16 %v464, %v455
  %v537 = vpack.c.b16 %v465, %v456
  %v538 = vpack.c.b16 %v466, %v457
  %v539 = vpack.c.b16 %v467, %v458
  %v540 = vpack.c.b16 %v468, %v459
  %v541 = vpack.c.b16 %v469, %v460
  %v758 = vunpack.c.l.b16 %v95
  %v759 = vunpack.c.l.b16 %v96
  %v760 = vunpack.c.l.b16 %v97
  %v761 = vunpack.c.l.b16 %v98
  %v762 = vunpack.c.l.b16 %v99
  %v763 = vunpack.c.l.b16 %v100
  %v764 = vunpack.c.l.b16 %v101
  %v765 = vunpack.c.l.b16 %v102
  %v766 = vunpack.c.l.b16 %v103
  %v767 = vunpack.c.l.b16 %v104
  %v768 = vunpack.c.l.b16 %v105
  %v769 = vunpack.c.l.b16 %v106
  %v770 = vunpack.c.l.b16 %v107
  %v771 = vunpack.c.l.b16 %v108
  %v772 = vunpack.c.l.b16 %v109
  %v773 = vunpack.c.l.b16 %v110
  %v774 = vunpack.c.l.b16 %v111
  %v775 = vunpack.c.l.b16 %v112
  %v776 = vunpack.c.l.b16 %v113
  %v777 = vunpack.c.l.b16 %v114
  %v778 = vunpack.c.l.b16 %v115
  %v779 = vunpack.c.l.b16 %v116
  %v780 = vunpack.c.l.b16 %v117
  %v781 = vunpack.c.l.b16 %v118
  %v782 = vunpack.c.l.b16 %v119
  %v783 = vunpack.c.l.b16 %v120
  %v784 = vunpack.c.l.b16 %v121
  %v785 = vunpack.c.l.b16 %v122
  %v786 = vunpack.c.l.b16 %v123
  %v787 = vunpack.c.l.b16 %v124
  %v788 = vunpack.c.l.b16 %v125
  %v789 = vunpack.c.l.b16 %v126
  %v790 = vunpack.c.l.b16 %v127
  %v791 = vunpack.c.l.b16 %v128
  %v792 = vunpack.c.l.b16 %v129
  %v793 = vunpack.c.l.b16 %v130
  %v794 = vunpack.c.l.b16 %v131
  %v795 = vunpack.c.l.b16 %v132
  %v796 = vunpack.c.l.b16 %v133
  %v797 = vunpack.c.l.b16 %v134
  %v798 = vunpack.c.l.b16 %v135
  %v799 = vunpack.c.l.b16 %v136
  %v800 = vunpack.c.l.b16 %v137
  %v801 = vunpack.c.l.b16 %v138
  %v802 = vunpack.c.l.b16 %v139
  %v803 = vunpack.c.l.b16 %v140
  %v804 = vunpack.c.l.b16 %v141
  %v805 = vunpack.c.l.b16 %v142
  %v806 = vunpack.c.l.b16 %v143
  %v807 = vunpack.c.l.b16 %v144
  %v808 = vunpack.c.l.b16 %v145
  %v809 = vunpack.c.l.b16 %v146
  %v810 = vunpack.c.l.b16 %v147
  %v811 = vunpack.c.l.b16 %v148
  %v812 = vunpack.c.l.b16 %v149
  %v813 = vunpack.c.l.b16 %v150
  %v814 = vunpack.c.l.b16 %v151
  %v815 = vunpack.c.l.b16 %v152
  %v816 = vunpack.c.l.b16 %v153
  %v817 = vunpack.c.l.b16 %v154
  %v818 = vunpack.c.l.b16 %v155
  %v819 = vunpack.c.l.b16 %v156
  %v820 = vunpack.c.l.b16 %v157
  %v821 = vunpack.c.l.b16 %v158
  %v822 = vunpack.c.l.b16 %v159
  %v823 = vunpack.c.l.b16 %v160
  %v824 = vunpack.c.l.b16 %v161
  %v825 = vunpack.c.l.b16 %v162
  %v826 = vunpack.c.l.b16 %v163
  %v827 = vunpack.c.l.b16 %v164
  %v828 = vunpack.c.l.b16 %v165
  %v829 = vunpack.c.l.b16 %v166
  %v830 = vunpack.c.l.b16 %v167
  %v831 = vunpack.c.l.b16 %v168
  %v832 = vunpack.c.l.b16 %v169
  %v833 = vunpack.c.l.b16 %v170
  %v834 = vunpack.c.l.b16 %v171
  %v835 = vunpack.c.l.b16 %v172
  %v836 = vunpack.c.l.b16 %v173
  %v837 = vunpack.c.l.b16 %v174
  %v838 = vunpack.c.l.b16 %v175
  %v839 = vunpack.c.l.b16 %v176
  %v840 = vunpack.c.l.b16 %v177
  %v841 = vunpack.c.l.b16 %v178
  %v842 = vunpack.c.l.b16 %v179
  %v843 = vunpack.c.l.b16 %v180
  %v844 = vunpack.c.l.b16 %v181
  %v845 = vunpack.c.l.b16 %v182
  %v846 = vunpack.c.l.b16 %v183
  %v847 = vunpack.c.l.b16 %v184
  %v848 = vunpack.c.l.b16 %v185
  %v849 = vunpack.c.l.b16 %v186
  %v850 = vunpack.c.l.b16 %v187
  %v851 = vunpack.c.l.b16 %v188
  %v852 = vunpack.c.l.b16 %v189
  %v853 = vunpack.c.l.b16 %v190
  %v854 = vunpack.c.l.b16 %v191
  %v855 = vunpack.c.l.b16 %v192
  %v856 = vunpack.c.l.b16 %v193
  %v857 = vunpack.c.l.b16 %v194
  %v858 = vunpack.c.l.b16 %v195
  %v859 = vunpack.c.l.b16 %v196
  %v860 = vunpack.c.l.b16 %v197
  %v861 = vunpack.c.l.b16 %v198
  %v862 = vunpack.c.l.b16 %v199
  %v863 = vunpack.c.l.b16 %v200
  %v864 = vunpack.c.l.b16 %v201
  %v865 = vunpack.c.l.b16 %v202
  %v866 = vunpack.c.l.b16 %v203
  %v867 = vunpack.c.l.b16 %v204
  %v868 = vunpack.c.l.b16 %v205
  %v869 = vunpack.c.l.b16 %v206
  %v870 = vunpack.c.l.b16 %v207
  %v871 = vunpack.c.l.b16 %v208
  %v872 = vunpack.c.l.b16 %v209
  %v873 = vunpack.c.l.b16 %v210
  %v874 = vunpack.c.l.b16 %v211
  %v875 = vunpack.c.l.b16 %v212
  %v876 = vunpack.c.l.b16 %v213
  %v877 = vunpack.c.l.b16 %v214
  %v878 = vunpack.c.l.b16 %v215
  %v879 = vunpack.c.l.b16 %v216
  %v880 = vunpack.c.l.b16 %v217
  %v881 = vunpack.c.l.b16 %v218
  %v882 = vunpack.c.l.b16 %v219
  %v883 = vunpack.c.l.b16 %v220
  %v884 = vunpack.c.l.b16 %v221
  %v885 = vunpack.c.l.b16 %v222
  %v886 = vunpack.c.l.b16 %v223
  %v887 = vunpack.c.l.b16 %v224
  %v888 = vunpack.c.l.b16 %v225
  %v889 = vunpack.c.l.b16 %v226
  %v890 = vunpack.c.l.b16 %v227
  %v891 = vunpack.c.l.b16 %v228
  %v892 = vunpack.c.l.b16 %v229
  %v893 = vunpack.c.l.b16 %v230
  %v894 = vunpack.c.l.b16 %v231
  %v895 = vunpack.c.l.b16 %v232
  %v896 = vunpack.c.l.b16 %v233
  %v897 = vunpack.c.l.b16 %v234
  %v898 = vunpack.c.l.b16 %v235
  %v899 = vunpack.c.l.b16 %v236
  %v900 = vunpack.c.l.b16 %v237
  %v901 = vunpack.c.l.b16 %v238
  %v902 = vpack.c.b16 %v759, %v758
  %v903 = vpack.c.b16 %v761, %v760
  %v904 = vpack.c.b16 %v763, %v762
  %v905 = vpack.c.b16 %v765, %v764
  %v906 = vpack.c.b16 %v767, %v766
  %v907 = vpack.c.b16 %v769, %v768
  %v908 = vpack.c.b16 %v771, %v770
  %v909 = vpack.c.b16 %v773, %v772
  %v910 = vpack.c.b16 %v775, %v774
  %v911 = vpack.c.b16 %v777, %v776
  %v912 = vpack.c.b16 %v779, %v778
  %v913 = vpack.c.b16 %v781, %v780
  %v914 = vpack.c.b16 %v783, %v782
  %v915 = vpack.c.b16 %v785, %v784
  %v916 = vpack.c.b16 %v787, %v786
  %v917 = vpack.c.b16 %v789, %v788
  %v918 = vpack.c.b16 %v791, %v790
  %v919 = vpack.c.b16 %v793, %v792
  %v920 = vpack.c.b16 %v795, %v794
  %v921 = vpack.c.b16 %v797, %v796
  %v922 = vpack.c.b16 %v799, %v798
  %v923 = vpack.c.b16 %v801, %v800
  %v924 = vpack.c.b16 %v803, %v802
  %v925 = vpack.c.b16 %v805, %v804
  %v926 = vpack.c.b16 %v807, %v806
  %v927 = vpack.c.b16 %v809, %v808
  %v928 = vpack.c.b16 %v811, %v810
  %v929 = vpack.c.b16 %v813, %v812
  %v930 = vpack.c.b16 %v815, %v814
  %v931 = vpack.c.b16 %v817, %v816
  %v932 = vpack.c.b16 %v819, %v818
  %v933 = vpack.c.b16 %v821, %v820
  %v934 = vpack.c.b16 %v823, %v822
  %v935 = vpack.c.b16 %v825, %v824
  %v936 = vpack.c.b16 %v827, %v826
  %v937 = vpack.c.b16 %v829, %v828
  %v938 = vpack.c.b16 %v831, %v830
  %v939 = vpack.c.b16 %v833, %v832
  %v940 = vpack.c.b16 %v835, %v834
  %v941 = vpack.c.b16 %v837, %v836
  %v942 = vpack.c.b16 %v839, %v838
  %v943 = vpack.c.b16 %v841, %v840
  %v944 = vpack.c.b16 %v843, %v842
  %v945 = vpack.c.b16 %v845, %v844
  %v946 = vpack.c.b16 %v847, %v846
  %v947 = vpack.c.b16 %v849, %v848
  %v948 = vpack.c.b16 %v851, %v850
  %v949 = vpack.c.b16 %v853, %v852
  %v950 = vpack.c.b16 %v855, %v854
  %v951 = vpack.c.b16 %v857, %v856
  %v952 = vpack.c.b16 %v859, %v858
  %v953 = vpack.c.b16 %v861, %v860
  %v954 = vpack.c.b16 %v863, %v862
  %v955 = vpack.c.b16 %v865, %v864
  %v956 = vpack.c.b16 %v867, %v866
  %v957 = vpack.c.b16 %v869, %v868
  %v958 = vpack.c.b16 %v871, %v870
  %v959 = vpack.c.b16 %v873, %v872
  %v960 = vpack.c.b16 %v875, %v874
  %v961 = vpack.c.b16 %v877, %v876
  %v962 = vpack.c.b16 %v879, %v878
  %v963 = vpack.c.b16 %v881, %v880
  %v964 = vpack.c.b16 %v883, %v882
  %v965 = vpack.c.b16 %v885, %v884
  %v966 = vpack.c.b16 %v887, %v886
  %v967 = vpack.c.b16 %v889, %v888
  %v968 = vpack.c.b16 %v891, %v890
  %v969 = vpack.c.b16 %v893, %v892
  %v970 = vpack.c.b16 %v895, %v894
  %v971 = vpack.c.b16 %v897, %v896
  %v972 = vpack.c.b16 %v899, %v898
  %v973 = vpack.c.b16 %v901, %v900
  %1046 = vmatprep.subr.bf16.mxu0 0
  %1047 = vmatpush1.bf16.msra.mxu0 %v909
  %1048 = vmatprep.subr.bf16.mxu0 0
  %1049 = vmatpush1.bf16.msra.mxu0 %v908
  %1050 = vmatprep.subr.bf16.mxu0 0
  %1051 = vmatpush1.bf16.msra.mxu0 %v907
  %1052 = vmatprep.subr.bf16.mxu0 0
  %1053 = vmatpush1.bf16.msra.mxu0 %v906
  %1054 = vmatprep.subr.bf16.mxu0 0
  %1055 = vmatpush1.bf16.msra.mxu0 %v905
  %1056 = vmatprep.subr.bf16.mxu0 0
  %1057 = vmatpush1.bf16.msra.mxu0 %v904
  %1058 = vmatprep.subr.bf16.mxu0 0
  %1059 = vmatpush1.bf16.msra.mxu0 %v903
  %1060 = vmatprep.subr.bf16.mxu0 0
  %1061 = vmatpush1.bf16.msra.mxu0 %v902
  %1062 = vmatprep.subr.bf16.mxu0 0
  %1063 = vmatpush2.bf16.msra.mxu0 %v917
  %1064 = vmatprep.subr.bf16.mxu0 0
  %1065 = vmatpush2.bf16.msra.mxu0 %v916
  %1066 = vmatprep.subr.bf16.mxu0 0
  %1067 = vmatpush2.bf16.msra.mxu0 %v915
  %1068 = vmatprep.subr.bf16.mxu0 0
  %1069 = vmatpush2.bf16.msra.mxu0 %v914
  %1070 = vmatprep.subr.bf16.mxu0 0
  %1071 = vmatpush2.bf16.msra.mxu0 %v913
  %1072 = vmatprep.subr.bf16.mxu0 0
  %1073 = vmatpush2.bf16.msra.mxu0 %v912
  %1074 = vmatprep.subr.bf16.mxu0 0
  %1075 = vmatpush2.bf16.msra.mxu0 %v911
  %1076 = vmatprep.subr.bf16.mxu0 0
  %1077 = vmatpush2.bf16.msra.mxu0 %v910
  %1078 = vmatprep.mubr.bf16.mxu0 %v471
  %1079 = vmatmul.mubr.bf16.gmra.mxu0 %v470
  %v1080 = vpop.f32.mrf.mxu0
  %v1081 = vadd.f32 %v244, %v1080
  %v1082 = vpop.f32.mrf.mxu0
  %v1083 = vpop.f32.mrf.mxu0
  %v1084 = vadd.f32 %v244, %v1083
  %v1085 = vpop.f32.mrf.mxu0
  %1086 = vmatprep.mubr.bf16.mxu0 %v480
  %1087 = vmatmul.mubr.bf16.gmra.mxu0 %v479
  %v1088 = vpop.f32.mrf.mxu0
  %v1089 = vadd.f32 %v244, %v1088
  %v1090 = vpop.f32.mrf.mxu0
  %v1091 = vpop.f32.mrf.mxu0
  %v1092 = vadd.f32 %v244, %v1091
  %v1093 = vpop.f32.mrf.mxu0
  %1094 = vmatprep.mubr.bf16.mxu0 %v489
  %1095 = vmatmul.mubr.bf16.gmra.mxu0 %v488
  %v1096 = vpop.f32.mrf.mxu0
  %v1097 = vadd.f32 %v244, %v1096
  %v1098 = vpop.f32.mrf.mxu0
  %v1099 = vpop.f32.mrf.mxu0
  %v1100 = vadd.f32 %v244, %v1099
  %v1101 = vpop.f32.mrf.mxu0
  %1102 = vmatprep.mubr.bf16.mxu0 %v498
  %1103 = vmatmul.mubr.bf16.gmra.mxu0 %v497
  %v1104 = vpop.f32.mrf.mxu0
  %v1105 = vadd.f32 %v244, %v1104
  %v1106 = vpop.f32.mrf.mxu0
  %v1107 = vpop.f32.mrf.mxu0
  %v1108 = vadd.f32 %v244, %v1107
  %v1109 = vpop.f32.mrf.mxu0
  %1110 = vmatprep.mubr.bf16.mxu0 %v507
  %1111 = vmatmul.mubr.bf16.gmra.mxu0 %v506
  %v1112 = vpop.f32.mrf.mxu0
  %v1113 = vadd.f32 %v244, %v1112
  %v1114 = vpop.f32.mrf.mxu0
  %v1115 = vpop.f32.mrf.mxu0
  %v1116 = vadd.f32 %v244, %v1115
  %v1117 = vpop.f32.mrf.mxu0
  %1118 = vmatprep.mubr.bf16.mxu0 %v516
  %1119 = vmatmul.mubr.bf16.gmra.mxu0 %v515
  %v1120 = vpop.f32.mrf.mxu0
  %v1121 = vadd.f32 %v244, %v1120
  %v1122 = vpop.f32.mrf.mxu0
  %v1123 = vpop.f32.mrf.mxu0
  %v1124 = vadd.f32 %v244, %v1123
  %v1125 = vpop.f32.mrf.mxu0
  %1126 = vmatprep.mubr.bf16.mxu0 %v525
  %1127 = vmatmul.mubr.bf16.gmra.mxu0 %v524
  %v1128 = vpop.f32.mrf.mxu0
  %v1129 = vadd.f32 %v244, %v1128
  %v1130 = vpop.f32.mrf.mxu0
  %v1131 = vpop.f32.mrf.mxu0
  %v1132 = vadd.f32 %v244, %v1131
  %v1133 = vpop.f32.mrf.mxu0
  %1134 = vmatprep.mubr.bf16.mxu0 %v534
  %1135 = vmatmul.mubr.bf16.gmra.mxu0 %v533
  %v1136 = vpop.f32.mrf.mxu0
  %v1137 = vadd.f32 %v244, %v1136
  %v1138 = vpop.f32.mrf.mxu0
  %v1139 = vpop.f32.mrf.mxu0
  %v1140 = vadd.f32 %v244, %v1139
  %v1141 = vpop.f32.mrf.mxu0
  %1142 = vdwg.mxu0
  %1143 = vmatprep.subr.bf16.mxu0 0
  %1144 = vmatpush1.bf16.msra.mxu0 %v925
  %1145 = vmatprep.subr.bf16.mxu0 0
  %1146 = vmatpush1.bf16.msra.mxu0 %v924
  %1147 = vmatprep.subr.bf16.mxu0 0
  %1148 = vmatpush1.bf16.msra.mxu0 %v923
  %1149 = vmatprep.subr.bf16.mxu0 0
  %1150 = vmatpush1.bf16.msra.mxu0 %v922
  %1151 = vmatprep.subr.bf16.mxu0 0
  %1152 = vmatpush1.bf16.msra.mxu0 %v921
  %1153 = vmatprep.subr.bf16.mxu0 0
  %1154 = vmatpush1.bf16.msra.mxu0 %v920
  %1155 = vmatprep.subr.bf16.mxu0 0
  %1156 = vmatpush1.bf16.msra.mxu0 %v919
  %1157 = vmatprep.subr.bf16.mxu0 0
  %1158 = vmatpush1.bf16.msra.mxu0 %v918
  %1159 = vmatprep.subr.bf16.mxu0 0
  %1160 = vmatpush2.bf16.msra.mxu0 %v933
  %1161 = vmatprep.subr.bf16.mxu0 0
  %1162 = vmatpush2.bf16.msra.mxu0 %v932
  %1163 = vmatprep.subr.bf16.mxu0 0
  %1164 = vmatpush2.bf16.msra.mxu0 %v931
  %1165 = vmatprep.subr.bf16.mxu0 0
  %1166 = vmatpush2.bf16.msra.mxu0 %v930
  %1167 = vmatprep.subr.bf16.mxu0 0
  %1168 = vmatpush2.bf16.msra.mxu0 %v929
  %1169 = vmatprep.subr.bf16.mxu0 0
  %1170 = vmatpush2.bf16.msra.mxu0 %v928
  %1171 = vmatprep.subr.bf16.mxu0 0
  %1172 = vmatpush2.bf16.msra.mxu0 %v927
  %1173 = vmatprep.subr.bf16.mxu0 0
  %1174 = vmatpush2.bf16.msra.mxu0 %v926
  %1175 = vmatprep.mubr.bf16.mxu0 %v473
  %1176 = vmatmul.mubr.bf16.gmra.mxu0 %v472
  %v1177 = vpop.f32.mrf.mxu0
  %v1178 = vadd.f32 %v1081, %v1177
  %v1179 = vpop.f32.mrf.mxu0
  %v1180 = vpop.f32.mrf.mxu0
  %v1181 = vadd.f32 %v1084, %v1180
  %v1182 = vpop.f32.mrf.mxu0
  %1183 = vmatprep.mubr.bf16.mxu0 %v482
  %1184 = vmatmul.mubr.bf16.gmra.mxu0 %v481
  %v1185 = vpop.f32.mrf.mxu0
  %v1186 = vadd.f32 %v1089, %v1185
  %v1187 = vpop.f32.mrf.mxu0
  %v1188 = vpop.f32.mrf.mxu0
  %v1189 = vadd.f32 %v1092, %v1188
  %v1190 = vpop.f32.mrf.mxu0
  %1191 = vmatprep.mubr.bf16.mxu0 %v491
  %1192 = vmatmul.mubr.bf16.gmra.mxu0 %v490
  %v1193 = vpop.f32.mrf.mxu0
  %v1194 = vadd.f32 %v1097, %v1193
  %v1195 = vpop.f32.mrf.mxu0
  %v1196 = vpop.f32.mrf.mxu0
  %v1197 = vadd.f32 %v1100, %v1196
  %v1198 = vpop.f32.mrf.mxu0
  %1199 = vmatprep.mubr.bf16.mxu0 %v500
  %1200 = vmatmul.mubr.bf16.gmra.mxu0 %v499
  %v1201 = vpop.f32.mrf.mxu0
  %v1202 = vadd.f32 %v1105, %v1201
  %v1203 = vpop.f32.mrf.mxu0
  %v1204 = vpop.f32.mrf.mxu0
  %v1205 = vadd.f32 %v1108, %v1204
  %v1206 = vpop.f32.mrf.mxu0
  %1207 = vmatprep.mubr.bf16.mxu0 %v509
  %1208 = vmatmul.mubr.bf16.gmra.mxu0 %v508
  %v1209 = vpop.f32.mrf.mxu0
  %v1210 = vadd.f32 %v1113, %v1209
  %v1211 = vpop.f32.mrf.mxu0
  %v1212 = vpop.f32.mrf.mxu0
  %v1213 = vadd.f32 %v1116, %v1212
  %v1214 = vpop.f32.mrf.mxu0
  %1215 = vmatprep.mubr.bf16.mxu0 %v518
  %1216 = vmatmul.mubr.bf16.gmra.mxu0 %v517
  %v1217 = vpop.f32.mrf.mxu0
  %v1218 = vadd.f32 %v1121, %v1217
  %v1219 = vpop.f32.mrf.mxu0
  %v1220 = vpop.f32.mrf.mxu0
  %v1221 = vadd.f32 %v1124, %v1220
  %v1222 = vpop.f32.mrf.mxu0
  %1223 = vmatprep.mubr.bf16.mxu0 %v527
  %1224 = vmatmul.mubr.bf16.gmra.mxu0 %v526
  %v1225 = vpop.f32.mrf.mxu0
  %v1226 = vadd.f32 %v1129, %v1225
  %v1227 = vpop.f32.mrf.mxu0
  %v1228 = vpop.f32.mrf.mxu0
  %v1229 = vadd.f32 %v1132, %v1228
  %v1230 = vpop.f32.mrf.mxu0
  %1231 = vmatprep.mubr.bf16.mxu0 %v536
  %1232 = vmatmul.mubr.bf16.gmra.mxu0 %v535
  %v1233 = vpop.f32.mrf.mxu0
  %v1234 = vadd.f32 %v1137, %v1233
  %v1235 = vpop.f32.mrf.mxu0
  %v1236 = vpop.f32.mrf.mxu0
  %v1237 = vadd.f32 %v1140, %v1236
  %v1238 = vpop.f32.mrf.mxu0
  %1239 = vdwg.mxu0
  %1240 = vmatprep.subr.bf16.mxu0 0
  %1241 = vmatpush1.bf16.msra.mxu0 %v941
  %1242 = vmatprep.subr.bf16.mxu0 0
  %1243 = vmatpush1.bf16.msra.mxu0 %v940
  %1244 = vmatprep.subr.bf16.mxu0 0
  %1245 = vmatpush1.bf16.msra.mxu0 %v939
  %1246 = vmatprep.subr.bf16.mxu0 0
  %1247 = vmatpush1.bf16.msra.mxu0 %v938
  %1248 = vmatprep.subr.bf16.mxu0 0
  %1249 = vmatpush1.bf16.msra.mxu0 %v937
  %1250 = vmatprep.subr.bf16.mxu0 0
  %1251 = vmatpush1.bf16.msra.mxu0 %v936
  %1252 = vmatprep.subr.bf16.mxu0 0
  %1253 = vmatpush1.bf16.msra.mxu0 %v935
  %1254 = vmatprep.subr.bf16.mxu0 0
  %1255 = vmatpush1.bf16.msra.mxu0 %v934
  %1256 = vmatprep.subr.bf16.mxu0 0
  %1257 = vmatpush2.bf16.msra.mxu0 %v949
  %1258 = vmatprep.subr.bf16.mxu0 0
  %1259 = vmatpush2.bf16.msra.mxu0 %v948
  %1260 = vmatprep.subr.bf16.mxu0 0
  %1261 = vmatpush2.bf16.msra.mxu0 %v947
  %1262 = vmatprep.subr.bf16.mxu0 0
  %1263 = vmatpush2.bf16.msra.mxu0 %v946
  %1264 = vmatprep.subr.bf16.mxu0 0
  %1265 = vmatpush2.bf16.msra.mxu0 %v945
  %1266 = vmatprep.subr.bf16.mxu0 0
  %1267 = vmatpush2.bf16.msra.mxu0 %v944
  %1268 = vmatprep.subr.bf16.mxu0 0
  %1269 = vmatpush2.bf16.msra.mxu0 %v943
  %1270 = vmatprep.subr.bf16.mxu0 0
  %1271 = vmatpush2.bf16.msra.mxu0 %v942
  %1272 = vmatprep.mubr.bf16.mxu0 %v475
  %1273 = vmatmul.mubr.bf16.gmra.mxu0 %v474
  %v1274 = vpop.f32.mrf.mxu0
  %v1275 = vadd.f32 %v1178, %v1274
  %v1276 = vpop.f32.mrf.mxu0
  %v1277 = vpop.f32.mrf.mxu0
  %v1278 = vadd.f32 %v1181, %v1277
  %v1279 = vpop.f32.mrf.mxu0
  %1280 = vmatprep.mubr.bf16.mxu0 %v484
  %1281 = vmatmul.mubr.bf16.gmra.mxu0 %v483
  %v1282 = vpop.f32.mrf.mxu0
  %v1283 = vadd.f32 %v1186, %v1282
  %v1284 = vpop.f32.mrf.mxu0
  %v1285 = vpop.f32.mrf.mxu0
  %v1286 = vadd.f32 %v1189, %v1285
  %v1287 = vpop.f32.mrf.mxu0
  %1288 = vmatprep.mubr.bf16.mxu0 %v493
  %1289 = vmatmul.mubr.bf16.gmra.mxu0 %v492
  %v1290 = vpop.f32.mrf.mxu0
  %v1291 = vadd.f32 %v1194, %v1290
  %v1292 = vpop.f32.mrf.mxu0
  %v1293 = vpop.f32.mrf.mxu0
  %v1294 = vadd.f32 %v1197, %v1293
  %v1295 = vpop.f32.mrf.mxu0
  %1296 = vmatprep.mubr.bf16.mxu0 %v502
  %1297 = vmatmul.mubr.bf16.gmra.mxu0 %v501
  %v1298 = vpop.f32.mrf.mxu0
  %v1299 = vadd.f32 %v1202, %v1298
  %v1300 = vpop.f32.mrf.mxu0
  %v1301 = vpop.f32.mrf.mxu0
  %v1302 = vadd.f32 %v1205, %v1301
  %v1303 = vpop.f32.mrf.mxu0
  %1304 = vmatprep.mubr.bf16.mxu0 %v511
  %1305 = vmatmul.mubr.bf16.gmra.mxu0 %v510
  %v1306 = vpop.f32.mrf.mxu0
  %v1307 = vadd.f32 %v1210, %v1306
  %v1308 = vpop.f32.mrf.mxu0
  %v1309 = vpop.f32.mrf.mxu0
  %v1310 = vadd.f32 %v1213, %v1309
  %v1311 = vpop.f32.mrf.mxu0
  %1312 = vmatprep.mubr.bf16.mxu0 %v520
  %1313 = vmatmul.mubr.bf16.gmra.mxu0 %v519
  %v1314 = vpop.f32.mrf.mxu0
  %v1315 = vadd.f32 %v1218, %v1314
  %v1316 = vpop.f32.mrf.mxu0
  %v1317 = vpop.f32.mrf.mxu0
  %v1318 = vadd.f32 %v1221, %v1317
  %v1319 = vpop.f32.mrf.mxu0
  %1320 = vmatprep.mubr.bf16.mxu0 %v529
  %1321 = vmatmul.mubr.bf16.gmra.mxu0 %v528
  %v1322 = vpop.f32.mrf.mxu0
  %v1323 = vadd.f32 %v1226, %v1322
  %v1324 = vpop.f32.mrf.mxu0
  %v1325 = vpop.f32.mrf.mxu0
  %v1326 = vadd.f32 %v1229, %v1325
  %v1327 = vpop.f32.mrf.mxu0
  %1328 = vmatprep.mubr.bf16.mxu0 %v538
  %1329 = vmatmul.mubr.bf16.gmra.mxu0 %v537
  %v1330 = vpop.f32.mrf.mxu0
  %v1331 = vadd.f32 %v1234, %v1330
  %v1332 = vpop.f32.mrf.mxu0
  %v1333 = vpop.f32.mrf.mxu0
  %v1334 = vadd.f32 %v1237, %v1333
  %v1335 = vpop.f32.mrf.mxu0
  %1336 = vdwg.mxu0
  %1337 = vmatprep.subr.bf16.mxu0 0
  %1338 = vmatpush1.bf16.msra.mxu0 %v957
  %1339 = vmatprep.subr.bf16.mxu0 0
  %1340 = vmatpush1.bf16.msra.mxu0 %v956
  %1341 = vmatprep.subr.bf16.mxu0 0
  %1342 = vmatpush1.bf16.msra.mxu0 %v955
  %1343 = vmatprep.subr.bf16.mxu0 0
  %1344 = vmatpush1.bf16.msra.mxu0 %v954
  %1345 = vmatprep.subr.bf16.mxu0 0
  %1346 = vmatpush1.bf16.msra.mxu0 %v953
  %1347 = vmatprep.subr.bf16.mxu0 0
  %1348 = vmatpush1.bf16.msra.mxu0 %v952
  %1349 = vmatprep.subr.bf16.mxu0 0
  %1350 = vmatpush1.bf16.msra.mxu0 %v951
  %1351 = vmatprep.subr.bf16.mxu0 0
  %1352 = vmatpush1.bf16.msra.mxu0 %v950
  %1353 = vmatprep.subr.bf16.mxu0 0
  %1354 = vmatpush2.bf16.msra.mxu0 %v965
  %1355 = vmatprep.subr.bf16.mxu0 0
  %1356 = vmatpush2.bf16.msra.mxu0 %v964
  %1357 = vmatprep.subr.bf16.mxu0 0
  %1358 = vmatpush2.bf16.msra.mxu0 %v963
  %1359 = vmatprep.subr.bf16.mxu0 0
  %1360 = vmatpush2.bf16.msra.mxu0 %v962
  %1361 = vmatprep.subr.bf16.mxu0 0
  %1362 = vmatpush2.bf16.msra.mxu0 %v961
  %1363 = vmatprep.subr.bf16.mxu0 0
  %1364 = vmatpush2.bf16.msra.mxu0 %v960
  %1365 = vmatprep.subr.bf16.mxu0 0
  %1366 = vmatpush2.bf16.msra.mxu0 %v959
  %1367 = vmatprep.subr.bf16.mxu0 0
  %1368 = vmatpush2.bf16.msra.mxu0 %v958
  %1369 = vmatprep.mubr.bf16.mxu0 %v477
  %1370 = vmatmul.mubr.bf16.gmra.mxu0 %v476
  %v1371 = vpop.f32.mrf.mxu0
  %v1372 = vadd.f32 %v1275, %v1371
  %v1373 = vpop.f32.mrf.mxu0
  %v1374 = vpop.f32.mrf.mxu0
  %v1375 = vadd.f32 %v1278, %v1374
  %v1376 = vpop.f32.mrf.mxu0
  %1377 = vmatprep.mubr.bf16.mxu0 %v486
  %1378 = vmatmul.mubr.bf16.gmra.mxu0 %v485
  %v1379 = vpop.f32.mrf.mxu0
  %v1380 = vadd.f32 %v1283, %v1379
  %v1381 = vpop.f32.mrf.mxu0
  %v1382 = vpop.f32.mrf.mxu0
  %v1383 = vadd.f32 %v1286, %v1382
  %v1384 = vpop.f32.mrf.mxu0
  %1385 = vmatprep.mubr.bf16.mxu0 %v495
  %1386 = vmatmul.mubr.bf16.gmra.mxu0 %v494
  %v1387 = vpop.f32.mrf.mxu0
  %v1388 = vadd.f32 %v1291, %v1387
  %v1389 = vpop.f32.mrf.mxu0
  %v1390 = vpop.f32.mrf.mxu0
  %v1391 = vadd.f32 %v1294, %v1390
  %v1392 = vpop.f32.mrf.mxu0
  %1393 = vmatprep.mubr.bf16.mxu0 %v504
  %1394 = vmatmul.mubr.bf16.gmra.mxu0 %v503
  %v1395 = vpop.f32.mrf.mxu0
  %v1396 = vadd.f32 %v1299, %v1395
  %v1397 = vpop.f32.mrf.mxu0
  %v1398 = vpop.f32.mrf.mxu0
  %v1399 = vadd.f32 %v1302, %v1398
  %v1400 = vpop.f32.mrf.mxu0
  %1401 = vmatprep.mubr.bf16.mxu0 %v513
  %1402 = vmatmul.mubr.bf16.gmra.mxu0 %v512
  %v1403 = vpop.f32.mrf.mxu0
  %v1404 = vadd.f32 %v1307, %v1403
  %v1405 = vpop.f32.mrf.mxu0
  %v1406 = vpop.f32.mrf.mxu0
  %v1407 = vadd.f32 %v1310, %v1406
  %v1408 = vpop.f32.mrf.mxu0
  %1409 = vmatprep.mubr.bf16.mxu0 %v522
  %1410 = vmatmul.mubr.bf16.gmra.mxu0 %v521
  %v1411 = vpop.f32.mrf.mxu0
  %v1412 = vadd.f32 %v1315, %v1411
  %v1413 = vpop.f32.mrf.mxu0
  %v1414 = vpop.f32.mrf.mxu0
  %v1415 = vadd.f32 %v1318, %v1414
  %v1416 = vpop.f32.mrf.mxu0
  %1417 = vmatprep.mubr.bf16.mxu0 %v531
  %1418 = vmatmul.mubr.bf16.gmra.mxu0 %v530
  %v1419 = vpop.f32.mrf.mxu0
  %v1420 = vadd.f32 %v1323, %v1419
  %v1421 = vpop.f32.mrf.mxu0
  %v1422 = vpop.f32.mrf.mxu0
  %v1423 = vadd.f32 %v1326, %v1422
  %v1424 = vpop.f32.mrf.mxu0
  %1425 = vmatprep.mubr.bf16.mxu0 %v540
  %1426 = vmatmul.mubr.bf16.gmra.mxu0 %v539
  %v1427 = vpop.f32.mrf.mxu0
  %v1428 = vadd.f32 %v1331, %v1427
  %v1429 = vpop.f32.mrf.mxu0
  %v1430 = vpop.f32.mrf.mxu0
  %v1431 = vadd.f32 %v1334, %v1430
  %v1432 = vpop.f32.mrf.mxu0
  %1433 = vdwg.mxu0
  %1434 = vmatprep.subr.bf16.mxu0 0
  %1435 = vmatpush1.bf16.msra.mxu0 %v973
  %1436 = vmatprep.subr.bf16.mxu0 0
  %1437 = vmatpush1.bf16.msra.mxu0 %v972
  %1438 = vmatprep.subr.bf16.mxu0 0
  %1439 = vmatpush1.bf16.msra.mxu0 %v971
  %1440 = vmatprep.subr.bf16.mxu0 0
  %1441 = vmatpush1.bf16.msra.mxu0 %v970
  %1442 = vmatprep.subr.bf16.mxu0 0
  %1443 = vmatpush1.bf16.msra.mxu0 %v969
  %1444 = vmatprep.subr.bf16.mxu0 0
  %1445 = vmatpush1.bf16.msra.mxu0 %v968
  %1446 = vmatprep.subr.bf16.mxu0 0
  %1447 = vmatpush1.bf16.msra.mxu0 %v967
  %1448 = vmatprep.subr.bf16.mxu0 0
  %1449 = vmatpush1.bf16.msra.mxu0 %v966
  %1450 = vmatprep.subr.bf16.mxu0 0
  %1451 = vmatpush2.bf16.msra.mxu0 0
  %1452 = vmatprep.subr.bf16.mxu0 0
  %1453 = vmatpush2.bf16.msra.mxu0 0
  %1454 = vmatprep.subr.bf16.mxu0 0
  %1455 = vmatpush2.bf16.msra.mxu0 0
  %1456 = vmatprep.subr.bf16.mxu0 0
  %1457 = vmatpush2.bf16.msra.mxu0 0
  %1458 = vmatprep.subr.bf16.mxu0 0
  %1459 = vmatpush2.bf16.msra.mxu0 0
  %1460 = vmatprep.subr.bf16.mxu0 0
  %1461 = vmatpush2.bf16.msra.mxu0 0
  %1462 = vmatprep.subr.bf16.mxu0 0
  %1463 = vmatpush2.bf16.msra.mxu0 0
  %1464 = vmatprep.subr.bf16.mxu0 0
  %1465 = vmatpush2.bf16.msra.mxu0 0
  %1466 = vmatprep.mubr.bf16.mxu0 0
  %1467 = vmatmul.mubr.bf16.gmra.mxu0 %v478
  %v1468 = vpop.f32.mrf.mxu0
  %v1469 = vadd.f32 %v1372, %v1468
  %v1470 = vpop.f32.mrf.mxu0
  %v1471 = vpop.f32.mrf.mxu0
  %v1472 = vadd.f32 %v1375, %v1471
  %v1473 = vpop.f32.mrf.mxu0
  %1474 = vmatprep.mubr.bf16.mxu0 0
  %1475 = vmatmul.mubr.bf16.gmra.mxu0 %v487
  %v1476 = vpop.f32.mrf.mxu0
  %v1477 = vadd.f32 %v1380, %v1476
  %v1478 = vpop.f32.mrf.mxu0
  %v1479 = vpop.f32.mrf.mxu0
  %v1480 = vadd.f32 %v1383, %v1479
  %v1481 = vpop.f32.mrf.mxu0
  %1482 = vmatprep.mubr.bf16.mxu0 0
  %1483 = vmatmul.mubr.bf16.gmra.mxu0 %v496
  %v1484 = vpop.f32.mrf.mxu0
  %v1485 = vadd.f32 %v1388, %v1484
  %v1486 = vpop.f32.mrf.mxu0
  %v1487 = vpop.f32.mrf.mxu0
  %v1488 = vadd.f32 %v1391, %v1487
  %v1489 = vpop.f32.mrf.mxu0
  %1490 = vmatprep.mubr.bf16.mxu0 0
  %1491 = vmatmul.mubr.bf16.gmra.mxu0 %v505
  %v1492 = vpop.f32.mrf.mxu0
  %v1493 = vadd.f32 %v1396, %v1492
  %v1494 = vpop.f32.mrf.mxu0
  %v1495 = vpop.f32.mrf.mxu0
  %v1496 = vadd.f32 %v1399, %v1495
  %v1497 = vpop.f32.mrf.mxu0
  %1498 = vmatprep.mubr.bf16.mxu0 0
  %1499 = vmatmul.mubr.bf16.gmra.mxu0 %v514
  %v1500 = vpop.f32.mrf.mxu0
  %v1501 = vadd.f32 %v1404, %v1500
  %v1502 = vpop.f32.mrf.mxu0
  %v1503 = vpop.f32.mrf.mxu0
  %v1504 = vadd.f32 %v1407, %v1503
  %v1505 = vpop.f32.mrf.mxu0
  %1506 = vmatprep.mubr.bf16.mxu0 0
  %1507 = vmatmul.mubr.bf16.gmra.mxu0 %v523
  %v1508 = vpop.f32.mrf.mxu0
  %v1509 = vadd.f32 %v1412, %v1508
  %v1510 = vpop.f32.mrf.mxu0
  %v1511 = vpop.f32.mrf.mxu0
  %v1512 = vadd.f32 %v1415, %v1511
  %v1513 = vpop.f32.mrf.mxu0
  %1514 = vmatprep.mubr.bf16.mxu0 0
  %1515 = vmatmul.mubr.bf16.gmra.mxu0 %v532
  %v1516 = vpop.f32.mrf.mxu0
  %v1517 = vadd.f32 %v1420, %v1516
  %v1518 = vpop.f32.mrf.mxu0
  %v1519 = vpop.f32.mrf.mxu0
  %v1520 = vadd.f32 %v1423, %v1519
  %v1521 = vpop.f32.mrf.mxu0
  %1522 = vmatprep.mubr.bf16.mxu0 0
  %1523 = vmatmul.mubr.bf16.gmra.mxu0 %v541
  %v1524 = vpop.f32.mrf.mxu0
  %v1525 = vadd.f32 %v1428, %v1524
  %v1526 = vpop.f32.mrf.mxu0
  %v1527 = vpop.f32.mrf.mxu0
  %v1528 = vadd.f32 %v1431, %v1527
  %v1529 = vpop.f32.mrf.mxu0
  %1530 = vdwg.mxu0
  %v1531 = vmax.f32 %v1469, 0.0
  %v1532 = vmax.f32 %v1472, 0.0
  %v1533 = vmax.f32 %v1477, 0.0
  %v1534 = vmax.f32 %v1480, 0.0
  %v1535 = vmax.f32 %v1485, 0.0
  %v1536 = vmax.f32 %v1488, 0.0
  %v1537 = vmax.f32 %v1493, 0.0
  %v1538 = vmax.f32 %v1496, 0.0
  %v1539 = vmax.f32 %v1501, 0.0
  %v1540 = vmax.f32 %v1504, 0.0
  %v1541 = vmax.f32 %v1509, 0.0
  %v1542 = vmax.f32 %v1512, 0.0
  %v1543 = vmax.f32 %v1517, 0.0
  %v1544 = vmax.f32 %v1520, 0.0
  %v1545 = vmax.f32 %v1525, 0.0
  %v1546 = vmax.f32 %v1528, 0.0
  %1547 = vst [vmem:[%s3] sm:$0xff] %v1531
  %1548 = vst [vmem:[%s3 + $0x8] sm:$0xff] %v1532
  %1549 = vst [vmem:[%s3 + $0x10] sm:$0xff] %v1533
  %1550 = vst [vmem:[%s3 + $0x18] sm:$0xff] %v1534
  %1551 = vst [vmem:[%s3 + $0x20] sm:$0xff] %v1535
  %1552 = vst [vmem:[%s3 + $0x28] sm:$0xff] %v1536
  %1553 = vst [vmem:[%s3 + $0x30] sm:$0xff] %v1537
  %1554 = vst [vmem:[%s3 + $0x38] sm:$0xff] %v1538
  %1555 = vst [vmem:[%s3 + $0x40] sm:$0xff] %v1539
  %1556 = vst [vmem:[%s3 + $0x48] sm:$0xff] %v1540
  %1557 = vst [vmem:[%s3 + $0x50] sm:$0xff] %v1541
  %1558 = vst [vmem:[%s3 + $0x58] sm:$0xff] %v1542
  %1559 = vst [vmem:[%s3 + $0x60] sm:$0xff] %v1543
  %1560 = vst [vmem:[%s3 + $0x68] sm:$0xff] %v1544
  %1561 = vst [vmem:[%s3 + $0x70] sm:$0xff] %v1545
  %1562 = vst [vmem:[%s3 + $0x78] sm:$0xff] %v1546
  // Predicated region
  $region14: #{compressor_forward.10} parent=0 // pred_check
    _
  $region15: #{compressor_forward.10} parent=0 // pred_check_branch
    %1564 = sbr.rel (0) target = $region17
  $region16: #{compressor_forward.10} parent=0 // pred_region
    _
  $region17: #{compressor_forward.10} parent=0 // pred_fallthru
    _
  // Predicated region
  $region18: #{compressor_forward.10} parent=0 // pred_check
    _
  $region19: #{compressor_forward.10} parent=0 // pred_check_branch
    %1566 = sbr.rel (0) target = $region21
  $region20: #{compressor_forward.10} parent=0 // pred_region
    _
  $region21: #{compressor_forward.10} parent=0 // pred_fallthru
    _

// kernel: compressor_forward.11
$region0: #{compressor_forward.11}
  #allocation0 [shape = 'u32[]', space=smem, size = 0x4, offset = 0x4, fixed_abs, tag = 'smem constant byte address 0x4 - core index']
  #allocation1 [shape = 'u32[144,128]{1,0:T(1,128)}', space=vmem, size = 0x12000, scoped, tag = 'internal scratch']
  %s0 = inlined_call_operand.vmem [shape: bf16[32,1152], index: 0, kind: input, shape index: {}]
  %s1 = inlined_call_operand.vmem [shape: bf16[1152,128], index: 1, kind: input, shape index: {}]
  %s2 = inlined_call_operand.vmem [shape: f32[1,128], index: 2, kind: input, shape index: {}]
  %s3 = inlined_call_operand.vmem [shape: f32[32,128], index: 3, kind: output, shape index: {}]
  %s4 = sld [smem:[#allocation0]]
  $region22: #{compressor_forward.11} parent=0
    _
  %s6 = ssub.s32 1, %s4
  %s7 = scalar_select 0, %s6, %s4
  // Predicated region
  $region2: #{compressor_forward.11} parent=0 // pred_check
    _
  $region3: #{compressor_forward.11} parent=0 // pred_check_branch
    %9 = sbr.rel (0) target = $region5
  $region4: #{compressor_forward.11} parent=0 // pred_region
    _
  $region5: #{compressor_forward.11} parent=0 // pred_fallthru
    _
  // Predicated region
  $region6: #{compressor_forward.11} parent=0 // pred_check
    _
  $region7: #{compressor_forward.11} parent=0 // pred_check_branch
    %11 = sbr.rel (0) target = $region9
  $region8: #{compressor_forward.11} parent=0 // pred_region
    _
  $region9: #{compressor_forward.11} parent=0 // pred_fallthru
    _
  // Predicated region
  $region10: #{compressor_forward.11} parent=0 // pred_check
    _
  $region11: #{compressor_forward.11} parent=0 // pred_check_branch
    %13 = sbr.rel (0) target = $region13
  $region12: #{compressor_forward.11} parent=0 // pred_region
    _
  $region13: #{compressor_forward.11} parent=0 // pred_fallthru
    _
  %v15 = vld [vmem:[%s0] sm:$0xff]
  %v16 = vld [vmem:[%s0 + $0x8] sm:$0xff]
  %v17 = vld [vmem:[%s0 + $0x10] sm:$0xff]
  %v18 = vld [vmem:[%s0 + $0x18] sm:$0xff]
  %v19 = vld [vmem:[%s0 + $0x20] sm:$0xf]
  %v20 = vld [vmem:[%s0 + $0x24] sm:$0xff]
  %v21 = vld [vmem:[%s0 + $0x2c] sm:$0xff]
  %v22 = vld [vmem:[%s0 + $0x34] sm:$0xff]
  %v23 = vld [vmem:[%s0 + $0x3c] sm:$0xff]
  %v24 = vld [vmem:[%s0 + $0x44] sm:$0xf]
  %v25 = vld [vmem:[%s0 + $0x48] sm:$0xff]
  %v26 = vld [vmem:[%s0 + $0x50] sm:$0xff]
  %v27 = vld [vmem:[%s0 + $0x58] sm:$0xff]
  %v28 = vld [vmem:[%s0 + $0x60] sm:$0xff]
  %v29 = vld [vmem:[%s0 + $0x68] sm:$0xf]
  %v30 = vld [vmem:[%s0 + $0x6c] sm:$0xff]
  %v31 = vld [vmem:[%s0 + $0x74] sm:$0xff]
  %v32 = vld [vmem:[%s0 + $0x7c] sm:$0xff]
  %v33 = vld [vmem:[%s0 + $0x84] sm:$0xff]
  %v34 = vld [vmem:[%s0 + $0x8c] sm:$0xf]
  %v35 = vld [vmem:[%s1] sm:$0xf]
  %v36 = vld [vmem:[%s1 + $0x4] sm:$0xf]
  %v37 = vld [vmem:[%s1 + $0x8] sm:$0xf]
  %v38 = vld [vmem:[%s1 + $0xc] sm:$0xf]
  %v39 = vld [vmem:[%s1 + $0x10] sm:$0xf]
  %v40 = vld [vmem:[%s1 + $0x14] sm:$0xf]
  %v41 = vld [vmem:[%s1 + $0x18] sm:$0xf]
  %v42 = vld [vmem:[%s1 + $0x1c] sm:$0xf]
  %v43 = vld [vmem:[%s1 + $0x20] sm:$0xf]
  %v44 = vld [vmem:[%s1 + $0x24] sm:$0xf]
  %v45 = vld [vmem:[%s1 + $0x28] sm:$0xf]
  %v46 = vld [vmem:[%s1 + $0x2c] sm:$0xf]
  %v47 = vld [vmem:[%s1 + $0x30] sm:$0xf]
  %v48 = vld [vmem:[%s1 + $0x34] sm:$0xf]
  %v49 = vld [vmem:[%s1 + $0x38] sm:$0xf]
  %v50 = vld [vmem:[%s1 + $0x3c] sm:$0xf]
  %v51 = vld [vmem:[%s1 + $0x40] sm:$0xf]
  %v52 = vld [vmem:[%s1 + $0x44] sm:$0xf]
  %v53 = vld [vmem:[%s1 + $0x48] sm:$0xf]
  %v54 = vld [vmem:[%s1 + $0x4c] sm:$0xf]
  %v55 = vld [vmem:[%s1 + $0x50] sm:$0xf]
  %v56 = vld [vmem:[%s1 + $0x54] sm:$0xf]
  %v57 = vld [vmem:[%s1 + $0x58] sm:$0xf]
  %v58 = vld [vmem:[%s1 + $0x5c] sm:$0xf]
  %v59 = vld [vmem:[%s1 + $0x60] sm:$0xf]
  %v60 = vld [vmem:[%s1 + $0x64] sm:$0xf]
  %v61 = vld [vmem:[%s1 + $0x68] sm:$0xf]
  %v62 = vld [vmem:[%s1 + $0x6c] sm:$0xf]
  %v63 = vld [vmem:[%s1 + $0x70] sm:$0xf]
  %v64 = vld [vmem:[%s1 + $0x74] sm:$0xf]
  %v65 = vld [vmem:[%s1 + $0x78] sm:$0xf]
  %v66 = vld [vmem:[%s1 + $0x7c] sm:$0xf]
  %v67 = vld [vmem:[%s1 + $0x80] sm:$0xf]
  %v68 = vld [vmem:[%s1 + $0x84] sm:$0xf]
  %v69 = vld [vmem:[%s1 + $0x88] sm:$0xf]
  %v70 = vld [vmem:[%s1 + $0x8c] sm:$0xf]
  %v71 = vld [vmem:[%s1 + $0x90] sm:$0xf]
  %v72 = vld [vmem:[%s1 + $0x94] sm:$0xf]
  %v73 = vld [vmem:[%s1 + $0x98] sm:$0xf]
  %v74 = vld [vmem:[%s1 + $0x9c] sm:$0xf]
  %v75 = vld [vmem:[%s1 + $0xa0] sm:$0xf]
  %v76 = vld [vmem:[%s1 + $0xa4] sm:$0xf]
  %v77 = vld [vmem:[%s1 + $0xa8] sm:$0xf]
  %v78 = vld [vmem:[%s1 + $0xac] sm:$0xf]
  %v79 = vld [vmem:[%s1 + $0xb0] sm:$0xf]
  %v80 = vld [vmem:[%s1 + $0xb4] sm:$0xf]
  %v81 = vld [vmem:[%s1 + $0xb8] sm:$0xf]
  %v82 = vld [vmem:[%s1 + $0xbc] sm:$0xf]
  %v83 = vld [vmem:[%s1 + $0xc0] sm:$0xf]
  %v84 = vld [vmem:[%s1 + $0xc4] sm:$0xf]
  %v85 = vld [vmem:[%s1 + $0xc8] sm:$0xf]
  %v86 = vld [vmem:[%s1 + $0xcc] sm:$0xf]
  %v87 = vld [vmem:[%s1 + $0xd0] sm:$0xf]
  %v88 = vld [vmem:[%s1 + $0xd4] sm:$0xf]
  %v89 = vld [vmem:[%s1 + $0xd8] sm:$0xf]
  %v90 = vld [vmem:[%s1 + $0xdc] sm:$0xf]
  %v91 = vld [vmem:[%s1 + $0xe0] sm:$0xf]
  %v92 = vld [vmem:[%s1 + $0xe4] sm:$0xf]
  %v93 = vld [vmem:[%s1 + $0xe8] sm:$0xf]
  %v94 = vld [vmem:[%s1 + $0xec] sm:$0xf]
  %v95 = vld [vmem:[%s1 + $0xf0] sm:$0xf]
  %v96 = vld [vmem:[%s1 + $0xf4] sm:$0xf]
  %v97 = vld [vmem:[%s1 + $0xf8] sm:$0xf]
  %v98 = vld [vmem:[%s1 + $0xfc] sm:$0xf]
  %v99 = vld [vmem:[%s1 + $0x100] sm:$0xf]
  %v100 = vld [vmem:[%s1 + $0x104] sm:$0xf]
  %v101 = vld [vmem:[%s1 + $0x108] sm:$0xf]
  %v102 = vld [vmem:[%s1 + $0x10c] sm:$0xf]
  %v103 = vld [vmem:[%s1 + $0x110] sm:$0xf]
  %v104 = vld [vmem:[%s1 + $0x114] sm:$0xf]
  %v105 = vld [vmem:[%s1 + $0x118] sm:$0xf]
  %v106 = vld [vmem:[%s1 + $0x11c] sm:$0xf]
  %v107 = vld [vmem:[%s1 + $0x120] sm:$0xf]
  %v108 = vld [vmem:[%s1 + $0x124] sm:$0xf]
  %v109 = vld [vmem:[%s1 + $0x128] sm:$0xf]
  %v110 = vld [vmem:[%s1 + $0x12c] sm:$0xf]
  %v111 = vld [vmem:[%s1 + $0x130] sm:$0xf]
  %v112 = vld [vmem:[%s1 + $0x134] sm:$0xf]
  %v113 = vld [vmem:[%s1 + $0x138] sm:$0xf]
  %v114 = vld [vmem:[%s1 + $0x13c] sm:$0xf]
  %v115 = vld [vmem:[%s1 + $0x140] sm:$0xf]
  %v116 = vld [vmem:[%s1 + $0x144] sm:$0xf]
  %v117 = vld [vmem:[%s1 + $0x148] sm:$0xf]
  %v118 = vld [vmem:[%s1 + $0x14c] sm:$0xf]
  %v119 = vld [vmem:[%s1 + $0x150] sm:$0xf]
  %v120 = vld [vmem:[%s1 + $0x154] sm:$0xf]
  %v121 = vld [vmem:[%s1 + $0x158] sm:$0xf]
  %v122 = vld [vmem:[%s1 + $0x15c] sm:$0xf]
  %v123 = vld [vmem:[%s1 + $0x160] sm:$0xf]
  %v124 = vld [vmem:[%s1 + $0x164] sm:$0xf]
  %v125 = vld [vmem:[%s1 + $0x168] sm:$0xf]
  %v126 = vld [vmem:[%s1 + $0x16c] sm:$0xf]
  %v127 = vld [vmem:[%s1 + $0x170] sm:$0xf]
  %v128 = vld [vmem:[%s1 + $0x174] sm:$0xf]
  %v129 = vld [vmem:[%s1 + $0x178] sm:$0xf]
  %v130 = vld [vmem:[%s1 + $0x17c] sm:$0xf]
  %v131 = vld [vmem:[%s1 + $0x180] sm:$0xf]
  %v132 = vld [vmem:[%s1 + $0x184] sm:$0xf]
  %v133 = vld [vmem:[%s1 + $0x188] sm:$0xf]
  %v134 = vld [vmem:[%s1 + $0x18c] sm:$0xf]
  %v135 = vld [vmem:[%s1 + $0x190] sm:$0xf]
  %v136 = vld [vmem:[%s1 + $0x194] sm:$0xf]
  %v137 = vld [vmem:[%s1 + $0x198] sm:$0xf]
  %v138 = vld [vmem:[%s1 + $0x19c] sm:$0xf]
  %v139 = vld [vmem:[%s1 + $0x1a0] sm:$0xf]
  %v140 = vld [vmem:[%s1 + $0x1a4] sm:$0xf]
  %v141 = vld [vmem:[%s1 + $0x1a8] sm:$0xf]
  %v142 = vld [vmem:[%s1 + $0x1ac] sm:$0xf]
  %v143 = vld [vmem:[%s1 + $0x1b0] sm:$0xf]
  %v144 = vld [vmem:[%s1 + $0x1b4] sm:$0xf]
  %v145 = vld [vmem:[%s1 + $0x1b8] sm:$0xf]
  %v146 = vld [vmem:[%s1 + $0x1bc] sm:$0xf]
  %v147 = vld [vmem:[%s1 + $0x1c0] sm:$0xf]
  %v148 = vld [vmem:[%s1 + $0x1c4] sm:$0xf]
  %v149 = vld [vmem:[%s1 + $0x1c8] sm:$0xf]
  %v150 = vld [vmem:[%s1 + $0x1cc] sm:$0xf]
  %v151 = vld [vmem:[%s1 + $0x1d0] sm:$0xf]
  %v152 = vld [vmem:[%s1 + $0x1d4] sm:$0xf]
  %v153 = vld [vmem:[%s1 + $0x1d8] sm:$0xf]
  %v154 = vld [vmem:[%s1 + $0x1dc] sm:$0xf]
  %v155 = vld [vmem:[%s1 + $0x1e0] sm:$0xf]
  %v156 = vld [vmem:[%s1 + $0x1e4] sm:$0xf]
  %v157 = vld [vmem:[%s1 + $0x1e8] sm:$0xf]
  %v158 = vld [vmem:[%s1 + $0x1ec] sm:$0xf]
  %v159 = vld [vmem:[%s1 + $0x1f0] sm:$0xf]
  %v160 = vld [vmem:[%s1 + $0x1f4] sm:$0xf]
  %v161 = vld [vmem:[%s1 + $0x1f8] sm:$0xf]
  %v162 = vld [vmem:[%s1 + $0x1fc] sm:$0xf]
  %v163 = vld [vmem:[%s1 + $0x200] sm:$0xf]
  %v164 = vld [vmem:[%s1 + $0x204] sm:$0xf]
  %v165 = vld [vmem:[%s1 + $0x208] sm:$0xf]
  %v166 = vld [vmem:[%s1 + $0x20c] sm:$0xf]
  %v167 = vld [vmem:[%s1 + $0x210] sm:$0xf]
  %v168 = vld [vmem:[%s1 + $0x214] sm:$0xf]
  %v169 = vld [vmem:[%s1 + $0x218] sm:$0xf]
  %v170 = vld [vmem:[%s1 + $0x21c] sm:$0xf]
  %v171 = vld [vmem:[%s1 + $0x220] sm:$0xf]
  %v172 = vld [vmem:[%s1 + $0x224] sm:$0xf]
  %v173 = vld [vmem:[%s1 + $0x228] sm:$0xf]
  %v174 = vld [vmem:[%s1 + $0x22c] sm:$0xf]
  %v175 = vld [vmem:[%s1 + $0x230] sm:$0xf]
  %v176 = vld [vmem:[%s1 + $0x234] sm:$0xf]
  %v177 = vld [vmem:[%s1 + $0x238] sm:$0xf]
  %v178 = vld [vmem:[%s1 + $0x23c] sm:$0xf]
  %v179 = vld [vmem:[%s2] sm:$0x1]
  %v181 = vlaneseq
  %v182 = vshrl.u32 %v181, 7
  %v183 = vsub.s32 0, %v182
  %v184 = vrot.slane %v179, %v183
  %v206 = vunpack.c.l.b16 %v15
  %v207 = vunpack.c.h.b16 %v15
  %v208 = vunpack.c.l.b16 %v16
  %v209 = vunpack.c.h.b16 %v16
  %v210 = vunpack.c.l.b16 %v17
  %v211 = vunpack.c.h.b16 %v17
  %v212 = vunpack.c.l.b16 %v18
  %v213 = vunpack.c.h.b16 %v18
  %v214 = vunpack.c.l.b16 %v19
  %v215 = vunpack.c.l.b16 %v20
  %v216 = vunpack.c.h.b16 %v20
  %v217 = vunpack.c.l.b16 %v21
  %v218 = vunpack.c.h.b16 %v21
  %v219 = vunpack.c.l.b16 %v22
  %v220 = vunpack.c.h.b16 %v22
  %v221 = vunpack.c.l.b16 %v23
  %v222 = vunpack.c.h.b16 %v23
  %v223 = vunpack.c.l.b16 %v24
  %v224 = vunpack.c.l.b16 %v25
  %v225 = vunpack.c.h.b16 %v25
  %v226 = vunpack.c.l.b16 %v26
  %v227 = vunpack.c.h.b16 %v26
  %v228 = vunpack.c.l.b16 %v27
  %v229 = vunpack.c.h.b16 %v27
  %v230 = vunpack.c.l.b16 %v28
  %v231 = vunpack.c.h.b16 %v28
  %v232 = vunpack.c.l.b16 %v29
  %v233 = vunpack.c.l.b16 %v30
  %v234 = vunpack.c.h.b16 %v30
  %v235 = vunpack.c.l.b16 %v31
  %v236 = vunpack.c.h.b16 %v31
  %v237 = vunpack.c.l.b16 %v32
  %v238 = vunpack.c.h.b16 %v32
  %v239 = vunpack.c.l.b16 %v33
  %v240 = vunpack.c.h.b16 %v33
  %v241 = vunpack.c.l.b16 %v34
  %v242 = vpack.c.b16 %v215, %v206
  %v243 = vpack.c.b16 %v216, %v207
  %v244 = vpack.c.b16 %v217, %v208
  %v245 = vpack.c.b16 %v218, %v209
  %v246 = vpack.c.b16 %v219, %v210
  %v247 = vpack.c.b16 %v220, %v211
  %v248 = vpack.c.b16 %v221, %v212
  %v249 = vpack.c.b16 %v222, %v213
  %v250 = vpack.c.b16 %v223, %v214
  %v251 = vpack.c.b16 %v233, %v224
  %v252 = vpack.c.b16 %v234, %v225
  %v253 = vpack.c.b16 %v235, %v226
  %v254 = vpack.c.b16 %v236, %v227
  %v255 = vpack.c.b16 %v237, %v228
  %v256 = vpack.c.b16 %v238, %v229
  %v257 = vpack.c.b16 %v239, %v230
  %v258 = vpack.c.b16 %v240, %v231
  %v259 = vpack.c.b16 %v241, %v232
  %v422 = vunpack.c.l.b16 %v35
  %v423 = vunpack.c.l.b16 %v36
  %v424 = vunpack.c.l.b16 %v37
  %v425 = vunpack.c.l.b16 %v38
  %v426 = vunpack.c.l.b16 %v39
  %v427 = vunpack.c.l.b16 %v40
  %v428 = vunpack.c.l.b16 %v41
  %v429 = vunpack.c.l.b16 %v42
  %v430 = vunpack.c.l.b16 %v43
  %v431 = vunpack.c.l.b16 %v44
  %v432 = vunpack.c.l.b16 %v45
  %v433 = vunpack.c.l.b16 %v46
  %v434 = vunpack.c.l.b16 %v47
  %v435 = vunpack.c.l.b16 %v48
  %v436 = vunpack.c.l.b16 %v49
  %v437 = vunpack.c.l.b16 %v50
  %v438 = vunpack.c.l.b16 %v51
  %v439 = vunpack.c.l.b16 %v52
  %v440 = vunpack.c.l.b16 %v53
  %v441 = vunpack.c.l.b16 %v54
  %v442 = vunpack.c.l.b16 %v55
  %v443 = vunpack.c.l.b16 %v56
  %v444 = vunpack.c.l.b16 %v57
  %v445 = vunpack.c.l.b16 %v58
  %v446 = vunpack.c.l.b16 %v59
  %v447 = vunpack.c.l.b16 %v60
  %v448 = vunpack.c.l.b16 %v61
  %v449 = vunpack.c.l.b16 %v62
  %v450 = vunpack.c.l.b16 %v63
  %v451 = vunpack.c.l.b16 %v64
  %v452 = vunpack.c.l.b16 %v65
  %v453 = vunpack.c.l.b16 %v66
  %v454 = vunpack.c.l.b16 %v67
  %v455 = vunpack.c.l.b16 %v68
  %v456 = vunpack.c.l.b16 %v69
  %v457 = vunpack.c.l.b16 %v70
  %v458 = vunpack.c.l.b16 %v71
  %v459 = vunpack.c.l.b16 %v72
  %v460 = vunpack.c.l.b16 %v73
  %v461 = vunpack.c.l.b16 %v74
  %v462 = vunpack.c.l.b16 %v75
  %v463 = vunpack.c.l.b16 %v76
  %v464 = vunpack.c.l.b16 %v77
  %v465 = vunpack.c.l.b16 %v78
  %v466 = vunpack.c.l.b16 %v79
  %v467 = vunpack.c.l.b16 %v80
  %v468 = vunpack.c.l.b16 %v81
  %v469 = vunpack.c.l.b16 %v82
  %v470 = vunpack.c.l.b16 %v83
  %v471 = vunpack.c.l.b16 %v84
  %v472 = vunpack.c.l.b16 %v85
  %v473 = vunpack.c.l.b16 %v86
  %v474 = vunpack.c.l.b16 %v87
  %v475 = vunpack.c.l.b16 %v88
  %v476 = vunpack.c.l.b16 %v89
  %v477 = vunpack.c.l.b16 %v90
  %v478 = vunpack.c.l.b16 %v91
  %v479 = vunpack.c.l.b16 %v92
  %v480 = vunpack.c.l.b16 %v93
  %v481 = vunpack.c.l.b16 %v94
  %v482 = vunpack.c.l.b16 %v95
  %v483 = vunpack.c.l.b16 %v96
  %v484 = vunpack.c.l.b16 %v97
  %v485 = vunpack.c.l.b16 %v98
  %v486 = vunpack.c.l.b16 %v99
  %v487 = vunpack.c.l.b16 %v100
  %v488 = vunpack.c.l.b16 %v101
  %v489 = vunpack.c.l.b16 %v102
  %v490 = vunpack.c.l.b16 %v103
  %v491 = vunpack.c.l.b16 %v104
  %v492 = vunpack.c.l.b16 %v105
  %v493 = vunpack.c.l.b16 %v106
  %v494 = vunpack.c.l.b16 %v107
  %v495 = vunpack.c.l.b16 %v108
  %v496 = vunpack.c.l.b16 %v109
  %v497 = vunpack.c.l.b16 %v110
  %v498 = vunpack.c.l.b16 %v111
  %v499 = vunpack.c.l.b16 %v112
  %v500 = vunpack.c.l.b16 %v113
  %v501 = vunpack.c.l.b16 %v114
  %v502 = vunpack.c.l.b16 %v115
  %v503 = vunpack.c.l.b16 %v116
  %v504 = vunpack.c.l.b16 %v117
  %v505 = vunpack.c.l.b16 %v118
  %v506 = vunpack.c.l.b16 %v119
  %v507 = vunpack.c.l.b16 %v120
  %v508 = vunpack.c.l.b16 %v121
  %v509 = vunpack.c.l.b16 %v122
  %v510 = vunpack.c.l.b16 %v123
  %v511 = vunpack.c.l.b16 %v124
  %v512 = vunpack.c.l.b16 %v125
  %v513 = vunpack.c.l.b16 %v126
  %v514 = vunpack.c.l.b16 %v127
  %v515 = vunpack.c.l.b16 %v128
  %v516 = vunpack.c.l.b16 %v129
  %v517 = vunpack.c.l.b16 %v130
  %v518 = vunpack.c.l.b16 %v131
  %v519 = vunpack.c.l.b16 %v132
  %v520 = vunpack.c.l.b16 %v133
  %v521 = vunpack.c.l.b16 %v134
  %v522 = vunpack.c.l.b16 %v135
  %v523 = vunpack.c.l.b16 %v136
  %v524 = vunpack.c.l.b16 %v137
  %v525 = vunpack.c.l.b16 %v138
  %v526 = vunpack.c.l.b16 %v139
  %v527 = vunpack.c.l.b16 %v140
  %v528 = vunpack.c.l.b16 %v141
  %v529 = vunpack.c.l.b16 %v142
  %v530 = vunpack.c.l.b16 %v143
  %v531 = vunpack.c.l.b16 %v144
  %v532 = vunpack.c.l.b16 %v145
  %v533 = vunpack.c.l.b16 %v146
  %v534 = vunpack.c.l.b16 %v147
  %v535 = vunpack.c.l.b16 %v148
  %v536 = vunpack.c.l.b16 %v149
  %v537 = vunpack.c.l.b16 %v150
  %v538 = vunpack.c.l.b16 %v151
  %v539 = vunpack.c.l.b16 %v152
  %v540 = vunpack.c.l.b16 %v153
  %v541 = vunpack.c.l.b16 %v154
  %v542 = vunpack.c.l.b16 %v155
  %v543 = vunpack.c.l.b16 %v156
  %v544 = vunpack.c.l.b16 %v157
  %v545 = vunpack.c.l.b16 %v158
  %v546 = vunpack.c.l.b16 %v159
  %v547 = vunpack.c.l.b16 %v160
  %v548 = vunpack.c.l.b16 %v161
  %v549 = vunpack.c.l.b16 %v162
  %v550 = vunpack.c.l.b16 %v163
  %v551 = vunpack.c.l.b16 %v164
  %v552 = vunpack.c.l.b16 %v165
  %v553 = vunpack.c.l.b16 %v166
  %v554 = vunpack.c.l.b16 %v167
  %v555 = vunpack.c.l.b16 %v168
  %v556 = vunpack.c.l.b16 %v169
  %v557 = vunpack.c.l.b16 %v170
  %v558 = vunpack.c.l.b16 %v171
  %v559 = vunpack.c.l.b16 %v172
  %v560 = vunpack.c.l.b16 %v173
  %v561 = vunpack.c.l.b16 %v174
  %v562 = vunpack.c.l.b16 %v175
  %v563 = vunpack.c.l.b16 %v176
  %v564 = vunpack.c.l.b16 %v177
  %v565 = vunpack.c.l.b16 %v178
  %v566 = vpack.c.b16 %v423, %v422
  %v567 = vpack.c.b16 %v425, %v424
  %v568 = vpack.c.b16 %v427, %v426
  %v569 = vpack.c.b16 %v429, %v428
  %v570 = vpack.c.b16 %v431, %v430
  %v571 = vpack.c.b16 %v433, %v432
  %v572 = vpack.c.b16 %v435, %v434
  %v573 = vpack.c.b16 %v437, %v436
  %v574 = vpack.c.b16 %v439, %v438
  %v575 = vpack.c.b16 %v441, %v440
  %v576 = vpack.c.b16 %v443, %v442
  %v577 = vpack.c.b16 %v445, %v444
  %v578 = vpack.c.b16 %v447, %v446
  %v579 = vpack.c.b16 %v449, %v448
  %v580 = vpack.c.b16 %v451, %v450
  %v581 = vpack.c.b16 %v453, %v452
  %v582 = vpack.c.b16 %v455, %v454
  %v583 = vpack.c.b16 %v457, %v456
  %v584 = vpack.c.b16 %v459, %v458
  %v585 = vpack.c.b16 %v461, %v460
  %v586 = vpack.c.b16 %v463, %v462
  %v587 = vpack.c.b16 %v465, %v464
  %v588 = vpack.c.b16 %v467, %v466
  %v589 = vpack.c.b16 %v469, %v468
  %v590 = vpack.c.b16 %v471, %v470
  %v591 = vpack.c.b16 %v473, %v472
  %v592 = vpack.c.b16 %v475, %v474
  %v593 = vpack.c.b16 %v477, %v476
  %v594 = vpack.c.b16 %v479, %v478
  %v595 = vpack.c.b16 %v481, %v480
  %v596 = vpack.c.b16 %v483, %v482
  %v597 = vpack.c.b16 %v485, %v484
  %v598 = vpack.c.b16 %v487, %v486
  %v599 = vpack.c.b16 %v489, %v488
  %v600 = vpack.c.b16 %v491, %v490
  %v601 = vpack.c.b16 %v493, %v492
  %v602 = vpack.c.b16 %v495, %v494
  %v603 = vpack.c.b16 %v497, %v496
  %v604 = vpack.c.b16 %v499, %v498
  %v605 = vpack.c.b16 %v501, %v500
  %v606 = vpack.c.b16 %v503, %v502
  %v607 = vpack.c.b16 %v505, %v504
  %v608 = vpack.c.b16 %v507, %v506
  %v609 = vpack.c.b16 %v509, %v508
  %v610 = vpack.c.b16 %v511, %v510
  %v611 = vpack.c.b16 %v513, %v512
  %v612 = vpack.c.b16 %v515, %v514
  %v613 = vpack.c.b16 %v517, %v516
  %v614 = vpack.c.b16 %v519, %v518
  %v615 = vpack.c.b16 %v521, %v520
  %v616 = vpack.c.b16 %v523, %v522
  %v617 = vpack.c.b16 %v525, %v524
  %v618 = vpack.c.b16 %v527, %v526
  %v619 = vpack.c.b16 %v529, %v528
  %v620 = vpack.c.b16 %v531, %v530
  %v621 = vpack.c.b16 %v533, %v532
  %v622 = vpack.c.b16 %v535, %v534
  %v623 = vpack.c.b16 %v537, %v536
  %v624 = vpack.c.b16 %v539, %v538
  %v625 = vpack.c.b16 %v541, %v540
  %v626 = vpack.c.b16 %v543, %v542
  %v627 = vpack.c.b16 %v545, %v544
  %v628 = vpack.c.b16 %v547, %v546
  %v629 = vpack.c.b16 %v549, %v548
  %v630 = vpack.c.b16 %v551, %v550
  %v631 = vpack.c.b16 %v553, %v552
  %v632 = vpack.c.b16 %v555, %v554
  %v633 = vpack.c.b16 %v557, %v556
  %v634 = vpack.c.b16 %v559, %v558
  %v635 = vpack.c.b16 %v561, %v560
  %v636 = vpack.c.b16 %v563, %v562
  %v637 = vpack.c.b16 %v565, %v564
  %710 = vmatprep.subr.bf16.mxu0 0
  %711 = vmatpush1.bf16.msra.mxu0 %v573
  %712 = vmatprep.subr.bf16.mxu0 0
  %713 = vmatpush1.bf16.msra.mxu0 %v572
  %714 = vmatprep.subr.bf16.mxu0 0
  %715 = vmatpush1.bf16.msra.mxu0 %v571
  %716 = vmatprep.subr.bf16.mxu0 0
  %717 = vmatpush1.bf16.msra.mxu0 %v570
  %718 = vmatprep.subr.bf16.mxu0 0
  %719 = vmatpush1.bf16.msra.mxu0 %v569
  %720 = vmatprep.subr.bf16.mxu0 0
  %721 = vmatpush1.bf16.msra.mxu0 %v568
  %722 = vmatprep.subr.bf16.mxu0 0
  %723 = vmatpush1.bf16.msra.mxu0 %v567
  %724 = vmatprep.subr.bf16.mxu0 0
  %725 = vmatpush1.bf16.msra.mxu0 %v566
  %726 = vmatprep.subr.bf16.mxu0 0
  %727 = vmatpush2.bf16.msra.mxu0 %v581
  %728 = vmatprep.subr.bf16.mxu0 0
  %729 = vmatpush2.bf16.msra.mxu0 %v580
  %730 = vmatprep.subr.bf16.mxu0 0
  %731 = vmatpush2.bf16.msra.mxu0 %v579
  %732 = vmatprep.subr.bf16.mxu0 0
  %733 = vmatpush2.bf16.msra.mxu0 %v578
  %734 = vmatprep.subr.bf16.mxu0 0
  %735 = vmatpush2.bf16.msra.mxu0 %v577
  %736 = vmatprep.subr.bf16.mxu0 0
  %737 = vmatpush2.bf16.msra.mxu0 %v576
  %738 = vmatprep.subr.bf16.mxu0 0
  %739 = vmatpush2.bf16.msra.mxu0 %v575
  %740 = vmatprep.subr.bf16.mxu0 0
  %741 = vmatpush2.bf16.msra.mxu0 %v574
  %742 = vmatprep.mubr.bf16.mxu0 %v243
  %743 = vmatmul.mubr.bf16.gmra.mxu0 %v242
  %v744 = vpop.f32.mrf.mxu0
  %v745 = vadd.f32 %v184, %v744
  %v746 = vpop.f32.mrf.mxu0
  %v747 = vpop.f32.mrf.mxu0
  %v748 = vadd.f32 %v184, %v747
  %v749 = vpop.f32.mrf.mxu0
  %750 = vmatprep.mubr.bf16.mxu0 %v252
  %751 = vmatmul.mubr.bf16.gmra.mxu0 %v251
  %v752 = vpop.f32.mrf.mxu0
  %v753 = vadd.f32 %v184, %v752
  %v754 = vpop.f32.mrf.mxu0
  %v755 = vpop.f32.mrf.mxu0
  %v756 = vadd.f32 %v184, %v755
  %v757 = vpop.f32.mrf.mxu0
  %758 = vdwg.mxu0
  %759 = vmatprep.subr.bf16.mxu0 0
  %760 = vmatpush1.bf16.msra.mxu0 %v589
  %761 = vmatprep.subr.bf16.mxu0 0
  %762 = vmatpush1.bf16.msra.mxu0 %v588
  %763 = vmatprep.subr.bf16.mxu0 0
  %764 = vmatpush1.bf16.msra.mxu0 %v587
  %765 = vmatprep.subr.bf16.mxu0 0
  %766 = vmatpush1.bf16.msra.mxu0 %v586
  %767 = vmatprep.subr.bf16.mxu0 0
  %768 = vmatpush1.bf16.msra.mxu0 %v585
  %769 = vmatprep.subr.bf16.mxu0 0
  %770 = vmatpush1.bf16.msra.mxu0 %v584
  %771 = vmatprep.subr.bf16.mxu0 0
  %772 = vmatpush1.bf16.msra.mxu0 %v583
  %773 = vmatprep.subr.bf16.mxu0 0
  %774 = vmatpush1.bf16.msra.mxu0 %v582
  %775 = vmatprep.subr.bf16.mxu0 0
  %776 = vmatpush2.bf16.msra.mxu0 %v597
  %777 = vmatprep.subr.bf16.mxu0 0
  %778 = vmatpush2.bf16.msra.mxu0 %v596
  %779 = vmatprep.subr.bf16.mxu0 0
  %780 = vmatpush2.bf16.msra.mxu0 %v595
  %781 = vmatprep.subr.bf16.mxu0 0
  %782 = vmatpush2.bf16.msra.mxu0 %v594
  %783 = vmatprep.subr.bf16.mxu0 0
  %784 = vmatpush2.bf16.msra.mxu0 %v593
  %785 = vmatprep.subr.bf16.mxu0 0
  %786 = vmatpush2.bf16.msra.mxu0 %v592
  %787 = vmatprep.subr.bf16.mxu0 0
  %788 = vmatpush2.bf16.msra.mxu0 %v591
  %789 = vmatprep.subr.bf16.mxu0 0
  %790 = vmatpush2.bf16.msra.mxu0 %v590
  %791 = vmatprep.mubr.bf16.mxu0 %v245
  %792 = vmatmul.mubr.bf16.gmra.mxu0 %v244
  %v793 = vpop.f32.mrf.mxu0
  %v794 = vadd.f32 %v745, %v793
  %v795 = vpop.f32.mrf.mxu0
  %v796 = vpop.f32.mrf.mxu0
  %v797 = vadd.f32 %v748, %v796
  %v798 = vpop.f32.mrf.mxu0
  %799 = vmatprep.mubr.bf16.mxu0 %v254
  %800 = vmatmul.mubr.bf16.gmra.mxu0 %v253
  %v801 = vpop.f32.mrf.mxu0
  %v802 = vadd.f32 %v753, %v801
  %v803 = vpop.f32.mrf.mxu0
  %v804 = vpop.f32.mrf.mxu0
  %v805 = vadd.f32 %v756, %v804
  %v806 = vpop.f32.mrf.mxu0
  %807 = vdwg.mxu0
  %808 = vmatprep.subr.bf16.mxu0 0
  %809 = vmatpush1.bf16.msra.mxu0 %v605
  %810 = vmatprep.subr.bf16.mxu0 0
  %811 = vmatpush1.bf16.msra.mxu0 %v604
  %812 = vmatprep.subr.bf16.mxu0 0
  %813 = vmatpush1.bf16.msra.mxu0 %v603
  %814 = vmatprep.subr.bf16.mxu0 0
  %815 = vmatpush1.bf16.msra.mxu0 %v602
  %816 = vmatprep.subr.bf16.mxu0 0
  %817 = vmatpush1.bf16.msra.mxu0 %v601
  %818 = vmatprep.subr.bf16.mxu0 0
  %819 = vmatpush1.bf16.msra.mxu0 %v600
  %820 = vmatprep.subr.bf16.mxu0 0
  %821 = vmatpush1.bf16.msra.mxu0 %v599
  %822 = vmatprep.subr.bf16.mxu0 0
  %823 = vmatpush1.bf16.msra.mxu0 %v598
  %824 = vmatprep.subr.bf16.mxu0 0
  %825 = vmatpush2.bf16.msra.mxu0 %v613
  %826 = vmatprep.subr.bf16.mxu0 0
  %827 = vmatpush2.bf16.msra.mxu0 %v612
  %828 = vmatprep.subr.bf16.mxu0 0
  %829 = vmatpush2.bf16.msra.mxu0 %v611
  %830 = vmatprep.subr.bf16.mxu0 0
  %831 = vmatpush2.bf16.msra.mxu0 %v610
  %832 = vmatprep.subr.bf16.mxu0 0
  %833 = vmatpush2.bf16.msra.mxu0 %v609
  %834 = vmatprep.subr.bf16.mxu0 0
  %835 = vmatpush2.bf16.msra.mxu0 %v608
  %836 = vmatprep.subr.bf16.mxu0 0
  %837 = vmatpush2.bf16.msra.mxu0 %v607
  %838 = vmatprep.subr.bf16.mxu0 0
  %839 = vmatpush2.bf16.msra.mxu0 %v606
  %840 = vmatprep.mubr.bf16.mxu0 %v247
  %841 = vmatmul.mubr.bf16.gmra.mxu0 %v246
  %v842 = vpop.f32.mrf.mxu0
  %v843 = vadd.f32 %v794, %v842
  %v844 = vpop.f32.mrf.mxu0
  %v845 = vpop.f32.mrf.mxu0
  %v846 = vadd.f32 %v797, %v845
  %v847 = vpop.f32.mrf.mxu0
  %848 = vmatprep.mubr.bf16.mxu0 %v256
  %849 = vmatmul.mubr.bf16.gmra.mxu0 %v255
  %v850 = vpop.f32.mrf.mxu0
  %v851 = vadd.f32 %v802, %v850
  %v852 = vpop.f32.mrf.mxu0
  %v853 = vpop.f32.mrf.mxu0
  %v854 = vadd.f32 %v805, %v853
  %v855 = vpop.f32.mrf.mxu0
  %856 = vdwg.mxu0
  %857 = vmatprep.subr.bf16.mxu0 0
  %858 = vmatpush1.bf16.msra.mxu0 %v621
  %859 = vmatprep.subr.bf16.mxu0 0
  %860 = vmatpush1.bf16.msra.mxu0 %v620
  %861 = vmatprep.subr.bf16.mxu0 0
  %862 = vmatpush1.bf16.msra.mxu0 %v619
  %863 = vmatprep.subr.bf16.mxu0 0
  %864 = vmatpush1.bf16.msra.mxu0 %v618
  %865 = vmatprep.subr.bf16.mxu0 0
  %866 = vmatpush1.bf16.msra.mxu0 %v617
  %867 = vmatprep.subr.bf16.mxu0 0
  %868 = vmatpush1.bf16.msra.mxu0 %v616
  %869 = vmatprep.subr.bf16.mxu0 0
  %870 = vmatpush1.bf16.msra.mxu0 %v615
  %871 = vmatprep.subr.bf16.mxu0 0
  %872 = vmatpush1.bf16.msra.mxu0 %v614
  %873 = vmatprep.subr.bf16.mxu0 0
  %874 = vmatpush2.bf16.msra.mxu0 %v629
  %875 = vmatprep.subr.bf16.mxu0 0
  %876 = vmatpush2.bf16.msra.mxu0 %v628
  %877 = vmatprep.subr.bf16.mxu0 0
  %878 = vmatpush2.bf16.msra.mxu0 %v627
  %879 = vmatprep.subr.bf16.mxu0 0
  %880 = vmatpush2.bf16.msra.mxu0 %v626
  %881 = vmatprep.subr.bf16.mxu0 0
  %882 = vmatpush2.bf16.msra.mxu0 %v625
  %883 = vmatprep.subr.bf16.mxu0 0
  %884 = vmatpush2.bf16.msra.mxu0 %v624
  %885 = vmatprep.subr.bf16.mxu0 0
  %886 = vmatpush2.bf16.msra.mxu0 %v623
  %887 = vmatprep.subr.bf16.mxu0 0
  %888 = vmatpush2.bf16.msra.mxu0 %v622
  %889 = vmatprep.mubr.bf16.mxu0 %v249
  %890 = vmatmul.mubr.bf16.gmra.mxu0 %v248
  %v891 = vpop.f32.mrf.mxu0
  %v892 = vadd.f32 %v843, %v891
  %v893 = vpop.f32.mrf.mxu0
  %v894 = vpop.f32.mrf.mxu0
  %v895 = vadd.f32 %v846, %v894
  %v896 = vpop.f32.mrf.mxu0
  %897 = vmatprep.mubr.bf16.mxu0 %v258
  %898 = vmatmul.mubr.bf16.gmra.mxu0 %v257
  %v899 = vpop.f32.mrf.mxu0
  %v900 = vadd.f32 %v851, %v899
  %v901 = vpop.f32.mrf.mxu0
  %v902 = vpop.f32.mrf.mxu0
  %v903 = vadd.f32 %v854, %v902
  %v904 = vpop.f32.mrf.mxu0
  %905 = vdwg.mxu0
  %906 = vmatprep.subr.bf16.mxu0 0
  %907 = vmatpush1.bf16.msra.mxu0 %v637
  %908 = vmatprep.subr.bf16.mxu0 0
  %909 = vmatpush1.bf16.msra.mxu0 %v636
  %910 = vmatprep.subr.bf16.mxu0 0
  %911 = vmatpush1.bf16.msra.mxu0 %v635
  %912 = vmatprep.subr.bf16.mxu0 0
  %913 = vmatpush1.bf16.msra.mxu0 %v634
  %914 = vmatprep.subr.bf16.mxu0 0
  %915 = vmatpush1.bf16.msra.mxu0 %v633
  %916 = vmatprep.subr.bf16.mxu0 0
  %917 = vmatpush1.bf16.msra.mxu0 %v632
  %918 = vmatprep.subr.bf16.mxu0 0
  %919 = vmatpush1.bf16.msra.mxu0 %v631
  %920 = vmatprep.subr.bf16.mxu0 0
  %921 = vmatpush1.bf16.msra.mxu0 %v630
  %922 = vmatprep.subr.bf16.mxu0 0
  %923 = vmatpush2.bf16.msra.mxu0 0
  %924 = vmatprep.subr.bf16.mxu0 0
  %925 = vmatpush2.bf16.msra.mxu0 0
  %926 = vmatprep.subr.bf16.mxu0 0
  %927 = vmatpush2.bf16.msra.mxu0 0
  %928 = vmatprep.subr.bf16.mxu0 0
  %929 = vmatpush2.bf16.msra.mxu0 0
  %930 = vmatprep.subr.bf16.mxu0 0
  %931 = vmatpush2.bf16.msra.mxu0 0
  %932 = vmatprep.subr.bf16.mxu0 0
  %933 = vmatpush2.bf16.msra.mxu0 0
  %934 = vmatprep.subr.bf16.mxu0 0
  %935 = vmatpush2.bf16.msra.mxu0 0
  %936 = vmatprep.subr.bf16.mxu0 0
  %937 = vmatpush2.bf16.msra.mxu0 0
  %938 = vmatprep.mubr.bf16.mxu0 0
  %939 = vmatmul.mubr.bf16.gmra.mxu0 %v250
  %v940 = vpop.f32.mrf.mxu0
  %v941 = vadd.f32 %v892, %v940
  %v942 = vpop.f32.mrf.mxu0
  %v943 = vpop.f32.mrf.mxu0
  %v944 = vadd.f32 %v895, %v943
  %v945 = vpop.f32.mrf.mxu0
  %946 = vmatprep.mubr.bf16.mxu0 0
  %947 = vmatmul.mubr.bf16.gmra.mxu0 %v259
  %v948 = vpop.f32.mrf.mxu0
  %v949 = vadd.f32 %v900, %v948
  %v950 = vpop.f32.mrf.mxu0
  %v951 = vpop.f32.mrf.mxu0
  %v952 = vadd.f32 %v903, %v951
  %v953 = vpop.f32.mrf.mxu0
  %954 = vdwg.mxu0
  %955 = vst [vmem:[%s3] sm:$0xff] %v941
  %956 = vst [vmem:[%s3 + $0x8] sm:$0xff] %v944
  %957 = vst [vmem:[%s3 + $0x10] sm:$0xff] %v949
  %958 = vst [vmem:[%s3 + $0x18] sm:$0xff] %v952
  // Predicated region
  $region14: #{compressor_forward.11} parent=0 // pred_check
    _
  $region15: #{compressor_forward.11} parent=0 // pred_check_branch
    %960 = sbr.rel (0) target = $region17
  $region16: #{compressor_forward.11} parent=0 // pred_region
    _
  $region17: #{compressor_forward.11} parent=0 // pred_fallthru
    _
  // Predicated region
  $region18: #{compressor_forward.11} parent=0 // pred_check
    _
  $region19: #{compressor_forward.11} parent=0 // pred_check_branch
    %962 = sbr.rel (0) target = $region21
  $region20: #{compressor_forward.11} parent=0 // pred_region
    _
  $region21: #{compressor_forward.11} parent=0 // pred_fallthru
    _

// kernel: compressor_forward.12
$region0: #{compressor_forward.12}
  #allocation0 [shape = 'u32[]', space=smem, size = 0x4, offset = 0x4, fixed_abs, tag = 'smem constant byte address 0x4 - core index']
  #allocation1 [shape = 'u32[144,128]{1,0:T(1,128)}', space=vmem, size = 0x12000, scoped, tag = 'internal scratch']
  %s0 = inlined_call_operand.vmem [shape: bf16[32,1152], index: 0, kind: input, shape index: {}]
  %s1 = inlined_call_operand.vmem [shape: bf16[1152,128], index: 1, kind: input, shape index: {}]
  %s2 = inlined_call_operand.vmem [shape: f32[1,128], index: 2, kind: input, shape index: {}]
  %s3 = inlined_call_operand.vmem [shape: f32[32,128], index: 3, kind: output, shape index: {}]
  %s4 = sld [smem:[#allocation0]]
  $region22: #{compressor_forward.12} parent=0
    _
  %s6 = ssub.s32 1, %s4
  %s7 = scalar_select 0, %s6, %s4
  // Predicated region
  $region2: #{compressor_forward.12} parent=0 // pred_check
    _
  $region3: #{compressor_forward.12} parent=0 // pred_check_branch
    %9 = sbr.rel (0) target = $region5
  $region4: #{compressor_forward.12} parent=0 // pred_region
    _
  $region5: #{compressor_forward.12} parent=0 // pred_fallthru
    _
  // Predicated region
  $region6: #{compressor_forward.12} parent=0 // pred_check
    _
  $region7: #{compressor_forward.12} parent=0 // pred_check_branch
    %11 = sbr.rel (0) target = $region9
  $region8: #{compressor_forward.12} parent=0 // pred_region
    _
  $region9: #{compressor_forward.12} parent=0 // pred_fallthru
    _
  // Predicated region
  $region10: #{compressor_forward.12} parent=0 // pred_check
    _
  $region11: #{compressor_forward.12} parent=0 // pred_check_branch
    %13 = sbr.rel (0) target = $region13
  $region12: #{compressor_forward.12} parent=0 // pred_region
    _
  $region13: #{compressor_forward.12} parent=0 // pred_fallthru
    _
  %v15 = vld [vmem:[%s0] sm:$0xff]
  %v16 = vld [vmem:[%s0 + $0x8] sm:$0xff]
  %v17 = vld [vmem:[%s0 + $0x10] sm:$0xff]
  %v18 = vld [vmem:[%s0 + $0x18] sm:$0xff]
  %v19 = vld [vmem:[%s0 + $0x20] sm:$0xf]
  %v20 = vld [vmem:[%s0 + $0x24] sm:$0xff]
  %v21 = vld [vmem:[%s0 + $0x2c] sm:$0xff]
  %v22 = vld [vmem:[%s0 + $0x34] sm:$0xff]
  %v23 = vld [vmem:[%s0 + $0x3c] sm:$0xff]
  %v24 = vld [vmem:[%s0 + $0x44] sm:$0xf]
  %v25 = vld [vmem:[%s0 + $0x48] sm:$0xff]
  %v26 = vld [vmem:[%s0 + $0x50] sm:$0xff]
  %v27 = vld [vmem:[%s0 + $0x58] sm:$0xff]
  %v28 = vld [vmem:[%s0 + $0x60] sm:$0xff]
  %v29 = vld [vmem:[%s0 + $0x68] sm:$0xf]
  %v30 = vld [vmem:[%s0 + $0x6c] sm:$0xff]
  %v31 = vld [vmem:[%s0 + $0x74] sm:$0xff]
  %v32 = vld [vmem:[%s0 + $0x7c] sm:$0xff]
  %v33 = vld [vmem:[%s0 + $0x84] sm:$0xff]
  %v34 = vld [vmem:[%s0 + $0x8c] sm:$0xf]
  %v35 = vld [vmem:[%s1] sm:$0xf]
  %v36 = vld [vmem:[%s1 + $0x4] sm:$0xf]
  %v37 = vld [vmem:[%s1 + $0x8] sm:$0xf]
  %v38 = vld [vmem:[%s1 + $0xc] sm:$0xf]
  %v39 = vld [vmem:[%s1 + $0x10] sm:$0xf]
  %v40 = vld [vmem:[%s1 + $0x14] sm:$0xf]
  %v41 = vld [vmem:[%s1 + $0x18] sm:$0xf]
  %v42 = vld [vmem:[%s1 + $0x1c] sm:$0xf]
  %v43 = vld [vmem:[%s1 + $0x20] sm:$0xf]
  %v44 = vld [vmem:[%s1 + $0x24] sm:$0xf]
  %v45 = vld [vmem:[%s1 + $0x28] sm:$0xf]
  %v46 = vld [vmem:[%s1 + $0x2c] sm:$0xf]
  %v47 = vld [vmem:[%s1 + $0x30] sm:$0xf]
  %v48 = vld [vmem:[%s1 + $0x34] sm:$0xf]
  %v49 = vld [vmem:[%s1 + $0x38] sm:$0xf]
  %v50 = vld [vmem:[%s1 + $0x3c] sm:$0xf]
  %v51 = vld [vmem:[%s1 + $0x40] sm:$0xf]
  %v52 = vld [vmem:[%s1 + $0x44] sm:$0xf]
  %v53 = vld [vmem:[%s1 + $0x48] sm:$0xf]
  %v54 = vld [vmem:[%s1 + $0x4c] sm:$0xf]
  %v55 = vld [vmem:[%s1 + $0x50] sm:$0xf]
  %v56 = vld [vmem:[%s1 + $0x54] sm:$0xf]
  %v57 = vld [vmem:[%s1 + $0x58] sm:$0xf]
  %v58 = vld [vmem:[%s1 + $0x5c] sm:$0xf]
  %v59 = vld [vmem:[%s1 + $0x60] sm:$0xf]
  %v60 = vld [vmem:[%s1 + $0x64] sm:$0xf]
  %v61 = vld [vmem:[%s1 + $0x68] sm:$0xf]
  %v62 = vld [vmem:[%s1 + $0x6c] sm:$0xf]
  %v63 = vld [vmem:[%s1 + $0x70] sm:$0xf]
  %v64 = vld [vmem:[%s1 + $0x74] sm:$0xf]
  %v65 = vld [vmem:[%s1 + $0x78] sm:$0xf]
  %v66 = vld [vmem:[%s1 + $0x7c] sm:$0xf]
  %v67 = vld [vmem:[%s1 + $0x80] sm:$0xf]
  %v68 = vld [vmem:[%s1 + $0x84] sm:$0xf]
  %v69 = vld [vmem:[%s1 + $0x88] sm:$0xf]
  %v70 = vld [vmem:[%s1 + $0x8c] sm:$0xf]
  %v71 = vld [vmem:[%s1 + $0x90] sm:$0xf]
  %v72 = vld [vmem:[%s1 + $0x94] sm:$0xf]
  %v73 = vld [vmem:[%s1 + $0x98] sm:$0xf]
  %v74 = vld [vmem:[%s1 + $0x9c] sm:$0xf]
  %v75 = vld [vmem:[%s1 + $0xa0] sm:$0xf]
  %v76 = vld [vmem:[%s1 + $0xa4] sm:$0xf]
  %v77 = vld [vmem:[%s1 + $0xa8] sm:$0xf]
  %v78 = vld [vmem:[%s1 + $0xac] sm:$0xf]
  %v79 = vld [vmem:[%s1 + $0xb0] sm:$0xf]
  %v80 = vld [vmem:[%s1 + $0xb4] sm:$0xf]
  %v81 = vld [vmem:[%s1 + $0xb8] sm:$0xf]
  %v82 = vld [vmem:[%s1 + $0xbc] sm:$0xf]
  %v83 = vld [vmem:[%s1 + $0xc0] sm:$0xf]
  %v84 = vld [vmem:[%s1 + $0xc4] sm:$0xf]
  %v85 = vld [vmem:[%s1 + $0xc8] sm:$0xf]
  %v86 = vld [vmem:[%s1 + $0xcc] sm:$0xf]
  %v87 = vld [vmem:[%s1 + $0xd0] sm:$0xf]
  %v88 = vld [vmem:[%s1 + $0xd4] sm:$0xf]
  %v89 = vld [vmem:[%s1 + $0xd8] sm:$0xf]
  %v90 = vld [vmem:[%s1 + $0xdc] sm:$0xf]
  %v91 = vld [vmem:[%s1 + $0xe0] sm:$0xf]
  %v92 = vld [vmem:[%s1 + $0xe4] sm:$0xf]
  %v93 = vld [vmem:[%s1 + $0xe8] sm:$0xf]
  %v94 = vld [vmem:[%s1 + $0xec] sm:$0xf]
  %v95 = vld [vmem:[%s1 + $0xf0] sm:$0xf]
  %v96 = vld [vmem:[%s1 + $0xf4] sm:$0xf]
  %v97 = vld [vmem:[%s1 + $0xf8] sm:$0xf]
  %v98 = vld [vmem:[%s1 + $0xfc] sm:$0xf]
  %v99 = vld [vmem:[%s1 + $0x100] sm:$0xf]
  %v100 = vld [vmem:[%s1 + $0x104] sm:$0xf]
  %v101 = vld [vmem:[%s1 + $0x108] sm:$0xf]
  %v102 = vld [vmem:[%s1 + $0x10c] sm:$0xf]
  %v103 = vld [vmem:[%s1 + $0x110] sm:$0xf]
  %v104 = vld [vmem:[%s1 + $0x114] sm:$0xf]
  %v105 = vld [vmem:[%s1 + $0x118] sm:$0xf]
  %v106 = vld [vmem:[%s1 + $0x11c] sm:$0xf]
  %v107 = vld [vmem:[%s1 + $0x120] sm:$0xf]
  %v108 = vld [vmem:[%s1 + $0x124] sm:$0xf]
  %v109 = vld [vmem:[%s1 + $0x128] sm:$0xf]
  %v110 = vld [vmem:[%s1 + $0x12c] sm:$0xf]
  %v111 = vld [vmem:[%s1 + $0x130] sm:$0xf]
  %v112 = vld [vmem:[%s1 + $0x134] sm:$0xf]
  %v113 = vld [vmem:[%s1 + $0x138] sm:$0xf]
  %v114 = vld [vmem:[%s1 + $0x13c] sm:$0xf]
  %v115 = vld [vmem:[%s1 + $0x140] sm:$0xf]
  %v116 = vld [vmem:[%s1 + $0x144] sm:$0xf]
  %v117 = vld [vmem:[%s1 + $0x148] sm:$0xf]
  %v118 = vld [vmem:[%s1 + $0x14c] sm:$0xf]
  %v119 = vld [vmem:[%s1 + $0x150] sm:$0xf]
  %v120 = vld [vmem:[%s1 + $0x154] sm:$0xf]
  %v121 = vld [vmem:[%s1 + $0x158] sm:$0xf]
  %v122 = vld [vmem:[%s1 + $0x15c] sm:$0xf]
  %v123 = vld [vmem:[%s1 + $0x160] sm:$0xf]
  %v124 = vld [vmem:[%s1 + $0x164] sm:$0xf]
  %v125 = vld [vmem:[%s1 + $0x168] sm:$0xf]
  %v126 = vld [vmem:[%s1 + $0x16c] sm:$0xf]
  %v127 = vld [vmem:[%s1 + $0x170] sm:$0xf]
  %v128 = vld [vmem:[%s1 + $0x174] sm:$0xf]
  %v129 = vld [vmem:[%s1 + $0x178] sm:$0xf]
  %v130 = vld [vmem:[%s1 + $0x17c] sm:$0xf]
  %v131 = vld [vmem:[%s1 + $0x180] sm:$0xf]
  %v132 = vld [vmem:[%s1 + $0x184] sm:$0xf]
  %v133 = vld [vmem:[%s1 + $0x188] sm:$0xf]
  %v134 = vld [vmem:[%s1 + $0x18c] sm:$0xf]
  %v135 = vld [vmem:[%s1 + $0x190] sm:$0xf]
  %v136 = vld [vmem:[%s1 + $0x194] sm:$0xf]
  %v137 = vld [vmem:[%s1 + $0x198] sm:$0xf]
  %v138 = vld [vmem:[%s1 + $0x19c] sm:$0xf]
  %v139 = vld [vmem:[%s1 + $0x1a0] sm:$0xf]
  %v140 = vld [vmem:[%s1 + $0x1a4] sm:$0xf]
  %v141 = vld [vmem:[%s1 + $0x1a8] sm:$0xf]
  %v142 = vld [vmem:[%s1 + $0x1ac] sm:$0xf]
  %v143 = vld [vmem:[%s1 + $0x1b0] sm:$0xf]
  %v144 = vld [vmem:[%s1 + $0x1b4] sm:$0xf]
  %v145 = vld [vmem:[%s1 + $0x1b8] sm:$0xf]
  %v146 = vld [vmem:[%s1 + $0x1bc] sm:$0xf]
  %v147 = vld [vmem:[%s1 + $0x1c0] sm:$0xf]
  %v148 = vld [vmem:[%s1 + $0x1c4] sm:$0xf]
  %v149 = vld [vmem:[%s1 + $0x1c8] sm:$0xf]
  %v150 = vld [vmem:[%s1 + $0x1cc] sm:$0xf]
  %v151 = vld [vmem:[%s1 + $0x1d0] sm:$0xf]
  %v152 = vld [vmem:[%s1 + $0x1d4] sm:$0xf]
  %v153 = vld [vmem:[%s1 + $0x1d8] sm:$0xf]
  %v154 = vld [vmem:[%s1 + $0x1dc] sm:$0xf]
  %v155 = vld [vmem:[%s1 + $0x1e0] sm:$0xf]
  %v156 = vld [vmem:[%s1 + $0x1e4] sm:$0xf]
  %v157 = vld [vmem:[%s1 + $0x1e8] sm:$0xf]
  %v158 = vld [vmem:[%s1 + $0x1ec] sm:$0xf]
  %v159 = vld [vmem:[%s1 + $0x1f0] sm:$0xf]
  %v160 = vld [vmem:[%s1 + $0x1f4] sm:$0xf]
  %v161 = vld [vmem:[%s1 + $0x1f8] sm:$0xf]
  %v162 = vld [vmem:[%s1 + $0x1fc] sm:$0xf]
  %v163 = vld [vmem:[%s1 + $0x200] sm:$0xf]
  %v164 = vld [vmem:[%s1 + $0x204] sm:$0xf]
  %v165 = vld [vmem:[%s1 + $0x208] sm:$0xf]
  %v166 = vld [vmem:[%s1 + $0x20c] sm:$0xf]
  %v167 = vld [vmem:[%s1 + $0x210] sm:$0xf]
  %v168 = vld [vmem:[%s1 + $0x214] sm:$0xf]
  %v169 = vld [vmem:[%s1 + $0x218] sm:$0xf]
  %v170 = vld [vmem:[%s1 + $0x21c] sm:$0xf]
  %v171 = vld [vmem:[%s1 + $0x220] sm:$0xf]
  %v172 = vld [vmem:[%s1 + $0x224] sm:$0xf]
  %v173 = vld [vmem:[%s1 + $0x228] sm:$0xf]
  %v174 = vld [vmem:[%s1 + $0x22c] sm:$0xf]
  %v175 = vld [vmem:[%s1 + $0x230] sm:$0xf]
  %v176 = vld [vmem:[%s1 + $0x234] sm:$0xf]
  %v177 = vld [vmem:[%s1 + $0x238] sm:$0xf]
  %v178 = vld [vmem:[%s1 + $0x23c] sm:$0xf]
  %v179 = vld [vmem:[%s2] sm:$0x1]
  %v181 = vlaneseq
  %v182 = vshrl.u32 %v181, 7
  %v183 = vsub.s32 0, %v182
  %v184 = vrot.slane %v179, %v183
  %v206 = vunpack.c.l.b16 %v15
  %v207 = vunpack.c.h.b16 %v15
  %v208 = vunpack.c.l.b16 %v16
  %v209 = vunpack.c.h.b16 %v16
  %v210 = vunpack.c.l.b16 %v17
  %v211 = vunpack.c.h.b16 %v17
  %v212 = vunpack.c.l.b16 %v18
  %v213 = vunpack.c.h.b16 %v18
  %v214 = vunpack.c.l.b16 %v19
  %v215 = vunpack.c.l.b16 %v20
  %v216 = vunpack.c.h.b16 %v20
  %v217 = vunpack.c.l.b16 %v21
  %v218 = vunpack.c.h.b16 %v21
  %v219 = vunpack.c.l.b16 %v22
  %v220 = vunpack.c.h.b16 %v22
  %v221 = vunpack.c.l.b16 %v23
  %v222 = vunpack.c.h.b16 %v23
  %v223 = vunpack.c.l.b16 %v24
  %v224 = vunpack.c.l.b16 %v25
  %v225 = vunpack.c.h.b16 %v25
  %v226 = vunpack.c.l.b16 %v26
  %v227 = vunpack.c.h.b16 %v26
  %v228 = vunpack.c.l.b16 %v27
  %v229 = vunpack.c.h.b16 %v27
  %v230 = vunpack.c.l.b16 %v28
  %v231 = vunpack.c.h.b16 %v28
  %v232 = vunpack.c.l.b16 %v29
  %v233 = vunpack.c.l.b16 %v30
  %v234 = vunpack.c.h.b16 %v30
  %v235 = vunpack.c.l.b16 %v31
  %v236 = vunpack.c.h.b16 %v31
  %v237 = vunpack.c.l.b16 %v32
  %v238 = vunpack.c.h.b16 %v32
  %v239 = vunpack.c.l.b16 %v33
  %v240 = vunpack.c.h.b16 %v33
  %v241 = vunpack.c.l.b16 %v34
  %v242 = vpack.c.b16 %v215, %v206
  %v243 = vpack.c.b16 %v216, %v207
  %v244 = vpack.c.b16 %v217, %v208
  %v245 = vpack.c.b16 %v218, %v209
  %v246 = vpack.c.b16 %v219, %v210
  %v247 = vpack.c.b16 %v220, %v211
  %v248 = vpack.c.b16 %v221, %v212
  %v249 = vpack.c.b16 %v222, %v213
  %v250 = vpack.c.b16 %v223, %v214
  %v251 = vpack.c.b16 %v233, %v224
  %v252 = vpack.c.b16 %v234, %v225
  %v253 = vpack.c.b16 %v235, %v226
  %v254 = vpack.c.b16 %v236, %v227
  %v255 = vpack.c.b16 %v237, %v228
  %v256 = vpack.c.b16 %v238, %v229
  %v257 = vpack.c.b16 %v239, %v230
  %v258 = vpack.c.b16 %v240, %v231
  %v259 = vpack.c.b16 %v241, %v232
  %v422 = vunpack.c.l.b16 %v35
  %v423 = vunpack.c.l.b16 %v36
  %v424 = vunpack.c.l.b16 %v37
  %v425 = vunpack.c.l.b16 %v38
  %v426 = vunpack.c.l.b16 %v39
  %v427 = vunpack.c.l.b16 %v40
  %v428 = vunpack.c.l.b16 %v41
  %v429 = vunpack.c.l.b16 %v42
  %v430 = vunpack.c.l.b16 %v43
  %v431 = vunpack.c.l.b16 %v44
  %v432 = vunpack.c.l.b16 %v45
  %v433 = vunpack.c.l.b16 %v46
  %v434 = vunpack.c.l.b16 %v47
  %v435 = vunpack.c.l.b16 %v48
  %v436 = vunpack.c.l.b16 %v49
  %v437 = vunpack.c.l.b16 %v50
  %v438 = vunpack.c.l.b16 %v51
  %v439 = vunpack.c.l.b16 %v52
  %v440 = vunpack.c.l.b16 %v53
  %v441 = vunpack.c.l.b16 %v54
  %v442 = vunpack.c.l.b16 %v55
  %v443 = vunpack.c.l.b16 %v56
  %v444 = vunpack.c.l.b16 %v57
  %v445 = vunpack.c.l.b16 %v58
  %v446 = vunpack.c.l.b16 %v59
  %v447 = vunpack.c.l.b16 %v60
  %v448 = vunpack.c.l.b16 %v61
  %v449 = vunpack.c.l.b16 %v62
  %v450 = vunpack.c.l.b16 %v63
  %v451 = vunpack.c.l.b16 %v64
  %v452 = vunpack.c.l.b16 %v65
  %v453 = vunpack.c.l.b16 %v66
  %v454 = vunpack.c.l.b16 %v67
  %v455 = vunpack.c.l.b16 %v68
  %v456 = vunpack.c.l.b16 %v69
  %v457 = vunpack.c.l.b16 %v70
  %v458 = vunpack.c.l.b16 %v71
  %v459 = vunpack.c.l.b16 %v72
  %v460 = vunpack.c.l.b16 %v73
  %v461 = vunpack.c.l.b16 %v74
  %v462 = vunpack.c.l.b16 %v75
  %v463 = vunpack.c.l.b16 %v76
  %v464 = vunpack.c.l.b16 %v77
  %v465 = vunpack.c.l.b16 %v78
  %v466 = vunpack.c.l.b16 %v79
  %v467 = vunpack.c.l.b16 %v80
  %v468 = vunpack.c.l.b16 %v81
  %v469 = vunpack.c.l.b16 %v82
  %v470 = vunpack.c.l.b16 %v83
  %v471 = vunpack.c.l.b16 %v84
  %v472 = vunpack.c.l.b16 %v85
  %v473 = vunpack.c.l.b16 %v86
  %v474 = vunpack.c.l.b16 %v87
  %v475 = vunpack.c.l.b16 %v88
  %v476 = vunpack.c.l.b16 %v89
  %v477 = vunpack.c.l.b16 %v90
  %v478 = vunpack.c.l.b16 %v91
  %v479 = vunpack.c.l.b16 %v92
  %v480 = vunpack.c.l.b16 %v93
  %v481 = vunpack.c.l.b16 %v94
  %v482 = vunpack.c.l.b16 %v95
  %v483 = vunpack.c.l.b16 %v96
  %v484 = vunpack.c.l.b16 %v97
  %v485 = vunpack.c.l.b16 %v98
  %v486 = vunpack.c.l.b16 %v99
  %v487 = vunpack.c.l.b16 %v100
  %v488 = vunpack.c.l.b16 %v101
  %v489 = vunpack.c.l.b16 %v102
  %v490 = vunpack.c.l.b16 %v103
  %v491 = vunpack.c.l.b16 %v104
  %v492 = vunpack.c.l.b16 %v105
  %v493 = vunpack.c.l.b16 %v106
  %v494 = vunpack.c.l.b16 %v107
  %v495 = vunpack.c.l.b16 %v108
  %v496 = vunpack.c.l.b16 %v109
  %v497 = vunpack.c.l.b16 %v110
  %v498 = vunpack.c.l.b16 %v111
  %v499 = vunpack.c.l.b16 %v112
  %v500 = vunpack.c.l.b16 %v113
  %v501 = vunpack.c.l.b16 %v114
  %v502 = vunpack.c.l.b16 %v115
  %v503 = vunpack.c.l.b16 %v116
  %v504 = vunpack.c.l.b16 %v117
  %v505 = vunpack.c.l.b16 %v118
  %v506 = vunpack.c.l.b16 %v119
  %v507 = vunpack.c.l.b16 %v120
  %v508 = vunpack.c.l.b16 %v121
  %v509 = vunpack.c.l.b16 %v122
  %v510 = vunpack.c.l.b16 %v123
  %v511 = vunpack.c.l.b16 %v124
  %v512 = vunpack.c.l.b16 %v125
  %v513 = vunpack.c.l.b16 %v126
  %v514 = vunpack.c.l.b16 %v127
  %v515 = vunpack.c.l.b16 %v128
  %v516 = vunpack.c.l.b16 %v129
  %v517 = vunpack.c.l.b16 %v130
  %v518 = vunpack.c.l.b16 %v131
  %v519 = vunpack.c.l.b16 %v132
  %v520 = vunpack.c.l.b16 %v133
  %v521 = vunpack.c.l.b16 %v134
  %v522 = vunpack.c.l.b16 %v135
  %v523 = vunpack.c.l.b16 %v136
  %v524 = vunpack.c.l.b16 %v137
  %v525 = vunpack.c.l.b16 %v138
  %v526 = vunpack.c.l.b16 %v139
  %v527 = vunpack.c.l.b16 %v140
  %v528 = vunpack.c.l.b16 %v141
  %v529 = vunpack.c.l.b16 %v142
  %v530 = vunpack.c.l.b16 %v143
  %v531 = vunpack.c.l.b16 %v144
  %v532 = vunpack.c.l.b16 %v145
  %v533 = vunpack.c.l.b16 %v146
  %v534 = vunpack.c.l.b16 %v147
  %v535 = vunpack.c.l.b16 %v148
  %v536 = vunpack.c.l.b16 %v149
  %v537 = vunpack.c.l.b16 %v150
  %v538 = vunpack.c.l.b16 %v151
  %v539 = vunpack.c.l.b16 %v152
  %v540 = vunpack.c.l.b16 %v153
  %v541 = vunpack.c.l.b16 %v154
  %v542 = vunpack.c.l.b16 %v155
  %v543 = vunpack.c.l.b16 %v156
  %v544 = vunpack.c.l.b16 %v157
  %v545 = vunpack.c.l.b16 %v158
  %v546 = vunpack.c.l.b16 %v159
  %v547 = vunpack.c.l.b16 %v160
  %v548 = vunpack.c.l.b16 %v161
  %v549 = vunpack.c.l.b16 %v162
  %v550 = vunpack.c.l.b16 %v163
  %v551 = vunpack.c.l.b16 %v164
  %v552 = vunpack.c.l.b16 %v165
  %v553 = vunpack.c.l.b16 %v166
  %v554 = vunpack.c.l.b16 %v167
  %v555 = vunpack.c.l.b16 %v168
  %v556 = vunpack.c.l.b16 %v169
  %v557 = vunpack.c.l.b16 %v170
  %v558 = vunpack.c.l.b16 %v171
  %v559 = vunpack.c.l.b16 %v172
  %v560 = vunpack.c.l.b16 %v173
  %v561 = vunpack.c.l.b16 %v174
  %v562 = vunpack.c.l.b16 %v175
  %v563 = vunpack.c.l.b16 %v176
  %v564 = vunpack.c.l.b16 %v177
  %v565 = vunpack.c.l.b16 %v178
  %v566 = vpack.c.b16 %v423, %v422
  %v567 = vpack.c.b16 %v425, %v424
  %v568 = vpack.c.b16 %v427, %v426
  %v569 = vpack.c.b16 %v429, %v428
  %v570 = vpack.c.b16 %v431, %v430
  %v571 = vpack.c.b16 %v433, %v432
  %v572 = vpack.c.b16 %v435, %v434
  %v573 = vpack.c.b16 %v437, %v436
  %v574 = vpack.c.b16 %v439, %v438
  %v575 = vpack.c.b16 %v441, %v440
  %v576 = vpack.c.b16 %v443, %v442
  %v577 = vpack.c.b16 %v445, %v444
  %v578 = vpack.c.b16 %v447, %v446
  %v579 = vpack.c.b16 %v449, %v448
  %v580 = vpack.c.b16 %v451, %v450
  %v581 = vpack.c.b16 %v453, %v452
  %v582 = vpack.c.b16 %v455, %v454
  %v583 = vpack.c.b16 %v457, %v456
  %v584 = vpack.c.b16 %v459, %v458
  %v585 = vpack.c.b16 %v461, %v460
  %v586 = vpack.c.b16 %v463, %v462
  %v587 = vpack.c.b16 %v465, %v464
  %v588 = vpack.c.b16 %v467, %v466
  %v589 = vpack.c.b16 %v469, %v468
  %v590 = vpack.c.b16 %v471, %v470
  %v591 = vpack.c.b16 %v473, %v472
  %v592 = vpack.c.b16 %v475, %v474
  %v593 = vpack.c.b16 %v477, %v476
  %v594 = vpack.c.b16 %v479, %v478
  %v595 = vpack.c.b16 %v481, %v480
  %v596 = vpack.c.b16 %v483, %v482
  %v597 = vpack.c.b16 %v485, %v484
  %v598 = vpack.c.b16 %v487, %v486
  %v599 = vpack.c.b16 %v489, %v488
  %v600 = vpack.c.b16 %v491, %v490
  %v601 = vpack.c.b16 %v493, %v492
  %v602 = vpack.c.b16 %v495, %v494
  %v603 = vpack.c.b16 %v497, %v496
  %v604 = vpack.c.b16 %v499, %v498
  %v605 = vpack.c.b16 %v501, %v500
  %v606 = vpack.c.b16 %v503, %v502
  %v607 = vpack.c.b16 %v505, %v504
  %v608 = vpack.c.b16 %v507, %v506
  %v609 = vpack.c.b16 %v509, %v508
  %v610 = vpack.c.b16 %v511, %v510
  %v611 = vpack.c.b16 %v513, %v512
  %v612 = vpack.c.b16 %v515, %v514
  %v613 = vpack.c.b16 %v517, %v516
  %v614 = vpack.c.b16 %v519, %v518
  %v615 = vpack.c.b16 %v521, %v520
  %v616 = vpack.c.b16 %v523, %v522
  %v617 = vpack.c.b16 %v525, %v524
  %v618 = vpack.c.b16 %v527, %v526
  %v619 = vpack.c.b16 %v529, %v528
  %v620 = vpack.c.b16 %v531, %v530
  %v621 = vpack.c.b16 %v533, %v532
  %v622 = vpack.c.b16 %v535, %v534
  %v623 = vpack.c.b16 %v537, %v536
  %v624 = vpack.c.b16 %v539, %v538
  %v625 = vpack.c.b16 %v541, %v540
  %v626 = vpack.c.b16 %v543, %v542
  %v627 = vpack.c.b16 %v545, %v544
  %v628 = vpack.c.b16 %v547, %v546
  %v629 = vpack.c.b16 %v549, %v548
  %v630 = vpack.c.b16 %v551, %v550
  %v631 = vpack.c.b16 %v553, %v552
  %v632 = vpack.c.b16 %v555, %v554
  %v633 = vpack.c.b16 %v557, %v556
  %v634 = vpack.c.b16 %v559, %v558
  %v635 = vpack.c.b16 %v561, %v560
  %v636 = vpack.c.b16 %v563, %v562
  %v637 = vpack.c.b16 %v565, %v564
  %710 = vmatprep.subr.bf16.mxu0 0
  %711 = vmatpush1.bf16.msra.mxu0 %v573
  %712 = vmatprep.subr.bf16.mxu0 0
  %713 = vmatpush1.bf16.msra.mxu0 %v572
  %714 = vmatprep.subr.bf16.mxu0 0
  %715 = vmatpush1.bf16.msra.mxu0 %v571
  %716 = vmatprep.subr.bf16.mxu0 0
  %717 = vmatpush1.bf16.msra.mxu0 %v570
  %718 = vmatprep.subr.bf16.mxu0 0
  %719 = vmatpush1.bf16.msra.mxu0 %v569
  %720 = vmatprep.subr.bf16.mxu0 0
  %721 = vmatpush1.bf16.msra.mxu0 %v568
  %722 = vmatprep.subr.bf16.mxu0 0
  %723 = vmatpush1.bf16.msra.mxu0 %v567
  %724 = vmatprep.subr.bf16.mxu0 0
  %725 = vmatpush1.bf16.msra.mxu0 %v566
  %726 = vmatprep.subr.bf16.mxu0 0
  %727 = vmatpush2.bf16.msra.mxu0 %v581
  %728 = vmatprep.subr.bf16.mxu0 0
  %729 = vmatpush2.bf16.msra.mxu0 %v580
  %730 = vmatprep.subr.bf16.mxu0 0
  %731 = vmatpush2.bf16.msra.mxu0 %v579
  %732 = vmatprep.subr.bf16.mxu0 0
  %733 = vmatpush2.bf16.msra.mxu0 %v578
  %734 = vmatprep.subr.bf16.mxu0 0
  %735 = vmatpush2.bf16.msra.mxu0 %v577
  %736 = vmatprep.subr.bf16.mxu0 0
  %737 = vmatpush2.bf16.msra.mxu0 %v576
  %738 = vmatprep.subr.bf16.mxu0 0
  %739 = vmatpush2.bf16.msra.mxu0 %v575
  %740 = vmatprep.subr.bf16.mxu0 0
  %741 = vmatpush2.bf16.msra.mxu0 %v574
  %742 = vmatprep.mubr.bf16.mxu0 %v243
  %743 = vmatmul.mubr.bf16.gmra.mxu0 %v242
  %v744 = vpop.f32.mrf.mxu0
  %v745 = vadd.f32 %v184, %v744
  %v746 = vpop.f32.mrf.mxu0
  %v747 = vpop.f32.mrf.mxu0
  %v748 = vadd.f32 %v184, %v747
  %v749 = vpop.f32.mrf.mxu0
  %750 = vmatprep.mubr.bf16.mxu0 %v252
  %751 = vmatmul.mubr.bf16.gmra.mxu0 %v251
  %v752 = vpop.f32.mrf.mxu0
  %v753 = vadd.f32 %v184, %v752
  %v754 = vpop.f32.mrf.mxu0
  %v755 = vpop.f32.mrf.mxu0
  %v756 = vadd.f32 %v184, %v755
  %v757 = vpop.f32.mrf.mxu0
  %758 = vdwg.mxu0
  %759 = vmatprep.subr.bf16.mxu0 0
  %760 = vmatpush1.bf16.msra.mxu0 %v589
  %761 = vmatprep.subr.bf16.mxu0 0
  %762 = vmatpush1.bf16.msra.mxu0 %v588
  %763 = vmatprep.subr.bf16.mxu0 0
  %764 = vmatpush1.bf16.msra.mxu0 %v587
  %765 = vmatprep.subr.bf16.mxu0 0
  %766 = vmatpush1.bf16.msra.mxu0 %v586
  %767 = vmatprep.subr.bf16.mxu0 0
  %768 = vmatpush1.bf16.msra.mxu0 %v585
  %769 = vmatprep.subr.bf16.mxu0 0
  %770 = vmatpush1.bf16.msra.mxu0 %v584
  %771 = vmatprep.subr.bf16.mxu0 0
  %772 = vmatpush1.bf16.msra.mxu0 %v583
  %773 = vmatprep.subr.bf16.mxu0 0
  %774 = vmatpush1.bf16.msra.mxu0 %v582
  %775 = vmatprep.subr.bf16.mxu0 0
  %776 = vmatpush2.bf16.msra.mxu0 %v597
  %777 = vmatprep.subr.bf16.mxu0 0
  %778 = vmatpush2.bf16.msra.mxu0 %v596
  %779 = vmatprep.subr.bf16.mxu0 0
  %780 = vmatpush2.bf16.msra.mxu0 %v595
  %781 = vmatprep.subr.bf16.mxu0 0
  %782 = vmatpush2.bf16.msra.mxu0 %v594
  %783 = vmatprep.subr.bf16.mxu0 0
  %784 = vmatpush2.bf16.msra.mxu0 %v593
  %785 = vmatprep.subr.bf16.mxu0 0
  %786 = vmatpush2.bf16.msra.mxu0 %v592
  %787 = vmatprep.subr.bf16.mxu0 0
  %788 = vmatpush2.bf16.msra.mxu0 %v591
  %789 = vmatprep.subr.bf16.mxu0 0
  %790 = vmatpush2.bf16.msra.mxu0 %v590
  %791 = vmatprep.mubr.bf16.mxu0 %v245
  %792 = vmatmul.mubr.bf16.gmra.mxu0 %v244
  %v793 = vpop.f32.mrf.mxu0
  %v794 = vadd.f32 %v745, %v793
  %v795 = vpop.f32.mrf.mxu0
  %v796 = vpop.f32.mrf.mxu0
  %v797 = vadd.f32 %v748, %v796
  %v798 = vpop.f32.mrf.mxu0
  %799 = vmatprep.mubr.bf16.mxu0 %v254
  %800 = vmatmul.mubr.bf16.gmra.mxu0 %v253
  %v801 = vpop.f32.mrf.mxu0
  %v802 = vadd.f32 %v753, %v801
  %v803 = vpop.f32.mrf.mxu0
  %v804 = vpop.f32.mrf.mxu0
  %v805 = vadd.f32 %v756, %v804
  %v806 = vpop.f32.mrf.mxu0
  %807 = vdwg.mxu0
  %808 = vmatprep.subr.bf16.mxu0 0
  %809 = vmatpush1.bf16.msra.mxu0 %v605
  %810 = vmatprep.subr.bf16.mxu0 0
  %811 = vmatpush1.bf16.msra.mxu0 %v604
  %812 = vmatprep.subr.bf16.mxu0 0
  %813 = vmatpush1.bf16.msra.mxu0 %v603
  %814 = vmatprep.subr.bf16.mxu0 0
  %815 = vmatpush1.bf16.msra.mxu0 %v602
  %816 = vmatprep.subr.bf16.mxu0 0
  %817 = vmatpush1.bf16.msra.mxu0 %v601
  %818 = vmatprep.subr.bf16.mxu0 0
  %819 = vmatpush1.bf16.msra.mxu0 %v600
  %820 = vmatprep.subr.bf16.mxu0 0
  %821 = vmatpush1.bf16.msra.mxu0 %v599
  %822 = vmatprep.subr.bf16.mxu0 0
  %823 = vmatpush1.bf16.msra.mxu0 %v598
  %824 = vmatprep.subr.bf16.mxu0 0
  %825 = vmatpush2.bf16.msra.mxu0 %v613
  %826 = vmatprep.subr.bf16.mxu0 0
  %827 = vmatpush2.bf16.msra.mxu0 %v612
  %828 = vmatprep.subr.bf16.mxu0 0
  %829 = vmatpush2.bf16.msra.mxu0 %v611
  %830 = vmatprep.subr.bf16.mxu0 0
  %831 = vmatpush2.bf16.msra.mxu0 %v610
  %832 = vmatprep.subr.bf16.mxu0 0
  %833 = vmatpush2.bf16.msra.mxu0 %v609
  %834 = vmatprep.subr.bf16.mxu0 0
  %835 = vmatpush2.bf16.msra.mxu0 %v608
  %836 = vmatprep.subr.bf16.mxu0 0
  %837 = vmatpush2.bf16.msra.mxu0 %v607
  %838 = vmatprep.subr.bf16.mxu0 0
  %839 = vmatpush2.bf16.msra.mxu0 %v606
  %840 = vmatprep.mubr.bf16.mxu0 %v247
  %841 = vmatmul.mubr.bf16.gmra.mxu0 %v246
  %v842 = vpop.f32.mrf.mxu0
  %v843 = vadd.f32 %v794, %v842
  %v844 = vpop.f32.mrf.mxu0
  %v845 = vpop.f32.mrf.mxu0
  %v846 = vadd.f32 %v797, %v845
  %v847 = vpop.f32.mrf.mxu0
  %848 = vmatprep.mubr.bf16.mxu0 %v256
  %849 = vmatmul.mubr.bf16.gmra.mxu0 %v255
  %v850 = vpop.f32.mrf.mxu0
  %v851 = vadd.f32 %v802, %v850
  %v852 = vpop.f32.mrf.mxu0
  %v853 = vpop.f32.mrf.mxu0
  %v854 = vadd.f32 %v805, %v853
  %v855 = vpop.f32.mrf.mxu0
  %856 = vdwg.mxu0
  %857 = vmatprep.subr.bf16.mxu0 0
  %858 = vmatpush1.bf16.msra.mxu0 %v621
  %859 = vmatprep.subr.bf16.mxu0 0
  %860 = vmatpush1.bf16.msra.mxu0 %v620
  %861 = vmatprep.subr.bf16.mxu0 0
  %862 = vmatpush1.bf16.msra.mxu0 %v619
  %863 = vmatprep.subr.bf16.mxu0 0
  %864 = vmatpush1.bf16.msra.mxu0 %v618
  %865 = vmatprep.subr.bf16.mxu0 0
  %866 = vmatpush1.bf16.msra.mxu0 %v617
  %867 = vmatprep.subr.bf16.mxu0 0
  %868 = vmatpush1.bf16.msra.mxu0 %v616
  %869 = vmatprep.subr.bf16.mxu0 0
  %870 = vmatpush1.bf16.msra.mxu0 %v615
  %871 = vmatprep.subr.bf16.mxu0 0
  %872 = vmatpush1.bf16.msra.mxu0 %v614
  %873 = vmatprep.subr.bf16.mxu0 0
  %874 = vmatpush2.bf16.msra.mxu0 %v629
  %875 = vmatprep.subr.bf16.mxu0 0
  %876 = vmatpush2.bf16.msra.mxu0 %v628
  %877 = vmatprep.subr.bf16.mxu0 0
  %878 = vmatpush2.bf16.msra.mxu0 %v627
  %879 = vmatprep.subr.bf16.mxu0 0
  %880 = vmatpush2.bf16.msra.mxu0 %v626
  %881 = vmatprep.subr.bf16.mxu0 0
  %882 = vmatpush2.bf16.msra.mxu0 %v625
  %883 = vmatprep.subr.bf16.mxu0 0
  %884 = vmatpush2.bf16.msra.mxu0 %v624
  %885 = vmatprep.subr.bf16.mxu0 0
  %886 = vmatpush2.bf16.msra.mxu0 %v623
  %887 = vmatprep.subr.bf16.mxu0 0
  %888 = vmatpush2.bf16.msra.mxu0 %v622
  %889 = vmatprep.mubr.bf16.mxu0 %v249
  %890 = vmatmul.mubr.bf16.gmra.mxu0 %v248
  %v891 = vpop.f32.mrf.mxu0
  %v892 = vadd.f32 %v843, %v891
  %v893 = vpop.f32.mrf.mxu0
  %v894 = vpop.f32.mrf.mxu0
  %v895 = vadd.f32 %v846, %v894
  %v896 = vpop.f32.mrf.mxu0
  %897 = vmatprep.mubr.bf16.mxu0 %v258
  %898 = vmatmul.mubr.bf16.gmra.mxu0 %v257
  %v899 = vpop.f32.mrf.mxu0
  %v900 = vadd.f32 %v851, %v899
  %v901 = vpop.f32.mrf.mxu0
  %v902 = vpop.f32.mrf.mxu0
  %v903 = vadd.f32 %v854, %v902
  %v904 = vpop.f32.mrf.mxu0
  %905 = vdwg.mxu0
  %906 = vmatprep.subr.bf16.mxu0 0
  %907 = vmatpush1.bf16.msra.mxu0 %v637
  %908 = vmatprep.subr.bf16.mxu0 0
  %909 = vmatpush1.bf16.msra.mxu0 %v636
  %910 = vmatprep.subr.bf16.mxu0 0
  %911 = vmatpush1.bf16.msra.mxu0 %v635
  %912 = vmatprep.subr.bf16.mxu0 0
  %913 = vmatpush1.bf16.msra.mxu0 %v634
  %914 = vmatprep.subr.bf16.mxu0 0
  %915 = vmatpush1.bf16.msra.mxu0 %v633
  %916 = vmatprep.subr.bf16.mxu0 0
  %917 = vmatpush1.bf16.msra.mxu0 %v632
  %918 = vmatprep.subr.bf16.mxu0 0
  %919 = vmatpush1.bf16.msra.mxu0 %v631
  %920 = vmatprep.subr.bf16.mxu0 0
  %921 = vmatpush1.bf16.msra.mxu0 %v630
  %922 = vmatprep.subr.bf16.mxu0 0
  %923 = vmatpush2.bf16.msra.mxu0 0
  %924 = vmatprep.subr.bf16.mxu0 0
  %925 = vmatpush2.bf16.msra.mxu0 0
  %926 = vmatprep.subr.bf16.mxu0 0
  %927 = vmatpush2.bf16.msra.mxu0 0
  %928 = vmatprep.subr.bf16.mxu0 0
  %929 = vmatpush2.bf16.msra.mxu0 0
  %930 = vmatprep.subr.bf16.mxu0 0
  %931 = vmatpush2.bf16.msra.mxu0 0
  %932 = vmatprep.subr.bf16.mxu0 0
  %933 = vmatpush2.bf16.msra.mxu0 0
  %934 = vmatprep.subr.bf16.mxu0 0
  %935 = vmatpush2.bf16.msra.mxu0 0
  %936 = vmatprep.subr.bf16.mxu0 0
  %937 = vmatpush2.bf16.msra.mxu0 0
  %938 = vmatprep.mubr.bf16.mxu0 0
  %939 = vmatmul.mubr.bf16.gmra.mxu0 %v250
  %v940 = vpop.f32.mrf.mxu0
  %v941 = vadd.f32 %v892, %v940
  %v942 = vpop.f32.mrf.mxu0
  %v943 = vpop.f32.mrf.mxu0
  %v944 = vadd.f32 %v895, %v943
  %v945 = vpop.f32.mrf.mxu0
  %946 = vmatprep.mubr.bf16.mxu0 0
  %947 = vmatmul.mubr.bf16.gmra.mxu0 %v259
  %v948 = vpop.f32.mrf.mxu0
  %v949 = vadd.f32 %v900, %v948
  %v950 = vpop.f32.mrf.mxu0
  %v951 = vpop.f32.mrf.mxu0
  %v952 = vadd.f32 %v903, %v951
  %v953 = vpop.f32.mrf.mxu0
  %954 = vdwg.mxu0
  %v955 = vmax.f32 %v941, 0.0
  %v956 = vmax.f32 %v944, 0.0
  %v957 = vmax.f32 %v949, 0.0
  %v958 = vmax.f32 %v952, 0.0
  %959 = vst [vmem:[%s3] sm:$0xff] %v955
  %960 = vst [vmem:[%s3 + $0x8] sm:$0xff] %v956
  %961 = vst [vmem:[%s3 + $0x10] sm:$0xff] %v957
  %962 = vst [vmem:[%s3 + $0x18] sm:$0xff] %v958
  // Predicated region
  $region14: #{compressor_forward.12} parent=0 // pred_check
    _
  $region15: #{compressor_forward.12} parent=0 // pred_check_branch
    %964 = sbr.rel (0) target = $region17
  $region16: #{compressor_forward.12} parent=0 // pred_region
    _
  $region17: #{compressor_forward.12} parent=0 // pred_fallthru
    _
  // Predicated region
  $region18: #{compressor_forward.12} parent=0 // pred_check
    _
  $region19: #{compressor_forward.12} parent=0 // pred_check_branch
    %966 = sbr.rel (0) target = $region21
  $region20: #{compressor_forward.12} parent=0 // pred_region
    _
  $region21: #{compressor_forward.12} parent=0 // pred_fallthru
    _

// kernel: compressor_forward.14
$region0: #{compressor_forward.14}
  #allocation0 [shape = 'u32[]', space=smem, size = 0x4, offset = 0x4, fixed_abs, tag = 'smem constant byte address 0x4 - core index']
  #allocation1 [shape = 'u32[144,128]{1,0:T(1,128)}', space=vmem, size = 0x12000, scoped, tag = 'internal scratch']
  %s0 = inlined_call_operand.vmem [shape: f32[8,128], index: 0, kind: input, shape index: {}]
  %s1 = inlined_call_operand.vmem [shape: f32[1,128], index: 1, kind: input, shape index: {}]
  %s2 = inlined_call_operand.vmem [shape: f32[1,128], index: 2, kind: input, shape index: {}]
  %s3 = inlined_call_operand.vmem [shape: f32[8,128], index: 3, kind: output, shape index: {0}]
  %s4 = inlined_call_operand.vmem [shape: f32[8,128], index: 4, kind: output, shape index: {1}]
  %5 = xla_tuple %s3, %s4
  %s6 = sld [smem:[#allocation0]]
  $region30: #{compressor_forward.14} parent=0
    _
  %s8 = ssub.s32 1, %s6
  %s9 = scalar_select 0, %s8, %s6
  // Predicated region
  $region2: #{compressor_forward.14} parent=0 // pred_check
    _
  $region3: #{compressor_forward.14} parent=0 // pred_check_branch
    %11 = sbr.rel (0) target = $region5
  $region4: #{compressor_forward.14} parent=0 // pred_region
    _
  $region5: #{compressor_forward.14} parent=0 // pred_fallthru
    _
  // Predicated region
  $region6: #{compressor_forward.14} parent=0 // pred_check
    _
  $region7: #{compressor_forward.14} parent=0 // pred_check_branch
    %13 = sbr.rel (0) target = $region9
  $region8: #{compressor_forward.14} parent=0 // pred_region
    _
  $region9: #{compressor_forward.14} parent=0 // pred_fallthru
    _
  // Predicated region
  $region10: #{compressor_forward.14} parent=0 // pred_check
    _
  $region11: #{compressor_forward.14} parent=0 // pred_check_branch
    %15 = sbr.rel (0) target = $region13
  $region12: #{compressor_forward.14} parent=0 // pred_region
    _
  $region13: #{compressor_forward.14} parent=0 // pred_fallthru
    _
  %v16 = vld [vmem:[%s0] sm:$0xff]
  %v17 = vld [vmem:[%s2] sm:$0x1]
  %v18 = vld [vmem:[%s1] sm:$0x1]
  %v19 = vmax.f32 %v18, 1e-06
  %v20 = vrcp.pop %v19
  %v21 = vround.ne.pseudo %v16
  %v23 = vlaneseq
  %v24 = vshrl.u32 %v23, 7
  %v25 = vsub.s32 0, %v24
  %v26 = vrot.slane %v17, %v25
  %v28 = vsub.f32 %v21, %v26
  %v30 = vlaneseq
  %v31 = vshrl.u32 %v30, 7
  %v32 = vsub.s32 0, %v31
  %v33 = vrot.slane %v20, %v32
  %v35 = vmul.f32 %v28, %v33
  %v36 = vmul.f32 %v20, 0.5
  %v38 = vlaneseq
  %v39 = vshrl.u32 %v38, 7
  %v40 = vsub.s32 0, %v39
  %v41 = vrot.slane %v36, %v40
  %v43 = vadd.f32 %v35, %v41
  %v44 = vsub.f32 0.0, %v43
  %v45 = vmul.f32 %v44, 1.442695
  %v46 = vpow.pop %v45
  %v47 = vadd.f32 %v46, 1.0
  %v48 = vrcp.pop %v47
  %v49 = vsub.f32 %v35, %v41
  %v50 = vsub.f32 0.0, %v49
  %v51 = vmul.f32 %v50, 1.442695
  %v52 = vpow.pop %v51
  %v53 = vadd.f32 %v52, 1.0
  %v54 = vrcp.pop %v53
  %v55 = vsub.f32 %v48, %v54
  %56 = vst [vmem:[%s3] sm:$0xff] %v21
  %v57 = vmax.f32 %v55, 1e-09
  %58 = vst [vmem:[%s4] sm:$0xff] %v57
  // Predicated region
  $region14: #{compressor_forward.14} parent=0 // pred_check
    _
  $region15: #{compressor_forward.14} parent=0 // pred_check_branch
    %60 = sbr.rel (0) target = $region17
  $region16: #{compressor_forward.14} parent=0 // pred_region
    _
  $region17: #{compressor_forward.14} parent=0 // pred_fallthru
    _
  // Predicated region
  $region18: #{compressor_forward.14} parent=0 // pred_check
    _
  $region19: #{compressor_forward.14} parent=0 // pred_check_branch
    %62 = sbr.rel (0) target = $region21
  $region20: #{compressor_forward.14} parent=0 // pred_region
    _
  $region21: #{compressor_forward.14} parent=0 // pred_fallthru
    _
  // Predicated region
  $region22: #{compressor_forward.14} parent=0 // pred_check
    _
  $region23: #{compressor_forward.14} parent=0 // pred_check_branch
    %64 = sbr.rel (0) target = $region25
  $region24: #{compressor_forward.14} parent=0 // pred_region
    _
  $region25: #{compressor_forward.14} parent=0 // pred_fallthru
    _
  // Predicated region
  $region26: #{compressor_forward.14} parent=0 // pred_check
    _
  $region27: #{compressor_forward.14} parent=0 // pred_check_branch
    %66 = sbr.rel (0) target = $region29
  $region28: #{compressor_forward.14} parent=0 // pred_region
    _
  $region29: #{compressor_forward.14} parent=0 // pred_fallthru
    _

// kernel: tile.18
$region0: #{tile.18}
  #allocation0 [shape = 's32[1]{0}', space=sflag, size = 0x4, scoped, tag = 'scoped memory for tile.18']
  %s0 = inlined_call_operand.vmem [shape: f32[128], index: 0, kind: input, shape index: {}]
  %s1 = inlined_call_operand.vmem [shape: f32[4,128], index: 1, kind: output, shape index: {}]
  // Predicated region
  $region2: #{tile.18} parent=0 // pred_check
    _
  $region3: #{tile.18} parent=0 // pred_check_branch
    %3 = sbr.rel (0) target = $region5
  $region4: #{tile.18} parent=0 // pred_region
    _
  $region5: #{tile.18} parent=0 // pred_fallthru
    _
  %v4 = vld [vmem:[%s0] ss:$0 sm:$0xff]
  %5 = vst [vmem:[%s1] sm:$0xf] %v4

// kernel: compressor_forward.13
$region0: #{compressor_forward.13}
  #allocation0 [shape = 'u32[]', space=smem, size = 0x4, offset = 0x4, fixed_abs, tag = 'smem constant byte address 0x4 - core index']
  #allocation1 [shape = 'u32[144,128]{1,0:T(1,128)}', space=vmem, size = 0x12000, scoped, tag = 'internal scratch']
  %s0 = inlined_call_operand.vmem [shape: bf16[16,1152], index: 0, kind: input, shape index: {}]
  %s1 = inlined_call_operand.vmem [shape: bf16[1152,128], index: 1, kind: input, shape index: {}]
  %s2 = inlined_call_operand.vmem [shape: f32[1,128], index: 2, kind: input, shape index: {}]
  %s3 = inlined_call_operand.vmem [shape: f32[16,128], index: 3, kind: output, shape index: {}]
  %s4 = sld [smem:[#allocation0]]
  $region22: #{compressor_forward.13} parent=0
    _
  %s6 = ssub.s32 1, %s4
  %s7 = scalar_select 0, %s6, %s4
  // Predicated region
  $region2: #{compressor_forward.13} parent=0 // pred_check
    _
  $region3: #{compressor_forward.13} parent=0 // pred_check_branch
    %9 = sbr.rel (0) target = $region5
  $region4: #{compressor_forward.13} parent=0 // pred_region
    _
  $region5: #{compressor_forward.13} parent=0 // pred_fallthru
    _
  // Predicated region
  $region6: #{compressor_forward.13} parent=0 // pred_check
    _
  $region7: #{compressor_forward.13} parent=0 // pred_check_branch
    %11 = sbr.rel (0) target = $region9
  $region8: #{compressor_forward.13} parent=0 // pred_region
    _
  $region9: #{compressor_forward.13} parent=0 // pred_fallthru
    _
  // Predicated region
  $region10: #{compressor_forward.13} parent=0 // pred_check
    _
  $region11: #{compressor_forward.13} parent=0 // pred_check_branch
    %13 = sbr.rel (0) target = $region13
  $region12: #{compressor_forward.13} parent=0 // pred_region
    _
  $region13: #{compressor_forward.13} parent=0 // pred_fallthru
    _
  %v15 = vld [vmem:[%s0] sm:$0xff]
  %v16 = vld [vmem:[%s0 + $0x8] sm:$0xff]
  %v17 = vld [vmem:[%s0 + $0x10] sm:$0xff]
  %v18 = vld [vmem:[%s0 + $0x18] sm:$0xff]
  %v19 = vld [vmem:[%s0 + $0x20] sm:$0xf]
  %v20 = vld [vmem:[%s0 + $0x24] sm:$0xff]
  %v21 = vld [vmem:[%s0 + $0x2c] sm:$0xff]
  %v22 = vld [vmem:[%s0 + $0x34] sm:$0xff]
  %v23 = vld [vmem:[%s0 + $0x3c] sm:$0xff]
  %v24 = vld [vmem:[%s0 + $0x44] sm:$0xf]
  %v25 = vld [vmem:[%s1] sm:$0xf]
  %v26 = vld [vmem:[%s1 + $0x4] sm:$0xf]
  %v27 = vld [vmem:[%s1 + $0x8] sm:$0xf]
  %v28 = vld [vmem:[%s1 + $0xc] sm:$0xf]
  %v29 = vld [vmem:[%s1 + $0x10] sm:$0xf]
  %v30 = vld [vmem:[%s1 + $0x14] sm:$0xf]
  %v31 = vld [vmem:[%s1 + $0x18] sm:$0xf]
  %v32 = vld [vmem:[%s1 + $0x1c] sm:$0xf]
  %v33 = vld [vmem:[%s1 + $0x20] sm:$0xf]
  %v34 = vld [vmem:[%s1 + $0x24] sm:$0xf]
  %v35 = vld [vmem:[%s1 + $0x28] sm:$0xf]
  %v36 = vld [vmem:[%s1 + $0x2c] sm:$0xf]
  %v37 = vld [vmem:[%s1 + $0x30] sm:$0xf]
  %v38 = vld [vmem:[%s1 + $0x34] sm:$0xf]
  %v39 = vld [vmem:[%s1 + $0x38] sm:$0xf]
  %v40 = vld [vmem:[%s1 + $0x3c] sm:$0xf]
  %v41 = vld [vmem:[%s1 + $0x40] sm:$0xf]
  %v42 = vld [vmem:[%s1 + $0x44] sm:$0xf]
  %v43 = vld [vmem:[%s1 + $0x48] sm:$0xf]
  %v44 = vld [vmem:[%s1 + $0x4c] sm:$0xf]
  %v45 = vld [vmem:[%s1 + $0x50] sm:$0xf]
  %v46 = vld [vmem:[%s1 + $0x54] sm:$0xf]
  %v47 = vld [vmem:[%s1 + $0x58] sm:$0xf]
  %v48 = vld [vmem:[%s1 + $0x5c] sm:$0xf]
  %v49 = vld [vmem:[%s1 + $0x60] sm:$0xf]
  %v50 = vld [vmem:[%s1 + $0x64] sm:$0xf]
  %v51 = vld [vmem:[%s1 + $0x68] sm:$0xf]
  %v52 = vld [vmem:[%s1 + $0x6c] sm:$0xf]
  %v53 = vld [vmem:[%s1 + $0x70] sm:$0xf]
  %v54 = vld [vmem:[%s1 + $0x74] sm:$0xf]
  %v55 = vld [vmem:[%s1 + $0x78] sm:$0xf]
  %v56 = vld [vmem:[%s1 + $0x7c] sm:$0xf]
  %v57 = vld [vmem:[%s1 + $0x80] sm:$0xf]
  %v58 = vld [vmem:[%s1 + $0x84] sm:$0xf]
  %v59 = vld [vmem:[%s1 + $0x88] sm:$0xf]
  %v60 = vld [vmem:[%s1 + $0x8c] sm:$0xf]
  %v61 = vld [vmem:[%s1 + $0x90] sm:$0xf]
  %v62 = vld [vmem:[%s1 + $0x94] sm:$0xf]
  %v63 = vld [vmem:[%s1 + $0x98] sm:$0xf]
  %v64 = vld [vmem:[%s1 + $0x9c] sm:$0xf]
  %v65 = vld [vmem:[%s1 + $0xa0] sm:$0xf]
  %v66 = vld [vmem:[%s1 + $0xa4] sm:$0xf]
  %v67 = vld [vmem:[%s1 + $0xa8] sm:$0xf]
  %v68 = vld [vmem:[%s1 + $0xac] sm:$0xf]
  %v69 = vld [vmem:[%s1 + $0xb0] sm:$0xf]
  %v70 = vld [vmem:[%s1 + $0xb4] sm:$0xf]
  %v71 = vld [vmem:[%s1 + $0xb8] sm:$0xf]
  %v72 = vld [vmem:[%s1 + $0xbc] sm:$0xf]
  %v73 = vld [vmem:[%s1 + $0xc0] sm:$0xf]
  %v74 = vld [vmem:[%s1 + $0xc4] sm:$0xf]
  %v75 = vld [vmem:[%s1 + $0xc8] sm:$0xf]
  %v76 = vld [vmem:[%s1 + $0xcc] sm:$0xf]
  %v77 = vld [vmem:[%s1 + $0xd0] sm:$0xf]
  %v78 = vld [vmem:[%s1 + $0xd4] sm:$0xf]
  %v79 = vld [vmem:[%s1 + $0xd8] sm:$0xf]
  %v80 = vld [vmem:[%s1 + $0xdc] sm:$0xf]
  %v81 = vld [vmem:[%s1 + $0xe0] sm:$0xf]
  %v82 = vld [vmem:[%s1 + $0xe4] sm:$0xf]
  %v83 = vld [vmem:[%s1 + $0xe8] sm:$0xf]
  %v84 = vld [vmem:[%s1 + $0xec] sm:$0xf]
  %v85 = vld [vmem:[%s1 + $0xf0] sm:$0xf]
  %v86 = vld [vmem:[%s1 + $0xf4] sm:$0xf]
  %v87 = vld [vmem:[%s1 + $0xf8] sm:$0xf]
  %v88 = vld [vmem:[%s1 + $0xfc] sm:$0xf]
  %v89 = vld [vmem:[%s1 + $0x100] sm:$0xf]
  %v90 = vld [vmem:[%s1 + $0x104] sm:$0xf]
  %v91 = vld [vmem:[%s1 + $0x108] sm:$0xf]
  %v92 = vld [vmem:[%s1 + $0x10c] sm:$0xf]
  %v93 = vld [vmem:[%s1 + $0x110] sm:$0xf]
  %v94 = vld [vmem:[%s1 + $0x114] sm:$0xf]
  %v95 = vld [vmem:[%s1 + $0x118] sm:$0xf]
  %v96 = vld [vmem:[%s1 + $0x11c] sm:$0xf]
  %v97 = vld [vmem:[%s1 + $0x120] sm:$0xf]
  %v98 = vld [vmem:[%s1 + $0x124] sm:$0xf]
  %v99 = vld [vmem:[%s1 + $0x128] sm:$0xf]
  %v100 = vld [vmem:[%s1 + $0x12c] sm:$0xf]
  %v101 = vld [vmem:[%s1 + $0x130] sm:$0xf]
  %v102 = vld [vmem:[%s1 + $0x134] sm:$0xf]
  %v103 = vld [vmem:[%s1 + $0x138] sm:$0xf]
  %v104 = vld [vmem:[%s1 + $0x13c] sm:$0xf]
  %v105 = vld [vmem:[%s1 + $0x140] sm:$0xf]
  %v106 = vld [vmem:[%s1 + $0x144] sm:$0xf]
  %v107 = vld [vmem:[%s1 + $0x148] sm:$0xf]
  %v108 = vld [vmem:[%s1 + $0x14c] sm:$0xf]
  %v109 = vld [vmem:[%s1 + $0x150] sm:$0xf]
  %v110 = vld [vmem:[%s1 + $0x154] sm:$0xf]
  %v111 = vld [vmem:[%s1 + $0x158] sm:$0xf]
  %v112 = vld [vmem:[%s1 + $0x15c] sm:$0xf]
  %v113 = vld [vmem:[%s1 + $0x160] sm:$0xf]
  %v114 = vld [vmem:[%s1 + $0x164] sm:$0xf]
  %v115 = vld [vmem:[%s1 + $0x168] sm:$0xf]
  %v116 = vld [vmem:[%s1 + $0x16c] sm:$0xf]
  %v117 = vld [vmem:[%s1 + $0x170] sm:$0xf]
  %v118 = vld [vmem:[%s1 + $0x174] sm:$0xf]
  %v119 = vld [vmem:[%s1 + $0x178] sm:$0xf]
  %v120 = vld [vmem:[%s1 + $0x17c] sm:$0xf]
  %v121 = vld [vmem:[%s1 + $0x180] sm:$0xf]
  %v122 = vld [vmem:[%s1 + $0x184] sm:$0xf]
  %v123 = vld [vmem:[%s1 + $0x188] sm:$0xf]
  %v124 = vld [vmem:[%s1 + $0x18c] sm:$0xf]
  %v125 = vld [vmem:[%s1 + $0x190] sm:$0xf]
  %v126 = vld [vmem:[%s1 + $0x194] sm:$0xf]
  %v127 = vld [vmem:[%s1 + $0x198] sm:$0xf]
  %v128 = vld [vmem:[%s1 + $0x19c] sm:$0xf]
  %v129 = vld [vmem:[%s1 + $0x1a0] sm:$0xf]
  %v130 = vld [vmem:[%s1 + $0x1a4] sm:$0xf]
  %v131 = vld [vmem:[%s1 + $0x1a8] sm:$0xf]
  %v132 = vld [vmem:[%s1 + $0x1ac] sm:$0xf]
  %v133 = vld [vmem:[%s1 + $0x1b0] sm:$0xf]
  %v134 = vld [vmem:[%s1 + $0x1b4] sm:$0xf]
  %v135 = vld [vmem:[%s1 + $0x1b8] sm:$0xf]
  %v136 = vld [vmem:[%s1 + $0x1bc] sm:$0xf]
  %v137 = vld [vmem:[%s1 + $0x1c0] sm:$0xf]
  %v138 = vld [vmem:[%s1 + $0x1c4] sm:$0xf]
  %v139 = vld [vmem:[%s1 + $0x1c8] sm:$0xf]
  %v140 = vld [vmem:[%s1 + $0x1cc] sm:$0xf]
  %v141 = vld [vmem:[%s1 + $0x1d0] sm:$0xf]
  %v142 = vld [vmem:[%s1 + $0x1d4] sm:$0xf]
  %v143 = vld [vmem:[%s1 + $0x1d8] sm:$0xf]
  %v144 = vld [vmem:[%s1 + $0x1dc] sm:$0xf]
  %v145 = vld [vmem:[%s1 + $0x1e0] sm:$0xf]
  %v146 = vld [vmem:[%s1 + $0x1e4] sm:$0xf]
  %v147 = vld [vmem:[%s1 + $0x1e8] sm:$0xf]
  %v148 = vld [vmem:[%s1 + $0x1ec] sm:$0xf]
  %v149 = vld [vmem:[%s1 + $0x1f0] sm:$0xf]
  %v150 = vld [vmem:[%s1 + $0x1f4] sm:$0xf]
  %v151 = vld [vmem:[%s1 + $0x1f8] sm:$0xf]
  %v152 = vld [vmem:[%s1 + $0x1fc] sm:$0xf]
  %v153 = vld [vmem:[%s1 + $0x200] sm:$0xf]
  %v154 = vld [vmem:[%s1 + $0x204] sm:$0xf]
  %v155 = vld [vmem:[%s1 + $0x208] sm:$0xf]
  %v156 = vld [vmem:[%s1 + $0x20c] sm:$0xf]
  %v157 = vld [vmem:[%s1 + $0x210] sm:$0xf]
  %v158 = vld [vmem:[%s1 + $0x214] sm:$0xf]
  %v159 = vld [vmem:[%s1 + $0x218] sm:$0xf]
  %v160 = vld [vmem:[%s1 + $0x21c] sm:$0xf]
  %v161 = vld [vmem:[%s1 + $0x220] sm:$0xf]
  %v162 = vld [vmem:[%s1 + $0x224] sm:$0xf]
  %v163 = vld [vmem:[%s1 + $0x228] sm:$0xf]
  %v164 = vld [vmem:[%s1 + $0x22c] sm:$0xf]
  %v165 = vld [vmem:[%s1 + $0x230] sm:$0xf]
  %v166 = vld [vmem:[%s1 + $0x234] sm:$0xf]
  %v167 = vld [vmem:[%s1 + $0x238] sm:$0xf]
  %v168 = vld [vmem:[%s1 + $0x23c] sm:$0xf]
  %v169 = vld [vmem:[%s2] sm:$0x1]
  %v171 = vlaneseq
  %v172 = vshrl.u32 %v171, 7
  %v173 = vsub.s32 0, %v172
  %v174 = vrot.slane %v169, %v173
  %v186 = vunpack.c.l.b16 %v15
  %v187 = vunpack.c.h.b16 %v15
  %v188 = vunpack.c.l.b16 %v16
  %v189 = vunpack.c.h.b16 %v16
  %v190 = vunpack.c.l.b16 %v17
  %v191 = vunpack.c.h.b16 %v17
  %v192 = vunpack.c.l.b16 %v18
  %v193 = vunpack.c.h.b16 %v18
  %v194 = vunpack.c.l.b16 %v19
  %v195 = vunpack.c.l.b16 %v20
  %v196 = vunpack.c.h.b16 %v20
  %v197 = vunpack.c.l.b16 %v21
  %v198 = vunpack.c.h.b16 %v21
  %v199 = vunpack.c.l.b16 %v22
  %v200 = vunpack.c.h.b16 %v22
  %v201 = vunpack.c.l.b16 %v23
  %v202 = vunpack.c.h.b16 %v23
  %v203 = vunpack.c.l.b16 %v24
  %v204 = vpack.c.b16 %v195, %v186
  %v205 = vpack.c.b16 %v196, %v187
  %v206 = vpack.c.b16 %v197, %v188
  %v207 = vpack.c.b16 %v198, %v189
  %v208 = vpack.c.b16 %v199, %v190
  %v209 = vpack.c.b16 %v200, %v191
  %v210 = vpack.c.b16 %v201, %v192
  %v211 = vpack.c.b16 %v202, %v193
  %v212 = vpack.c.b16 %v203, %v194
  %v366 = vunpack.c.l.b16 %v25
  %v367 = vunpack.c.l.b16 %v26
  %v368 = vunpack.c.l.b16 %v27
  %v369 = vunpack.c.l.b16 %v28
  %v370 = vunpack.c.l.b16 %v29
  %v371 = vunpack.c.l.b16 %v30
  %v372 = vunpack.c.l.b16 %v31
  %v373 = vunpack.c.l.b16 %v32
  %v374 = vunpack.c.l.b16 %v33
  %v375 = vunpack.c.l.b16 %v34
  %v376 = vunpack.c.l.b16 %v35
  %v377 = vunpack.c.l.b16 %v36
  %v378 = vunpack.c.l.b16 %v37
  %v379 = vunpack.c.l.b16 %v38
  %v380 = vunpack.c.l.b16 %v39
  %v381 = vunpack.c.l.b16 %v40
  %v382 = vunpack.c.l.b16 %v41
  %v383 = vunpack.c.l.b16 %v42
  %v384 = vunpack.c.l.b16 %v43
  %v385 = vunpack.c.l.b16 %v44
  %v386 = vunpack.c.l.b16 %v45
  %v387 = vunpack.c.l.b16 %v46
  %v388 = vunpack.c.l.b16 %v47
  %v389 = vunpack.c.l.b16 %v48
  %v390 = vunpack.c.l.b16 %v49
  %v391 = vunpack.c.l.b16 %v50
  %v392 = vunpack.c.l.b16 %v51
  %v393 = vunpack.c.l.b16 %v52
  %v394 = vunpack.c.l.b16 %v53
  %v395 = vunpack.c.l.b16 %v54
  %v396 = vunpack.c.l.b16 %v55
  %v397 = vunpack.c.l.b16 %v56
  %v398 = vunpack.c.l.b16 %v57
  %v399 = vunpack.c.l.b16 %v58
  %v400 = vunpack.c.l.b16 %v59
  %v401 = vunpack.c.l.b16 %v60
  %v402 = vunpack.c.l.b16 %v61
  %v403 = vunpack.c.l.b16 %v62
  %v404 = vunpack.c.l.b16 %v63
  %v405 = vunpack.c.l.b16 %v64
  %v406 = vunpack.c.l.b16 %v65
  %v407 = vunpack.c.l.b16 %v66
  %v408 = vunpack.c.l.b16 %v67
  %v409 = vunpack.c.l.b16 %v68
  %v410 = vunpack.c.l.b16 %v69
  %v411 = vunpack.c.l.b16 %v70
  %v412 = vunpack.c.l.b16 %v71
  %v413 = vunpack.c.l.b16 %v72
  %v414 = vunpack.c.l.b16 %v73
  %v415 = vunpack.c.l.b16 %v74
  %v416 = vunpack.c.l.b16 %v75
  %v417 = vunpack.c.l.b16 %v76
  %v418 = vunpack.c.l.b16 %v77
  %v419 = vunpack.c.l.b16 %v78
  %v420 = vunpack.c.l.b16 %v79
  %v421 = vunpack.c.l.b16 %v80
  %v422 = vunpack.c.l.b16 %v81
  %v423 = vunpack.c.l.b16 %v82
  %v424 = vunpack.c.l.b16 %v83
  %v425 = vunpack.c.l.b16 %v84
  %v426 = vunpack.c.l.b16 %v85
  %v427 = vunpack.c.l.b16 %v86
  %v428 = vunpack.c.l.b16 %v87
  %v429 = vunpack.c.l.b16 %v88
  %v430 = vunpack.c.l.b16 %v89
  %v431 = vunpack.c.l.b16 %v90
  %v432 = vunpack.c.l.b16 %v91
  %v433 = vunpack.c.l.b16 %v92
  %v434 = vunpack.c.l.b16 %v93
  %v435 = vunpack.c.l.b16 %v94
  %v436 = vunpack.c.l.b16 %v95
  %v437 = vunpack.c.l.b16 %v96
  %v438 = vunpack.c.l.b16 %v97
  %v439 = vunpack.c.l.b16 %v98
  %v440 = vunpack.c.l.b16 %v99
  %v441 = vunpack.c.l.b16 %v100
  %v442 = vunpack.c.l.b16 %v101
  %v443 = vunpack.c.l.b16 %v102
  %v444 = vunpack.c.l.b16 %v103
  %v445 = vunpack.c.l.b16 %v104
  %v446 = vunpack.c.l.b16 %v105
  %v447 = vunpack.c.l.b16 %v106
  %v448 = vunpack.c.l.b16 %v107
  %v449 = vunpack.c.l.b16 %v108
  %v450 = vunpack.c.l.b16 %v109
  %v451 = vunpack.c.l.b16 %v110
  %v452 = vunpack.c.l.b16 %v111
  %v453 = vunpack.c.l.b16 %v112
  %v454 = vunpack.c.l.b16 %v113
  %v455 = vunpack.c.l.b16 %v114
  %v456 = vunpack.c.l.b16 %v115
  %v457 = vunpack.c.l.b16 %v116
  %v458 = vunpack.c.l.b16 %v117
  %v459 = vunpack.c.l.b16 %v118
  %v460 = vunpack.c.l.b16 %v119
  %v461 = vunpack.c.l.b16 %v120
  %v462 = vunpack.c.l.b16 %v121
  %v463 = vunpack.c.l.b16 %v122
  %v464 = vunpack.c.l.b16 %v123
  %v465 = vunpack.c.l.b16 %v124
  %v466 = vunpack.c.l.b16 %v125
  %v467 = vunpack.c.l.b16 %v126
  %v468 = vunpack.c.l.b16 %v127
  %v469 = vunpack.c.l.b16 %v128
  %v470 = vunpack.c.l.b16 %v129
  %v471 = vunpack.c.l.b16 %v130
  %v472 = vunpack.c.l.b16 %v131
  %v473 = vunpack.c.l.b16 %v132
  %v474 = vunpack.c.l.b16 %v133
  %v475 = vunpack.c.l.b16 %v134
  %v476 = vunpack.c.l.b16 %v135
  %v477 = vunpack.c.l.b16 %v136
  %v478 = vunpack.c.l.b16 %v137
  %v479 = vunpack.c.l.b16 %v138
  %v480 = vunpack.c.l.b16 %v139
  %v481 = vunpack.c.l.b16 %v140
  %v482 = vunpack.c.l.b16 %v141
  %v483 = vunpack.c.l.b16 %v142
  %v484 = vunpack.c.l.b16 %v143
  %v485 = vunpack.c.l.b16 %v144
  %v486 = vunpack.c.l.b16 %v145
  %v487 = vunpack.c.l.b16 %v146
  %v488 = vunpack.c.l.b16 %v147
  %v489 = vunpack.c.l.b16 %v148
  %v490 = vunpack.c.l.b16 %v149
  %v491 = vunpack.c.l.b16 %v150
  %v492 = vunpack.c.l.b16 %v151
  %v493 = vunpack.c.l.b16 %v152
  %v494 = vunpack.c.l.b16 %v153
  %v495 = vunpack.c.l.b16 %v154
  %v496 = vunpack.c.l.b16 %v155
  %v497 = vunpack.c.l.b16 %v156
  %v498 = vunpack.c.l.b16 %v157
  %v499 = vunpack.c.l.b16 %v158
  %v500 = vunpack.c.l.b16 %v159
  %v501 = vunpack.c.l.b16 %v160
  %v502 = vunpack.c.l.b16 %v161
  %v503 = vunpack.c.l.b16 %v162
  %v504 = vunpack.c.l.b16 %v163
  %v505 = vunpack.c.l.b16 %v164
  %v506 = vunpack.c.l.b16 %v165
  %v507 = vunpack.c.l.b16 %v166
  %v508 = vunpack.c.l.b16 %v167
  %v509 = vunpack.c.l.b16 %v168
  %v510 = vpack.c.b16 %v367, %v366
  %v511 = vpack.c.b16 %v369, %v368
  %v512 = vpack.c.b16 %v371, %v370
  %v513 = vpack.c.b16 %v373, %v372
  %v514 = vpack.c.b16 %v375, %v374
  %v515 = vpack.c.b16 %v377, %v376
  %v516 = vpack.c.b16 %v379, %v378
  %v517 = vpack.c.b16 %v381, %v380
  %v518 = vpack.c.b16 %v383, %v382
  %v519 = vpack.c.b16 %v385, %v384
  %v520 = vpack.c.b16 %v387, %v386
  %v521 = vpack.c.b16 %v389, %v388
  %v522 = vpack.c.b16 %v391, %v390
  %v523 = vpack.c.b16 %v393, %v392
  %v524 = vpack.c.b16 %v395, %v394
  %v525 = vpack.c.b16 %v397, %v396
  %v526 = vpack.c.b16 %v399, %v398
  %v527 = vpack.c.b16 %v401, %v400
  %v528 = vpack.c.b16 %v403, %v402
  %v529 = vpack.c.b16 %v405, %v404
  %v530 = vpack.c.b16 %v407, %v406
  %v531 = vpack.c.b16 %v409, %v408
  %v532 = vpack.c.b16 %v411, %v410
  %v533 = vpack.c.b16 %v413, %v412
  %v534 = vpack.c.b16 %v415, %v414
  %v535 = vpack.c.b16 %v417, %v416
  %v536 = vpack.c.b16 %v419, %v418
  %v537 = vpack.c.b16 %v421, %v420
  %v538 = vpack.c.b16 %v423, %v422
  %v539 = vpack.c.b16 %v425, %v424
  %v540 = vpack.c.b16 %v427, %v426
  %v541 = vpack.c.b16 %v429, %v428
  %v542 = vpack.c.b16 %v431, %v430
  %v543 = vpack.c.b16 %v433, %v432
  %v544 = vpack.c.b16 %v435, %v434
  %v545 = vpack.c.b16 %v437, %v436
  %v546 = vpack.c.b16 %v439, %v438
  %v547 = vpack.c.b16 %v441, %v440
  %v548 = vpack.c.b16 %v443, %v442
  %v549 = vpack.c.b16 %v445, %v444
  %v550 = vpack.c.b16 %v447, %v446
  %v551 = vpack.c.b16 %v449, %v448
  %v552 = vpack.c.b16 %v451, %v450
  %v553 = vpack.c.b16 %v453, %v452
  %v554 = vpack.c.b16 %v455, %v454
  %v555 = vpack.c.b16 %v457, %v456
  %v556 = vpack.c.b16 %v459, %v458
  %v557 = vpack.c.b16 %v461, %v460
  %v558 = vpack.c.b16 %v463, %v462
  %v559 = vpack.c.b16 %v465, %v464
  %v560 = vpack.c.b16 %v467, %v466
  %v561 = vpack.c.b16 %v469, %v468
  %v562 = vpack.c.b16 %v471, %v470
  %v563 = vpack.c.b16 %v473, %v472
  %v564 = vpack.c.b16 %v475, %v474
  %v565 = vpack.c.b16 %v477, %v476
  %v566 = vpack.c.b16 %v479, %v478
  %v567 = vpack.c.b16 %v481, %v480
  %v568 = vpack.c.b16 %v483, %v482
  %v569 = vpack.c.b16 %v485, %v484
  %v570 = vpack.c.b16 %v487, %v486
  %v571 = vpack.c.b16 %v489, %v488
  %v572 = vpack.c.b16 %v491, %v490
  %v573 = vpack.c.b16 %v493, %v492
  %v574 = vpack.c.b16 %v495, %v494
  %v575 = vpack.c.b16 %v497, %v496
  %v576 = vpack.c.b16 %v499, %v498
  %v577 = vpack.c.b16 %v501, %v500
  %v578 = vpack.c.b16 %v503, %v502
  %v579 = vpack.c.b16 %v505, %v504
  %v580 = vpack.c.b16 %v507, %v506
  %v581 = vpack.c.b16 %v509, %v508
  %654 = vmatprep.subr.bf16.mxu0 0
  %655 = vmatpush1.bf16.msra.mxu0 %v517
  %656 = vmatprep.subr.bf16.mxu0 0
  %657 = vmatpush1.bf16.msra.mxu0 %v516
  %658 = vmatprep.subr.bf16.mxu0 0
  %659 = vmatpush1.bf16.msra.mxu0 %v515
  %660 = vmatprep.subr.bf16.mxu0 0
  %661 = vmatpush1.bf16.msra.mxu0 %v514
  %662 = vmatprep.subr.bf16.mxu0 0
  %663 = vmatpush1.bf16.msra.mxu0 %v513
  %664 = vmatprep.subr.bf16.mxu0 0
  %665 = vmatpush1.bf16.msra.mxu0 %v512
  %666 = vmatprep.subr.bf16.mxu0 0
  %667 = vmatpush1.bf16.msra.mxu0 %v511
  %668 = vmatprep.subr.bf16.mxu0 0
  %669 = vmatpush1.bf16.msra.mxu0 %v510
  %670 = vmatprep.subr.bf16.mxu0 0
  %671 = vmatpush2.bf16.msra.mxu0 %v525
  %672 = vmatprep.subr.bf16.mxu0 0
  %673 = vmatpush2.bf16.msra.mxu0 %v524
  %674 = vmatprep.subr.bf16.mxu0 0
  %675 = vmatpush2.bf16.msra.mxu0 %v523
  %676 = vmatprep.subr.bf16.mxu0 0
  %677 = vmatpush2.bf16.msra.mxu0 %v522
  %678 = vmatprep.subr.bf16.mxu0 0
  %679 = vmatpush2.bf16.msra.mxu0 %v521
  %680 = vmatprep.subr.bf16.mxu0 0
  %681 = vmatpush2.bf16.msra.mxu0 %v520
  %682 = vmatprep.subr.bf16.mxu0 0
  %683 = vmatpush2.bf16.msra.mxu0 %v519
  %684 = vmatprep.subr.bf16.mxu0 0
  %685 = vmatpush2.bf16.msra.mxu0 %v518
  %686 = vmatprep.mubr.bf16.mxu0 %v205
  %687 = vmatmul.mubr.bf16.gmra.mxu0 %v204
  %v688 = vpop.f32.mrf.mxu0
  %v689 = vadd.f32 %v174, %v688
  %v690 = vpop.f32.mrf.mxu0
  %v691 = vpop.f32.mrf.mxu0
  %v692 = vadd.f32 %v174, %v691
  %v693 = vpop.f32.mrf.mxu0
  %694 = vdwg.mxu0
  %695 = vmatprep.subr.bf16.mxu0 0
  %696 = vmatpush1.bf16.msra.mxu0 %v533
  %697 = vmatprep.subr.bf16.mxu0 0
  %698 = vmatpush1.bf16.msra.mxu0 %v532
  %699 = vmatprep.subr.bf16.mxu0 0
  %700 = vmatpush1.bf16.msra.mxu0 %v531
  %701 = vmatprep.subr.bf16.mxu0 0
  %702 = vmatpush1.bf16.msra.mxu0 %v530
  %703 = vmatprep.subr.bf16.mxu0 0
  %704 = vmatpush1.bf16.msra.mxu0 %v529
  %705 = vmatprep.subr.bf16.mxu0 0
  %706 = vmatpush1.bf16.msra.mxu0 %v528
  %707 = vmatprep.subr.bf16.mxu0 0
  %708 = vmatpush1.bf16.msra.mxu0 %v527
  %709 = vmatprep.subr.bf16.mxu0 0
  %710 = vmatpush1.bf16.msra.mxu0 %v526
  %711 = vmatprep.subr.bf16.mxu0 0
  %712 = vmatpush2.bf16.msra.mxu0 %v541
  %713 = vmatprep.subr.bf16.mxu0 0
  %714 = vmatpush2.bf16.msra.mxu0 %v540
  %715 = vmatprep.subr.bf16.mxu0 0
  %716 = vmatpush2.bf16.msra.mxu0 %v539
  %717 = vmatprep.subr.bf16.mxu0 0
  %718 = vmatpush2.bf16.msra.mxu0 %v538
  %719 = vmatprep.subr.bf16.mxu0 0
  %720 = vmatpush2.bf16.msra.mxu0 %v537
  %721 = vmatprep.subr.bf16.mxu0 0
  %722 = vmatpush2.bf16.msra.mxu0 %v536
  %723 = vmatprep.subr.bf16.mxu0 0
  %724 = vmatpush2.bf16.msra.mxu0 %v535
  %725 = vmatprep.subr.bf16.mxu0 0
  %726 = vmatpush2.bf16.msra.mxu0 %v534
  %727 = vmatprep.mubr.bf16.mxu0 %v207
  %728 = vmatmul.mubr.bf16.gmra.mxu0 %v206
  %v729 = vpop.f32.mrf.mxu0
  %v730 = vadd.f32 %v689, %v729
  %v731 = vpop.f32.mrf.mxu0
  %v732 = vpop.f32.mrf.mxu0
  %v733 = vadd.f32 %v692, %v732
  %v734 = vpop.f32.mrf.mxu0
  %735 = vdwg.mxu0
  %736 = vmatprep.subr.bf16.mxu0 0
  %737 = vmatpush1.bf16.msra.mxu0 %v549
  %738 = vmatprep.subr.bf16.mxu0 0
  %739 = vmatpush1.bf16.msra.mxu0 %v548
  %740 = vmatprep.subr.bf16.mxu0 0
  %741 = vmatpush1.bf16.msra.mxu0 %v547
  %742 = vmatprep.subr.bf16.mxu0 0
  %743 = vmatpush1.bf16.msra.mxu0 %v546
  %744 = vmatprep.subr.bf16.mxu0 0
  %745 = vmatpush1.bf16.msra.mxu0 %v545
  %746 = vmatprep.subr.bf16.mxu0 0
  %747 = vmatpush1.bf16.msra.mxu0 %v544
  %748 = vmatprep.subr.bf16.mxu0 0
  %749 = vmatpush1.bf16.msra.mxu0 %v543
  %750 = vmatprep.subr.bf16.mxu0 0
  %751 = vmatpush1.bf16.msra.mxu0 %v542
  %752 = vmatprep.subr.bf16.mxu0 0
  %753 = vmatpush2.bf16.msra.mxu0 %v557
  %754 = vmatprep.subr.bf16.mxu0 0
  %755 = vmatpush2.bf16.msra.mxu0 %v556
  %756 = vmatprep.subr.bf16.mxu0 0
  %757 = vmatpush2.bf16.msra.mxu0 %v555
  %758 = vmatprep.subr.bf16.mxu0 0
  %759 = vmatpush2.bf16.msra.mxu0 %v554
  %760 = vmatprep.subr.bf16.mxu0 0
  %761 = vmatpush2.bf16.msra.mxu0 %v553
  %762 = vmatprep.subr.bf16.mxu0 0
  %763 = vmatpush2.bf16.msra.mxu0 %v552
  %764 = vmatprep.subr.bf16.mxu0 0
  %765 = vmatpush2.bf16.msra.mxu0 %v551
  %766 = vmatprep.subr.bf16.mxu0 0
  %767 = vmatpush2.bf16.msra.mxu0 %v550
  %768 = vmatprep.mubr.bf16.mxu0 %v209
  %769 = vmatmul.mubr.bf16.gmra.mxu0 %v208
  %v770 = vpop.f32.mrf.mxu0
  %v771 = vadd.f32 %v730, %v770
  %v772 = vpop.f32.mrf.mxu0
  %v773 = vpop.f32.mrf.mxu0
  %v774 = vadd.f32 %v733, %v773
  %v775 = vpop.f32.mrf.mxu0
  %776 = vdwg.mxu0
  %777 = vmatprep.subr.bf16.mxu0 0
  %778 = vmatpush1.bf16.msra.mxu0 %v565
  %779 = vmatprep.subr.bf16.mxu0 0
  %780 = vmatpush1.bf16.msra.mxu0 %v564
  %781 = vmatprep.subr.bf16.mxu0 0
  %782 = vmatpush1.bf16.msra.mxu0 %v563
  %783 = vmatprep.subr.bf16.mxu0 0
  %784 = vmatpush1.bf16.msra.mxu0 %v562
  %785 = vmatprep.subr.bf16.mxu0 0
  %786 = vmatpush1.bf16.msra.mxu0 %v561
  %787 = vmatprep.subr.bf16.mxu0 0
  %788 = vmatpush1.bf16.msra.mxu0 %v560
  %789 = vmatprep.subr.bf16.mxu0 0
  %790 = vmatpush1.bf16.msra.mxu0 %v559
  %791 = vmatprep.subr.bf16.mxu0 0
  %792 = vmatpush1.bf16.msra.mxu0 %v558
  %793 = vmatprep.subr.bf16.mxu0 0
  %794 = vmatpush2.bf16.msra.mxu0 %v573
  %795 = vmatprep.subr.bf16.mxu0 0
  %796 = vmatpush2.bf16.msra.mxu0 %v572
  %797 = vmatprep.subr.bf16.mxu0 0
  %798 = vmatpush2.bf16.msra.mxu0 %v571
  %799 = vmatprep.subr.bf16.mxu0 0
  %800 = vmatpush2.bf16.msra.mxu0 %v570
  %801 = vmatprep.subr.bf16.mxu0 0
  %802 = vmatpush2.bf16.msra.mxu0 %v569
  %803 = vmatprep.subr.bf16.mxu0 0
  %804 = vmatpush2.bf16.msra.mxu0 %v568
  %805 = vmatprep.subr.bf16.mxu0 0
  %806 = vmatpush2.bf16.msra.mxu0 %v567
  %807 = vmatprep.subr.bf16.mxu0 0
  %808 = vmatpush2.bf16.msra.mxu0 %v566
  %809 = vmatprep.mubr.bf16.mxu0 %v211
  %810 = vmatmul.mubr.bf16.gmra.mxu0 %v210
  %v811 = vpop.f32.mrf.mxu0
  %v812 = vadd.f32 %v771, %v811
  %v813 = vpop.f32.mrf.mxu0
  %v814 = vpop.f32.mrf.mxu0
  %v815 = vadd.f32 %v774, %v814
  %v816 = vpop.f32.mrf.mxu0
  %817 = vdwg.mxu0
  %818 = vmatprep.subr.bf16.mxu0 0
  %819 = vmatpush1.bf16.msra.mxu0 %v581
  %820 = vmatprep.subr.bf16.mxu0 0
  %821 = vmatpush1.bf16.msra.mxu0 %v580
  %822 = vmatprep.subr.bf16.mxu0 0
  %823 = vmatpush1.bf16.msra.mxu0 %v579
  %824 = vmatprep.subr.bf16.mxu0 0
  %825 = vmatpush1.bf16.msra.mxu0 %v578
  %826 = vmatprep.subr.bf16.mxu0 0
  %827 = vmatpush1.bf16.msra.mxu0 %v577
  %828 = vmatprep.subr.bf16.mxu0 0
  %829 = vmatpush1.bf16.msra.mxu0 %v576
  %830 = vmatprep.subr.bf16.mxu0 0
  %831 = vmatpush1.bf16.msra.mxu0 %v575
  %832 = vmatprep.subr.bf16.mxu0 0
  %833 = vmatpush1.bf16.msra.mxu0 %v574
  %834 = vmatprep.subr.bf16.mxu0 0
  %835 = vmatpush2.bf16.msra.mxu0 0
  %836 = vmatprep.subr.bf16.mxu0 0
  %837 = vmatpush2.bf16.msra.mxu0 0
  %838 = vmatprep.subr.bf16.mxu0 0
  %839 = vmatpush2.bf16.msra.mxu0 0
  %840 = vmatprep.subr.bf16.mxu0 0
  %841 = vmatpush2.bf16.msra.mxu0 0
  %842 = vmatprep.subr.bf16.mxu0 0
  %843 = vmatpush2.bf16.msra.mxu0 0
  %844 = vmatprep.subr.bf16.mxu0 0
  %845 = vmatpush2.bf16.msra.mxu0 0
  %846 = vmatprep.subr.bf16.mxu0 0
  %847 = vmatpush2.bf16.msra.mxu0 0
  %848 = vmatprep.subr.bf16.mxu0 0
  %849 = vmatpush2.bf16.msra.mxu0 0
  %850 = vmatprep.mubr.bf16.mxu0 0
  %851 = vmatmul.mubr.bf16.gmra.mxu0 %v212
  %v852 = vpop.f32.mrf.mxu0
  %v853 = vadd.f32 %v812, %v852
  %v854 = vpop.f32.mrf.mxu0
  %v855 = vpop.f32.mrf.mxu0
  %v856 = vadd.f32 %v815, %v855
  %v857 = vpop.f32.mrf.mxu0
  %858 = vdwg.mxu0
  %859 = vst [vmem:[%s3] sm:$0xff] %v853
  %860 = vst [vmem:[%s3 + $0x8] sm:$0xff] %v856
  // Predicated region
  $region14: #{compressor_forward.13} parent=0 // pred_check
    _
  $region15: #{compressor_forward.13} parent=0 // pred_check_branch
    %862 = sbr.rel (0) target = $region17
  $region16: #{compressor_forward.13} parent=0 // pred_region
    _
  $region17: #{compressor_forward.13} parent=0 // pred_fallthru
    _
  // Predicated region
  $region18: #{compressor_forward.13} parent=0 // pred_check
    _
  $region19: #{compressor_forward.13} parent=0 // pred_check_branch
    %864 = sbr.rel (0) target = $region21
  $region20: #{compressor_forward.13} parent=0 // pred_region
    _
  $region21: #{compressor_forward.13} parent=0 // pred_fallthru
    _

// kernel: compressor_forward.15
$region0: #{compressor_forward.15}
  #allocation0 [shape = 'u32[]', space=smem, size = 0x4, offset = 0x4, fixed_abs, tag = 'smem constant byte address 0x4 - core index']
  #allocation1 [shape = 'u32[144,128]{1,0:T(1,128)}', space=vmem, size = 0x12000, scoped, tag = 'internal scratch']
  %s0 = inlined_call_operand.vmem [shape: bf16[16,512], index: 0, kind: input, shape index: {}]
  %s1 = inlined_call_operand.vmem [shape: bf16[512,512], index: 1, kind: input, shape index: {}]
  %s2 = inlined_call_operand.vmem [shape: f32[1,512], index: 2, kind: input, shape index: {}]
  %s3 = inlined_call_operand.vmem [shape: f32[16,512], index: 3, kind: output, shape index: {}]
  %s4 = sld [smem:[#allocation0]]
  $region22: #{compressor_forward.15} parent=0
    _
  %s6 = ssub.s32 1, %s4
  %s7 = scalar_select 0, %s6, %s4
  // Predicated region
  $region2: #{compressor_forward.15} parent=0 // pred_check
    _
  $region3: #{compressor_forward.15} parent=0 // pred_check_branch
    %9 = sbr.rel (0) target = $region5
  $region4: #{compressor_forward.15} parent=0 // pred_region
    _
  $region5: #{compressor_forward.15} parent=0 // pred_fallthru
    _
  // Predicated region
  $region6: #{compressor_forward.15} parent=0 // pred_check
    _
  $region7: #{compressor_forward.15} parent=0 // pred_check_branch
    %11 = sbr.rel (0) target = $region9
  $region8: #{compressor_forward.15} parent=0 // pred_region
    _
  $region9: #{compressor_forward.15} parent=0 // pred_fallthru
    _
  // Predicated region
  $region10: #{compressor_forward.15} parent=0 // pred_check
    _
  $region11: #{compressor_forward.15} parent=0 // pred_check_branch
    %13 = sbr.rel (0) target = $region13
  $region12: #{compressor_forward.15} parent=0 // pred_region
    _
  $region13: #{compressor_forward.15} parent=0 // pred_fallthru
    _
  %v14 = vld [vmem:[%s0] sm:$0xff]
  %v15 = vld [vmem:[%s0 + $0x8] sm:$0xff]
  %v16 = vld [vmem:[%s0 + $0x10] sm:$0xff]
  %v17 = vld [vmem:[%s0 + $0x18] sm:$0xff]
  %v18 = vld [vmem:[%s1] sm:$0xff]
  %v19 = vld [vmem:[%s1 + $0x8] sm:$0xff]
  %v20 = vld [vmem:[%s1 + $0x10] sm:$0xff]
  %v21 = vld [vmem:[%s1 + $0x18] sm:$0xff]
  %v22 = vld [vmem:[%s1 + $0x20] sm:$0xff]
  %v23 = vld [vmem:[%s1 + $0x28] sm:$0xff]
  %v24 = vld [vmem:[%s1 + $0x30] sm:$0xff]
  %v25 = vld [vmem:[%s1 + $0x38] sm:$0xff]
  %v26 = vld [vmem:[%s1 + $0x40] sm:$0xff]
  %v27 = vld [vmem:[%s1 + $0x48] sm:$0xff]
  %v28 = vld [vmem:[%s1 + $0x50] sm:$0xff]
  %v29 = vld [vmem:[%s1 + $0x58] sm:$0xff]
  %v30 = vld [vmem:[%s1 + $0x60] sm:$0xff]
  %v31 = vld [vmem:[%s1 + $0x68] sm:$0xff]
  %v32 = vld [vmem:[%s1 + $0x70] sm:$0xff]
  %v33 = vld [vmem:[%s1 + $0x78] sm:$0xff]
  %v34 = vld [vmem:[%s1 + $0x80] sm:$0xff]
  %v35 = vld [vmem:[%s1 + $0x88] sm:$0xff]
  %v36 = vld [vmem:[%s1 + $0x90] sm:$0xff]
  %v37 = vld [vmem:[%s1 + $0x98] sm:$0xff]
  %v38 = vld [vmem:[%s1 + $0xa0] sm:$0xff]
  %v39 = vld [vmem:[%s1 + $0xa8] sm:$0xff]
  %v40 = vld [vmem:[%s1 + $0xb0] sm:$0xff]
  %v41 = vld [vmem:[%s1 + $0xb8] sm:$0xff]
  %v42 = vld [vmem:[%s1 + $0xc0] sm:$0xff]
  %v43 = vld [vmem:[%s1 + $0xc8] sm:$0xff]
  %v44 = vld [vmem:[%s1 + $0xd0] sm:$0xff]
  %v45 = vld [vmem:[%s1 + $0xd8] sm:$0xff]
  %v46 = vld [vmem:[%s1 + $0xe0] sm:$0xff]
  %v47 = vld [vmem:[%s1 + $0xe8] sm:$0xff]
  %v48 = vld [vmem:[%s1 + $0xf0] sm:$0xff]
  %v49 = vld [vmem:[%s1 + $0xf8] sm:$0xff]
  %v50 = vld [vmem:[%s1 + $0x100] sm:$0xff]
  %v51 = vld [vmem:[%s1 + $0x108] sm:$0xff]
  %v52 = vld [vmem:[%s1 + $0x110] sm:$0xff]
  %v53 = vld [vmem:[%s1 + $0x118] sm:$0xff]
  %v54 = vld [vmem:[%s1 + $0x120] sm:$0xff]
  %v55 = vld [vmem:[%s1 + $0x128] sm:$0xff]
  %v56 = vld [vmem:[%s1 + $0x130] sm:$0xff]
  %v57 = vld [vmem:[%s1 + $0x138] sm:$0xff]
  %v58 = vld [vmem:[%s1 + $0x140] sm:$0xff]
  %v59 = vld [vmem:[%s1 + $0x148] sm:$0xff]
  %v60 = vld [vmem:[%s1 + $0x150] sm:$0xff]
  %v61 = vld [vmem:[%s1 + $0x158] sm:$0xff]
  %v62 = vld [vmem:[%s1 + $0x160] sm:$0xff]
  %v63 = vld [vmem:[%s1 + $0x168] sm:$0xff]
  %v64 = vld [vmem:[%s1 + $0x170] sm:$0xff]
  %v65 = vld [vmem:[%s1 + $0x178] sm:$0xff]
  %v66 = vld [vmem:[%s1 + $0x180] sm:$0xff]
  %v67 = vld [vmem:[%s1 + $0x188] sm:$0xff]
  %v68 = vld [vmem:[%s1 + $0x190] sm:$0xff]
  %v69 = vld [vmem:[%s1 + $0x198] sm:$0xff]
  %v70 = vld [vmem:[%s1 + $0x1a0] sm:$0xff]
  %v71 = vld [vmem:[%s1 + $0x1a8] sm:$0xff]
  %v72 = vld [vmem:[%s1 + $0x1b0] sm:$0xff]
  %v73 = vld [vmem:[%s1 + $0x1b8] sm:$0xff]
  %v74 = vld [vmem:[%s1 + $0x1c0] sm:$0xff]
  %v75 = vld [vmem:[%s1 + $0x1c8] sm:$0xff]
  %v76 = vld [vmem:[%s1 + $0x1d0] sm:$0xff]
  %v77 = vld [vmem:[%s1 + $0x1d8] sm:$0xff]
  %v78 = vld [vmem:[%s1 + $0x1e0] sm:$0xff]
  %v79 = vld [vmem:[%s1 + $0x1e8] sm:$0xff]
  %v80 = vld [vmem:[%s1 + $0x1f0] sm:$0xff]
  %v81 = vld [vmem:[%s1 + $0x1f8] sm:$0xff]
  %v82 = vld [vmem:[%s1 + $0x200] sm:$0xff]
  %v83 = vld [vmem:[%s1 + $0x208] sm:$0xff]
  %v84 = vld [vmem:[%s1 + $0x210] sm:$0xff]
  %v85 = vld [vmem:[%s1 + $0x218] sm:$0xff]
  %v86 = vld [vmem:[%s1 + $0x220] sm:$0xff]
  %v87 = vld [vmem:[%s1 + $0x228] sm:$0xff]
  %v88 = vld [vmem:[%s1 + $0x230] sm:$0xff]
  %v89 = vld [vmem:[%s1 + $0x238] sm:$0xff]
  %v90 = vld [vmem:[%s1 + $0x240] sm:$0xff]
  %v91 = vld [vmem:[%s1 + $0x248] sm:$0xff]
  %v92 = vld [vmem:[%s1 + $0x250] sm:$0xff]
  %v93 = vld [vmem:[%s1 + $0x258] sm:$0xff]
  %v94 = vld [vmem:[%s1 + $0x260] sm:$0xff]
  %v95 = vld [vmem:[%s1 + $0x268] sm:$0xff]
  %v96 = vld [vmem:[%s1 + $0x270] sm:$0xff]
  %v97 = vld [vmem:[%s1 + $0x278] sm:$0xff]
  %v98 = vld [vmem:[%s1 + $0x280] sm:$0xff]
  %v99 = vld [vmem:[%s1 + $0x288] sm:$0xff]
  %v100 = vld [vmem:[%s1 + $0x290] sm:$0xff]
  %v101 = vld [vmem:[%s1 + $0x298] sm:$0xff]
  %v102 = vld [vmem:[%s1 + $0x2a0] sm:$0xff]
  %v103 = vld [vmem:[%s1 + $0x2a8] sm:$0xff]
  %v104 = vld [vmem:[%s1 + $0x2b0] sm:$0xff]
  %v105 = vld [vmem:[%s1 + $0x2b8] sm:$0xff]
  %v106 = vld [vmem:[%s1 + $0x2c0] sm:$0xff]
  %v107 = vld [vmem:[%s1 + $0x2c8] sm:$0xff]
  %v108 = vld [vmem:[%s1 + $0x2d0] sm:$0xff]
  %v109 = vld [vmem:[%s1 + $0x2d8] sm:$0xff]
  %v110 = vld [vmem:[%s1 + $0x2e0] sm:$0xff]
  %v111 = vld [vmem:[%s1 + $0x2e8] sm:$0xff]
  %v112 = vld [vmem:[%s1 + $0x2f0] sm:$0xff]
  %v113 = vld [vmem:[%s1 + $0x2f8] sm:$0xff]
  %v114 = vld [vmem:[%s1 + $0x300] sm:$0xff]
  %v115 = vld [vmem:[%s1 + $0x308] sm:$0xff]
  %v116 = vld [vmem:[%s1 + $0x310] sm:$0xff]
  %v117 = vld [vmem:[%s1 + $0x318] sm:$0xff]
  %v118 = vld [vmem:[%s1 + $0x320] sm:$0xff]
  %v119 = vld [vmem:[%s1 + $0x328] sm:$0xff]
  %v120 = vld [vmem:[%s1 + $0x330] sm:$0xff]
  %v121 = vld [vmem:[%s1 + $0x338] sm:$0xff]
  %v122 = vld [vmem:[%s1 + $0x340] sm:$0xff]
  %v123 = vld [vmem:[%s1 + $0x348] sm:$0xff]
  %v124 = vld [vmem:[%s1 + $0x350] sm:$0xff]
  %v125 = vld [vmem:[%s1 + $0x358] sm:$0xff]
  %v126 = vld [vmem:[%s1 + $0x360] sm:$0xff]
  %v127 = vld [vmem:[%s1 + $0x368] sm:$0xff]
  %v128 = vld [vmem:[%s1 + $0x370] sm:$0xff]
  %v129 = vld [vmem:[%s1 + $0x378] sm:$0xff]
  %v130 = vld [vmem:[%s1 + $0x380] sm:$0xff]
  %v131 = vld [vmem:[%s1 + $0x388] sm:$0xff]
  %v132 = vld [vmem:[%s1 + $0x390] sm:$0xff]
  %v133 = vld [vmem:[%s1 + $0x398] sm:$0xff]
  %v134 = vld [vmem:[%s1 + $0x3a0] sm:$0xff]
  %v135 = vld [vmem:[%s1 + $0x3a8] sm:$0xff]
  %v136 = vld [vmem:[%s1 + $0x3b0] sm:$0xff]
  %v137 = vld [vmem:[%s1 + $0x3b8] sm:$0xff]
  %v138 = vld [vmem:[%s1 + $0x3c0] sm:$0xff]
  %v139 = vld [vmem:[%s1 + $0x3c8] sm:$0xff]
  %v140 = vld [vmem:[%s1 + $0x3d0] sm:$0xff]
  %v141 = vld [vmem:[%s1 + $0x3d8] sm:$0xff]
  %v142 = vld [vmem:[%s1 + $0x3e0] sm:$0xff]
  %v143 = vld [vmem:[%s1 + $0x3e8] sm:$0xff]
  %v144 = vld [vmem:[%s1 + $0x3f0] sm:$0xff]
  %v145 = vld [vmem:[%s1 + $0x3f8] sm:$0xff]
  %v146 = vld [vmem:[%s2] sm:$0xf]
  %v148 = vlaneseq
  %v149 = vshrl.u32 %v148, 7
  %v150 = vsub.s32 0, %v149
  %v151 = vrot.slane %v146, %v150
  %v152 = vlaneseq
  %v153 = vshrl.u32 %v152, 7
  %v154 = vsub.s32 1, %v153
  %v155 = vrot.slane %v146, %v154
  %v156 = vlaneseq
  %v157 = vshrl.u32 %v156, 7
  %v158 = vsub.s32 2, %v157
  %v159 = vrot.slane %v146, %v158
  %v160 = vlaneseq
  %v161 = vshrl.u32 %v160, 7
  %v162 = vsub.s32 3, %v161
  %v163 = vrot.slane %v146, %v162
  %v172 = vunpack.c.l.b16 %v14
  %v173 = vunpack.c.h.b16 %v14
  %v174 = vunpack.c.l.b16 %v15
  %v175 = vunpack.c.h.b16 %v15
  %v176 = vunpack.c.l.b16 %v16
  %v177 = vunpack.c.h.b16 %v16
  %v178 = vunpack.c.l.b16 %v17
  %v179 = vunpack.c.h.b16 %v17
  %v180 = vpack.c.b16 %v176, %v172
  %v181 = vpack.c.b16 %v177, %v173
  %v182 = vpack.c.b16 %v178, %v174
  %v183 = vpack.c.b16 %v179, %v175
  %v316 = vunpack.c.l.b16 %v18
  %v317 = vunpack.c.h.b16 %v18
  %v318 = vunpack.c.l.b16 %v19
  %v319 = vunpack.c.h.b16 %v19
  %v320 = vunpack.c.l.b16 %v20
  %v321 = vunpack.c.h.b16 %v20
  %v322 = vunpack.c.l.b16 %v21
  %v323 = vunpack.c.h.b16 %v21
  %v324 = vunpack.c.l.b16 %v22
  %v325 = vunpack.c.h.b16 %v22
  %v326 = vunpack.c.l.b16 %v23
  %v327 = vunpack.c.h.b16 %v23
  %v328 = vunpack.c.l.b16 %v24
  %v329 = vunpack.c.h.b16 %v24
  %v330 = vunpack.c.l.b16 %v25
  %v331 = vunpack.c.h.b16 %v25
  %v332 = vunpack.c.l.b16 %v26
  %v333 = vunpack.c.h.b16 %v26
  %v334 = vunpack.c.l.b16 %v27
  %v335 = vunpack.c.h.b16 %v27
  %v336 = vunpack.c.l.b16 %v28
  %v337 = vunpack.c.h.b16 %v28
  %v338 = vunpack.c.l.b16 %v29
  %v339 = vunpack.c.h.b16 %v29
  %v340 = vunpack.c.l.b16 %v30
  %v341 = vunpack.c.h.b16 %v30
  %v342 = vunpack.c.l.b16 %v31
  %v343 = vunpack.c.h.b16 %v31
  %v344 = vunpack.c.l.b16 %v32
  %v345 = vunpack.c.h.b16 %v32
  %v346 = vunpack.c.l.b16 %v33
  %v347 = vunpack.c.h.b16 %v33
  %v348 = vunpack.c.l.b16 %v34
  %v349 = vunpack.c.h.b16 %v34
  %v350 = vunpack.c.l.b16 %v35
  %v351 = vunpack.c.h.b16 %v35
  %v352 = vunpack.c.l.b16 %v36
  %v353 = vunpack.c.h.b16 %v36
  %v354 = vunpack.c.l.b16 %v37
  %v355 = vunpack.c.h.b16 %v37
  %v356 = vunpack.c.l.b16 %v38
  %v357 = vunpack.c.h.b16 %v38
  %v358 = vunpack.c.l.b16 %v39
  %v359 = vunpack.c.h.b16 %v39
  %v360 = vunpack.c.l.b16 %v40
  %v361 = vunpack.c.h.b16 %v40
  %v362 = vunpack.c.l.b16 %v41
  %v363 = vunpack.c.h.b16 %v41
  %v364 = vunpack.c.l.b16 %v42
  %v365 = vunpack.c.h.b16 %v42
  %v366 = vunpack.c.l.b16 %v43
  %v367 = vunpack.c.h.b16 %v43
  %v368 = vunpack.c.l.b16 %v44
  %v369 = vunpack.c.h.b16 %v44
  %v370 = vunpack.c.l.b16 %v45
  %v371 = vunpack.c.h.b16 %v45
  %v372 = vunpack.c.l.b16 %v46
  %v373 = vunpack.c.h.b16 %v46
  %v374 = vunpack.c.l.b16 %v47
  %v375 = vunpack.c.h.b16 %v47
  %v376 = vunpack.c.l.b16 %v48
  %v377 = vunpack.c.h.b16 %v48
  %v378 = vunpack.c.l.b16 %v49
  %v379 = vunpack.c.h.b16 %v49
  %v380 = vunpack.c.l.b16 %v50
  %v381 = vunpack.c.h.b16 %v50
  %v382 = vunpack.c.l.b16 %v51
  %v383 = vunpack.c.h.b16 %v51
  %v384 = vunpack.c.l.b16 %v52
  %v385 = vunpack.c.h.b16 %v52
  %v386 = vunpack.c.l.b16 %v53
  %v387 = vunpack.c.h.b16 %v53
  %v388 = vunpack.c.l.b16 %v54
  %v389 = vunpack.c.h.b16 %v54
  %v390 = vunpack.c.l.b16 %v55
  %v391 = vunpack.c.h.b16 %v55
  %v392 = vunpack.c.l.b16 %v56
  %v393 = vunpack.c.h.b16 %v56
  %v394 = vunpack.c.l.b16 %v57
  %v395 = vunpack.c.h.b16 %v57
  %v396 = vunpack.c.l.b16 %v58
  %v397 = vunpack.c.h.b16 %v58
  %v398 = vunpack.c.l.b16 %v59
  %v399 = vunpack.c.h.b16 %v59
  %v400 = vunpack.c.l.b16 %v60
  %v401 = vunpack.c.h.b16 %v60
  %v402 = vunpack.c.l.b16 %v61
  %v403 = vunpack.c.h.b16 %v61
  %v404 = vunpack.c.l.b16 %v62
  %v405 = vunpack.c.h.b16 %v62
  %v406 = vunpack.c.l.b16 %v63
  %v407 = vunpack.c.h.b16 %v63
  %v408 = vunpack.c.l.b16 %v64
  %v409 = vunpack.c.h.b16 %v64
  %v410 = vunpack.c.l.b16 %v65
  %v411 = vunpack.c.h.b16 %v65
  %v412 = vunpack.c.l.b16 %v66
  %v413 = vunpack.c.h.b16 %v66
  %v414 = vunpack.c.l.b16 %v67
  %v415 = vunpack.c.h.b16 %v67
  %v416 = vunpack.c.l.b16 %v68
  %v417 = vunpack.c.h.b16 %v68
  %v418 = vunpack.c.l.b16 %v69
  %v419 = vunpack.c.h.b16 %v69
  %v420 = vunpack.c.l.b16 %v70
  %v421 = vunpack.c.h.b16 %v70
  %v422 = vunpack.c.l.b16 %v71
  %v423 = vunpack.c.h.b16 %v71
  %v424 = vunpack.c.l.b16 %v72
  %v425 = vunpack.c.h.b16 %v72
  %v426 = vunpack.c.l.b16 %v73
  %v427 = vunpack.c.h.b16 %v73
  %v428 = vunpack.c.l.b16 %v74
  %v429 = vunpack.c.h.b16 %v74
  %v430 = vunpack.c.l.b16 %v75
  %v431 = vunpack.c.h.b16 %v75
  %v432 = vunpack.c.l.b16 %v76
  %v433 = vunpack.c.h.b16 %v76
  %v434 = vunpack.c.l.b16 %v77
  %v435 = vunpack.c.h.b16 %v77
  %v436 = vunpack.c.l.b16 %v78
  %v437 = vunpack.c.h.b16 %v78
  %v438 = vunpack.c.l.b16 %v79
  %v439 = vunpack.c.h.b16 %v79
  %v440 = vunpack.c.l.b16 %v80
  %v441 = vunpack.c.h.b16 %v80
  %v442 = vunpack.c.l.b16 %v81
  %v443 = vunpack.c.h.b16 %v81
  %v444 = vunpack.c.l.b16 %v82
  %v445 = vunpack.c.h.b16 %v82
  %v446 = vunpack.c.l.b16 %v83
  %v447 = vunpack.c.h.b16 %v83
  %v448 = vunpack.c.l.b16 %v84
  %v449 = vunpack.c.h.b16 %v84
  %v450 = vunpack.c.l.b16 %v85
  %v451 = vunpack.c.h.b16 %v85
  %v452 = vunpack.c.l.b16 %v86
  %v453 = vunpack.c.h.b16 %v86
  %v454 = vunpack.c.l.b16 %v87
  %v455 = vunpack.c.h.b16 %v87
  %v456 = vunpack.c.l.b16 %v88
  %v457 = vunpack.c.h.b16 %v88
  %v458 = vunpack.c.l.b16 %v89
  %v459 = vunpack.c.h.b16 %v89
  %v460 = vunpack.c.l.b16 %v90
  %v461 = vunpack.c.h.b16 %v90
  %v462 = vunpack.c.l.b16 %v91
  %v463 = vunpack.c.h.b16 %v91
  %v464 = vunpack.c.l.b16 %v92
  %v465 = vunpack.c.h.b16 %v92
  %v466 = vunpack.c.l.b16 %v93
  %v467 = vunpack.c.h.b16 %v93
  %v468 = vunpack.c.l.b16 %v94
  %v469 = vunpack.c.h.b16 %v94
  %v470 = vunpack.c.l.b16 %v95
  %v471 = vunpack.c.h.b16 %v95
  %v472 = vunpack.c.l.b16 %v96
  %v473 = vunpack.c.h.b16 %v96
  %v474 = vunpack.c.l.b16 %v97
  %v475 = vunpack.c.h.b16 %v97
  %v476 = vunpack.c.l.b16 %v98
  %v477 = vunpack.c.h.b16 %v98
  %v478 = vunpack.c.l.b16 %v99
  %v479 = vunpack.c.h.b16 %v99
  %v480 = vunpack.c.l.b16 %v100
  %v481 = vunpack.c.h.b16 %v100
  %v482 = vunpack.c.l.b16 %v101
  %v483 = vunpack.c.h.b16 %v101
  %v484 = vunpack.c.l.b16 %v102
  %v485 = vunpack.c.h.b16 %v102
  %v486 = vunpack.c.l.b16 %v103
  %v487 = vunpack.c.h.b16 %v103
  %v488 = vunpack.c.l.b16 %v104
  %v489 = vunpack.c.h.b16 %v104
  %v490 = vunpack.c.l.b16 %v105
  %v491 = vunpack.c.h.b16 %v105
  %v492 = vunpack.c.l.b16 %v106
  %v493 = vunpack.c.h.b16 %v106
  %v494 = vunpack.c.l.b16 %v107
  %v495 = vunpack.c.h.b16 %v107
  %v496 = vunpack.c.l.b16 %v108
  %v497 = vunpack.c.h.b16 %v108
  %v498 = vunpack.c.l.b16 %v109
  %v499 = vunpack.c.h.b16 %v109
  %v500 = vunpack.c.l.b16 %v110
  %v501 = vunpack.c.h.b16 %v110
  %v502 = vunpack.c.l.b16 %v111
  %v503 = vunpack.c.h.b16 %v111
  %v504 = vunpack.c.l.b16 %v112
  %v505 = vunpack.c.h.b16 %v112
  %v506 = vunpack.c.l.b16 %v113
  %v507 = vunpack.c.h.b16 %v113
  %v508 = vunpack.c.l.b16 %v114
  %v509 = vunpack.c.h.b16 %v114
  %v510 = vunpack.c.l.b16 %v115
  %v511 = vunpack.c.h.b16 %v115
  %v512 = vunpack.c.l.b16 %v116
  %v513 = vunpack.c.h.b16 %v116
  %v514 = vunpack.c.l.b16 %v117
  %v515 = vunpack.c.h.b16 %v117
  %v516 = vunpack.c.l.b16 %v118
  %v517 = vunpack.c.h.b16 %v118
  %v518 = vunpack.c.l.b16 %v119
  %v519 = vunpack.c.h.b16 %v119
  %v520 = vunpack.c.l.b16 %v120
  %v521 = vunpack.c.h.b16 %v120
  %v522 = vunpack.c.l.b16 %v121
  %v523 = vunpack.c.h.b16 %v121
  %v524 = vunpack.c.l.b16 %v122
  %v525 = vunpack.c.h.b16 %v122
  %v526 = vunpack.c.l.b16 %v123
  %v527 = vunpack.c.h.b16 %v123
  %v528 = vunpack.c.l.b16 %v124
  %v529 = vunpack.c.h.b16 %v124
  %v530 = vunpack.c.l.b16 %v125
  %v531 = vunpack.c.h.b16 %v125
  %v532 = vunpack.c.l.b16 %v126
  %v533 = vunpack.c.h.b16 %v126
  %v534 = vunpack.c.l.b16 %v127
  %v535 = vunpack.c.h.b16 %v127
  %v536 = vunpack.c.l.b16 %v128
  %v537 = vunpack.c.h.b16 %v128
  %v538 = vunpack.c.l.b16 %v129
  %v539 = vunpack.c.h.b16 %v129
  %v540 = vunpack.c.l.b16 %v130
  %v541 = vunpack.c.h.b16 %v130
  %v542 = vunpack.c.l.b16 %v131
  %v543 = vunpack.c.h.b16 %v131
  %v544 = vunpack.c.l.b16 %v132
  %v545 = vunpack.c.h.b16 %v132
  %v546 = vunpack.c.l.b16 %v133
  %v547 = vunpack.c.h.b16 %v133
  %v548 = vunpack.c.l.b16 %v134
  %v549 = vunpack.c.h.b16 %v134
  %v550 = vunpack.c.l.b16 %v135
  %v551 = vunpack.c.h.b16 %v135
  %v552 = vunpack.c.l.b16 %v136
  %v553 = vunpack.c.h.b16 %v136
  %v554 = vunpack.c.l.b16 %v137
  %v555 = vunpack.c.h.b16 %v137
  %v556 = vunpack.c.l.b16 %v138
  %v557 = vunpack.c.h.b16 %v138
  %v558 = vunpack.c.l.b16 %v139
  %v559 = vunpack.c.h.b16 %v139
  %v560 = vunpack.c.l.b16 %v140
  %v561 = vunpack.c.h.b16 %v140
  %v562 = vunpack.c.l.b16 %v141
  %v563 = vunpack.c.h.b16 %v141
  %v564 = vunpack.c.l.b16 %v142
  %v565 = vunpack.c.h.b16 %v142
  %v566 = vunpack.c.l.b16 %v143
  %v567 = vunpack.c.h.b16 %v143
  %v568 = vunpack.c.l.b16 %v144
  %v569 = vunpack.c.h.b16 %v144
  %v570 = vunpack.c.l.b16 %v145
  %v571 = vunpack.c.h.b16 %v145
  %v572 = vpack.c.b16 %v320, %v316
  %v573 = vpack.c.b16 %v321, %v317
  %v574 = vpack.c.b16 %v322, %v318
  %v575 = vpack.c.b16 %v323, %v319
  %v576 = vpack.c.b16 %v328, %v324
  %v577 = vpack.c.b16 %v329, %v325
  %v578 = vpack.c.b16 %v330, %v326
  %v579 = vpack.c.b16 %v331, %v327
  %v580 = vpack.c.b16 %v336, %v332
  %v581 = vpack.c.b16 %v337, %v333
  %v582 = vpack.c.b16 %v338, %v334
  %v583 = vpack.c.b16 %v339, %v335
  %v584 = vpack.c.b16 %v344, %v340
  %v585 = vpack.c.b16 %v345, %v341
  %v586 = vpack.c.b16 %v346, %v342
  %v587 = vpack.c.b16 %v347, %v343
  %v588 = vpack.c.b16 %v352, %v348
  %v589 = vpack.c.b16 %v353, %v349
  %v590 = vpack.c.b16 %v354, %v350
  %v591 = vpack.c.b16 %v355, %v351
  %v592 = vpack.c.b16 %v360, %v356
  %v593 = vpack.c.b16 %v361, %v357
  %v594 = vpack.c.b16 %v362, %v358
  %v595 = vpack.c.b16 %v363, %v359
  %v596 = vpack.c.b16 %v368, %v364
  %v597 = vpack.c.b16 %v369, %v365
  %v598 = vpack.c.b16 %v370, %v366
  %v599 = vpack.c.b16 %v371, %v367
  %v600 = vpack.c.b16 %v376, %v372
  %v601 = vpack.c.b16 %v377, %v373
  %v602 = vpack.c.b16 %v378, %v374
  %v603 = vpack.c.b16 %v379, %v375
  %v604 = vpack.c.b16 %v384, %v380
  %v605 = vpack.c.b16 %v385, %v381
  %v606 = vpack.c.b16 %v386, %v382
  %v607 = vpack.c.b16 %v387, %v383
  %v608 = vpack.c.b16 %v392, %v388
  %v609 = vpack.c.b16 %v393, %v389
  %v610 = vpack.c.b16 %v394, %v390
  %v611 = vpack.c.b16 %v395, %v391
  %v612 = vpack.c.b16 %v400, %v396
  %v613 = vpack.c.b16 %v401, %v397
  %v614 = vpack.c.b16 %v402, %v398
  %v615 = vpack.c.b16 %v403, %v399
  %v616 = vpack.c.b16 %v408, %v404
  %v617 = vpack.c.b16 %v409, %v405
  %v618 = vpack.c.b16 %v410, %v406
  %v619 = vpack.c.b16 %v411, %v407
  %v620 = vpack.c.b16 %v416, %v412
  %v621 = vpack.c.b16 %v417, %v413
  %v622 = vpack.c.b16 %v418, %v414
  %v623 = vpack.c.b16 %v419, %v415
  %v624 = vpack.c.b16 %v424, %v420
  %v625 = vpack.c.b16 %v425, %v421
  %v626 = vpack.c.b16 %v426, %v422
  %v627 = vpack.c.b16 %v427, %v423
  %v628 = vpack.c.b16 %v432, %v428
  %v629 = vpack.c.b16 %v433, %v429
  %v630 = vpack.c.b16 %v434, %v430
  %v631 = vpack.c.b16 %v435, %v431
  %v632 = vpack.c.b16 %v440, %v436
  %v633 = vpack.c.b16 %v441, %v437
  %v634 = vpack.c.b16 %v442, %v438
  %v635 = vpack.c.b16 %v443, %v439
  %v636 = vpack.c.b16 %v448, %v444
  %v637 = vpack.c.b16 %v449, %v445
  %v638 = vpack.c.b16 %v450, %v446
  %v639 = vpack.c.b16 %v451, %v447
  %v640 = vpack.c.b16 %v456, %v452
  %v641 = vpack.c.b16 %v457, %v453
  %v642 = vpack.c.b16 %v458, %v454
  %v643 = vpack.c.b16 %v459, %v455
  %v644 = vpack.c.b16 %v464, %v460
  %v645 = vpack.c.b16 %v465, %v461
  %v646 = vpack.c.b16 %v466, %v462
  %v647 = vpack.c.b16 %v467, %v463
  %v648 = vpack.c.b16 %v472, %v468
  %v649 = vpack.c.b16 %v473, %v469
  %v650 = vpack.c.b16 %v474, %v470
  %v651 = vpack.c.b16 %v475, %v471
  %v652 = vpack.c.b16 %v480, %v476
  %v653 = vpack.c.b16 %v481, %v477
  %v654 = vpack.c.b16 %v482, %v478
  %v655 = vpack.c.b16 %v483, %v479
  %v656 = vpack.c.b16 %v488, %v484
  %v657 = vpack.c.b16 %v489, %v485
  %v658 = vpack.c.b16 %v490, %v486
  %v659 = vpack.c.b16 %v491, %v487
  %v660 = vpack.c.b16 %v496, %v492
  %v661 = vpack.c.b16 %v497, %v493
  %v662 = vpack.c.b16 %v498, %v494
  %v663 = vpack.c.b16 %v499, %v495
  %v664 = vpack.c.b16 %v504, %v500
  %v665 = vpack.c.b16 %v505, %v501
  %v666 = vpack.c.b16 %v506, %v502
  %v667 = vpack.c.b16 %v507, %v503
  %v668 = vpack.c.b16 %v512, %v508
  %v669 = vpack.c.b16 %v513, %v509
  %v670 = vpack.c.b16 %v514, %v510
  %v671 = vpack.c.b16 %v515, %v511
  %v672 = vpack.c.b16 %v520, %v516
  %v673 = vpack.c.b16 %v521, %v517
  %v674 = vpack.c.b16 %v522, %v518
  %v675 = vpack.c.b16 %v523, %v519
  %v676 = vpack.c.b16 %v528, %v524
  %v677 = vpack.c.b16 %v529, %v525
  %v678 = vpack.c.b16 %v530, %v526
  %v679 = vpack.c.b16 %v531, %v527
  %v680 = vpack.c.b16 %v536, %v532
  %v681 = vpack.c.b16 %v537, %v533
  %v682 = vpack.c.b16 %v538, %v534
  %v683 = vpack.c.b16 %v539, %v535
  %v684 = vpack.c.b16 %v544, %v540
  %v685 = vpack.c.b16 %v545, %v541
  %v686 = vpack.c.b16 %v546, %v542
  %v687 = vpack.c.b16 %v547, %v543
  %v688 = vpack.c.b16 %v552, %v548
  %v689 = vpack.c.b16 %v553, %v549
  %v690 = vpack.c.b16 %v554, %v550
  %v691 = vpack.c.b16 %v555, %v551
  %v692 = vpack.c.b16 %v560, %v556
  %v693 = vpack.c.b16 %v561, %v557
  %v694 = vpack.c.b16 %v562, %v558
  %v695 = vpack.c.b16 %v563, %v559
  %v696 = vpack.c.b16 %v568, %v564
  %v697 = vpack.c.b16 %v569, %v565
  %v698 = vpack.c.b16 %v570, %v566
  %v699 = vpack.c.b16 %v571, %v567
  %828 = vmatprep.subr.bf16.mxu0 %v601
  %829 = vmatpush1.bf16.msra.mxu0 %v600
  %830 = vmatprep.subr.bf16.mxu0 %v597
  %831 = vmatpush1.bf16.msra.mxu0 %v596
  %832 = vmatprep.subr.bf16.mxu0 %v593
  %833 = vmatpush1.bf16.msra.mxu0 %v592
  %834 = vmatprep.subr.bf16.mxu0 %v589
  %835 = vmatpush1.bf16.msra.mxu0 %v588
  %836 = vmatprep.subr.bf16.mxu0 %v585
  %837 = vmatpush1.bf16.msra.mxu0 %v584
  %838 = vmatprep.subr.bf16.mxu0 %v581
  %839 = vmatpush1.bf16.msra.mxu0 %v580
  %840 = vmatprep.subr.bf16.mxu0 %v577
  %841 = vmatpush1.bf16.msra.mxu0 %v576
  %842 = vmatprep.subr.bf16.mxu0 %v573
  %843 = vmatpush1.bf16.msra.mxu0 %v572
  %844 = vmatprep.subr.bf16.mxu0 %v633
  %845 = vmatpush2.bf16.msra.mxu0 %v632
  %846 = vmatprep.subr.bf16.mxu0 %v629
  %847 = vmatpush2.bf16.msra.mxu0 %v628
  %848 = vmatprep.subr.bf16.mxu0 %v625
  %849 = vmatpush2.bf16.msra.mxu0 %v624
  %850 = vmatprep.subr.bf16.mxu0 %v621
  %851 = vmatpush2.bf16.msra.mxu0 %v620
  %852 = vmatprep.subr.bf16.mxu0 %v617
  %853 = vmatpush2.bf16.msra.mxu0 %v616
  %854 = vmatprep.subr.bf16.mxu0 %v613
  %855 = vmatpush2.bf16.msra.mxu0 %v612
  %856 = vmatprep.subr.bf16.mxu0 %v609
  %857 = vmatpush2.bf16.msra.mxu0 %v608
  %858 = vmatprep.subr.bf16.mxu0 %v605
  %859 = vmatpush2.bf16.msra.mxu0 %v604
  %860 = vmatprep.mubr.bf16.mxu0 %v181
  %861 = vmatmul.mubr.bf16.gmra.mxu0 %v180
  %v862 = vpop.f32.mrf.mxu0
  %v863 = vadd.f32 %v151, %v862
  %v864 = vpop.f32.mrf.mxu0
  %v865 = vadd.f32 %v155, %v864
  %v866 = vpop.f32.mrf.mxu0
  %v867 = vadd.f32 %v151, %v866
  %v868 = vpop.f32.mrf.mxu0
  %v869 = vadd.f32 %v155, %v868
  %870 = vdwg.mxu0
  %871 = vmatprep.subr.bf16.mxu0 %v665
  %872 = vmatpush1.bf16.msra.mxu0 %v664
  %873 = vmatprep.subr.bf16.mxu0 %v661
  %874 = vmatpush1.bf16.msra.mxu0 %v660
  %875 = vmatprep.subr.bf16.mxu0 %v657
  %876 = vmatpush1.bf16.msra.mxu0 %v656
  %877 = vmatprep.subr.bf16.mxu0 %v653
  %878 = vmatpush1.bf16.msra.mxu0 %v652
  %879 = vmatprep.subr.bf16.mxu0 %v649
  %880 = vmatpush1.bf16.msra.mxu0 %v648
  %881 = vmatprep.subr.bf16.mxu0 %v645
  %882 = vmatpush1.bf16.msra.mxu0 %v644
  %883 = vmatprep.subr.bf16.mxu0 %v641
  %884 = vmatpush1.bf16.msra.mxu0 %v640
  %885 = vmatprep.subr.bf16.mxu0 %v637
  %886 = vmatpush1.bf16.msra.mxu0 %v636
  %887 = vmatprep.subr.bf16.mxu0 %v697
  %888 = vmatpush2.bf16.msra.mxu0 %v696
  %889 = vmatprep.subr.bf16.mxu0 %v693
  %890 = vmatpush2.bf16.msra.mxu0 %v692
  %891 = vmatprep.subr.bf16.mxu0 %v689
  %892 = vmatpush2.bf16.msra.mxu0 %v688
  %893 = vmatprep.subr.bf16.mxu0 %v685
  %894 = vmatpush2.bf16.msra.mxu0 %v684
  %895 = vmatprep.subr.bf16.mxu0 %v681
  %896 = vmatpush2.bf16.msra.mxu0 %v680
  %897 = vmatprep.subr.bf16.mxu0 %v677
  %898 = vmatpush2.bf16.msra.mxu0 %v676
  %899 = vmatprep.subr.bf16.mxu0 %v673
  %900 = vmatpush2.bf16.msra.mxu0 %v672
  %901 = vmatprep.subr.bf16.mxu0 %v669
  %902 = vmatpush2.bf16.msra.mxu0 %v668
  %903 = vmatprep.mubr.bf16.mxu0 %v183
  %904 = vmatmul.mubr.bf16.gmra.mxu0 %v182
  %v905 = vpop.f32.mrf.mxu0
  %v906 = vadd.f32 %v863, %v905
  %v907 = vpop.f32.mrf.mxu0
  %v908 = vadd.f32 %v865, %v907
  %v909 = vpop.f32.mrf.mxu0
  %v910 = vadd.f32 %v867, %v909
  %v911 = vpop.f32.mrf.mxu0
  %v912 = vadd.f32 %v869, %v911
  %913 = vdwg.mxu0
  %914 = vmatprep.subr.bf16.mxu0 %v603
  %915 = vmatpush1.bf16.msra.mxu0 %v602
  %916 = vmatprep.subr.bf16.mxu0 %v599
  %917 = vmatpush1.bf16.msra.mxu0 %v598
  %918 = vmatprep.subr.bf16.mxu0 %v595
  %919 = vmatpush1.bf16.msra.mxu0 %v594
  %920 = vmatprep.subr.bf16.mxu0 %v591
  %921 = vmatpush1.bf16.msra.mxu0 %v590
  %922 = vmatprep.subr.bf16.mxu0 %v587
  %923 = vmatpush1.bf16.msra.mxu0 %v586
  %924 = vmatprep.subr.bf16.mxu0 %v583
  %925 = vmatpush1.bf16.msra.mxu0 %v582
  %926 = vmatprep.subr.bf16.mxu0 %v579
  %927 = vmatpush1.bf16.msra.mxu0 %v578
  %928 = vmatprep.subr.bf16.mxu0 %v575
  %929 = vmatpush1.bf16.msra.mxu0 %v574
  %930 = vmatprep.subr.bf16.mxu0 %v635
  %931 = vmatpush2.bf16.msra.mxu0 %v634
  %932 = vmatprep.subr.bf16.mxu0 %v631
  %933 = vmatpush2.bf16.msra.mxu0 %v630
  %934 = vmatprep.subr.bf16.mxu0 %v627
  %935 = vmatpush2.bf16.msra.mxu0 %v626
  %936 = vmatprep.subr.bf16.mxu0 %v623
  %937 = vmatpush2.bf16.msra.mxu0 %v622
  %938 = vmatprep.subr.bf16.mxu0 %v619
  %939 = vmatpush2.bf16.msra.mxu0 %v618
  %940 = vmatprep.subr.bf16.mxu0 %v615
  %941 = vmatpush2.bf16.msra.mxu0 %v614
  %942 = vmatprep.subr.bf16.mxu0 %v611
  %943 = vmatpush2.bf16.msra.mxu0 %v610
  %944 = vmatprep.subr.bf16.mxu0 %v607
  %945 = vmatpush2.bf16.msra.mxu0 %v606
  %946 = vmatprep.mubr.bf16.mxu0 %v181
  %947 = vmatmul.mubr.bf16.gmra.mxu0 %v180
  %v948 = vpop.f32.mrf.mxu0
  %v949 = vadd.f32 %v159, %v948
  %v950 = vpop.f32.mrf.mxu0
  %v951 = vadd.f32 %v163, %v950
  %v952 = vpop.f32.mrf.mxu0
  %v953 = vadd.f32 %v159, %v952
  %v954 = vpop.f32.mrf.mxu0
  %v955 = vadd.f32 %v163, %v954
  %956 = vdwg.mxu0
  %957 = vmatprep.subr.bf16.mxu0 %v667
  %958 = vmatpush1.bf16.msra.mxu0 %v666
  %959 = vmatprep.subr.bf16.mxu0 %v663
  %960 = vmatpush1.bf16.msra.mxu0 %v662
  %961 = vmatprep.subr.bf16.mxu0 %v659
  %962 = vmatpush1.bf16.msra.mxu0 %v658
  %963 = vmatprep.subr.bf16.mxu0 %v655
  %964 = vmatpush1.bf16.msra.mxu0 %v654
  %965 = vmatprep.subr.bf16.mxu0 %v651
  %966 = vmatpush1.bf16.msra.mxu0 %v650
  %967 = vmatprep.subr.bf16.mxu0 %v647
  %968 = vmatpush1.bf16.msra.mxu0 %v646
  %969 = vmatprep.subr.bf16.mxu0 %v643
  %970 = vmatpush1.bf16.msra.mxu0 %v642
  %971 = vmatprep.subr.bf16.mxu0 %v639
  %972 = vmatpush1.bf16.msra.mxu0 %v638
  %973 = vmatprep.subr.bf16.mxu0 %v699
  %974 = vmatpush2.bf16.msra.mxu0 %v698
  %975 = vmatprep.subr.bf16.mxu0 %v695
  %976 = vmatpush2.bf16.msra.mxu0 %v694
  %977 = vmatprep.subr.bf16.mxu0 %v691
  %978 = vmatpush2.bf16.msra.mxu0 %v690
  %979 = vmatprep.subr.bf16.mxu0 %v687
  %980 = vmatpush2.bf16.msra.mxu0 %v686
  %981 = vmatprep.subr.bf16.mxu0 %v683
  %982 = vmatpush2.bf16.msra.mxu0 %v682
  %983 = vmatprep.subr.bf16.mxu0 %v679
  %984 = vmatpush2.bf16.msra.mxu0 %v678
  %985 = vmatprep.subr.bf16.mxu0 %v675
  %986 = vmatpush2.bf16.msra.mxu0 %v674
  %987 = vmatprep.subr.bf16.mxu0 %v671
  %988 = vmatpush2.bf16.msra.mxu0 %v670
  %989 = vmatprep.mubr.bf16.mxu0 %v183
  %990 = vmatmul.mubr.bf16.gmra.mxu0 %v182
  %v991 = vpop.f32.mrf.mxu0
  %v992 = vadd.f32 %v949, %v991
  %v993 = vpop.f32.mrf.mxu0
  %v994 = vadd.f32 %v951, %v993
  %v995 = vpop.f32.mrf.mxu0
  %v996 = vadd.f32 %v953, %v995
  %v997 = vpop.f32.mrf.mxu0
  %v998 = vadd.f32 %v955, %v997
  %999 = vdwg.mxu0
  %v1000 = vmax.f32 %v906, 0.0
  %v1001 = vmax.f32 %v908, 0.0
  %v1002 = vmax.f32 %v992, 0.0
  %v1003 = vmax.f32 %v994, 0.0
  %v1004 = vmax.f32 %v910, 0.0
  %v1005 = vmax.f32 %v912, 0.0
  %v1006 = vmax.f32 %v996, 0.0
  %v1007 = vmax.f32 %v998, 0.0
  %1008 = vst [vmem:[%s3] sm:$0xff] %v1000
  %1009 = vst [vmem:[%s3 + $0x8] sm:$0xff] %v1001
  %1010 = vst [vmem:[%s3 + $0x10] sm:$0xff] %v1002
  %1011 = vst [vmem:[%s3 + $0x18] sm:$0xff] %v1003
  %1012 = vst [vmem:[%s3 + $0x20] sm:$0xff] %v1004
  %1013 = vst [vmem:[%s3 + $0x28] sm:$0xff] %v1005
  %1014 = vst [vmem:[%s3 + $0x30] sm:$0xff] %v1006
  %1015 = vst [vmem:[%s3 + $0x38] sm:$0xff] %v1007
  // Predicated region
  $region14: #{compressor_forward.15} parent=0 // pred_check
    _
  $region15: #{compressor_forward.15} parent=0 // pred_check_branch
    %1017 = sbr.rel (0) target = $region17
  $region16: #{compressor_forward.15} parent=0 // pred_region
    _
  $region17: #{compressor_forward.15} parent=0 // pred_fallthru
    _
  // Predicated region
  $region18: #{compressor_forward.15} parent=0 // pred_check
    _
  $region19: #{compressor_forward.15} parent=0 // pred_check_branch
    %1019 = sbr.rel (0) target = $region21
  $region20: #{compressor_forward.15} parent=0 // pred_region
    _
  $region21: #{compressor_forward.15} parent=0 // pred_fallthru
    _

// kernel: compressor_forward.17
$region0: #{compressor_forward.17}
  #allocation0 [shape = 'u32[]', space=smem, size = 0x4, offset = 0x4, fixed_abs, tag = 'smem constant byte address 0x4 - core index']
  #allocation1 [shape = 'u32[144,128]{1,0:T(1,128)}', space=vmem, size = 0x12000, scoped, tag = 'internal scratch']
  %s0 = inlined_call_operand.vmem [shape: f32[32,128], index: 0, kind: input, shape index: {}]
  %s1 = inlined_call_operand.vmem [shape: f32[32,128], index: 1, kind: input, shape index: {}]
  %s2 = inlined_call_operand.vmem [shape: f32[32,128], index: 2, kind: input, shape index: {}]
  %s3 = inlined_call_operand.vmem [shape: f32[32,128], index: 3, kind: output, shape index: {0}]
  %s4 = inlined_call_operand.vmem [shape: f32[32,128], index: 4, kind: output, shape index: {1}]
  %5 = xla_tuple %s3, %s4
  %s6 = sld [smem:[#allocation0]]
  $region30: #{compressor_forward.17} parent=0
    _
  %s8 = ssub.s32 1, %s6
  %s9 = scalar_select 0, %s8, %s6
  // Predicated region
  $region2: #{compressor_forward.17} parent=0 // pred_check
    _
  $region3: #{compressor_forward.17} parent=0 // pred_check_branch
    %11 = sbr.rel (0) target = $region5
  $region4: #{compressor_forward.17} parent=0 // pred_region
    _
  $region5: #{compressor_forward.17} parent=0 // pred_fallthru
    _
  // Predicated region
  $region6: #{compressor_forward.17} parent=0 // pred_check
    _
  $region7: #{compressor_forward.17} parent=0 // pred_check_branch
    %13 = sbr.rel (0) target = $region9
  $region8: #{compressor_forward.17} parent=0 // pred_region
    _
  $region9: #{compressor_forward.17} parent=0 // pred_fallthru
    _
  // Predicated region
  $region10: #{compressor_forward.17} parent=0 // pred_check
    _
  $region11: #{compressor_forward.17} parent=0 // pred_check_branch
    %15 = sbr.rel (0) target = $region13
  $region12: #{compressor_forward.17} parent=0 // pred_region
    _
  $region13: #{compressor_forward.17} parent=0 // pred_fallthru
    _
  %v16 = vld [vmem:[%s0] sm:$0xff]
  %v17 = vld [vmem:[%s0 + $0x8] sm:$0xff]
  %v18 = vld [vmem:[%s0 + $0x10] sm:$0xff]
  %v19 = vld [vmem:[%s0 + $0x18] sm:$0xff]
  %v20 = vld [vmem:[%s2] sm:$0xff]
  %v21 = vld [vmem:[%s2 + $0x8] sm:$0xff]
  %v22 = vld [vmem:[%s2 + $0x10] sm:$0xff]
  %v23 = vld [vmem:[%s2 + $0x18] sm:$0xff]
  %v24 = vld [vmem:[%s1] sm:$0xff]
  %v25 = vld [vmem:[%s1 + $0x8] sm:$0xff]
  %v26 = vld [vmem:[%s1 + $0x10] sm:$0xff]
  %v27 = vld [vmem:[%s1 + $0x18] sm:$0xff]
  %v28 = vmax.f32 %v24, 0.11
  %v29 = vmax.f32 %v25, 0.11
  %v30 = vmax.f32 %v26, 0.11
  %v31 = vmax.f32 %v27, 0.11
  %v32 = vrcp.pop %v28
  %v33 = vrcp.pop %v29
  %v34 = vrcp.pop %v30
  %v35 = vrcp.pop %v31
  %v36 = vsub.f32 %v16, %v20
  %v37 = vsub.f32 %v17, %v21
  %v38 = vsub.f32 %v18, %v22
  %v39 = vsub.f32 %v19, %v23
  %v40 = vround.ne.pseudo %v36
  %v41 = vround.ne.pseudo %v37
  %v42 = vround.ne.pseudo %v38
  %v43 = vround.ne.pseudo %v39
  %v44 = vadd.f32 %v40, %v20
  %v45 = vadd.f32 %v41, %v21
  %v46 = vadd.f32 %v42, %v22
  %v47 = vadd.f32 %v43, %v23
  %v48 = vsub.f32 %v44, %v20
  %v49 = vsub.f32 %v45, %v21
  %v50 = vsub.f32 %v46, %v22
  %v51 = vsub.f32 %v47, %v23
  %v52 = vand.u32 2147483647, %v48
  %v53 = vand.u32 2147483647, %v49
  %v54 = vand.u32 2147483647, %v50
  %v55 = vand.u32 2147483647, %v51
  %v56 = vsub.f32 0.5, %v52
  %v57 = vsub.f32 0.5, %v53
  %v58 = vsub.f32 0.5, %v54
  %v59 = vsub.f32 0.5, %v55
  %v60 = vmul.f32 %v56, %v32
  %v61 = vmul.f32 %v57, %v33
  %v62 = vmul.f32 %v58, %v34
  %v63 = vmul.f32 %v59, %v35
  %v64 = vmul.f32 %v60, 0.70710677
  %v65 = vmul.f32 %v61, 0.70710677
  %v66 = vmul.f32 %v62, 0.70710677
  %v67 = vmul.f32 %v63, 0.70710677
  %vm68 = vcmp.ge.f32.partialorder %v64, 0.0
  %vm69 = vcmp.ge.f32.partialorder %v65, 0.0
  %vm70 = vcmp.ge.f32.partialorder %v66, 0.0
  %vm71 = vcmp.ge.f32.partialorder %v67, 0.0
  %v72 = vsel %vm68, 1.0, -1.0
  %v73 = vsel %vm69, 1.0, -1.0
  %v74 = vsel %vm70, 1.0, -1.0
  %v75 = vsel %vm71, 1.0, -1.0
  %v76 = vand.u32 2147483647, %v64
  %v77 = vand.u32 2147483647, %v65
  %v78 = vand.u32 2147483647, %v66
  %v79 = vand.u32 2147483647, %v67
  %v80 = vmul.f32 %v76, 0.3275911
  %v81 = vmul.f32 %v77, 0.3275911
  %v82 = vmul.f32 %v78, 0.3275911
  %v83 = vmul.f32 %v79, 0.3275911
  %v84 = vadd.f32 %v80, 1.0
  %v85 = vadd.f32 %v81, 1.0
  %v86 = vadd.f32 %v82, 1.0
  %v87 = vadd.f32 %v83, 1.0
  %v88 = vrcp.pop %v84
  %v89 = vrcp.pop %v85
  %v90 = vrcp.pop %v86
  %v91 = vrcp.pop %v87
  %v92 = vmul.f32 %v88, 1.0614054
  %v93 = vmul.f32 %v89, 1.0614054
  %v94 = vmul.f32 %v90, 1.0614054
  %v95 = vmul.f32 %v91, 1.0614054
  %v96 = vadd.f32 %v92, -1.4531521
  %v97 = vadd.f32 %v93, -1.4531521
  %v98 = vadd.f32 %v94, -1.4531521
  %v99 = vadd.f32 %v95, -1.4531521
  %v100 = vmul.f32 %v96, %v88
  %v101 = vmul.f32 %v97, %v89
  %v102 = vmul.f32 %v98, %v90
  %v103 = vmul.f32 %v99, %v91
  %v104 = vadd.f32 %v100, 1.4214138
  %v105 = vadd.f32 %v101, 1.4214138
  %v106 = vadd.f32 %v102, 1.4214138
  %v107 = vadd.f32 %v103, 1.4214138
  %v108 = vmul.f32 %v104, %v88
  %v109 = vmul.f32 %v105, %v89
  %v110 = vmul.f32 %v106, %v90
  %v111 = vmul.f32 %v107, %v91
  %v112 = vadd.f32 %v108, -0.28449672
  %v113 = vadd.f32 %v109, -0.28449672
  %v114 = vadd.f32 %v110, -0.28449672
  %v115 = vadd.f32 %v111, -0.28449672
  %v116 = vmul.f32 %v112, %v88
  %v117 = vmul.f32 %v113, %v89
  %v118 = vmul.f32 %v114, %v90
  %v119 = vmul.f32 %v115, %v91
  %v120 = vadd.f32 %v116, 0.2548296
  %v121 = vadd.f32 %v117, 0.2548296
  %v122 = vadd.f32 %v118, 0.2548296
  %v123 = vadd.f32 %v119, 0.2548296
  %v124 = vmul.f32 %v120, %v88
  %v125 = vmul.f32 %v121, %v89
  %v126 = vmul.f32 %v122, %v90
  %v127 = vmul.f32 %v123, %v91
  %v128 = vsub.f32 0.0, %v76
  %v129 = vsub.f32 0.0, %v77
  %v130 = vsub.f32 0.0, %v78
  %v131 = vsub.f32 0.0, %v79
  %v132 = vmul.f32 %v128, %v76
  %v133 = vmul.f32 %v129, %v77
  %v134 = vmul.f32 %v130, %v78
  %v135 = vmul.f32 %v131, %v79
  %v136 = vmul.f32 %v132, 1.442695
  %v137 = vpow.pop %v136
  %v138 = vmul.f32 %v133, 1.442695
  %v139 = vpow.pop %v138
  %v140 = vmul.f32 %v134, 1.442695
  %v141 = vpow.pop %v140
  %v142 = vmul.f32 %v135, 1.442695
  %v143 = vpow.pop %v142
  %v144 = vmul.f32 %v124, %v137
  %v145 = vmul.f32 %v125, %v139
  %v146 = vmul.f32 %v126, %v141
  %v147 = vmul.f32 %v127, %v143
  %v148 = vsub.f32 1.0, %v144
  %v149 = vsub.f32 1.0, %v145
  %v150 = vsub.f32 1.0, %v146
  %v151 = vsub.f32 1.0, %v147
  %v152 = vmul.f32 %v72, %v148
  %v153 = vmul.f32 %v73, %v149
  %v154 = vmul.f32 %v74, %v150
  %v155 = vmul.f32 %v75, %v151
  %v156 = vadd.f32 %v152, 1.0
  %v157 = vadd.f32 %v153, 1.0
  %v158 = vadd.f32 %v154, 1.0
  %v159 = vadd.f32 %v155, 1.0
  %v160 = vmul.f32 %v156, 0.5
  %v161 = vmul.f32 %v157, 0.5
  %v162 = vmul.f32 %v158, 0.5
  %v163 = vmul.f32 %v159, 0.5
  %v164 = vsub.f32 -0.5, %v52
  %v165 = vsub.f32 -0.5, %v53
  %v166 = vsub.f32 -0.5, %v54
  %v167 = vsub.f32 -0.5, %v55
  %v168 = vmul.f32 %v164, %v32
  %v169 = vmul.f32 %v165, %v33
  %v170 = vmul.f32 %v166, %v34
  %v171 = vmul.f32 %v167, %v35
  %v172 = vmul.f32 %v168, 0.70710677
  %v173 = vmul.f32 %v169, 0.70710677
  %v174 = vmul.f32 %v170, 0.70710677
  %v175 = vmul.f32 %v171, 0.70710677
  %vm176 = vcmp.ge.f32.partialorder %v172, 0.0
  %vm177 = vcmp.ge.f32.partialorder %v173, 0.0
  %vm178 = vcmp.ge.f32.partialorder %v174, 0.0
  %vm179 = vcmp.ge.f32.partialorder %v175, 0.0
  %v180 = vsel %vm176, 1.0, -1.0
  %v181 = vsel %vm177, 1.0, -1.0
  %v182 = vsel %vm178, 1.0, -1.0
  %v183 = vsel %vm179, 1.0, -1.0
  %v184 = vand.u32 2147483647, %v172
  %v185 = vand.u32 2147483647, %v173
  %v186 = vand.u32 2147483647, %v174
  %v187 = vand.u32 2147483647, %v175
  %v188 = vmul.f32 %v184, 0.3275911
  %v189 = vmul.f32 %v185, 0.3275911
  %v190 = vmul.f32 %v186, 0.3275911
  %v191 = vmul.f32 %v187, 0.3275911
  %v192 = vadd.f32 %v188, 1.0
  %v193 = vadd.f32 %v189, 1.0
  %v194 = vadd.f32 %v190, 1.0
  %v195 = vadd.f32 %v191, 1.0
  %v196 = vrcp.pop %v192
  %v197 = vrcp.pop %v193
  %v198 = vrcp.pop %v194
  %v199 = vrcp.pop %v195
  %v200 = vmul.f32 %v196, 1.0614054
  %v201 = vmul.f32 %v197, 1.0614054
  %v202 = vmul.f32 %v198, 1.0614054
  %v203 = vmul.f32 %v199, 1.0614054
  %v204 = vadd.f32 %v200, -1.4531521
  %v205 = vadd.f32 %v201, -1.4531521
  %v206 = vadd.f32 %v202, -1.4531521
  %v207 = vadd.f32 %v203, -1.4531521
  %v208 = vmul.f32 %v204, %v196
  %v209 = vmul.f32 %v205, %v197
  %v210 = vmul.f32 %v206, %v198
  %v211 = vmul.f32 %v207, %v199
  %v212 = vadd.f32 %v208, 1.4214138
  %v213 = vadd.f32 %v209, 1.4214138
  %v214 = vadd.f32 %v210, 1.4214138
  %v215 = vadd.f32 %v211, 1.4214138
  %v216 = vmul.f32 %v212, %v196
  %v217 = vmul.f32 %v213, %v197
  %v218 = vmul.f32 %v214, %v198
  %v219 = vmul.f32 %v215, %v199
  %v220 = vadd.f32 %v216, -0.28449672
  %v221 = vadd.f32 %v217, -0.28449672
  %v222 = vadd.f32 %v218, -0.28449672
  %v223 = vadd.f32 %v219, -0.28449672
  %v224 = vmul.f32 %v220, %v196
  %v225 = vmul.f32 %v221, %v197
  %v226 = vmul.f32 %v222, %v198
  %v227 = vmul.f32 %v223, %v199
  %v228 = vadd.f32 %v224, 0.2548296
  %v229 = vadd.f32 %v225, 0.2548296
  %v230 = vadd.f32 %v226, 0.2548296
  %v231 = vadd.f32 %v227, 0.2548296
  %v232 = vmul.f32 %v228, %v196
  %v233 = vmul.f32 %v229, %v197
  %v234 = vmul.f32 %v230, %v198
  %v235 = vmul.f32 %v231, %v199
  %v236 = vsub.f32 0.0, %v184
  %v237 = vsub.f32 0.0, %v185
  %v238 = vsub.f32 0.0, %v186
  %v239 = vsub.f32 0.0, %v187
  %v240 = vmul.f32 %v236, %v184
  %v241 = vmul.f32 %v237, %v185
  %v242 = vmul.f32 %v238, %v186
  %v243 = vmul.f32 %v239, %v187
  %v244 = vmul.f32 %v240, 1.442695
  %v245 = vpow.pop %v244
  %v246 = vmul.f32 %v241, 1.442695
  %v247 = vpow.pop %v246
  %v248 = vmul.f32 %v242, 1.442695
  %v249 = vpow.pop %v248
  %v250 = vmul.f32 %v243, 1.442695
  %v251 = vpow.pop %v250
  %v252 = vmul.f32 %v232, %v245
  %v253 = vmul.f32 %v233, %v247
  %v254 = vmul.f32 %v234, %v249
  %v255 = vmul.f32 %v235, %v251
  %v256 = vsub.f32 1.0, %v252
  %v257 = vsub.f32 1.0, %v253
  %v258 = vsub.f32 1.0, %v254
  %v259 = vsub.f32 1.0, %v255
  %v260 = vmul.f32 %v180, %v256
  %v261 = vmul.f32 %v181, %v257
  %v262 = vmul.f32 %v182, %v258
  %v263 = vmul.f32 %v183, %v259
  %v264 = vadd.f32 %v260, 1.0
  %v265 = vadd.f32 %v261, 1.0
  %v266 = vadd.f32 %v262, 1.0
  %v267 = vadd.f32 %v263, 1.0
  %v268 = vmul.f32 %v264, 0.5
  %v269 = vmul.f32 %v265, 0.5
  %v270 = vmul.f32 %v266, 0.5
  %v271 = vmul.f32 %v267, 0.5
  %v272 = vsub.f32 %v160, %v268
  %v273 = vsub.f32 %v161, %v269
  %v274 = vsub.f32 %v162, %v270
  %v275 = vsub.f32 %v163, %v271
  %276 = vst [vmem:[%s3] sm:$0xff] %v44
  %277 = vst [vmem:[%s3 + $0x8] sm:$0xff] %v45
  %278 = vst [vmem:[%s3 + $0x10] sm:$0xff] %v46
  %279 = vst [vmem:[%s3 + $0x18] sm:$0xff] %v47
  %v280 = vmax.f32 %v272, 1e-09
  %v281 = vmax.f32 %v273, 1e-09
  %v282 = vmax.f32 %v274, 1e-09
  %v283 = vmax.f32 %v275, 1e-09
  %284 = vst [vmem:[%s4] sm:$0xff] %v280
  %285 = vst [vmem:[%s4 + $0x8] sm:$0xff] %v281
  %286 = vst [vmem:[%s4 + $0x10] sm:$0xff] %v282
  %287 = vst [vmem:[%s4 + $0x18] sm:$0xff] %v283
  // Predicated region
  $region14: #{compressor_forward.17} parent=0 // pred_check
    _
  $region15: #{compressor_forward.17} parent=0 // pred_check_branch
    %289 = sbr.rel (0) target = $region17
  $region16: #{compressor_forward.17} parent=0 // pred_region
    _
  $region17: #{compressor_forward.17} parent=0 // pred_fallthru
    _
  // Predicated region
  $region18: #{compressor_forward.17} parent=0 // pred_check
    _
  $region19: #{compressor_forward.17} parent=0 // pred_check_branch
    %291 = sbr.rel (0) target = $region21
  $region20: #{compressor_forward.17} parent=0 // pred_region
    _
  $region21: #{compressor_forward.17} parent=0 // pred_fallthru
    _
  // Predicated region
  $region22: #{compressor_forward.17} parent=0 // pred_check
    _
  $region23: #{compressor_forward.17} parent=0 // pred_check_branch
    %293 = sbr.rel (0) target = $region25
  $region24: #{compressor_forward.17} parent=0 // pred_region
    _
  $region25: #{compressor_forward.17} parent=0 // pred_fallthru
    _
  // Predicated region
  $region26: #{compressor_forward.17} parent=0 // pred_check
    _
  $region27: #{compressor_forward.17} parent=0 // pred_check_branch
    %295 = sbr.rel (0) target = $region29
  $region28: #{compressor_forward.17} parent=0 // pred_region
    _
  $region29: #{compressor_forward.17} parent=0 // pred_fallthru
    _

// kernel: compressor_forward.18
$region0: #{compressor_forward.18}
  #allocation0 [shape = 'u32[]', space=smem, size = 0x4, offset = 0x4, fixed_abs, tag = 'smem constant byte address 0x4 - core index']
  #allocation1 [shape = 'u32[144,128]{1,0:T(1,128)}', space=vmem, size = 0x12000, scoped, tag = 'internal scratch']
  %s0 = inlined_call_operand.vmem [shape: bf16[32,512], index: 0, kind: input, shape index: {}]
  %s1 = inlined_call_operand.vmem [shape: bf16[512,512], index: 1, kind: input, shape index: {}]
  %s2 = inlined_call_operand.vmem [shape: f32[1,512], index: 2, kind: input, shape index: {}]
  %s3 = inlined_call_operand.vmem [shape: f32[32,512], index: 3, kind: output, shape index: {}]
  %s4 = sld [smem:[#allocation0]]
  $region22: #{compressor_forward.18} parent=0
    _
  %s6 = ssub.s32 1, %s4
  %s7 = scalar_select 0, %s6, %s4
  // Predicated region
  $region2: #{compressor_forward.18} parent=0 // pred_check
    _
  $region3: #{compressor_forward.18} parent=0 // pred_check_branch
    %9 = sbr.rel (0) target = $region5
  $region4: #{compressor_forward.18} parent=0 // pred_region
    _
  $region5: #{compressor_forward.18} parent=0 // pred_fallthru
    _
  // Predicated region
  $region6: #{compressor_forward.18} parent=0 // pred_check
    _
  $region7: #{compressor_forward.18} parent=0 // pred_check_branch
    %11 = sbr.rel (0) target = $region9
  $region8: #{compressor_forward.18} parent=0 // pred_region
    _
  $region9: #{compressor_forward.18} parent=0 // pred_fallthru
    _
  // Predicated region
  $region10: #{compressor_forward.18} parent=0 // pred_check
    _
  $region11: #{compressor_forward.18} parent=0 // pred_check_branch
    %13 = sbr.rel (0) target = $region13
  $region12: #{compressor_forward.18} parent=0 // pred_region
    _
  $region13: #{compressor_forward.18} parent=0 // pred_fallthru
    _
  %v14 = vld [vmem:[%s0] sm:$0xff]
  %v15 = vld [vmem:[%s0 + $0x8] sm:$0xff]
  %v16 = vld [vmem:[%s0 + $0x10] sm:$0xff]
  %v17 = vld [vmem:[%s0 + $0x18] sm:$0xff]
  %v18 = vld [vmem:[%s0 + $0x20] sm:$0xff]
  %v19 = vld [vmem:[%s0 + $0x28] sm:$0xff]
  %v20 = vld [vmem:[%s0 + $0x30] sm:$0xff]
  %v21 = vld [vmem:[%s0 + $0x38] sm:$0xff]
  %v22 = vld [vmem:[%s1] sm:$0xff]
  %v23 = vld [vmem:[%s1 + $0x8] sm:$0xff]
  %v24 = vld [vmem:[%s1 + $0x10] sm:$0xff]
  %v25 = vld [vmem:[%s1 + $0x18] sm:$0xff]
  %v26 = vld [vmem:[%s1 + $0x20] sm:$0xff]
  %v27 = vld [vmem:[%s1 + $0x28] sm:$0xff]
  %v28 = vld [vmem:[%s1 + $0x30] sm:$0xff]
  %v29 = vld [vmem:[%s1 + $0x38] sm:$0xff]
  %v30 = vld [vmem:[%s1 + $0x40] sm:$0xff]
  %v31 = vld [vmem:[%s1 + $0x48] sm:$0xff]
  %v32 = vld [vmem:[%s1 + $0x50] sm:$0xff]
  %v33 = vld [vmem:[%s1 + $0x58] sm:$0xff]
  %v34 = vld [vmem:[%s1 + $0x60] sm:$0xff]
  %v35 = vld [vmem:[%s1 + $0x68] sm:$0xff]
  %v36 = vld [vmem:[%s1 + $0x70] sm:$0xff]
  %v37 = vld [vmem:[%s1 + $0x78] sm:$0xff]
  %v38 = vld [vmem:[%s1 + $0x80] sm:$0xff]
  %v39 = vld [vmem:[%s1 + $0x88] sm:$0xff]
  %v40 = vld [vmem:[%s1 + $0x90] sm:$0xff]
  %v41 = vld [vmem:[%s1 + $0x98] sm:$0xff]
  %v42 = vld [vmem:[%s1 + $0xa0] sm:$0xff]
  %v43 = vld [vmem:[%s1 + $0xa8] sm:$0xff]
  %v44 = vld [vmem:[%s1 + $0xb0] sm:$0xff]
  %v45 = vld [vmem:[%s1 + $0xb8] sm:$0xff]
  %v46 = vld [vmem:[%s1 + $0xc0] sm:$0xff]
  %v47 = vld [vmem:[%s1 + $0xc8] sm:$0xff]
  %v48 = vld [vmem:[%s1 + $0xd0] sm:$0xff]
  %v49 = vld [vmem:[%s1 + $0xd8] sm:$0xff]
  %v50 = vld [vmem:[%s1 + $0xe0] sm:$0xff]
  %v51 = vld [vmem:[%s1 + $0xe8] sm:$0xff]
  %v52 = vld [vmem:[%s1 + $0xf0] sm:$0xff]
  %v53 = vld [vmem:[%s1 + $0xf8] sm:$0xff]
  %v54 = vld [vmem:[%s1 + $0x100] sm:$0xff]
  %v55 = vld [vmem:[%s1 + $0x108] sm:$0xff]
  %v56 = vld [vmem:[%s1 + $0x110] sm:$0xff]
  %v57 = vld [vmem:[%s1 + $0x118] sm:$0xff]
  %v58 = vld [vmem:[%s1 + $0x120] sm:$0xff]
  %v59 = vld [vmem:[%s1 + $0x128] sm:$0xff]
  %v60 = vld [vmem:[%s1 + $0x130] sm:$0xff]
  %v61 = vld [vmem:[%s1 + $0x138] sm:$0xff]
  %v62 = vld [vmem:[%s1 + $0x140] sm:$0xff]
  %v63 = vld [vmem:[%s1 + $0x148] sm:$0xff]
  %v64 = vld [vmem:[%s1 + $0x150] sm:$0xff]
  %v65 = vld [vmem:[%s1 + $0x158] sm:$0xff]
  %v66 = vld [vmem:[%s1 + $0x160] sm:$0xff]
  %v67 = vld [vmem:[%s1 + $0x168] sm:$0xff]
  %v68 = vld [vmem:[%s1 + $0x170] sm:$0xff]
  %v69 = vld [vmem:[%s1 + $0x178] sm:$0xff]
  %v70 = vld [vmem:[%s1 + $0x180] sm:$0xff]
  %v71 = vld [vmem:[%s1 + $0x188] sm:$0xff]
  %v72 = vld [vmem:[%s1 + $0x190] sm:$0xff]
  %v73 = vld [vmem:[%s1 + $0x198] sm:$0xff]
  %v74 = vld [vmem:[%s1 + $0x1a0] sm:$0xff]
  %v75 = vld [vmem:[%s1 + $0x1a8] sm:$0xff]
  %v76 = vld [vmem:[%s1 + $0x1b0] sm:$0xff]
  %v77 = vld [vmem:[%s1 + $0x1b8] sm:$0xff]
  %v78 = vld [vmem:[%s1 + $0x1c0] sm:$0xff]
  %v79 = vld [vmem:[%s1 + $0x1c8] sm:$0xff]
  %v80 = vld [vmem:[%s1 + $0x1d0] sm:$0xff]
  %v81 = vld [vmem:[%s1 + $0x1d8] sm:$0xff]
  %v82 = vld [vmem:[%s1 + $0x1e0] sm:$0xff]
  %v83 = vld [vmem:[%s1 + $0x1e8] sm:$0xff]
  %v84 = vld [vmem:[%s1 + $0x1f0] sm:$0xff]
  %v85 = vld [vmem:[%s1 + $0x1f8] sm:$0xff]
  %v86 = vld [vmem:[%s1 + $0x200] sm:$0xff]
  %v87 = vld [vmem:[%s1 + $0x208] sm:$0xff]
  %v88 = vld [vmem:[%s1 + $0x210] sm:$0xff]
  %v89 = vld [vmem:[%s1 + $0x218] sm:$0xff]
  %v90 = vld [vmem:[%s1 + $0x220] sm:$0xff]
  %v91 = vld [vmem:[%s1 + $0x228] sm:$0xff]
  %v92 = vld [vmem:[%s1 + $0x230] sm:$0xff]
  %v93 = vld [vmem:[%s1 + $0x238] sm:$0xff]
  %v94 = vld [vmem:[%s1 + $0x240] sm:$0xff]
  %v95 = vld [vmem:[%s1 + $0x248] sm:$0xff]
  %v96 = vld [vmem:[%s1 + $0x250] sm:$0xff]
  %v97 = vld [vmem:[%s1 + $0x258] sm:$0xff]
  %v98 = vld [vmem:[%s1 + $0x260] sm:$0xff]
  %v99 = vld [vmem:[%s1 + $0x268] sm:$0xff]
  %v100 = vld [vmem:[%s1 + $0x270] sm:$0xff]
  %v101 = vld [vmem:[%s1 + $0x278] sm:$0xff]
  %v102 = vld [vmem:[%s1 + $0x280] sm:$0xff]
  %v103 = vld [vmem:[%s1 + $0x288] sm:$0xff]
  %v104 = vld [vmem:[%s1 + $0x290] sm:$0xff]
  %v105 = vld [vmem:[%s1 + $0x298] sm:$0xff]
  %v106 = vld [vmem:[%s1 + $0x2a0] sm:$0xff]
  %v107 = vld [vmem:[%s1 + $0x2a8] sm:$0xff]
  %v108 = vld [vmem:[%s1 + $0x2b0] sm:$0xff]
  %v109 = vld [vmem:[%s1 + $0x2b8] sm:$0xff]
  %v110 = vld [vmem:[%s1 + $0x2c0] sm:$0xff]
  %v111 = vld [vmem:[%s1 + $0x2c8] sm:$0xff]
  %v112 = vld [vmem:[%s1 + $0x2d0] sm:$0xff]
  %v113 = vld [vmem:[%s1 + $0x2d8] sm:$0xff]
  %v114 = vld [vmem:[%s1 + $0x2e0] sm:$0xff]
  %v115 = vld [vmem:[%s1 + $0x2e8] sm:$0xff]
  %v116 = vld [vmem:[%s1 + $0x2f0] sm:$0xff]
  %v117 = vld [vmem:[%s1 + $0x2f8] sm:$0xff]
  %v118 = vld [vmem:[%s1 + $0x300] sm:$0xff]
  %v119 = vld [vmem:[%s1 + $0x308] sm:$0xff]
  %v120 = vld [vmem:[%s1 + $0x310] sm:$0xff]
  %v121 = vld [vmem:[%s1 + $0x318] sm:$0xff]
  %v122 = vld [vmem:[%s1 + $0x320] sm:$0xff]
  %v123 = vld [vmem:[%s1 + $0x328] sm:$0xff]
  %v124 = vld [vmem:[%s1 + $0x330] sm:$0xff]
  %v125 = vld [vmem:[%s1 + $0x338] sm:$0xff]
  %v126 = vld [vmem:[%s1 + $0x340] sm:$0xff]
  %v127 = vld [vmem:[%s1 + $0x348] sm:$0xff]
  %v128 = vld [vmem:[%s1 + $0x350] sm:$0xff]
  %v129 = vld [vmem:[%s1 + $0x358] sm:$0xff]
  %v130 = vld [vmem:[%s1 + $0x360] sm:$0xff]
  %v131 = vld [vmem:[%s1 + $0x368] sm:$0xff]
  %v132 = vld [vmem:[%s1 + $0x370] sm:$0xff]
  %v133 = vld [vmem:[%s1 + $0x378] sm:$0xff]
  %v134 = vld [vmem:[%s1 + $0x380] sm:$0xff]
  %v135 = vld [vmem:[%s1 + $0x388] sm:$0xff]
  %v136 = vld [vmem:[%s1 + $0x390] sm:$0xff]
  %v137 = vld [vmem:[%s1 + $0x398] sm:$0xff]
  %v138 = vld [vmem:[%s1 + $0x3a0] sm:$0xff]
  %v139 = vld [vmem:[%s1 + $0x3a8] sm:$0xff]
  %v140 = vld [vmem:[%s1 + $0x3b0] sm:$0xff]
  %v141 = vld [vmem:[%s1 + $0x3b8] sm:$0xff]
  %v142 = vld [vmem:[%s1 + $0x3c0] sm:$0xff]
  %v143 = vld [vmem:[%s1 + $0x3c8] sm:$0xff]
  %v144 = vld [vmem:[%s1 + $0x3d0] sm:$0xff]
  %v145 = vld [vmem:[%s1 + $0x3d8] sm:$0xff]
  %v146 = vld [vmem:[%s1 + $0x3e0] sm:$0xff]
  %v147 = vld [vmem:[%s1 + $0x3e8] sm:$0xff]
  %v148 = vld [vmem:[%s1 + $0x3f0] sm:$0xff]
  %v149 = vld [vmem:[%s1 + $0x3f8] sm:$0xff]
  %v150 = vld [vmem:[%s2] sm:$0xf]
  %v152 = vlaneseq
  %v153 = vshrl.u32 %v152, 7
  %v154 = vsub.s32 0, %v153
  %v155 = vrot.slane %v150, %v154
  %v156 = vlaneseq
  %v157 = vshrl.u32 %v156, 7
  %v158 = vsub.s32 1, %v157
  %v159 = vrot.slane %v150, %v158
  %v160 = vlaneseq
  %v161 = vshrl.u32 %v160, 7
  %v162 = vsub.s32 2, %v161
  %v163 = vrot.slane %v150, %v162
  %v164 = vlaneseq
  %v165 = vshrl.u32 %v164, 7
  %v166 = vsub.s32 3, %v165
  %v167 = vrot.slane %v150, %v166
  %v180 = vunpack.c.l.b16 %v14
  %v181 = vunpack.c.h.b16 %v14
  %v182 = vunpack.c.l.b16 %v15
  %v183 = vunpack.c.h.b16 %v15
  %v184 = vunpack.c.l.b16 %v16
  %v185 = vunpack.c.h.b16 %v16
  %v186 = vunpack.c.l.b16 %v17
  %v187 = vunpack.c.h.b16 %v17
  %v188 = vunpack.c.l.b16 %v18
  %v189 = vunpack.c.h.b16 %v18
  %v190 = vunpack.c.l.b16 %v19
  %v191 = vunpack.c.h.b16 %v19
  %v192 = vunpack.c.l.b16 %v20
  %v193 = vunpack.c.h.b16 %v20
  %v194 = vunpack.c.l.b16 %v21
  %v195 = vunpack.c.h.b16 %v21
  %v196 = vpack.c.b16 %v184, %v180
  %v197 = vpack.c.b16 %v185, %v181
  %v198 = vpack.c.b16 %v186, %v182
  %v199 = vpack.c.b16 %v187, %v183
  %v200 = vpack.c.b16 %v192, %v188
  %v201 = vpack.c.b16 %v193, %v189
  %v202 = vpack.c.b16 %v194, %v190
  %v203 = vpack.c.b16 %v195, %v191
  %v340 = vunpack.c.l.b16 %v22
  %v341 = vunpack.c.h.b16 %v22
  %v342 = vunpack.c.l.b16 %v23
  %v343 = vunpack.c.h.b16 %v23
  %v344 = vunpack.c.l.b16 %v24
  %v345 = vunpack.c.h.b16 %v24
  %v346 = vunpack.c.l.b16 %v25
  %v347 = vunpack.c.h.b16 %v25
  %v348 = vunpack.c.l.b16 %v26
  %v349 = vunpack.c.h.b16 %v26
  %v350 = vunpack.c.l.b16 %v27
  %v351 = vunpack.c.h.b16 %v27
  %v352 = vunpack.c.l.b16 %v28
  %v353 = vunpack.c.h.b16 %v28
  %v354 = vunpack.c.l.b16 %v29
  %v355 = vunpack.c.h.b16 %v29
  %v356 = vunpack.c.l.b16 %v30
  %v357 = vunpack.c.h.b16 %v30
  %v358 = vunpack.c.l.b16 %v31
  %v359 = vunpack.c.h.b16 %v31
  %v360 = vunpack.c.l.b16 %v32
  %v361 = vunpack.c.h.b16 %v32
  %v362 = vunpack.c.l.b16 %v33
  %v363 = vunpack.c.h.b16 %v33
  %v364 = vunpack.c.l.b16 %v34
  %v365 = vunpack.c.h.b16 %v34
  %v366 = vunpack.c.l.b16 %v35
  %v367 = vunpack.c.h.b16 %v35
  %v368 = vunpack.c.l.b16 %v36
  %v369 = vunpack.c.h.b16 %v36
  %v370 = vunpack.c.l.b16 %v37
  %v371 = vunpack.c.h.b16 %v37
  %v372 = vunpack.c.l.b16 %v38
  %v373 = vunpack.c.h.b16 %v38
  %v374 = vunpack.c.l.b16 %v39
  %v375 = vunpack.c.h.b16 %v39
  %v376 = vunpack.c.l.b16 %v40
  %v377 = vunpack.c.h.b16 %v40
  %v378 = vunpack.c.l.b16 %v41
  %v379 = vunpack.c.h.b16 %v41
  %v380 = vunpack.c.l.b16 %v42
  %v381 = vunpack.c.h.b16 %v42
  %v382 = vunpack.c.l.b16 %v43
  %v383 = vunpack.c.h.b16 %v43
  %v384 = vunpack.c.l.b16 %v44
  %v385 = vunpack.c.h.b16 %v44
  %v386 = vunpack.c.l.b16 %v45
  %v387 = vunpack.c.h.b16 %v45
  %v388 = vunpack.c.l.b16 %v46
  %v389 = vunpack.c.h.b16 %v46
  %v390 = vunpack.c.l.b16 %v47
  %v391 = vunpack.c.h.b16 %v47
  %v392 = vunpack.c.l.b16 %v48
  %v393 = vunpack.c.h.b16 %v48
  %v394 = vunpack.c.l.b16 %v49
  %v395 = vunpack.c.h.b16 %v49
  %v396 = vunpack.c.l.b16 %v50
  %v397 = vunpack.c.h.b16 %v50
  %v398 = vunpack.c.l.b16 %v51
  %v399 = vunpack.c.h.b16 %v51
  %v400 = vunpack.c.l.b16 %v52
  %v401 = vunpack.c.h.b16 %v52
  %v402 = vunpack.c.l.b16 %v53
  %v403 = vunpack.c.h.b16 %v53
  %v404 = vunpack.c.l.b16 %v54
  %v405 = vunpack.c.h.b16 %v54
  %v406 = vunpack.c.l.b16 %v55
  %v407 = vunpack.c.h.b16 %v55
  %v408 = vunpack.c.l.b16 %v56
  %v409 = vunpack.c.h.b16 %v56
  %v410 = vunpack.c.l.b16 %v57
  %v411 = vunpack.c.h.b16 %v57
  %v412 = vunpack.c.l.b16 %v58
  %v413 = vunpack.c.h.b16 %v58
  %v414 = vunpack.c.l.b16 %v59
  %v415 = vunpack.c.h.b16 %v59
  %v416 = vunpack.c.l.b16 %v60
  %v417 = vunpack.c.h.b16 %v60
  %v418 = vunpack.c.l.b16 %v61
  %v419 = vunpack.c.h.b16 %v61
  %v420 = vunpack.c.l.b16 %v62
  %v421 = vunpack.c.h.b16 %v62
  %v422 = vunpack.c.l.b16 %v63
  %v423 = vunpack.c.h.b16 %v63
  %v424 = vunpack.c.l.b16 %v64
  %v425 = vunpack.c.h.b16 %v64
  %v426 = vunpack.c.l.b16 %v65
  %v427 = vunpack.c.h.b16 %v65
  %v428 = vunpack.c.l.b16 %v66
  %v429 = vunpack.c.h.b16 %v66
  %v430 = vunpack.c.l.b16 %v67
  %v431 = vunpack.c.h.b16 %v67
  %v432 = vunpack.c.l.b16 %v68
  %v433 = vunpack.c.h.b16 %v68
  %v434 = vunpack.c.l.b16 %v69
  %v435 = vunpack.c.h.b16 %v69
  %v436 = vunpack.c.l.b16 %v70
  %v437 = vunpack.c.h.b16 %v70
  %v438 = vunpack.c.l.b16 %v71
  %v439 = vunpack.c.h.b16 %v71
  %v440 = vunpack.c.l.b16 %v72
  %v441 = vunpack.c.h.b16 %v72
  %v442 = vunpack.c.l.b16 %v73
  %v443 = vunpack.c.h.b16 %v73
  %v444 = vunpack.c.l.b16 %v74
  %v445 = vunpack.c.h.b16 %v74
  %v446 = vunpack.c.l.b16 %v75
  %v447 = vunpack.c.h.b16 %v75
  %v448 = vunpack.c.l.b16 %v76
  %v449 = vunpack.c.h.b16 %v76
  %v450 = vunpack.c.l.b16 %v77
  %v451 = vunpack.c.h.b16 %v77
  %v452 = vunpack.c.l.b16 %v78
  %v453 = vunpack.c.h.b16 %v78
  %v454 = vunpack.c.l.b16 %v79
  %v455 = vunpack.c.h.b16 %v79
  %v456 = vunpack.c.l.b16 %v80
  %v457 = vunpack.c.h.b16 %v80
  %v458 = vunpack.c.l.b16 %v81
  %v459 = vunpack.c.h.b16 %v81
  %v460 = vunpack.c.l.b16 %v82
  %v461 = vunpack.c.h.b16 %v82
  %v462 = vunpack.c.l.b16 %v83
  %v463 = vunpack.c.h.b16 %v83
  %v464 = vunpack.c.l.b16 %v84
  %v465 = vunpack.c.h.b16 %v84
  %v466 = vunpack.c.l.b16 %v85
  %v467 = vunpack.c.h.b16 %v85
  %v468 = vunpack.c.l.b16 %v86
  %v469 = vunpack.c.h.b16 %v86
  %v470 = vunpack.c.l.b16 %v87
  %v471 = vunpack.c.h.b16 %v87
  %v472 = vunpack.c.l.b16 %v88
  %v473 = vunpack.c.h.b16 %v88
  %v474 = vunpack.c.l.b16 %v89
  %v475 = vunpack.c.h.b16 %v89
  %v476 = vunpack.c.l.b16 %v90
  %v477 = vunpack.c.h.b16 %v90
  %v478 = vunpack.c.l.b16 %v91
  %v479 = vunpack.c.h.b16 %v91
  %v480 = vunpack.c.l.b16 %v92
  %v481 = vunpack.c.h.b16 %v92
  %v482 = vunpack.c.l.b16 %v93
  %v483 = vunpack.c.h.b16 %v93
  %v484 = vunpack.c.l.b16 %v94
  %v485 = vunpack.c.h.b16 %v94
  %v486 = vunpack.c.l.b16 %v95
  %v487 = vunpack.c.h.b16 %v95
  %v488 = vunpack.c.l.b16 %v96
  %v489 = vunpack.c.h.b16 %v96
  %v490 = vunpack.c.l.b16 %v97
  %v491 = vunpack.c.h.b16 %v97
  %v492 = vunpack.c.l.b16 %v98
  %v493 = vunpack.c.h.b16 %v98
  %v494 = vunpack.c.l.b16 %v99
  %v495 = vunpack.c.h.b16 %v99
  %v496 = vunpack.c.l.b16 %v100
  %v497 = vunpack.c.h.b16 %v100
  %v498 = vunpack.c.l.b16 %v101
  %v499 = vunpack.c.h.b16 %v101
  %v500 = vunpack.c.l.b16 %v102
  %v501 = vunpack.c.h.b16 %v102
  %v502 = vunpack.c.l.b16 %v103
  %v503 = vunpack.c.h.b16 %v103
  %v504 = vunpack.c.l.b16 %v104
  %v505 = vunpack.c.h.b16 %v104
  %v506 = vunpack.c.l.b16 %v105
  %v507 = vunpack.c.h.b16 %v105
  %v508 = vunpack.c.l.b16 %v106
  %v509 = vunpack.c.h.b16 %v106
  %v510 = vunpack.c.l.b16 %v107
  %v511 = vunpack.c.h.b16 %v107
  %v512 = vunpack.c.l.b16 %v108
  %v513 = vunpack.c.h.b16 %v108
  %v514 = vunpack.c.l.b16 %v109
  %v515 = vunpack.c.h.b16 %v109
  %v516 = vunpack.c.l.b16 %v110
  %v517 = vunpack.c.h.b16 %v110
  %v518 = vunpack.c.l.b16 %v111
  %v519 = vunpack.c.h.b16 %v111
  %v520 = vunpack.c.l.b16 %v112
  %v521 = vunpack.c.h.b16 %v112
  %v522 = vunpack.c.l.b16 %v113
  %v523 = vunpack.c.h.b16 %v113
  %v524 = vunpack.c.l.b16 %v114
  %v525 = vunpack.c.h.b16 %v114
  %v526 = vunpack.c.l.b16 %v115
  %v527 = vunpack.c.h.b16 %v115
  %v528 = vunpack.c.l.b16 %v116
  %v529 = vunpack.c.h.b16 %v116
  %v530 = vunpack.c.l.b16 %v117
  %v531 = vunpack.c.h.b16 %v117
  %v532 = vunpack.c.l.b16 %v118
  %v533 = vunpack.c.h.b16 %v118
  %v534 = vunpack.c.l.b16 %v119
  %v535 = vunpack.c.h.b16 %v119
  %v536 = vunpack.c.l.b16 %v120
  %v537 = vunpack.c.h.b16 %v120
  %v538 = vunpack.c.l.b16 %v121
  %v539 = vunpack.c.h.b16 %v121
  %v540 = vunpack.c.l.b16 %v122
  %v541 = vunpack.c.h.b16 %v122
  %v542 = vunpack.c.l.b16 %v123
  %v543 = vunpack.c.h.b16 %v123
  %v544 = vunpack.c.l.b16 %v124
  %v545 = vunpack.c.h.b16 %v124
  %v546 = vunpack.c.l.b16 %v125
  %v547 = vunpack.c.h.b16 %v125
  %v548 = vunpack.c.l.b16 %v126
  %v549 = vunpack.c.h.b16 %v126
  %v550 = vunpack.c.l.b16 %v127
  %v551 = vunpack.c.h.b16 %v127
  %v552 = vunpack.c.l.b16 %v128
  %v553 = vunpack.c.h.b16 %v128
  %v554 = vunpack.c.l.b16 %v129
  %v555 = vunpack.c.h.b16 %v129
  %v556 = vunpack.c.l.b16 %v130
  %v557 = vunpack.c.h.b16 %v130
  %v558 = vunpack.c.l.b16 %v131
  %v559 = vunpack.c.h.b16 %v131
  %v560 = vunpack.c.l.b16 %v132
  %v561 = vunpack.c.h.b16 %v132
  %v562 = vunpack.c.l.b16 %v133
  %v563 = vunpack.c.h.b16 %v133
  %v564 = vunpack.c.l.b16 %v134
  %v565 = vunpack.c.h.b16 %v134
  %v566 = vunpack.c.l.b16 %v135
  %v567 = vunpack.c.h.b16 %v135
  %v568 = vunpack.c.l.b16 %v136
  %v569 = vunpack.c.h.b16 %v136
  %v570 = vunpack.c.l.b16 %v137
  %v571 = vunpack.c.h.b16 %v137
  %v572 = vunpack.c.l.b16 %v138
  %v573 = vunpack.c.h.b16 %v138
  %v574 = vunpack.c.l.b16 %v139
  %v575 = vunpack.c.h.b16 %v139
  %v576 = vunpack.c.l.b16 %v140
  %v577 = vunpack.c.h.b16 %v140
  %v578 = vunpack.c.l.b16 %v141
  %v579 = vunpack.c.h.b16 %v141
  %v580 = vunpack.c.l.b16 %v142
  %v581 = vunpack.c.h.b16 %v142
  %v582 = vunpack.c.l.b16 %v143
  %v583 = vunpack.c.h.b16 %v143
  %v584 = vunpack.c.l.b16 %v144
  %v585 = vunpack.c.h.b16 %v144
  %v586 = vunpack.c.l.b16 %v145
  %v587 = vunpack.c.h.b16 %v145
  %v588 = vunpack.c.l.b16 %v146
  %v589 = vunpack.c.h.b16 %v146
  %v590 = vunpack.c.l.b16 %v147
  %v591 = vunpack.c.h.b16 %v147
  %v592 = vunpack.c.l.b16 %v148
  %v593 = vunpack.c.h.b16 %v148
  %v594 = vunpack.c.l.b16 %v149
  %v595 = vunpack.c.h.b16 %v149
  %v596 = vpack.c.b16 %v344, %v340
  %v597 = vpack.c.b16 %v345, %v341
  %v598 = vpack.c.b16 %v346, %v342
  %v599 = vpack.c.b16 %v347, %v343
  %v600 = vpack.c.b16 %v352, %v348
  %v601 = vpack.c.b16 %v353, %v349
  %v602 = vpack.c.b16 %v354, %v350
  %v603 = vpack.c.b16 %v355, %v351
  %v604 = vpack.c.b16 %v360, %v356
  %v605 = vpack.c.b16 %v361, %v357
  %v606 = vpack.c.b16 %v362, %v358
  %v607 = vpack.c.b16 %v363, %v359
  %v608 = vpack.c.b16 %v368, %v364
  %v609 = vpack.c.b16 %v369, %v365
  %v610 = vpack.c.b16 %v370, %v366
  %v611 = vpack.c.b16 %v371, %v367
  %v612 = vpack.c.b16 %v376, %v372
  %v613 = vpack.c.b16 %v377, %v373
  %v614 = vpack.c.b16 %v378, %v374
  %v615 = vpack.c.b16 %v379, %v375
  %v616 = vpack.c.b16 %v384, %v380
  %v617 = vpack.c.b16 %v385, %v381
  %v618 = vpack.c.b16 %v386, %v382
  %v619 = vpack.c.b16 %v387, %v383
  %v620 = vpack.c.b16 %v392, %v388
  %v621 = vpack.c.b16 %v393, %v389
  %v622 = vpack.c.b16 %v394, %v390
  %v623 = vpack.c.b16 %v395, %v391
  %v624 = vpack.c.b16 %v400, %v396
  %v625 = vpack.c.b16 %v401, %v397
  %v626 = vpack.c.b16 %v402, %v398
  %v627 = vpack.c.b16 %v403, %v399
  %v628 = vpack.c.b16 %v408, %v404
  %v629 = vpack.c.b16 %v409, %v405
  %v630 = vpack.c.b16 %v410, %v406
  %v631 = vpack.c.b16 %v411, %v407
  %v632 = vpack.c.b16 %v416, %v412
  %v633 = vpack.c.b16 %v417, %v413
  %v634 = vpack.c.b16 %v418, %v414
  %v635 = vpack.c.b16 %v419, %v415
  %v636 = vpack.c.b16 %v424, %v420
  %v637 = vpack.c.b16 %v425, %v421
  %v638 = vpack.c.b16 %v426, %v422
  %v639 = vpack.c.b16 %v427, %v423
  %v640 = vpack.c.b16 %v432, %v428
  %v641 = vpack.c.b16 %v433, %v429
  %v642 = vpack.c.b16 %v434, %v430
  %v643 = vpack.c.b16 %v435, %v431
  %v644 = vpack.c.b16 %v440, %v436
  %v645 = vpack.c.b16 %v441, %v437
  %v646 = vpack.c.b16 %v442, %v438
  %v647 = vpack.c.b16 %v443, %v439
  %v648 = vpack.c.b16 %v448, %v444
  %v649 = vpack.c.b16 %v449, %v445
  %v650 = vpack.c.b16 %v450, %v446
  %v651 = vpack.c.b16 %v451, %v447
  %v652 = vpack.c.b16 %v456, %v452
  %v653 = vpack.c.b16 %v457, %v453
  %v654 = vpack.c.b16 %v458, %v454
  %v655 = vpack.c.b16 %v459, %v455
  %v656 = vpack.c.b16 %v464, %v460
  %v657 = vpack.c.b16 %v465, %v461
  %v658 = vpack.c.b16 %v466, %v462
  %v659 = vpack.c.b16 %v467, %v463
  %v660 = vpack.c.b16 %v472, %v468
  %v661 = vpack.c.b16 %v473, %v469
  %v662 = vpack.c.b16 %v474, %v470
  %v663 = vpack.c.b16 %v475, %v471
  %v664 = vpack.c.b16 %v480, %v476
  %v665 = vpack.c.b16 %v481, %v477
  %v666 = vpack.c.b16 %v482, %v478
  %v667 = vpack.c.b16 %v483, %v479
  %v668 = vpack.c.b16 %v488, %v484
  %v669 = vpack.c.b16 %v489, %v485
  %v670 = vpack.c.b16 %v490, %v486
  %v671 = vpack.c.b16 %v491, %v487
  %v672 = vpack.c.b16 %v496, %v492
  %v673 = vpack.c.b16 %v497, %v493
  %v674 = vpack.c.b16 %v498, %v494
  %v675 = vpack.c.b16 %v499, %v495
  %v676 = vpack.c.b16 %v504, %v500
  %v677 = vpack.c.b16 %v505, %v501
  %v678 = vpack.c.b16 %v506, %v502
  %v679 = vpack.c.b16 %v507, %v503
  %v680 = vpack.c.b16 %v512, %v508
  %v681 = vpack.c.b16 %v513, %v509
  %v682 = vpack.c.b16 %v514, %v510
  %v683 = vpack.c.b16 %v515, %v511
  %v684 = vpack.c.b16 %v520, %v516
  %v685 = vpack.c.b16 %v521, %v517
  %v686 = vpack.c.b16 %v522, %v518
  %v687 = vpack.c.b16 %v523, %v519
  %v688 = vpack.c.b16 %v528, %v524
  %v689 = vpack.c.b16 %v529, %v525
  %v690 = vpack.c.b16 %v530, %v526
  %v691 = vpack.c.b16 %v531, %v527
  %v692 = vpack.c.b16 %v536, %v532
  %v693 = vpack.c.b16 %v537, %v533
  %v694 = vpack.c.b16 %v538, %v534
  %v695 = vpack.c.b16 %v539, %v535
  %v696 = vpack.c.b16 %v544, %v540
  %v697 = vpack.c.b16 %v545, %v541
  %v698 = vpack.c.b16 %v546, %v542
  %v699 = vpack.c.b16 %v547, %v543
  %v700 = vpack.c.b16 %v552, %v548
  %v701 = vpack.c.b16 %v553, %v549
  %v702 = vpack.c.b16 %v554, %v550
  %v703 = vpack.c.b16 %v555, %v551
  %v704 = vpack.c.b16 %v560, %v556
  %v705 = vpack.c.b16 %v561, %v557
  %v706 = vpack.c.b16 %v562, %v558
  %v707 = vpack.c.b16 %v563, %v559
  %v708 = vpack.c.b16 %v568, %v564
  %v709 = vpack.c.b16 %v569, %v565
  %v710 = vpack.c.b16 %v570, %v566
  %v711 = vpack.c.b16 %v571, %v567
  %v712 = vpack.c.b16 %v576, %v572
  %v713 = vpack.c.b16 %v577, %v573
  %v714 = vpack.c.b16 %v578, %v574
  %v715 = vpack.c.b16 %v579, %v575
  %v716 = vpack.c.b16 %v584, %v580
  %v717 = vpack.c.b16 %v585, %v581
  %v718 = vpack.c.b16 %v586, %v582
  %v719 = vpack.c.b16 %v587, %v583
  %v720 = vpack.c.b16 %v592, %v588
  %v721 = vpack.c.b16 %v593, %v589
  %v722 = vpack.c.b16 %v594, %v590
  %v723 = vpack.c.b16 %v595, %v591
  %852 = vmatprep.subr.bf16.mxu0 %v625
  %853 = vmatpush1.bf16.msra.mxu0 %v624
  %854 = vmatprep.subr.bf16.mxu0 %v621
  %855 = vmatpush1.bf16.msra.mxu0 %v620
  %856 = vmatprep.subr.bf16.mxu0 %v617
  %857 = vmatpush1.bf16.msra.mxu0 %v616
  %858 = vmatprep.subr.bf16.mxu0 %v613
  %859 = vmatpush1.bf16.msra.mxu0 %v612
  %860 = vmatprep.subr.bf16.mxu0 %v609
  %861 = vmatpush1.bf16.msra.mxu0 %v608
  %862 = vmatprep.subr.bf16.mxu0 %v605
  %863 = vmatpush1.bf16.msra.mxu0 %v604
  %864 = vmatprep.subr.bf16.mxu0 %v601
  %865 = vmatpush1.bf16.msra.mxu0 %v600
  %866 = vmatprep.subr.bf16.mxu0 %v597
  %867 = vmatpush1.bf16.msra.mxu0 %v596
  %868 = vmatprep.subr.bf16.mxu0 %v657
  %869 = vmatpush2.bf16.msra.mxu0 %v656
  %870 = vmatprep.subr.bf16.mxu0 %v653
  %871 = vmatpush2.bf16.msra.mxu0 %v652
  %872 = vmatprep.subr.bf16.mxu0 %v649
  %873 = vmatpush2.bf16.msra.mxu0 %v648
  %874 = vmatprep.subr.bf16.mxu0 %v645
  %875 = vmatpush2.bf16.msra.mxu0 %v644
  %876 = vmatprep.subr.bf16.mxu0 %v641
  %877 = vmatpush2.bf16.msra.mxu0 %v640
  %878 = vmatprep.subr.bf16.mxu0 %v637
  %879 = vmatpush2.bf16.msra.mxu0 %v636
  %880 = vmatprep.subr.bf16.mxu0 %v633
  %881 = vmatpush2.bf16.msra.mxu0 %v632
  %882 = vmatprep.subr.bf16.mxu0 %v629
  %883 = vmatpush2.bf16.msra.mxu0 %v628
  %884 = vmatprep.mubr.bf16.mxu0 %v197
  %885 = vmatmul.mubr.bf16.gmra.mxu0 %v196
  %v886 = vpop.f32.mrf.mxu0
  %v887 = vadd.f32 %v155, %v886
  %v888 = vpop.f32.mrf.mxu0
  %v889 = vadd.f32 %v159, %v888
  %v890 = vpop.f32.mrf.mxu0
  %v891 = vadd.f32 %v155, %v890
  %v892 = vpop.f32.mrf.mxu0
  %v893 = vadd.f32 %v159, %v892
  %894 = vmatprep.mubr.bf16.mxu0 %v201
  %895 = vmatmul.mubr.bf16.gmra.mxu0 %v200
  %v896 = vpop.f32.mrf.mxu0
  %v897 = vadd.f32 %v155, %v896
  %v898 = vpop.f32.mrf.mxu0
  %v899 = vadd.f32 %v159, %v898
  %v900 = vpop.f32.mrf.mxu0
  %v901 = vadd.f32 %v155, %v900
  %v902 = vpop.f32.mrf.mxu0
  %v903 = vadd.f32 %v159, %v902
  %904 = vdwg.mxu0
  %905 = vmatprep.subr.bf16.mxu0 %v689
  %906 = vmatpush1.bf16.msra.mxu0 %v688
  %907 = vmatprep.subr.bf16.mxu0 %v685
  %908 = vmatpush1.bf16.msra.mxu0 %v684
  %909 = vmatprep.subr.bf16.mxu0 %v681
  %910 = vmatpush1.bf16.msra.mxu0 %v680
  %911 = vmatprep.subr.bf16.mxu0 %v677
  %912 = vmatpush1.bf16.msra.mxu0 %v676
  %913 = vmatprep.subr.bf16.mxu0 %v673
  %914 = vmatpush1.bf16.msra.mxu0 %v672
  %915 = vmatprep.subr.bf16.mxu0 %v669
  %916 = vmatpush1.bf16.msra.mxu0 %v668
  %917 = vmatprep.subr.bf16.mxu0 %v665
  %918 = vmatpush1.bf16.msra.mxu0 %v664
  %919 = vmatprep.subr.bf16.mxu0 %v661
  %920 = vmatpush1.bf16.msra.mxu0 %v660
  %921 = vmatprep.subr.bf16.mxu0 %v721
  %922 = vmatpush2.bf16.msra.mxu0 %v720
  %923 = vmatprep.subr.bf16.mxu0 %v717
  %924 = vmatpush2.bf16.msra.mxu0 %v716
  %925 = vmatprep.subr.bf16.mxu0 %v713
  %926 = vmatpush2.bf16.msra.mxu0 %v712
  %927 = vmatprep.subr.bf16.mxu0 %v709
  %928 = vmatpush2.bf16.msra.mxu0 %v708
  %929 = vmatprep.subr.bf16.mxu0 %v705
  %930 = vmatpush2.bf16.msra.mxu0 %v704
  %931 = vmatprep.subr.bf16.mxu0 %v701
  %932 = vmatpush2.bf16.msra.mxu0 %v700
  %933 = vmatprep.subr.bf16.mxu0 %v697
  %934 = vmatpush2.bf16.msra.mxu0 %v696
  %935 = vmatprep.subr.bf16.mxu0 %v693
  %936 = vmatpush2.bf16.msra.mxu0 %v692
  %937 = vmatprep.mubr.bf16.mxu0 %v199
  %938 = vmatmul.mubr.bf16.gmra.mxu0 %v198
  %v939 = vpop.f32.mrf.mxu0
  %v940 = vadd.f32 %v887, %v939
  %v941 = vpop.f32.mrf.mxu0
  %v942 = vadd.f32 %v889, %v941
  %v943 = vpop.f32.mrf.mxu0
  %v944 = vadd.f32 %v891, %v943
  %v945 = vpop.f32.mrf.mxu0
  %v946 = vadd.f32 %v893, %v945
  %947 = vmatprep.mubr.bf16.mxu0 %v203
  %948 = vmatmul.mubr.bf16.gmra.mxu0 %v202
  %v949 = vpop.f32.mrf.mxu0
  %v950 = vadd.f32 %v897, %v949
  %v951 = vpop.f32.mrf.mxu0
  %v952 = vadd.f32 %v899, %v951
  %v953 = vpop.f32.mrf.mxu0
  %v954 = vadd.f32 %v901, %v953
  %v955 = vpop.f32.mrf.mxu0
  %v956 = vadd.f32 %v903, %v955
  %957 = vdwg.mxu0
  %958 = vmatprep.subr.bf16.mxu0 %v627
  %959 = vmatpush1.bf16.msra.mxu0 %v626
  %960 = vmatprep.subr.bf16.mxu0 %v623
  %961 = vmatpush1.bf16.msra.mxu0 %v622
  %962 = vmatprep.subr.bf16.mxu0 %v619
  %963 = vmatpush1.bf16.msra.mxu0 %v618
  %964 = vmatprep.subr.bf16.mxu0 %v615
  %965 = vmatpush1.bf16.msra.mxu0 %v614
  %966 = vmatprep.subr.bf16.mxu0 %v611
  %967 = vmatpush1.bf16.msra.mxu0 %v610
  %968 = vmatprep.subr.bf16.mxu0 %v607
  %969 = vmatpush1.bf16.msra.mxu0 %v606
  %970 = vmatprep.subr.bf16.mxu0 %v603
  %971 = vmatpush1.bf16.msra.mxu0 %v602
  %972 = vmatprep.subr.bf16.mxu0 %v599
  %973 = vmatpush1.bf16.msra.mxu0 %v598
  %974 = vmatprep.subr.bf16.mxu0 %v659
  %975 = vmatpush2.bf16.msra.mxu0 %v658
  %976 = vmatprep.subr.bf16.mxu0 %v655
  %977 = vmatpush2.bf16.msra.mxu0 %v654
  %978 = vmatprep.subr.bf16.mxu0 %v651
  %979 = vmatpush2.bf16.msra.mxu0 %v650
  %980 = vmatprep.subr.bf16.mxu0 %v647
  %981 = vmatpush2.bf16.msra.mxu0 %v646
  %982 = vmatprep.subr.bf16.mxu0 %v643
  %983 = vmatpush2.bf16.msra.mxu0 %v642
  %984 = vmatprep.subr.bf16.mxu0 %v639
  %985 = vmatpush2.bf16.msra.mxu0 %v638
  %986 = vmatprep.subr.bf16.mxu0 %v635
  %987 = vmatpush2.bf16.msra.mxu0 %v634
  %988 = vmatprep.subr.bf16.mxu0 %v631
  %989 = vmatpush2.bf16.msra.mxu0 %v630
  %990 = vmatprep.mubr.bf16.mxu0 %v197
  %991 = vmatmul.mubr.bf16.gmra.mxu0 %v196
  %v992 = vpop.f32.mrf.mxu0
  %v993 = vadd.f32 %v163, %v992
  %v994 = vpop.f32.mrf.mxu0
  %v995 = vadd.f32 %v167, %v994
  %v996 = vpop.f32.mrf.mxu0
  %v997 = vadd.f32 %v163, %v996
  %v998 = vpop.f32.mrf.mxu0
  %v999 = vadd.f32 %v167, %v998
  %1000 = vmatprep.mubr.bf16.mxu0 %v201
  %1001 = vmatmul.mubr.bf16.gmra.mxu0 %v200
  %v1002 = vpop.f32.mrf.mxu0
  %v1003 = vadd.f32 %v163, %v1002
  %v1004 = vpop.f32.mrf.mxu0
  %v1005 = vadd.f32 %v167, %v1004
  %v1006 = vpop.f32.mrf.mxu0
  %v1007 = vadd.f32 %v163, %v1006
  %v1008 = vpop.f32.mrf.mxu0
  %v1009 = vadd.f32 %v167, %v1008
  %1010 = vdwg.mxu0
  %1011 = vmatprep.subr.bf16.mxu0 %v691
  %1012 = vmatpush1.bf16.msra.mxu0 %v690
  %1013 = vmatprep.subr.bf16.mxu0 %v687
  %1014 = vmatpush1.bf16.msra.mxu0 %v686
  %1015 = vmatprep.subr.bf16.mxu0 %v683
  %1016 = vmatpush1.bf16.msra.mxu0 %v682
  %1017 = vmatprep.subr.bf16.mxu0 %v679
  %1018 = vmatpush1.bf16.msra.mxu0 %v678
  %1019 = vmatprep.subr.bf16.mxu0 %v675
  %1020 = vmatpush1.bf16.msra.mxu0 %v674
  %1021 = vmatprep.subr.bf16.mxu0 %v671
  %1022 = vmatpush1.bf16.msra.mxu0 %v670
  %1023 = vmatprep.subr.bf16.mxu0 %v667
  %1024 = vmatpush1.bf16.msra.mxu0 %v666
  %1025 = vmatprep.subr.bf16.mxu0 %v663
  %1026 = vmatpush1.bf16.msra.mxu0 %v662
  %1027 = vmatprep.subr.bf16.mxu0 %v723
  %1028 = vmatpush2.bf16.msra.mxu0 %v722
  %1029 = vmatprep.subr.bf16.mxu0 %v719
  %1030 = vmatpush2.bf16.msra.mxu0 %v718
  %1031 = vmatprep.subr.bf16.mxu0 %v715
  %1032 = vmatpush2.bf16.msra.mxu0 %v714
  %1033 = vmatprep.subr.bf16.mxu0 %v711
  %1034 = vmatpush2.bf16.msra.mxu0 %v710
  %1035 = vmatprep.subr.bf16.mxu0 %v707
  %1036 = vmatpush2.bf16.msra.mxu0 %v706
  %1037 = vmatprep.subr.bf16.mxu0 %v703
  %1038 = vmatpush2.bf16.msra.mxu0 %v702
  %1039 = vmatprep.subr.bf16.mxu0 %v699
  %1040 = vmatpush2.bf16.msra.mxu0 %v698
  %1041 = vmatprep.subr.bf16.mxu0 %v695
  %1042 = vmatpush2.bf16.msra.mxu0 %v694
  %1043 = vmatprep.mubr.bf16.mxu0 %v199
  %1044 = vmatmul.mubr.bf16.gmra.mxu0 %v198
  %v1045 = vpop.f32.mrf.mxu0
  %v1046 = vadd.f32 %v993, %v1045
  %v1047 = vpop.f32.mrf.mxu0
  %v1048 = vadd.f32 %v995, %v1047
  %v1049 = vpop.f32.mrf.mxu0
  %v1050 = vadd.f32 %v997, %v1049
  %v1051 = vpop.f32.mrf.mxu0
  %v1052 = vadd.f32 %v999, %v1051
  %1053 = vmatprep.mubr.bf16.mxu0 %v203
  %1054 = vmatmul.mubr.bf16.gmra.mxu0 %v202
  %v1055 = vpop.f32.mrf.mxu0
  %v1056 = vadd.f32 %v1003, %v1055
  %v1057 = vpop.f32.mrf.mxu0
  %v1058 = vadd.f32 %v1005, %v1057
  %v1059 = vpop.f32.mrf.mxu0
  %v1060 = vadd.f32 %v1007, %v1059
  %v1061 = vpop.f32.mrf.mxu0
  %v1062 = vadd.f32 %v1009, %v1061
  %1063 = vdwg.mxu0
  %v1064 = vmax.f32 %v940, 0.0
  %v1065 = vmax.f32 %v942, 0.0
  %v1066 = vmax.f32 %v1046, 0.0
  %v1067 = vmax.f32 %v1048, 0.0
  %v1068 = vmax.f32 %v944, 0.0
  %v1069 = vmax.f32 %v946, 0.0
  %v1070 = vmax.f32 %v1050, 0.0
  %v1071 = vmax.f32 %v1052, 0.0
  %v1072 = vmax.f32 %v950, 0.0
  %v1073 = vmax.f32 %v952, 0.0
  %v1074 = vmax.f32 %v1056, 0.0
  %v1075 = vmax.f32 %v1058, 0.0
  %v1076 = vmax.f32 %v954, 0.0
  %v1077 = vmax.f32 %v956, 0.0
  %v1078 = vmax.f32 %v1060, 0.0
  %v1079 = vmax.f32 %v1062, 0.0
  %1080 = vst [vmem:[%s3] sm:$0xff] %v1064
  %1081 = vst [vmem:[%s3 + $0x8] sm:$0xff] %v1065
  %1082 = vst [vmem:[%s3 + $0x10] sm:$0xff] %v1066
  %1083 = vst [vmem:[%s3 + $0x18] sm:$0xff] %v1067
  %1084 = vst [vmem:[%s3 + $0x20] sm:$0xff] %v1068
  %1085 = vst [vmem:[%s3 + $0x28] sm:$0xff] %v1069
  %1086 = vst [vmem:[%s3 + $0x30] sm:$0xff] %v1070
  %1087 = vst [vmem:[%s3 + $0x38] sm:$0xff] %v1071
  %1088 = vst [vmem:[%s3 + $0x40] sm:$0xff] %v1072
  %1089 = vst [vmem:[%s3 + $0x48] sm:$0xff] %v1073
  %1090 = vst [vmem:[%s3 + $0x50] sm:$0xff] %v1074
  %1091 = vst [vmem:[%s3 + $0x58] sm:$0xff] %v1075
  %1092 = vst [vmem:[%s3 + $0x60] sm:$0xff] %v1076
  %1093 = vst [vmem:[%s3 + $0x68] sm:$0xff] %v1077
  %1094 = vst [vmem:[%s3 + $0x70] sm:$0xff] %v1078
  %1095 = vst [vmem:[%s3 + $0x78] sm:$0xff] %v1079
  // Predicated region
  $region14: #{compressor_forward.18} parent=0 // pred_check
    _
  $region15: #{compressor_forward.18} parent=0 // pred_check_branch
    %1097 = sbr.rel (0) target = $region17
  $region16: #{compressor_forward.18} parent=0 // pred_region
    _
  $region17: #{compressor_forward.18} parent=0 // pred_fallthru
    _
  // Predicated region
  $region18: #{compressor_forward.18} parent=0 // pred_check
    _
  $region19: #{compressor_forward.18} parent=0 // pred_check_branch
    %1099 = sbr.rel (0) target = $region21
  $region20: #{compressor_forward.18} parent=0 // pred_region
    _
  $region21: #{compressor_forward.18} parent=0 // pred_fallthru
    _

// kernel: compressor_forward.19
$region0: #{compressor_forward.19}
  #allocation0 [shape = 'u32[]', space=smem, size = 0x4, offset = 0x4, fixed_abs, tag = 'smem constant byte address 0x4 - core index']
  #allocation1 [shape = 'u32[144,128]{1,0:T(1,128)}', space=vmem, size = 0x12000, scoped, tag = 'internal scratch']
  %s0 = inlined_call_operand.vmem [shape: bf16[128,512], index: 0, kind: input, shape index: {}]
  %s1 = inlined_call_operand.vmem [shape: bf16[512,512], index: 1, kind: input, shape index: {}]
  %s2 = inlined_call_operand.vmem [shape: f32[1,512], index: 2, kind: input, shape index: {}]
  %s3 = inlined_call_operand.vmem [shape: f32[128,512], index: 3, kind: output, shape index: {}]
  %s4 = sld [smem:[#allocation0]]
  $region22: #{compressor_forward.19} parent=0
    _
  %s6 = ssub.s32 1, %s4
  %s7 = scalar_select 0, %s6, %s4
  // Predicated region
  $region2: #{compressor_forward.19} parent=0 // pred_check
    _
  $region3: #{compressor_forward.19} parent=0 // pred_check_branch
    %9 = sbr.rel (0) target = $region5
  $region4: #{compressor_forward.19} parent=0 // pred_region
    _
  $region5: #{compressor_forward.19} parent=0 // pred_fallthru
    _
  // Predicated region
  $region6: #{compressor_forward.19} parent=0 // pred_check
    _
  $region7: #{compressor_forward.19} parent=0 // pred_check_branch
    %11 = sbr.rel (0) target = $region9
  $region8: #{compressor_forward.19} parent=0 // pred_region
    _
  $region9: #{compressor_forward.19} parent=0 // pred_fallthru
    _
  // Predicated region
  $region10: #{compressor_forward.19} parent=0 // pred_check
    _
  $region11: #{compressor_forward.19} parent=0 // pred_check_branch
    %13 = sbr.rel (0) target = $region13
  $region12: #{compressor_forward.19} parent=0 // pred_region
    _
  $region13: #{compressor_forward.19} parent=0 // pred_fallthru
    _
  %v14 = vld [vmem:[%s0] sm:$0xff]
  %v15 = vld [vmem:[%s0 + $0x8] sm:$0xff]
  %v16 = vld [vmem:[%s0 + $0x10] sm:$0xff]
  %v17 = vld [vmem:[%s0 + $0x18] sm:$0xff]
  %v18 = vld [vmem:[%s0 + $0x20] sm:$0xff]
  %v19 = vld [vmem:[%s0 + $0x28] sm:$0xff]
  %v20 = vld [vmem:[%s0 + $0x30] sm:$0xff]
  %v21 = vld [vmem:[%s0 + $0x38] sm:$0xff]
  %v22 = vld [vmem:[%s0 + $0x40] sm:$0xff]
  %v23 = vld [vmem:[%s0 + $0x48] sm:$0xff]
  %v24 = vld [vmem:[%s0 + $0x50] sm:$0xff]
  %v25 = vld [vmem:[%s0 + $0x58] sm:$0xff]
  %v26 = vld [vmem:[%s0 + $0x60] sm:$0xff]
  %v27 = vld [vmem:[%s0 + $0x68] sm:$0xff]
  %v28 = vld [vmem:[%s0 + $0x70] sm:$0xff]
  %v29 = vld [vmem:[%s0 + $0x78] sm:$0xff]
  %v30 = vld [vmem:[%s0 + $0x80] sm:$0xff]
  %v31 = vld [vmem:[%s0 + $0x88] sm:$0xff]
  %v32 = vld [vmem:[%s0 + $0x90] sm:$0xff]
  %v33 = vld [vmem:[%s0 + $0x98] sm:$0xff]
  %v34 = vld [vmem:[%s0 + $0xa0] sm:$0xff]
  %v35 = vld [vmem:[%s0 + $0xa8] sm:$0xff]
  %v36 = vld [vmem:[%s0 + $0xb0] sm:$0xff]
  %v37 = vld [vmem:[%s0 + $0xb8] sm:$0xff]
  %v38 = vld [vmem:[%s0 + $0xc0] sm:$0xff]
  %v39 = vld [vmem:[%s0 + $0xc8] sm:$0xff]
  %v40 = vld [vmem:[%s0 + $0xd0] sm:$0xff]
  %v41 = vld [vmem:[%s0 + $0xd8] sm:$0xff]
  %v42 = vld [vmem:[%s0 + $0xe0] sm:$0xff]
  %v43 = vld [vmem:[%s0 + $0xe8] sm:$0xff]
  %v44 = vld [vmem:[%s0 + $0xf0] sm:$0xff]
  %v45 = vld [vmem:[%s0 + $0xf8] sm:$0xff]
  %v46 = vld [vmem:[%s1] sm:$0xff]
  %v47 = vld [vmem:[%s1 + $0x8] sm:$0xff]
  %v48 = vld [vmem:[%s1 + $0x10] sm:$0xff]
  %v49 = vld [vmem:[%s1 + $0x18] sm:$0xff]
  %v50 = vld [vmem:[%s1 + $0x20] sm:$0xff]
  %v51 = vld [vmem:[%s1 + $0x28] sm:$0xff]
  %v52 = vld [vmem:[%s1 + $0x30] sm:$0xff]
  %v53 = vld [vmem:[%s1 + $0x38] sm:$0xff]
  %v54 = vld [vmem:[%s1 + $0x40] sm:$0xff]
  %v55 = vld [vmem:[%s1 + $0x48] sm:$0xff]
  %v56 = vld [vmem:[%s1 + $0x50] sm:$0xff]
  %v57 = vld [vmem:[%s1 + $0x58] sm:$0xff]
  %v58 = vld [vmem:[%s1 + $0x60] sm:$0xff]
  %v59 = vld [vmem:[%s1 + $0x68] sm:$0xff]
  %v60 = vld [vmem:[%s1 + $0x70] sm:$0xff]
  %v61 = vld [vmem:[%s1 + $0x78] sm:$0xff]
  %v62 = vld [vmem:[%s1 + $0x80] sm:$0xff]
  %v63 = vld [vmem:[%s1 + $0x88] sm:$0xff]
  %v64 = vld [vmem:[%s1 + $0x90] sm:$0xff]
  %v65 = vld [vmem:[%s1 + $0x98] sm:$0xff]
  %v66 = vld [vmem:[%s1 + $0xa0] sm:$0xff]
  %v67 = vld [vmem:[%s1 + $0xa8] sm:$0xff]
  %v68 = vld [vmem:[%s1 + $0xb0] sm:$0xff]
  %v69 = vld [vmem:[%s1 + $0xb8] sm:$0xff]
  %v70 = vld [vmem:[%s1 + $0xc0] sm:$0xff]
  %v71 = vld [vmem:[%s1 + $0xc8] sm:$0xff]
  %v72 = vld [vmem:[%s1 + $0xd0] sm:$0xff]
  %v73 = vld [vmem:[%s1 + $0xd8] sm:$0xff]
  %v74 = vld [vmem:[%s1 + $0xe0] sm:$0xff]
  %v75 = vld [vmem:[%s1 + $0xe8] sm:$0xff]
  %v76 = vld [vmem:[%s1 + $0xf0] sm:$0xff]
  %v77 = vld [vmem:[%s1 + $0xf8] sm:$0xff]
  %v78 = vld [vmem:[%s1 + $0x100] sm:$0xff]
  %v79 = vld [vmem:[%s1 + $0x108] sm:$0xff]
  %v80 = vld [vmem:[%s1 + $0x110] sm:$0xff]
  %v81 = vld [vmem:[%s1 + $0x118] sm:$0xff]
  %v82 = vld [vmem:[%s1 + $0x120] sm:$0xff]
  %v83 = vld [vmem:[%s1 + $0x128] sm:$0xff]
  %v84 = vld [vmem:[%s1 + $0x130] sm:$0xff]
  %v85 = vld [vmem:[%s1 + $0x138] sm:$0xff]
  %v86 = vld [vmem:[%s1 + $0x140] sm:$0xff]
  %v87 = vld [vmem:[%s1 + $0x148] sm:$0xff]
  %v88 = vld [vmem:[%s1 + $0x150] sm:$0xff]
  %v89 = vld [vmem:[%s1 + $0x158] sm:$0xff]
  %v90 = vld [vmem:[%s1 + $0x160] sm:$0xff]
  %v91 = vld [vmem:[%s1 + $0x168] sm:$0xff]
  %v92 = vld [vmem:[%s1 + $0x170] sm:$0xff]
  %v93 = vld [vmem:[%s1 + $0x178] sm:$0xff]
  %v94 = vld [vmem:[%s1 + $0x180] sm:$0xff]
  %v95 = vld [vmem:[%s1 + $0x188] sm:$0xff]
  %v96 = vld [vmem:[%s1 + $0x190] sm:$0xff]
  %v97 = vld [vmem:[%s1 + $0x198] sm:$0xff]
  %v98 = vld [vmem:[%s1 + $0x1a0] sm:$0xff]
  %v99 = vld [vmem:[%s1 + $0x1a8] sm:$0xff]
  %v100 = vld [vmem:[%s1 + $0x1b0] sm:$0xff]
  %v101 = vld [vmem:[%s1 + $0x1b8] sm:$0xff]
  %v102 = vld [vmem:[%s1 + $0x1c0] sm:$0xff]
  %v103 = vld [vmem:[%s1 + $0x1c8] sm:$0xff]
  %v104 = vld [vmem:[%s1 + $0x1d0] sm:$0xff]
  %v105 = vld [vmem:[%s1 + $0x1d8] sm:$0xff]
  %v106 = vld [vmem:[%s1 + $0x1e0] sm:$0xff]
  %v107 = vld [vmem:[%s1 + $0x1e8] sm:$0xff]
  %v108 = vld [vmem:[%s1 + $0x1f0] sm:$0xff]
  %v109 = vld [vmem:[%s1 + $0x1f8] sm:$0xff]
  %v110 = vld [vmem:[%s1 + $0x200] sm:$0xff]
  %v111 = vld [vmem:[%s1 + $0x208] sm:$0xff]
  %v112 = vld [vmem:[%s1 + $0x210] sm:$0xff]
  %v113 = vld [vmem:[%s1 + $0x218] sm:$0xff]
  %v114 = vld [vmem:[%s1 + $0x220] sm:$0xff]
  %v115 = vld [vmem:[%s1 + $0x228] sm:$0xff]
  %v116 = vld [vmem:[%s1 + $0x230] sm:$0xff]
  %v117 = vld [vmem:[%s1 + $0x238] sm:$0xff]
  %v118 = vld [vmem:[%s1 + $0x240] sm:$0xff]
  %v119 = vld [vmem:[%s1 + $0x248] sm:$0xff]
  %v120 = vld [vmem:[%s1 + $0x250] sm:$0xff]
  %v121 = vld [vmem:[%s1 + $0x258] sm:$0xff]
  %v122 = vld [vmem:[%s1 + $0x260] sm:$0xff]
  %v123 = vld [vmem:[%s1 + $0x268] sm:$0xff]
  %v124 = vld [vmem:[%s1 + $0x270] sm:$0xff]
  %v125 = vld [vmem:[%s1 + $0x278] sm:$0xff]
  %v126 = vld [vmem:[%s1 + $0x280] sm:$0xff]
  %v127 = vld [vmem:[%s1 + $0x288] sm:$0xff]
  %v128 = vld [vmem:[%s1 + $0x290] sm:$0xff]
  %v129 = vld [vmem:[%s1 + $0x298] sm:$0xff]
  %v130 = vld [vmem:[%s1 + $0x2a0] sm:$0xff]
  %v131 = vld [vmem:[%s1 + $0x2a8] sm:$0xff]
  %v132 = vld [vmem:[%s1 + $0x2b0] sm:$0xff]
  %v133 = vld [vmem:[%s1 + $0x2b8] sm:$0xff]
  %v134 = vld [vmem:[%s1 + $0x2c0] sm:$0xff]
  %v135 = vld [vmem:[%s1 + $0x2c8] sm:$0xff]
  %v136 = vld [vmem:[%s1 + $0x2d0] sm:$0xff]
  %v137 = vld [vmem:[%s1 + $0x2d8] sm:$0xff]
  %v138 = vld [vmem:[%s1 + $0x2e0] sm:$0xff]
  %v139 = vld [vmem:[%s1 + $0x2e8] sm:$0xff]
  %v140 = vld [vmem:[%s1 + $0x2f0] sm:$0xff]
  %v141 = vld [vmem:[%s1 + $0x2f8] sm:$0xff]
  %v142 = vld [vmem:[%s1 + $0x300] sm:$0xff]
  %v143 = vld [vmem:[%s1 + $0x308] sm:$0xff]
  %v144 = vld [vmem:[%s1 + $0x310] sm:$0xff]
  %v145 = vld [vmem:[%s1 + $0x318] sm:$0xff]
  %v146 = vld [vmem:[%s1 + $0x320] sm:$0xff]
  %v147 = vld [vmem:[%s1 + $0x328] sm:$0xff]
  %v148 = vld [vmem:[%s1 + $0x330] sm:$0xff]
  %v149 = vld [vmem:[%s1 + $0x338] sm:$0xff]
  %v150 = vld [vmem:[%s1 + $0x340] sm:$0xff]
  %v151 = vld [vmem:[%s1 + $0x348] sm:$0xff]
  %v152 = vld [vmem:[%s1 + $0x350] sm:$0xff]
  %v153 = vld [vmem:[%s1 + $0x358] sm:$0xff]
  %v154 = vld [vmem:[%s1 + $0x360] sm:$0xff]
  %v155 = vld [vmem:[%s1 + $0x368] sm:$0xff]
  %v156 = vld [vmem:[%s1 + $0x370] sm:$0xff]
  %v157 = vld [vmem:[%s1 + $0x378] sm:$0xff]
  %v158 = vld [vmem:[%s1 + $0x380] sm:$0xff]
  %v159 = vld [vmem:[%s1 + $0x388] sm:$0xff]
  %v160 = vld [vmem:[%s1 + $0x390] sm:$0xff]
  %v161 = vld [vmem:[%s1 + $0x398] sm:$0xff]
  %v162 = vld [vmem:[%s1 + $0x3a0] sm:$0xff]
  %v163 = vld [vmem:[%s1 + $0x3a8] sm:$0xff]
  %v164 = vld [vmem:[%s1 + $0x3b0] sm:$0xff]
  %v165 = vld [vmem:[%s1 + $0x3b8] sm:$0xff]
  %v166 = vld [vmem:[%s1 + $0x3c0] sm:$0xff]
  %v167 = vld [vmem:[%s1 + $0x3c8] sm:$0xff]
  %v168 = vld [vmem:[%s1 + $0x3d0] sm:$0xff]
  %v169 = vld [vmem:[%s1 + $0x3d8] sm:$0xff]
  %v170 = vld [vmem:[%s1 + $0x3e0] sm:$0xff]
  %v171 = vld [vmem:[%s1 + $0x3e8] sm:$0xff]
  %v172 = vld [vmem:[%s1 + $0x3f0] sm:$0xff]
  %v173 = vld [vmem:[%s1 + $0x3f8] sm:$0xff]
  %v174 = vld [vmem:[%s2] sm:$0xf]
  %v176 = vlaneseq
  %v177 = vshrl.u32 %v176, 7
  %v178 = vsub.s32 0, %v177
  %v179 = vrot.slane %v174, %v178
  %v180 = vlaneseq
  %v181 = vshrl.u32 %v180, 7
  %v182 = vsub.s32 1, %v181
  %v183 = vrot.slane %v174, %v182
  %v184 = vlaneseq
  %v185 = vshrl.u32 %v184, 7
  %v186 = vsub.s32 2, %v185
  %v187 = vrot.slane %v174, %v186
  %v188 = vlaneseq
  %v189 = vshrl.u32 %v188, 7
  %v190 = vsub.s32 3, %v189
  %v191 = vrot.slane %v174, %v190
  %v228 = vunpack.c.l.b16 %v14
  %v229 = vunpack.c.h.b16 %v14
  %v230 = vunpack.c.l.b16 %v15
  %v231 = vunpack.c.h.b16 %v15
  %v232 = vunpack.c.l.b16 %v16
  %v233 = vunpack.c.h.b16 %v16
  %v234 = vunpack.c.l.b16 %v17
  %v235 = vunpack.c.h.b16 %v17
  %v236 = vunpack.c.l.b16 %v18
  %v237 = vunpack.c.h.b16 %v18
  %v238 = vunpack.c.l.b16 %v19
  %v239 = vunpack.c.h.b16 %v19
  %v240 = vunpack.c.l.b16 %v20
  %v241 = vunpack.c.h.b16 %v20
  %v242 = vunpack.c.l.b16 %v21
  %v243 = vunpack.c.h.b16 %v21
  %v244 = vunpack.c.l.b16 %v22
  %v245 = vunpack.c.h.b16 %v22
  %v246 = vunpack.c.l.b16 %v23
  %v247 = vunpack.c.h.b16 %v23
  %v248 = vunpack.c.l.b16 %v24
  %v249 = vunpack.c.h.b16 %v24
  %v250 = vunpack.c.l.b16 %v25
  %v251 = vunpack.c.h.b16 %v25
  %v252 = vunpack.c.l.b16 %v26
  %v253 = vunpack.c.h.b16 %v26
  %v254 = vunpack.c.l.b16 %v27
  %v255 = vunpack.c.h.b16 %v27
  %v256 = vunpack.c.l.b16 %v28
  %v257 = vunpack.c.h.b16 %v28
  %v258 = vunpack.c.l.b16 %v29
  %v259 = vunpack.c.h.b16 %v29
  %v260 = vunpack.c.l.b16 %v30
  %v261 = vunpack.c.h.b16 %v30
  %v262 = vunpack.c.l.b16 %v31
  %v263 = vunpack.c.h.b16 %v31
  %v264 = vunpack.c.l.b16 %v32
  %v265 = vunpack.c.h.b16 %v32
  %v266 = vunpack.c.l.b16 %v33
  %v267 = vunpack.c.h.b16 %v33
  %v268 = vunpack.c.l.b16 %v34
  %v269 = vunpack.c.h.b16 %v34
  %v270 = vunpack.c.l.b16 %v35
  %v271 = vunpack.c.h.b16 %v35
  %v272 = vunpack.c.l.b16 %v36
  %v273 = vunpack.c.h.b16 %v36
  %v274 = vunpack.c.l.b16 %v37
  %v275 = vunpack.c.h.b16 %v37
  %v276 = vunpack.c.l.b16 %v38
  %v277 = vunpack.c.h.b16 %v38
  %v278 = vunpack.c.l.b16 %v39
  %v279 = vunpack.c.h.b16 %v39
  %v280 = vunpack.c.l.b16 %v40
  %v281 = vunpack.c.h.b16 %v40
  %v282 = vunpack.c.l.b16 %v41
  %v283 = vunpack.c.h.b16 %v41
  %v284 = vunpack.c.l.b16 %v42
  %v285 = vunpack.c.h.b16 %v42
  %v286 = vunpack.c.l.b16 %v43
  %v287 = vunpack.c.h.b16 %v43
  %v288 = vunpack.c.l.b16 %v44
  %v289 = vunpack.c.h.b16 %v44
  %v290 = vunpack.c.l.b16 %v45
  %v291 = vunpack.c.h.b16 %v45
  %v292 = vpack.c.b16 %v232, %v228
  %v293 = vpack.c.b16 %v233, %v229
  %v294 = vpack.c.b16 %v234, %v230
  %v295 = vpack.c.b16 %v235, %v231
  %v296 = vpack.c.b16 %v240, %v236
  %v297 = vpack.c.b16 %v241, %v237
  %v298 = vpack.c.b16 %v242, %v238
  %v299 = vpack.c.b16 %v243, %v239
  %v300 = vpack.c.b16 %v248, %v244
  %v301 = vpack.c.b16 %v249, %v245
  %v302 = vpack.c.b16 %v250, %v246
  %v303 = vpack.c.b16 %v251, %v247
  %v304 = vpack.c.b16 %v256, %v252
  %v305 = vpack.c.b16 %v257, %v253
  %v306 = vpack.c.b16 %v258, %v254
  %v307 = vpack.c.b16 %v259, %v255
  %v308 = vpack.c.b16 %v264, %v260
  %v309 = vpack.c.b16 %v265, %v261
  %v310 = vpack.c.b16 %v266, %v262
  %v311 = vpack.c.b16 %v267, %v263
  %v312 = vpack.c.b16 %v272, %v268
  %v313 = vpack.c.b16 %v273, %v269
  %v314 = vpack.c.b16 %v274, %v270
  %v315 = vpack.c.b16 %v275, %v271
  %v316 = vpack.c.b16 %v280, %v276
  %v317 = vpack.c.b16 %v281, %v277
  %v318 = vpack.c.b16 %v282, %v278
  %v319 = vpack.c.b16 %v283, %v279
  %v320 = vpack.c.b16 %v288, %v284
  %v321 = vpack.c.b16 %v289, %v285
  %v322 = vpack.c.b16 %v290, %v286
  %v323 = vpack.c.b16 %v291, %v287
  %v484 = vunpack.c.l.b16 %v46
  %v485 = vunpack.c.h.b16 %v46
  %v486 = vunpack.c.l.b16 %v47
  %v487 = vunpack.c.h.b16 %v47
  %v488 = vunpack.c.l.b16 %v48
  %v489 = vunpack.c.h.b16 %v48
  %v490 = vunpack.c.l.b16 %v49
  %v491 = vunpack.c.h.b16 %v49
  %v492 = vunpack.c.l.b16 %v50
  %v493 = vunpack.c.h.b16 %v50
  %v494 = vunpack.c.l.b16 %v51
  %v495 = vunpack.c.h.b16 %v51
  %v496 = vunpack.c.l.b16 %v52
  %v497 = vunpack.c.h.b16 %v52
  %v498 = vunpack.c.l.b16 %v53
  %v499 = vunpack.c.h.b16 %v53
  %v500 = vunpack.c.l.b16 %v54
  %v501 = vunpack.c.h.b16 %v54
  %v502 = vunpack.c.l.b16 %v55
  %v503 = vunpack.c.h.b16 %v55
  %v504 = vunpack.c.l.b16 %v56
  %v505 = vunpack.c.h.b16 %v56
  %v506 = vunpack.c.l.b16 %v57
  %v507 = vunpack.c.h.b16 %v57
  %v508 = vunpack.c.l.b16 %v58
  %v509 = vunpack.c.h.b16 %v58
  %v510 = vunpack.c.l.b16 %v59
  %v511 = vunpack.c.h.b16 %v59
  %v512 = vunpack.c.l.b16 %v60
  %v513 = vunpack.c.h.b16 %v60
  %v514 = vunpack.c.l.b16 %v61
  %v515 = vunpack.c.h.b16 %v61
  %v516 = vunpack.c.l.b16 %v62
  %v517 = vunpack.c.h.b16 %v62
  %v518 = vunpack.c.l.b16 %v63
  %v519 = vunpack.c.h.b16 %v63
  %v520 = vunpack.c.l.b16 %v64
  %v521 = vunpack.c.h.b16 %v64
  %v522 = vunpack.c.l.b16 %v65
  %v523 = vunpack.c.h.b16 %v65
  %v524 = vunpack.c.l.b16 %v66
  %v525 = vunpack.c.h.b16 %v66
  %v526 = vunpack.c.l.b16 %v67
  %v527 = vunpack.c.h.b16 %v67
  %v528 = vunpack.c.l.b16 %v68
  %v529 = vunpack.c.h.b16 %v68
  %v530 = vunpack.c.l.b16 %v69
  %v531 = vunpack.c.h.b16 %v69
  %v532 = vunpack.c.l.b16 %v70
  %v533 = vunpack.c.h.b16 %v70
  %v534 = vunpack.c.l.b16 %v71
  %v535 = vunpack.c.h.b16 %v71
  %v536 = vunpack.c.l.b16 %v72
  %v537 = vunpack.c.h.b16 %v72
  %v538 = vunpack.c.l.b16 %v73
  %v539 = vunpack.c.h.b16 %v73
  %v540 = vunpack.c.l.b16 %v74
  %v541 = vunpack.c.h.b16 %v74
  %v542 = vunpack.c.l.b16 %v75
  %v543 = vunpack.c.h.b16 %v75
  %v544 = vunpack.c.l.b16 %v76
  %v545 = vunpack.c.h.b16 %v76
  %v546 = vunpack.c.l.b16 %v77
  %v547 = vunpack.c.h.b16 %v77
  %v548 = vunpack.c.l.b16 %v78
  %v549 = vunpack.c.h.b16 %v78
  %v550 = vunpack.c.l.b16 %v79
  %v551 = vunpack.c.h.b16 %v79
  %v552 = vunpack.c.l.b16 %v80
  %v553 = vunpack.c.h.b16 %v80
  %v554 = vunpack.c.l.b16 %v81
  %v555 = vunpack.c.h.b16 %v81
  %v556 = vunpack.c.l.b16 %v82
  %v557 = vunpack.c.h.b16 %v82
  %v558 = vunpack.c.l.b16 %v83
  %v559 = vunpack.c.h.b16 %v83
  %v560 = vunpack.c.l.b16 %v84
  %v561 = vunpack.c.h.b16 %v84
  %v562 = vunpack.c.l.b16 %v85
  %v563 = vunpack.c.h.b16 %v85
  %v564 = vunpack.c.l.b16 %v86
  %v565 = vunpack.c.h.b16 %v86
  %v566 = vunpack.c.l.b16 %v87
  %v567 = vunpack.c.h.b16 %v87
  %v568 = vunpack.c.l.b16 %v88
  %v569 = vunpack.c.h.b16 %v88
  %v570 = vunpack.c.l.b16 %v89
  %v571 = vunpack.c.h.b16 %v89
  %v572 = vunpack.c.l.b16 %v90
  %v573 = vunpack.c.h.b16 %v90
  %v574 = vunpack.c.l.b16 %v91
  %v575 = vunpack.c.h.b16 %v91
  %v576 = vunpack.c.l.b16 %v92
  %v577 = vunpack.c.h.b16 %v92
  %v578 = vunpack.c.l.b16 %v93
  %v579 = vunpack.c.h.b16 %v93
  %v580 = vunpack.c.l.b16 %v94
  %v581 = vunpack.c.h.b16 %v94
  %v582 = vunpack.c.l.b16 %v95
  %v583 = vunpack.c.h.b16 %v95
  %v584 = vunpack.c.l.b16 %v96
  %v585 = vunpack.c.h.b16 %v96
  %v586 = vunpack.c.l.b16 %v97
  %v587 = vunpack.c.h.b16 %v97
  %v588 = vunpack.c.l.b16 %v98
  %v589 = vunpack.c.h.b16 %v98
  %v590 = vunpack.c.l.b16 %v99
  %v591 = vunpack.c.h.b16 %v99
  %v592 = vunpack.c.l.b16 %v100
  %v593 = vunpack.c.h.b16 %v100
  %v594 = vunpack.c.l.b16 %v101
  %v595 = vunpack.c.h.b16 %v101
  %v596 = vunpack.c.l.b16 %v102
  %v597 = vunpack.c.h.b16 %v102
  %v598 = vunpack.c.l.b16 %v103
  %v599 = vunpack.c.h.b16 %v103
  %v600 = vunpack.c.l.b16 %v104
  %v601 = vunpack.c.h.b16 %v104
  %v602 = vunpack.c.l.b16 %v105
  %v603 = vunpack.c.h.b16 %v105
  %v604 = vunpack.c.l.b16 %v106
  %v605 = vunpack.c.h.b16 %v106
  %v606 = vunpack.c.l.b16 %v107
  %v607 = vunpack.c.h.b16 %v107
  %v608 = vunpack.c.l.b16 %v108
  %v609 = vunpack.c.h.b16 %v108
  %v610 = vunpack.c.l.b16 %v109
  %v611 = vunpack.c.h.b16 %v109
  %v612 = vunpack.c.l.b16 %v110
  %v613 = vunpack.c.h.b16 %v110
  %v614 = vunpack.c.l.b16 %v111
  %v615 = vunpack.c.h.b16 %v111
  %v616 = vunpack.c.l.b16 %v112
  %v617 = vunpack.c.h.b16 %v112
  %v618 = vunpack.c.l.b16 %v113
  %v619 = vunpack.c.h.b16 %v113
  %v620 = vunpack.c.l.b16 %v114
  %v621 = vunpack.c.h.b16 %v114
  %v622 = vunpack.c.l.b16 %v115
  %v623 = vunpack.c.h.b16 %v115
  %v624 = vunpack.c.l.b16 %v116
  %v625 = vunpack.c.h.b16 %v116
  %v626 = vunpack.c.l.b16 %v117
  %v627 = vunpack.c.h.b16 %v117
  %v628 = vunpack.c.l.b16 %v118
  %v629 = vunpack.c.h.b16 %v118
  %v630 = vunpack.c.l.b16 %v119
  %v631 = vunpack.c.h.b16 %v119
  %v632 = vunpack.c.l.b16 %v120
  %v633 = vunpack.c.h.b16 %v120
  %v634 = vunpack.c.l.b16 %v121
  %v635 = vunpack.c.h.b16 %v121
  %v636 = vunpack.c.l.b16 %v122
  %v637 = vunpack.c.h.b16 %v122
  %v638 = vunpack.c.l.b16 %v123
  %v639 = vunpack.c.h.b16 %v123
  %v640 = vunpack.c.l.b16 %v124
  %v641 = vunpack.c.h.b16 %v124
  %v642 = vunpack.c.l.b16 %v125
  %v643 = vunpack.c.h.b16 %v125
  %v644 = vunpack.c.l.b16 %v126
  %v645 = vunpack.c.h.b16 %v126
  %v646 = vunpack.c.l.b16 %v127
  %v647 = vunpack.c.h.b16 %v127
  %v648 = vunpack.c.l.b16 %v128
  %v649 = vunpack.c.h.b16 %v128
  %v650 = vunpack.c.l.b16 %v129
  %v651 = vunpack.c.h.b16 %v129
  %v652 = vunpack.c.l.b16 %v130
  %v653 = vunpack.c.h.b16 %v130
  %v654 = vunpack.c.l.b16 %v131
  %v655 = vunpack.c.h.b16 %v131
  %v656 = vunpack.c.l.b16 %v132
  %v657 = vunpack.c.h.b16 %v132
  %v658 = vunpack.c.l.b16 %v133
  %v659 = vunpack.c.h.b16 %v133
  %v660 = vunpack.c.l.b16 %v134
  %v661 = vunpack.c.h.b16 %v134
  %v662 = vunpack.c.l.b16 %v135
  %v663 = vunpack.c.h.b16 %v135
  %v664 = vunpack.c.l.b16 %v136
  %v665 = vunpack.c.h.b16 %v136
  %v666 = vunpack.c.l.b16 %v137
  %v667 = vunpack.c.h.b16 %v137
  %v668 = vunpack.c.l.b16 %v138
  %v669 = vunpack.c.h.b16 %v138
  %v670 = vunpack.c.l.b16 %v139
  %v671 = vunpack.c.h.b16 %v139
  %v672 = vunpack.c.l.b16 %v140
  %v673 = vunpack.c.h.b16 %v140
  %v674 = vunpack.c.l.b16 %v141
  %v675 = vunpack.c.h.b16 %v141
  %v676 = vunpack.c.l.b16 %v142
  %v677 = vunpack.c.h.b16 %v142
  %v678 = vunpack.c.l.b16 %v143
  %v679 = vunpack.c.h.b16 %v143
  %v680 = vunpack.c.l.b16 %v144
  %v681 = vunpack.c.h.b16 %v144
  %v682 = vunpack.c.l.b16 %v145
  %v683 = vunpack.c.h.b16 %v145
  %v684 = vunpack.c.l.b16 %v146
  %v685 = vunpack.c.h.b16 %v146
  %v686 = vunpack.c.l.b16 %v147
  %v687 = vunpack.c.h.b16 %v147
  %v688 = vunpack.c.l.b16 %v148
  %v689 = vunpack.c.h.b16 %v148
  %v690 = vunpack.c.l.b16 %v149
  %v691 = vunpack.c.h.b16 %v149
  %v692 = vunpack.c.l.b16 %v150
  %v693 = vunpack.c.h.b16 %v150
  %v694 = vunpack.c.l.b16 %v151
  %v695 = vunpack.c.h.b16 %v151
  %v696 = vunpack.c.l.b16 %v152
  %v697 = vunpack.c.h.b16 %v152
  %v698 = vunpack.c.l.b16 %v153
  %v699 = vunpack.c.h.b16 %v153
  %v700 = vunpack.c.l.b16 %v154
  %v701 = vunpack.c.h.b16 %v154
  %v702 = vunpack.c.l.b16 %v155
  %v703 = vunpack.c.h.b16 %v155
  %v704 = vunpack.c.l.b16 %v156
  %v705 = vunpack.c.h.b16 %v156
  %v706 = vunpack.c.l.b16 %v157
  %v707 = vunpack.c.h.b16 %v157
  %v708 = vunpack.c.l.b16 %v158
  %v709 = vunpack.c.h.b16 %v158
  %v710 = vunpack.c.l.b16 %v159
  %v711 = vunpack.c.h.b16 %v159
  %v712 = vunpack.c.l.b16 %v160
  %v713 = vunpack.c.h.b16 %v160
  %v714 = vunpack.c.l.b16 %v161
  %v715 = vunpack.c.h.b16 %v161
  %v716 = vunpack.c.l.b16 %v162
  %v717 = vunpack.c.h.b16 %v162
  %v718 = vunpack.c.l.b16 %v163
  %v719 = vunpack.c.h.b16 %v163
  %v720 = vunpack.c.l.b16 %v164
  %v721 = vunpack.c.h.b16 %v164
  %v722 = vunpack.c.l.b16 %v165
  %v723 = vunpack.c.h.b16 %v165
  %v724 = vunpack.c.l.b16 %v166
  %v725 = vunpack.c.h.b16 %v166
  %v726 = vunpack.c.l.b16 %v167
  %v727 = vunpack.c.h.b16 %v167
  %v728 = vunpack.c.l.b16 %v168
  %v729 = vunpack.c.h.b16 %v168
  %v730 = vunpack.c.l.b16 %v169
  %v731 = vunpack.c.h.b16 %v169
  %v732 = vunpack.c.l.b16 %v170
  %v733 = vunpack.c.h.b16 %v170
  %v734 = vunpack.c.l.b16 %v171
  %v735 = vunpack.c.h.b16 %v171
  %v736 = vunpack.c.l.b16 %v172
  %v737 = vunpack.c.h.b16 %v172
  %v738 = vunpack.c.l.b16 %v173
  %v739 = vunpack.c.h.b16 %v173
  %v740 = vpack.c.b16 %v488, %v484
  %v741 = vpack.c.b16 %v489, %v485
  %v742 = vpack.c.b16 %v490, %v486
  %v743 = vpack.c.b16 %v491, %v487
  %v744 = vpack.c.b16 %v496, %v492
  %v745 = vpack.c.b16 %v497, %v493
  %v746 = vpack.c.b16 %v498, %v494
  %v747 = vpack.c.b16 %v499, %v495
  %v748 = vpack.c.b16 %v504, %v500
  %v749 = vpack.c.b16 %v505, %v501
  %v750 = vpack.c.b16 %v506, %v502
  %v751 = vpack.c.b16 %v507, %v503
  %v752 = vpack.c.b16 %v512, %v508
  %v753 = vpack.c.b16 %v513, %v509
  %v754 = vpack.c.b16 %v514, %v510
  %v755 = vpack.c.b16 %v515, %v511
  %v756 = vpack.c.b16 %v520, %v516
  %v757 = vpack.c.b16 %v521, %v517
  %v758 = vpack.c.b16 %v522, %v518
  %v759 = vpack.c.b16 %v523, %v519
  %v760 = vpack.c.b16 %v528, %v524
  %v761 = vpack.c.b16 %v529, %v525
  %v762 = vpack.c.b16 %v530, %v526
  %v763 = vpack.c.b16 %v531, %v527
  %v764 = vpack.c.b16 %v536, %v532
  %v765 = vpack.c.b16 %v537, %v533
  %v766 = vpack.c.b16 %v538, %v534
  %v767 = vpack.c.b16 %v539, %v535
  %v768 = vpack.c.b16 %v544, %v540
  %v769 = vpack.c.b16 %v545, %v541
  %v770 = vpack.c.b16 %v546, %v542
  %v771 = vpack.c.b16 %v547, %v543
  %v772 = vpack.c.b16 %v552, %v548
  %v773 = vpack.c.b16 %v553, %v549
  %v774 = vpack.c.b16 %v554, %v550
  %v775 = vpack.c.b16 %v555, %v551
  %v776 = vpack.c.b16 %v560, %v556
  %v777 = vpack.c.b16 %v561, %v557
  %v778 = vpack.c.b16 %v562, %v558
  %v779 = vpack.c.b16 %v563, %v559
  %v780 = vpack.c.b16 %v568, %v564
  %v781 = vpack.c.b16 %v569, %v565
  %v782 = vpack.c.b16 %v570, %v566
  %v783 = vpack.c.b16 %v571, %v567
  %v784 = vpack.c.b16 %v576, %v572
  %v785 = vpack.c.b16 %v577, %v573
  %v786 = vpack.c.b16 %v578, %v574
  %v787 = vpack.c.b16 %v579, %v575
  %v788 = vpack.c.b16 %v584, %v580
  %v789 = vpack.c.b16 %v585, %v581
  %v790 = vpack.c.b16 %v586, %v582
  %v791 = vpack.c.b16 %v587, %v583
  %v792 = vpack.c.b16 %v592, %v588
  %v793 = vpack.c.b16 %v593, %v589
  %v794 = vpack.c.b16 %v594, %v590
  %v795 = vpack.c.b16 %v595, %v591
  %v796 = vpack.c.b16 %v600, %v596
  %v797 = vpack.c.b16 %v601, %v597
  %v798 = vpack.c.b16 %v602, %v598
  %v799 = vpack.c.b16 %v603, %v599
  %v800 = vpack.c.b16 %v608, %v604
  %v801 = vpack.c.b16 %v609, %v605
  %v802 = vpack.c.b16 %v610, %v606
  %v803 = vpack.c.b16 %v611, %v607
  %v804 = vpack.c.b16 %v616, %v612
  %v805 = vpack.c.b16 %v617, %v613
  %v806 = vpack.c.b16 %v618, %v614
  %v807 = vpack.c.b16 %v619, %v615
  %v808 = vpack.c.b16 %v624, %v620
  %v809 = vpack.c.b16 %v625, %v621
  %v810 = vpack.c.b16 %v626, %v622
  %v811 = vpack.c.b16 %v627, %v623
  %v812 = vpack.c.b16 %v632, %v628
  %v813 = vpack.c.b16 %v633, %v629
  %v814 = vpack.c.b16 %v634, %v630
  %v815 = vpack.c.b16 %v635, %v631
  %v816 = vpack.c.b16 %v640, %v636
  %v817 = vpack.c.b16 %v641, %v637
  %v818 = vpack.c.b16 %v642, %v638
  %v819 = vpack.c.b16 %v643, %v639
  %v820 = vpack.c.b16 %v648, %v644
  %v821 = vpack.c.b16 %v649, %v645
  %v822 = vpack.c.b16 %v650, %v646
  %v823 = vpack.c.b16 %v651, %v647
  %v824 = vpack.c.b16 %v656, %v652
  %v825 = vpack.c.b16 %v657, %v653
  %v826 = vpack.c.b16 %v658, %v654
  %v827 = vpack.c.b16 %v659, %v655
  %v828 = vpack.c.b16 %v664, %v660
  %v829 = vpack.c.b16 %v665, %v661
  %v830 = vpack.c.b16 %v666, %v662
  %v831 = vpack.c.b16 %v667, %v663
  %v832 = vpack.c.b16 %v672, %v668
  %v833 = vpack.c.b16 %v673, %v669
  %v834 = vpack.c.b16 %v674, %v670
  %v835 = vpack.c.b16 %v675, %v671
  %v836 = vpack.c.b16 %v680, %v676
  %v837 = vpack.c.b16 %v681, %v677
  %v838 = vpack.c.b16 %v682, %v678
  %v839 = vpack.c.b16 %v683, %v679
  %v840 = vpack.c.b16 %v688, %v684
  %v841 = vpack.c.b16 %v689, %v685
  %v842 = vpack.c.b16 %v690, %v686
  %v843 = vpack.c.b16 %v691, %v687
  %v844 = vpack.c.b16 %v696, %v692
  %v845 = vpack.c.b16 %v697, %v693
  %v846 = vpack.c.b16 %v698, %v694
  %v847 = vpack.c.b16 %v699, %v695
  %v848 = vpack.c.b16 %v704, %v700
  %v849 = vpack.c.b16 %v705, %v701
  %v850 = vpack.c.b16 %v706, %v702
  %v851 = vpack.c.b16 %v707, %v703
  %v852 = vpack.c.b16 %v712, %v708
  %v853 = vpack.c.b16 %v713, %v709
  %v854 = vpack.c.b16 %v714, %v710
  %v855 = vpack.c.b16 %v715, %v711
  %v856 = vpack.c.b16 %v720, %v716
  %v857 = vpack.c.b16 %v721, %v717
  %v858 = vpack.c.b16 %v722, %v718
  %v859 = vpack.c.b16 %v723, %v719
  %v860 = vpack.c.b16 %v728, %v724
  %v861 = vpack.c.b16 %v729, %v725
  %v862 = vpack.c.b16 %v730, %v726
  %v863 = vpack.c.b16 %v731, %v727
  %v864 = vpack.c.b16 %v736, %v732
  %v865 = vpack.c.b16 %v737, %v733
  %v866 = vpack.c.b16 %v738, %v734
  %v867 = vpack.c.b16 %v739, %v735
  %996 = vmatprep.subr.bf16.mxu0 %v769
  %997 = vmatpush1.bf16.msra.mxu0 %v768
  %998 = vmatprep.subr.bf16.mxu0 %v765
  %999 = vmatpush1.bf16.msra.mxu0 %v764
  %1000 = vmatprep.subr.bf16.mxu0 %v761
  %1001 = vmatpush1.bf16.msra.mxu0 %v760
  %1002 = vmatprep.subr.bf16.mxu0 %v757
  %1003 = vmatpush1.bf16.msra.mxu0 %v756
  %1004 = vmatprep.subr.bf16.mxu0 %v753
  %1005 = vmatpush1.bf16.msra.mxu0 %v752
  %1006 = vmatprep.subr.bf16.mxu0 %v749
  %1007 = vmatpush1.bf16.msra.mxu0 %v748
  %1008 = vmatprep.subr.bf16.mxu0 %v745
  %1009 = vmatpush1.bf16.msra.mxu0 %v744
  %1010 = vmatprep.subr.bf16.mxu0 %v741
  %1011 = vmatpush1.bf16.msra.mxu0 %v740
  %1012 = vmatprep.subr.bf16.mxu0 %v801
  %1013 = vmatpush2.bf16.msra.mxu0 %v800
  %1014 = vmatprep.subr.bf16.mxu0 %v797
  %1015 = vmatpush2.bf16.msra.mxu0 %v796
  %1016 = vmatprep.subr.bf16.mxu0 %v793
  %1017 = vmatpush2.bf16.msra.mxu0 %v792
  %1018 = vmatprep.subr.bf16.mxu0 %v789
  %1019 = vmatpush2.bf16.msra.mxu0 %v788
  %1020 = vmatprep.subr.bf16.mxu0 %v785
  %1021 = vmatpush2.bf16.msra.mxu0 %v784
  %1022 = vmatprep.subr.bf16.mxu0 %v781
  %1023 = vmatpush2.bf16.msra.mxu0 %v780
  %1024 = vmatprep.subr.bf16.mxu0 %v777
  %1025 = vmatpush2.bf16.msra.mxu0 %v776
  %1026 = vmatprep.subr.bf16.mxu0 %v773
  %1027 = vmatpush2.bf16.msra.mxu0 %v772
  %1028 = vmatprep.mubr.bf16.mxu0 %v293
  %1029 = vmatmul.mubr.bf16.gmra.mxu0 %v292
  %v1030 = vpop.f32.mrf.mxu0
  %v1031 = vadd.f32 %v179, %v1030
  %v1032 = vpop.f32.mrf.mxu0
  %v1033 = vadd.f32 %v183, %v1032
  %v1034 = vpop.f32.mrf.mxu0
  %v1035 = vadd.f32 %v179, %v1034
  %v1036 = vpop.f32.mrf.mxu0
  %v1037 = vadd.f32 %v183, %v1036
  %1038 = vmatprep.mubr.bf16.mxu0 %v297
  %1039 = vmatmul.mubr.bf16.gmra.mxu0 %v296
  %v1040 = vpop.f32.mrf.mxu0
  %v1041 = vadd.f32 %v179, %v1040
  %v1042 = vpop.f32.mrf.mxu0
  %v1043 = vadd.f32 %v183, %v1042
  %v1044 = vpop.f32.mrf.mxu0
  %v1045 = vadd.f32 %v179, %v1044
  %v1046 = vpop.f32.mrf.mxu0
  %v1047 = vadd.f32 %v183, %v1046
  %1048 = vmatprep.mubr.bf16.mxu0 %v301
  %1049 = vmatmul.mubr.bf16.gmra.mxu0 %v300
  %v1050 = vpop.f32.mrf.mxu0
  %v1051 = vadd.f32 %v179, %v1050
  %v1052 = vpop.f32.mrf.mxu0
  %v1053 = vadd.f32 %v183, %v1052
  %v1054 = vpop.f32.mrf.mxu0
  %v1055 = vadd.f32 %v179, %v1054
  %v1056 = vpop.f32.mrf.mxu0
  %v1057 = vadd.f32 %v183, %v1056
  %1058 = vmatprep.mubr.bf16.mxu0 %v305
  %1059 = vmatmul.mubr.bf16.gmra.mxu0 %v304
  %v1060 = vpop.f32.mrf.mxu0
  %v1061 = vadd.f32 %v179, %v1060
  %v1062 = vpop.f32.mrf.mxu0
  %v1063 = vadd.f32 %v183, %v1062
  %v1064 = vpop.f32.mrf.mxu0
  %v1065 = vadd.f32 %v179, %v1064
  %v1066 = vpop.f32.mrf.mxu0
  %v1067 = vadd.f32 %v183, %v1066
  %1068 = vmatprep.mubr.bf16.mxu0 %v309
  %1069 = vmatmul.mubr.bf16.gmra.mxu0 %v308
  %v1070 = vpop.f32.mrf.mxu0
  %v1071 = vadd.f32 %v179, %v1070
  %v1072 = vpop.f32.mrf.mxu0
  %v1073 = vadd.f32 %v183, %v1072
  %v1074 = vpop.f32.mrf.mxu0
  %v1075 = vadd.f32 %v179, %v1074
  %v1076 = vpop.f32.mrf.mxu0
  %v1077 = vadd.f32 %v183, %v1076
  %1078 = vmatprep.mubr.bf16.mxu0 %v313
  %1079 = vmatmul.mubr.bf16.gmra.mxu0 %v312
  %v1080 = vpop.f32.mrf.mxu0
  %v1081 = vadd.f32 %v179, %v1080
  %v1082 = vpop.f32.mrf.mxu0
  %v1083 = vadd.f32 %v183, %v1082
  %v1084 = vpop.f32.mrf.mxu0
  %v1085 = vadd.f32 %v179, %v1084
  %v1086 = vpop.f32.mrf.mxu0
  %v1087 = vadd.f32 %v183, %v1086
  %1088 = vmatprep.mubr.bf16.mxu0 %v317
  %1089 = vmatmul.mubr.bf16.gmra.mxu0 %v316
  %v1090 = vpop.f32.mrf.mxu0
  %v1091 = vadd.f32 %v179, %v1090
  %v1092 = vpop.f32.mrf.mxu0
  %v1093 = vadd.f32 %v183, %v1092
  %v1094 = vpop.f32.mrf.mxu0
  %v1095 = vadd.f32 %v179, %v1094
  %v1096 = vpop.f32.mrf.mxu0
  %v1097 = vadd.f32 %v183, %v1096
  %1098 = vmatprep.mubr.bf16.mxu0 %v321
  %1099 = vmatmul.mubr.bf16.gmra.mxu0 %v320
  %v1100 = vpop.f32.mrf.mxu0
  %v1101 = vadd.f32 %v179, %v1100
  %v1102 = vpop.f32.mrf.mxu0
  %v1103 = vadd.f32 %v183, %v1102
  %v1104 = vpop.f32.mrf.mxu0
  %v1105 = vadd.f32 %v179, %v1104
  %v1106 = vpop.f32.mrf.mxu0
  %v1107 = vadd.f32 %v183, %v1106
  %1108 = vdwg.mxu0
  %1109 = vmatprep.subr.bf16.mxu0 %v833
  %1110 = vmatpush1.bf16.msra.mxu0 %v832
  %1111 = vmatprep.subr.bf16.mxu0 %v829
  %1112 = vmatpush1.bf16.msra.mxu0 %v828
  %1113 = vmatprep.subr.bf16.mxu0 %v825
  %1114 = vmatpush1.bf16.msra.mxu0 %v824
  %1115 = vmatprep.subr.bf16.mxu0 %v821
  %1116 = vmatpush1.bf16.msra.mxu0 %v820
  %1117 = vmatprep.subr.bf16.mxu0 %v817
  %1118 = vmatpush1.bf16.msra.mxu0 %v816
  %1119 = vmatprep.subr.bf16.mxu0 %v813
  %1120 = vmatpush1.bf16.msra.mxu0 %v812
  %1121 = vmatprep.subr.bf16.mxu0 %v809
  %1122 = vmatpush1.bf16.msra.mxu0 %v808
  %1123 = vmatprep.subr.bf16.mxu0 %v805
  %1124 = vmatpush1.bf16.msra.mxu0 %v804
  %1125 = vmatprep.subr.bf16.mxu0 %v865
  %1126 = vmatpush2.bf16.msra.mxu0 %v864
  %1127 = vmatprep.subr.bf16.mxu0 %v861
  %1128 = vmatpush2.bf16.msra.mxu0 %v860
  %1129 = vmatprep.subr.bf16.mxu0 %v857
  %1130 = vmatpush2.bf16.msra.mxu0 %v856
  %1131 = vmatprep.subr.bf16.mxu0 %v853
  %1132 = vmatpush2.bf16.msra.mxu0 %v852
  %1133 = vmatprep.subr.bf16.mxu0 %v849
  %1134 = vmatpush2.bf16.msra.mxu0 %v848
  %1135 = vmatprep.subr.bf16.mxu0 %v845
  %1136 = vmatpush2.bf16.msra.mxu0 %v844
  %1137 = vmatprep.subr.bf16.mxu0 %v841
  %1138 = vmatpush2.bf16.msra.mxu0 %v840
  %1139 = vmatprep.subr.bf16.mxu0 %v837
  %1140 = vmatpush2.bf16.msra.mxu0 %v836
  %1141 = vmatprep.mubr.bf16.mxu0 %v295
  %1142 = vmatmul.mubr.bf16.gmra.mxu0 %v294
  %v1143 = vpop.f32.mrf.mxu0
  %v1144 = vadd.f32 %v1031, %v1143
  %v1145 = vpop.f32.mrf.mxu0
  %v1146 = vadd.f32 %v1033, %v1145
  %v1147 = vpop.f32.mrf.mxu0
  %v1148 = vadd.f32 %v1035, %v1147
  %v1149 = vpop.f32.mrf.mxu0
  %v1150 = vadd.f32 %v1037, %v1149
  %1151 = vmatprep.mubr.bf16.mxu0 %v299
  %1152 = vmatmul.mubr.bf16.gmra.mxu0 %v298
  %v1153 = vpop.f32.mrf.mxu0
  %v1154 = vadd.f32 %v1041, %v1153
  %v1155 = vpop.f32.mrf.mxu0
  %v1156 = vadd.f32 %v1043, %v1155
  %v1157 = vpop.f32.mrf.mxu0
  %v1158 = vadd.f32 %v1045, %v1157
  %v1159 = vpop.f32.mrf.mxu0
  %v1160 = vadd.f32 %v1047, %v1159
  %1161 = vmatprep.mubr.bf16.mxu0 %v303
  %1162 = vmatmul.mubr.bf16.gmra.mxu0 %v302
  %v1163 = vpop.f32.mrf.mxu0
  %v1164 = vadd.f32 %v1051, %v1163
  %v1165 = vpop.f32.mrf.mxu0
  %v1166 = vadd.f32 %v1053, %v1165
  %v1167 = vpop.f32.mrf.mxu0
  %v1168 = vadd.f32 %v1055, %v1167
  %v1169 = vpop.f32.mrf.mxu0
  %v1170 = vadd.f32 %v1057, %v1169
  %1171 = vmatprep.mubr.bf16.mxu0 %v307
  %1172 = vmatmul.mubr.bf16.gmra.mxu0 %v306
  %v1173 = vpop.f32.mrf.mxu0
  %v1174 = vadd.f32 %v1061, %v1173
  %v1175 = vpop.f32.mrf.mxu0
  %v1176 = vadd.f32 %v1063, %v1175
  %v1177 = vpop.f32.mrf.mxu0
  %v1178 = vadd.f32 %v1065, %v1177
  %v1179 = vpop.f32.mrf.mxu0
  %v1180 = vadd.f32 %v1067, %v1179
  %1181 = vmatprep.mubr.bf16.mxu0 %v311
  %1182 = vmatmul.mubr.bf16.gmra.mxu0 %v310
  %v1183 = vpop.f32.mrf.mxu0
  %v1184 = vadd.f32 %v1071, %v1183
  %v1185 = vpop.f32.mrf.mxu0
  %v1186 = vadd.f32 %v1073, %v1185
  %v1187 = vpop.f32.mrf.mxu0
  %v1188 = vadd.f32 %v1075, %v1187
  %v1189 = vpop.f32.mrf.mxu0
  %v1190 = vadd.f32 %v1077, %v1189
  %1191 = vmatprep.mubr.bf16.mxu0 %v315
  %1192 = vmatmul.mubr.bf16.gmra.mxu0 %v314
  %v1193 = vpop.f32.mrf.mxu0
  %v1194 = vadd.f32 %v1081, %v1193
  %v1195 = vpop.f32.mrf.mxu0
  %v1196 = vadd.f32 %v1083, %v1195
  %v1197 = vpop.f32.mrf.mxu0
  %v1198 = vadd.f32 %v1085, %v1197
  %v1199 = vpop.f32.mrf.mxu0
  %v1200 = vadd.f32 %v1087, %v1199
  %1201 = vmatprep.mubr.bf16.mxu0 %v319
  %1202 = vmatmul.mubr.bf16.gmra.mxu0 %v318
  %v1203 = vpop.f32.mrf.mxu0
  %v1204 = vadd.f32 %v1091, %v1203
  %v1205 = vpop.f32.mrf.mxu0
  %v1206 = vadd.f32 %v1093, %v1205
  %v1207 = vpop.f32.mrf.mxu0
  %v1208 = vadd.f32 %v1095, %v1207
  %v1209 = vpop.f32.mrf.mxu0
  %v1210 = vadd.f32 %v1097, %v1209
  %1211 = vmatprep.mubr.bf16.mxu0 %v323
  %1212 = vmatmul.mubr.bf16.gmra.mxu0 %v322
  %v1213 = vpop.f32.mrf.mxu0
  %v1214 = vadd.f32 %v1101, %v1213
  %v1215 = vpop.f32.mrf.mxu0
  %v1216 = vadd.f32 %v1103, %v1215
  %v1217 = vpop.f32.mrf.mxu0
  %v1218 = vadd.f32 %v1105, %v1217
  %v1219 = vpop.f32.mrf.mxu0
  %v1220 = vadd.f32 %v1107, %v1219
  %1221 = vdwg.mxu0
  %1222 = vmatprep.subr.bf16.mxu0 %v771
  %1223 = vmatpush1.bf16.msra.mxu0 %v770
  %1224 = vmatprep.subr.bf16.mxu0 %v767
  %1225 = vmatpush1.bf16.msra.mxu0 %v766
  %1226 = vmatprep.subr.bf16.mxu0 %v763
  %1227 = vmatpush1.bf16.msra.mxu0 %v762
  %1228 = vmatprep.subr.bf16.mxu0 %v759
  %1229 = vmatpush1.bf16.msra.mxu0 %v758
  %1230 = vmatprep.subr.bf16.mxu0 %v755
  %1231 = vmatpush1.bf16.msra.mxu0 %v754
  %1232 = vmatprep.subr.bf16.mxu0 %v751
  %1233 = vmatpush1.bf16.msra.mxu0 %v750
  %1234 = vmatprep.subr.bf16.mxu0 %v747
  %1235 = vmatpush1.bf16.msra.mxu0 %v746
  %1236 = vmatprep.subr.bf16.mxu0 %v743
  %1237 = vmatpush1.bf16.msra.mxu0 %v742
  %1238 = vmatprep.subr.bf16.mxu0 %v803
  %1239 = vmatpush2.bf16.msra.mxu0 %v802
  %1240 = vmatprep.subr.bf16.mxu0 %v799
  %1241 = vmatpush2.bf16.msra.mxu0 %v798
  %1242 = vmatprep.subr.bf16.mxu0 %v795
  %1243 = vmatpush2.bf16.msra.mxu0 %v794
  %1244 = vmatprep.subr.bf16.mxu0 %v791
  %1245 = vmatpush2.bf16.msra.mxu0 %v790
  %1246 = vmatprep.subr.bf16.mxu0 %v787
  %1247 = vmatpush2.bf16.msra.mxu0 %v786
  %1248 = vmatprep.subr.bf16.mxu0 %v783
  %1249 = vmatpush2.bf16.msra.mxu0 %v782
  %1250 = vmatprep.subr.bf16.mxu0 %v779
  %1251 = vmatpush2.bf16.msra.mxu0 %v778
  %1252 = vmatprep.subr.bf16.mxu0 %v775
  %1253 = vmatpush2.bf16.msra.mxu0 %v774
  %1254 = vmatprep.mubr.bf16.mxu0 %v293
  %1255 = vmatmul.mubr.bf16.gmra.mxu0 %v292
  %v1256 = vpop.f32.mrf.mxu0
  %v1257 = vadd.f32 %v187, %v1256
  %v1258 = vpop.f32.mrf.mxu0
  %v1259 = vadd.f32 %v191, %v1258
  %v1260 = vpop.f32.mrf.mxu0
  %v1261 = vadd.f32 %v187, %v1260
  %v1262 = vpop.f32.mrf.mxu0
  %v1263 = vadd.f32 %v191, %v1262
  %1264 = vmatprep.mubr.bf16.mxu0 %v297
  %1265 = vmatmul.mubr.bf16.gmra.mxu0 %v296
  %v1266 = vpop.f32.mrf.mxu0
  %v1267 = vadd.f32 %v187, %v1266
  %v1268 = vpop.f32.mrf.mxu0
  %v1269 = vadd.f32 %v191, %v1268
  %v1270 = vpop.f32.mrf.mxu0
  %v1271 = vadd.f32 %v187, %v1270
  %v1272 = vpop.f32.mrf.mxu0
  %v1273 = vadd.f32 %v191, %v1272
  %1274 = vmatprep.mubr.bf16.mxu0 %v301
  %1275 = vmatmul.mubr.bf16.gmra.mxu0 %v300
  %v1276 = vpop.f32.mrf.mxu0
  %v1277 = vadd.f32 %v187, %v1276
  %v1278 = vpop.f32.mrf.mxu0
  %v1279 = vadd.f32 %v191, %v1278
  %v1280 = vpop.f32.mrf.mxu0
  %v1281 = vadd.f32 %v187, %v1280
  %v1282 = vpop.f32.mrf.mxu0
  %v1283 = vadd.f32 %v191, %v1282
  %1284 = vmatprep.mubr.bf16.mxu0 %v305
  %1285 = vmatmul.mubr.bf16.gmra.mxu0 %v304
  %v1286 = vpop.f32.mrf.mxu0
  %v1287 = vadd.f32 %v187, %v1286
  %v1288 = vpop.f32.mrf.mxu0
  %v1289 = vadd.f32 %v191, %v1288
  %v1290 = vpop.f32.mrf.mxu0
  %v1291 = vadd.f32 %v187, %v1290
  %v1292 = vpop.f32.mrf.mxu0
  %v1293 = vadd.f32 %v191, %v1292
  %1294 = vmatprep.mubr.bf16.mxu0 %v309
  %1295 = vmatmul.mubr.bf16.gmra.mxu0 %v308
  %v1296 = vpop.f32.mrf.mxu0
  %v1297 = vadd.f32 %v187, %v1296
  %v1298 = vpop.f32.mrf.mxu0
  %v1299 = vadd.f32 %v191, %v1298
  %v1300 = vpop.f32.mrf.mxu0
  %v1301 = vadd.f32 %v187, %v1300
  %v1302 = vpop.f32.mrf.mxu0
  %v1303 = vadd.f32 %v191, %v1302
  %1304 = vmatprep.mubr.bf16.mxu0 %v313
  %1305 = vmatmul.mubr.bf16.gmra.mxu0 %v312
  %v1306 = vpop.f32.mrf.mxu0
  %v1307 = vadd.f32 %v187, %v1306
  %v1308 = vpop.f32.mrf.mxu0
  %v1309 = vadd.f32 %v191, %v1308
  %v1310 = vpop.f32.mrf.mxu0
  %v1311 = vadd.f32 %v187, %v1310
  %v1312 = vpop.f32.mrf.mxu0
  %v1313 = vadd.f32 %v191, %v1312
  %1314 = vmatprep.mubr.bf16.mxu0 %v317
  %1315 = vmatmul.mubr.bf16.gmra.mxu0 %v316
  %v1316 = vpop.f32.mrf.mxu0
  %v1317 = vadd.f32 %v187, %v1316
  %v1318 = vpop.f32.mrf.mxu0
  %v1319 = vadd.f32 %v191, %v1318
  %v1320 = vpop.f32.mrf.mxu0
  %v1321 = vadd.f32 %v187, %v1320
  %v1322 = vpop.f32.mrf.mxu0
  %v1323 = vadd.f32 %v191, %v1322
  %1324 = vmatprep.mubr.bf16.mxu0 %v321
  %1325 = vmatmul.mubr.bf16.gmra.mxu0 %v320
  %v1326 = vpop.f32.mrf.mxu0
  %v1327 = vadd.f32 %v187, %v1326
  %v1328 = vpop.f32.mrf.mxu0
  %v1329 = vadd.f32 %v191, %v1328
  %v1330 = vpop.f32.mrf.mxu0
  %v1331 = vadd.f32 %v187, %v1330
  %v1332 = vpop.f32.mrf.mxu0
  %v1333 = vadd.f32 %v191, %v1332
  %1334 = vdwg.mxu0
  %1335 = vmatprep.subr.bf16.mxu0 %v835
  %1336 = vmatpush1.bf16.msra.mxu0 %v834
  %1337 = vmatprep.subr.bf16.mxu0 %v831
  %1338 = vmatpush1.bf16.msra.mxu0 %v830
  %1339 = vmatprep.subr.bf16.mxu0 %v827
  %1340 = vmatpush1.bf16.msra.mxu0 %v826
  %1341 = vmatprep.subr.bf16.mxu0 %v823
  %1342 = vmatpush1.bf16.msra.mxu0 %v822
  %1343 = vmatprep.subr.bf16.mxu0 %v819
  %1344 = vmatpush1.bf16.msra.mxu0 %v818
  %1345 = vmatprep.subr.bf16.mxu0 %v815
  %1346 = vmatpush1.bf16.msra.mxu0 %v814
  %1347 = vmatprep.subr.bf16.mxu0 %v811
  %1348 = vmatpush1.bf16.msra.mxu0 %v810
  %1349 = vmatprep.subr.bf16.mxu0 %v807
  %1350 = vmatpush1.bf16.msra.mxu0 %v806
  %1351 = vmatprep.subr.bf16.mxu0 %v867
  %1352 = vmatpush2.bf16.msra.mxu0 %v866
  %1353 = vmatprep.subr.bf16.mxu0 %v863
  %1354 = vmatpush2.bf16.msra.mxu0 %v862
  %1355 = vmatprep.subr.bf16.mxu0 %v859
  %1356 = vmatpush2.bf16.msra.mxu0 %v858
  %1357 = vmatprep.subr.bf16.mxu0 %v855
  %1358 = vmatpush2.bf16.msra.mxu0 %v854
  %1359 = vmatprep.subr.bf16.mxu0 %v851
  %1360 = vmatpush2.bf16.msra.mxu0 %v850
  %1361 = vmatprep.subr.bf16.mxu0 %v847
  %1362 = vmatpush2.bf16.msra.mxu0 %v846
  %1363 = vmatprep.subr.bf16.mxu0 %v843
  %1364 = vmatpush2.bf16.msra.mxu0 %v842
  %1365 = vmatprep.subr.bf16.mxu0 %v839
  %1366 = vmatpush2.bf16.msra.mxu0 %v838
  %1367 = vmatprep.mubr.bf16.mxu0 %v295
  %1368 = vmatmul.mubr.bf16.gmra.mxu0 %v294
  %v1369 = vpop.f32.mrf.mxu0
  %v1370 = vadd.f32 %v1257, %v1369
  %v1371 = vpop.f32.mrf.mxu0
  %v1372 = vadd.f32 %v1259, %v1371
  %v1373 = vpop.f32.mrf.mxu0
  %v1374 = vadd.f32 %v1261, %v1373
  %v1375 = vpop.f32.mrf.mxu0
  %v1376 = vadd.f32 %v1263, %v1375
  %1377 = vmatprep.mubr.bf16.mxu0 %v299
  %1378 = vmatmul.mubr.bf16.gmra.mxu0 %v298
  %v1379 = vpop.f32.mrf.mxu0
  %v1380 = vadd.f32 %v1267, %v1379
  %v1381 = vpop.f32.mrf.mxu0
  %v1382 = vadd.f32 %v1269, %v1381
  %v1383 = vpop.f32.mrf.mxu0
  %v1384 = vadd.f32 %v1271, %v1383
  %v1385 = vpop.f32.mrf.mxu0
  %v1386 = vadd.f32 %v1273, %v1385
  %1387 = vmatprep.mubr.bf16.mxu0 %v303
  %1388 = vmatmul.mubr.bf16.gmra.mxu0 %v302
  %v1389 = vpop.f32.mrf.mxu0
  %v1390 = vadd.f32 %v1277, %v1389
  %v1391 = vpop.f32.mrf.mxu0
  %v1392 = vadd.f32 %v1279, %v1391
  %v1393 = vpop.f32.mrf.mxu0
  %v1394 = vadd.f32 %v1281, %v1393
  %v1395 = vpop.f32.mrf.mxu0
  %v1396 = vadd.f32 %v1283, %v1395
  %1397 = vmatprep.mubr.bf16.mxu0 %v307
  %1398 = vmatmul.mubr.bf16.gmra.mxu0 %v306
  %v1399 = vpop.f32.mrf.mxu0
  %v1400 = vadd.f32 %v1287, %v1399
  %v1401 = vpop.f32.mrf.mxu0
  %v1402 = vadd.f32 %v1289, %v1401
  %v1403 = vpop.f32.mrf.mxu0
  %v1404 = vadd.f32 %v1291, %v1403
  %v1405 = vpop.f32.mrf.mxu0
  %v1406 = vadd.f32 %v1293, %v1405
  %1407 = vmatprep.mubr.bf16.mxu0 %v311
  %1408 = vmatmul.mubr.bf16.gmra.mxu0 %v310
  %v1409 = vpop.f32.mrf.mxu0
  %v1410 = vadd.f32 %v1297, %v1409
  %v1411 = vpop.f32.mrf.mxu0
  %v1412 = vadd.f32 %v1299, %v1411
  %v1413 = vpop.f32.mrf.mxu0
  %v1414 = vadd.f32 %v1301, %v1413
  %v1415 = vpop.f32.mrf.mxu0
  %v1416 = vadd.f32 %v1303, %v1415
  %1417 = vmatprep.mubr.bf16.mxu0 %v315
  %1418 = vmatmul.mubr.bf16.gmra.mxu0 %v314
  %v1419 = vpop.f32.mrf.mxu0
  %v1420 = vadd.f32 %v1307, %v1419
  %v1421 = vpop.f32.mrf.mxu0
  %v1422 = vadd.f32 %v1309, %v1421
  %v1423 = vpop.f32.mrf.mxu0
  %v1424 = vadd.f32 %v1311, %v1423
  %v1425 = vpop.f32.mrf.mxu0
  %v1426 = vadd.f32 %v1313, %v1425
  %1427 = vmatprep.mubr.bf16.mxu0 %v319
  %1428 = vmatmul.mubr.bf16.gmra.mxu0 %v318
  %v1429 = vpop.f32.mrf.mxu0
  %v1430 = vadd.f32 %v1317, %v1429
  %v1431 = vpop.f32.mrf.mxu0
  %v1432 = vadd.f32 %v1319, %v1431
  %v1433 = vpop.f32.mrf.mxu0
  %v1434 = vadd.f32 %v1321, %v1433
  %v1435 = vpop.f32.mrf.mxu0
  %v1436 = vadd.f32 %v1323, %v1435
  %1437 = vmatprep.mubr.bf16.mxu0 %v323
  %1438 = vmatmul.mubr.bf16.gmra.mxu0 %v322
  %v1439 = vpop.f32.mrf.mxu0
  %v1440 = vadd.f32 %v1327, %v1439
  %v1441 = vpop.f32.mrf.mxu0
  %v1442 = vadd.f32 %v1329, %v1441
  %v1443 = vpop.f32.mrf.mxu0
  %v1444 = vadd.f32 %v1331, %v1443
  %v1445 = vpop.f32.mrf.mxu0
  %v1446 = vadd.f32 %v1333, %v1445
  %1447 = vdwg.mxu0
  %1448 = vst [vmem:[%s3] sm:$0xff] %v1144
  %1449 = vst [vmem:[%s3 + $0x8] sm:$0xff] %v1146
  %1450 = vst [vmem:[%s3 + $0x10] sm:$0xff] %v1370
  %1451 = vst [vmem:[%s3 + $0x18] sm:$0xff] %v1372
  %1452 = vst [vmem:[%s3 + $0x20] sm:$0xff] %v1148
  %1453 = vst [vmem:[%s3 + $0x28] sm:$0xff] %v1150
  %1454 = vst [vmem:[%s3 + $0x30] sm:$0xff] %v1374
  %1455 = vst [vmem:[%s3 + $0x38] sm:$0xff] %v1376
  %1456 = vst [vmem:[%s3 + $0x40] sm:$0xff] %v1154
  %1457 = vst [vmem:[%s3 + $0x48] sm:$0xff] %v1156
  %1458 = vst [vmem:[%s3 + $0x50] sm:$0xff] %v1380
  %1459 = vst [vmem:[%s3 + $0x58] sm:$0xff] %v1382
  %1460 = vst [vmem:[%s3 + $0x60] sm:$0xff] %v1158
  %1461 = vst [vmem:[%s3 + $0x68] sm:$0xff] %v1160
  %1462 = vst [vmem:[%s3 + $0x70] sm:$0xff] %v1384
  %1463 = vst [vmem:[%s3 + $0x78] sm:$0xff] %v1386
  %1464 = vst [vmem:[%s3 + $0x80] sm:$0xff] %v1164
  %1465 = vst [vmem:[%s3 + $0x88] sm:$0xff] %v1166
  %1466 = vst [vmem:[%s3 + $0x90] sm:$0xff] %v1390
  %1467 = vst [vmem:[%s3 + $0x98] sm:$0xff] %v1392
  %1468 = vst [vmem:[%s3 + $0xa0] sm:$0xff] %v1168
  %1469 = vst [vmem:[%s3 + $0xa8] sm:$0xff] %v1170
  %1470 = vst [vmem:[%s3 + $0xb0] sm:$0xff] %v1394
  %1471 = vst [vmem:[%s3 + $0xb8] sm:$0xff] %v1396
  %1472 = vst [vmem:[%s3 + $0xc0] sm:$0xff] %v1174
  %1473 = vst [vmem:[%s3 + $0xc8] sm:$0xff] %v1176
  %1474 = vst [vmem:[%s3 + $0xd0] sm:$0xff] %v1400
  %1475 = vst [vmem:[%s3 + $0xd8] sm:$0xff] %v1402
  %1476 = vst [vmem:[%s3 + $0xe0] sm:$0xff] %v1178
  %1477 = vst [vmem:[%s3 + $0xe8] sm:$0xff] %v1180
  %1478 = vst [vmem:[%s3 + $0xf0] sm:$0xff] %v1404
  %1479 = vst [vmem:[%s3 + $0xf8] sm:$0xff] %v1406
  %1480 = vst [vmem:[%s3 + $0x100] sm:$0xff] %v1184
  %1481 = vst [vmem:[%s3 + $0x108] sm:$0xff] %v1186
  %1482 = vst [vmem:[%s3 + $0x110] sm:$0xff] %v1410
  %1483 = vst [vmem:[%s3 + $0x118] sm:$0xff] %v1412
  %1484 = vst [vmem:[%s3 + $0x120] sm:$0xff] %v1188
  %1485 = vst [vmem:[%s3 + $0x128] sm:$0xff] %v1190
  %1486 = vst [vmem:[%s3 + $0x130] sm:$0xff] %v1414
  %1487 = vst [vmem:[%s3 + $0x138] sm:$0xff] %v1416
  %1488 = vst [vmem:[%s3 + $0x140] sm:$0xff] %v1194
  %1489 = vst [vmem:[%s3 + $0x148] sm:$0xff] %v1196
  %1490 = vst [vmem:[%s3 + $0x150] sm:$0xff] %v1420
  %1491 = vst [vmem:[%s3 + $0x158] sm:$0xff] %v1422
  %1492 = vst [vmem:[%s3 + $0x160] sm:$0xff] %v1198
  %1493 = vst [vmem:[%s3 + $0x168] sm:$0xff] %v1200
  %1494 = vst [vmem:[%s3 + $0x170] sm:$0xff] %v1424
  %1495 = vst [vmem:[%s3 + $0x178] sm:$0xff] %v1426
  %1496 = vst [vmem:[%s3 + $0x180] sm:$0xff] %v1204
  %1497 = vst [vmem:[%s3 + $0x188] sm:$0xff] %v1206
  %1498 = vst [vmem:[%s3 + $0x190] sm:$0xff] %v1430
  %1499 = vst [vmem:[%s3 + $0x198] sm:$0xff] %v1432
  %1500 = vst [vmem:[%s3 + $0x1a0] sm:$0xff] %v1208
  %1501 = vst [vmem:[%s3 + $0x1a8] sm:$0xff] %v1210
  %1502 = vst [vmem:[%s3 + $0x1b0] sm:$0xff] %v1434
  %1503 = vst [vmem:[%s3 + $0x1b8] sm:$0xff] %v1436
  %1504 = vst [vmem:[%s3 + $0x1c0] sm:$0xff] %v1214
  %1505 = vst [vmem:[%s3 + $0x1c8] sm:$0xff] %v1216
  %1506 = vst [vmem:[%s3 + $0x1d0] sm:$0xff] %v1440
  %1507 = vst [vmem:[%s3 + $0x1d8] sm:$0xff] %v1442
  %1508 = vst [vmem:[%s3 + $0x1e0] sm:$0xff] %v1218
  %1509 = vst [vmem:[%s3 + $0x1e8] sm:$0xff] %v1220
  %1510 = vst [vmem:[%s3 + $0x1f0] sm:$0xff] %v1444
  %1511 = vst [vmem:[%s3 + $0x1f8] sm:$0xff] %v1446
  // Predicated region
  $region14: #{compressor_forward.19} parent=0 // pred_check
    _
  $region15: #{compressor_forward.19} parent=0 // pred_check_branch
    %1513 = sbr.rel (0) target = $region17
  $region16: #{compressor_forward.19} parent=0 // pred_region
    _
  $region17: #{compressor_forward.19} parent=0 // pred_fallthru
    _
  // Predicated region
  $region18: #{compressor_forward.19} parent=0 // pred_check
    _
  $region19: #{compressor_forward.19} parent=0 // pred_check_branch
    %1515 = sbr.rel (0) target = $region21
  $region20: #{compressor_forward.19} parent=0 // pred_region
    _
  $region21: #{compressor_forward.19} parent=0 // pred_fallthru
    _

</llo_original>
